<compile_context>
chip_gen: v6e
topology: v6e:2x2x1
jax: 0.10.0
libtpu: 0.0.40
codegen_flags: <defaults>
</compile_context>

<pallas_src>
import functools

import jax
import jax.numpy as jnp
from jax.experimental import pallas as pl
from jax.experimental.pallas import tpu as pltpu


F = 1000          # real feature width produced by the backbone
F_PAD = 1024      # padded to a multiple of 128 (lane-dense)
OUT_PAD = 128     # output block kept 128 lanes wide (unmasked vst); lane 0 is real


# ----------------------------------------------------------------------------
# Fused kernel: stand-in backbone (GAP + FC) + relu + fc(1000->1) + sigmoid.
# Everything is tiny (< 40 KB), so it lives in VMEM as full blocks:
# grid size 1, whole-array BlockSpecs.  No MXU use at these shapes.
# ----------------------------------------------------------------------------
def vgg16_head_kernel(
    x_ref,                  # [N, C, H*W]  f32  (spatial axis lane-dense)
    wb_ref,                 # [C, 1024]    f32  (1/(H*W) scale folded in)
    bb_ref,                 # [1, 1024]    f32
    wfc_ref,                # [1, 1024]    f32  fc weight row (1000 real + 24 zero)
    bfc_ref,                # [1, 1]       f32  fc bias
    o_ref,                  # [N, 128]     f32  (only lane 0 is the real output)
    *,
    channels,               # static channel count (unrolled FMA trip count)
):
    x = x_ref[...]                                      # [N, C, H*W] f32

    # ---- stand-in VGG16 backbone: global average pool + FC -> 1024 (padded) ----
    # TODO(synk): injected torchvision VGG16 backbone is external; stand-in only.
    pooled = jnp.sum(x, axis=-1)                        # [N, C] lane reduce (XLU);
                                                        # mean scale folded into wb

    # Backbone FC as unrolled f32 VPU FMAs (K=4, M=2 is MXU-hostile).
    x0 = bb_ref[...]                                    # [1, 1024] -> broadcasts to [N, 1024]
    for ch in range(channels):
        x0 = x0 + pooled[:, ch:ch + 1] * wb_ref[ch:ch + 1, :]

    # ---- head: relu -> fc (1000 -> 1) -> sigmoid ----
    x1 = jnp.maximum(x0, 0.0)                           # [N, 1024] f32 ReLU (VPU)
    # fc as VPU multiply + lane reduction; padded lanes of wfc are zero.
    logit = jnp.sum(x1 * wfc_ref[...], axis=-1, keepdims=True) + bfc_ref[...]  # [N, 1]
    # Broadcast the scalar logit across 128 lanes so the store is lane-dense.
    o_ref[...] = jnp.broadcast_to(jax.nn.sigmoid(logit), o_ref.shape)


def vgg16_forward(x, params):
    """x: [N, C, H, W] float32. Returns [N, 1] float32."""
    n, c, h, w = x.shape
    x3d = x.reshape(n, c, h * w)          # lane-dense spatial reduction axis

    args = (x3d, params["wb"], params["bb"], params["w_fc"], params["b_fc"])

    # Truthful advisory cost: pool reduce + C FMAs over 1024 lanes + fc row dot.
    flops = n * c * (h * w) + 2 * n * c * F_PAD + 2 * n * F_PAD
    bytes_accessed = sum(int(a.size) * a.dtype.itemsize for a in args) \
        + n * OUT_PAD * 4

    out = pl.pallas_call(
        functools.partial(vgg16_head_kernel, channels=c),
        out_shape=jax.ShapeDtypeStruct((n, OUT_PAD), jnp.float32),
        # Whole-array VMEM-resident blocks (everything is < 40 KB total).
        in_specs=[pl.BlockSpec(memory_space=pltpu.VMEM) for _ in args],
        out_specs=pl.BlockSpec(memory_space=pltpu.VMEM),
        compiler_params=pltpu.CompilerParams(vmem_limit_bytes=32 << 20),
        cost_estimate=pl.CostEstimate(
            flops=int(flops),
            transcendentals=int(n),
            bytes_accessed=int(bytes_accessed),
        ),
    )(*args)
    return out[:, :1]                     # drop lane padding -> [N, 1]


def init_params(key, in_channels, spatial_size):
    """Deterministic synthetic parameters (not a checkpoint load)."""
    ks = jax.random.split(key, 4)
    s = 0.02
    # Stand-in backbone FC: C -> 1000, zero-padded to 1024 lanes, f32.
    # The 1/(H*W) global-average-pool scale is folded in here.
    wb = jnp.zeros((in_channels, F_PAD), jnp.float32).at[:, :F].set(
        jax.random.normal(ks[0], (in_channels, F), jnp.float32) * s)
    wb = wb / float(spatial_size)
    bb = jnp.zeros((1, F_PAD), jnp.float32).at[:, :F].set(
        jax.random.normal(ks[1], (1, F), jnp.float32) * s)
    # Head fc: 1000 -> 1 stored as a single weight row [1, 1024]; padded lanes
    # are zero so they cannot leak into the logit (ReLU output is >= 0 there
    # but multiplied by exact zeros).
    w_fc = jnp.zeros((1, F_PAD), jnp.float32).at[:, :F].set(
        jax.random.normal(ks[2], (1, F), jnp.float32) * s)
    b_fc = jax.random.normal(ks[3], (1, 1), jnp.float32) * s
    return {"wb": wb, "bb": bb, "w_fc": w_fc, "b_fc": b_fc}


def reference_forward(x, p):
    """Plain-JAX reference (same params / same f32 math) for correctness checks."""
    n, c, h, w = x.shape
    pooled = jnp.sum(x.reshape(n, c, h * w), axis=-1)          # [N, C]
    x0 = jnp.sum(pooled[:, :, None] * p["wb"][None, :, :], axis=1) + p["bb"]
    x1 = jnp.maximum(x0, 0.0)
    logit = jnp.sum(x1 * p["w_fc"], axis=-1, keepdims=True) + p["b_fc"]
    return jax.nn.sigmoid(logit)                                # [N, 1]


if __name__ == "__main__":
    key = jax.random.PRNGKey(0)
    k_x, k_p = jax.random.split(key)

    # Small deterministic input, NCHW like PyTorch: batch=2, channels=4, 16x16.
    x = jax.random.normal(k_x, (2, 4, 16, 16), jnp.float32)
    params = init_params(k_p, in_channels=4, spatial_size=16 * 16)

    out = jax.block_until_ready(vgg16_forward(x, params))
    ref = reference_forward(x, params)

    assert out.shape == (2, 1)
    assert jnp.allclose(out, ref, atol=1e-5, rtol=1e-5)

    print("KERNEL_OK")
</pallas_src>

<mosaic_0001>
module attributes {stable_mosaic.version = 11 : i64} {
  func.func @vgg16_head_kernel(%arg0: memref<2x4x256xf32, #tpu.memory_space<vmem>>, %arg1: memref<4x1024xf32, #tpu.memory_space<vmem>>, %arg2: memref<1x1024xf32, #tpu.memory_space<vmem>>, %arg3: memref<1x1024xf32, #tpu.memory_space<vmem>>, %arg4: memref<1x1xf32, #tpu.memory_space<vmem>>, %arg5: memref<2x128xf32, #tpu.memory_space<vmem>>) attributes {dimension_semantics = [], scalar_prefetch = 0 : i64, scratch_operands = 0 : i64, tpu.core_type = #tpu.core_type<tc>} {
    %c0 = arith.constant 0 : index
    %c0_0 = arith.constant 0 : index
    %c0_1 = arith.constant 0 : index
    %0 = vector.load %arg0[%c0, %c0_0, %c0_1] : memref<2x4x256xf32, #tpu.memory_space<vmem>>, vector<2x4x256xf32>
    %cst = arith.constant dense<0.000000e+00> : vector<2x4xf32>
    %1 = vector.multi_reduction <add>, %0, %cst [2] : vector<2x4x256xf32> to vector<2x4xf32>
    %c0_2 = arith.constant 0 : index
    %c0_3 = arith.constant 0 : index
    %2 = vector.load %arg2[%c0_2, %c0_3] : memref<1x1024xf32, #tpu.memory_space<vmem>>, vector<1x1024xf32>
    %3 = vector.extract_strided_slice %1 {offsets = [0, 0], sizes = [2, 1], strides = [1, 1]} : vector<2x4xf32> to vector<2x1xf32>
    %c0_4 = arith.constant 0 : index
    %c0_5 = arith.constant 0 : index
    %4 = vector.load %arg1[%c0_4, %c0_5] : memref<4x1024xf32, #tpu.memory_space<vmem>>, vector<1x1024xf32>
    %5 = vector.broadcast %3 : vector<2x1xf32> to vector<2x1024xf32>
    %6 = vector.broadcast %4 : vector<1x1024xf32> to vector<2x1024xf32>
    %7 = arith.mulf %5, %6 : vector<2x1024xf32>
    %8 = vector.broadcast %2 : vector<1x1024xf32> to vector<2x1024xf32>
    %9 = arith.addf %8, %7 : vector<2x1024xf32>
    %10 = vector.extract_strided_slice %1 {offsets = [0, 1], sizes = [2, 1], strides = [1, 1]} : vector<2x4xf32> to vector<2x1xf32>
    %c1 = arith.constant 1 : index
    %c0_6 = arith.constant 0 : index
    %11 = vector.load %arg1[%c1, %c0_6] : memref<4x1024xf32, #tpu.memory_space<vmem>>, vector<1x1024xf32>
    %12 = vector.broadcast %10 : vector<2x1xf32> to vector<2x1024xf32>
    %13 = vector.broadcast %11 : vector<1x1024xf32> to vector<2x1024xf32>
    %14 = arith.mulf %12, %13 : vector<2x1024xf32>
    %15 = arith.addf %9, %14 : vector<2x1024xf32>
    %16 = vector.extract_strided_slice %1 {offsets = [0, 2], sizes = [2, 1], strides = [1, 1]} : vector<2x4xf32> to vector<2x1xf32>
    %c2 = arith.constant 2 : index
    %c0_7 = arith.constant 0 : index
    %17 = vector.load %arg1[%c2, %c0_7] : memref<4x1024xf32, #tpu.memory_space<vmem>>, vector<1x1024xf32>
    %18 = vector.broadcast %16 : vector<2x1xf32> to vector<2x1024xf32>
    %19 = vector.broadcast %17 : vector<1x1024xf32> to vector<2x1024xf32>
    %20 = arith.mulf %18, %19 : vector<2x1024xf32>
    %21 = arith.addf %15, %20 : vector<2x1024xf32>
    %22 = vector.extract_strided_slice %1 {offsets = [0, 3], sizes = [2, 1], strides = [1, 1]} : vector<2x4xf32> to vector<2x1xf32>
    %c3 = arith.constant 3 : index
    %c0_8 = arith.constant 0 : index
    %23 = vector.load %arg1[%c3, %c0_8] : memref<4x1024xf32, #tpu.memory_space<vmem>>, vector<1x1024xf32>
    %24 = vector.broadcast %22 : vector<2x1xf32> to vector<2x1024xf32>
    %25 = vector.broadcast %23 : vector<1x1024xf32> to vector<2x1024xf32>
    %26 = arith.mulf %24, %25 : vector<2x1024xf32>
    %27 = arith.addf %21, %26 : vector<2x1024xf32>
    %cst_9 = arith.constant 0.000000e+00 : f32
    %28 = vector.broadcast %cst_9 : f32 to vector<2x1024xf32>
    %29 = arith.maximumf %27, %28 : vector<2x1024xf32>
    %c0_10 = arith.constant 0 : index
    %c0_11 = arith.constant 0 : index
    %30 = vector.load %arg3[%c0_10, %c0_11] : memref<1x1024xf32, #tpu.memory_space<vmem>>, vector<1x1024xf32>
    %31 = vector.broadcast %30 : vector<1x1024xf32> to vector<2x1024xf32>
    %32 = arith.mulf %29, %31 : vector<2x1024xf32>
    %cst_12 = arith.constant dense<0.000000e+00> : vector<2xf32>
    %33 = vector.multi_reduction <add>, %32, %cst_12 [1] : vector<2x1024xf32> to vector<2xf32>
    %34 = vector.shape_cast %33 : vector<2xf32> to vector<2x1xf32>
    %c0_13 = arith.constant 0 : index
    %c0_14 = arith.constant 0 : index
    %35 = vector.load %arg4[%c0_13, %c0_14] : memref<1x1xf32, #tpu.memory_space<vmem>>, vector<1x1xf32>
    %36 = vector.broadcast %35 : vector<1x1xf32> to vector<2x1xf32>
    %37 = arith.addf %34, %36 : vector<2x1xf32>
    %38 = arith.negf %37 : vector<2x1xf32>
    %39 = math.exp %38 : vector<2x1xf32>
    %cst_15 = arith.constant 1.000000e+00 : f32
    %40 = vector.broadcast %cst_15 : f32 to vector<2x1xf32>
    %41 = arith.addf %40, %39 : vector<2x1xf32>
    %42 = arith.divf %40, %41 : vector<2x1xf32>
    %43 = vector.shape_cast %42 : vector<2x1xf32> to vector<2x1xf32>
    %44 = vector.broadcast %43 : vector<2x1xf32> to vector<2x128xf32>
    %c0_16 = arith.constant 0 : index
    %c0_17 = arith.constant 0 : index
    %45 = vector.load %arg5[%c0_16, %c0_17] : memref<2x128xf32, #tpu.memory_space<vmem>>, vector<2x128xf32>
    tpu.vector_store %arg5[%c0_16, %c0_17], %44 {strides = array<i32>} : memref<2x128xf32, #tpu.memory_space<vmem>>, vector<2x128xf32>,
    return
  }
}

</mosaic_0001>

<llo_original>
// kernel: tpu_custom_call.1
$region0: #{tpu_custom_call.1}
  #allocation0 [shape = 'u32[]', space=smem, size = 0x4, offset = 0x4, fixed_abs, tag = 'smem constant byte address 0x4 - core index']
  #allocation1 [shape = 'u32[144,128]{1,0:T(1,128)}', space=vmem, size = 0x12000, scoped, tag = 'internal scratch']
  #allocation2 [shape = 'f32[1,1]{1,0:T(1,128)S(1)}', space=vmem, size = 0x200, scoped, tag = 'scoped memory for tpu_custom_call.1']
  %s0 = inlined_call_operand.hbm [shape: f32[2,4,256], index: 0, kind: input, shape index: {}]
  %s1 = inlined_call_operand.hbm [shape: f32[4,1024], index: 1, kind: input, shape index: {}]
  %s2 = inlined_call_operand.hbm [shape: f32[1,1024], index: 2, kind: input, shape index: {}]
  %s3 = inlined_call_operand.hbm [shape: f32[1,1024], index: 3, kind: input, shape index: {}]
  %s4 = inlined_call_operand.<no memory space> [shape: f32[1,1], index: 4, kind: input, shape index: {}]
  %s5 = inlined_call_operand.hbm [shape: f32[2,128], index: 5, kind: output, shape index: {}]
  %s6 = sld [smem:[#allocation0]]
  $region46: #{tpu_custom_call.1} parent=0
    _
  %s8 = ssub.s32 1, %s6
  %s9 = scalar_select 0, %s8, %s6
  %v10 = vstv %s4
  %11 = vst [vmem:[#allocation2] sm:$0x1] %v10
  $region1: #{tpu_custom_call.1} parent=0
    #allocation3 [shape = 'u8[8192]{0}', space=vmem, size = 0x2000, scoped, tag = 'input window, operand 0, single buffered']
    #allocation4 [shape = 's32[1]{0}', space=sflag, size = 0x4, scoped, tag = 'scoped memory for tpu_custom_call.1']
    #allocation5 [shape = 's32[1]{0}', space=sflag, size = 0x4, scoped, tag = 'scoped memory for tpu_custom_call.1']
    #allocation6 [shape = 'u8[16384]{0}', space=vmem, size = 0x4000, scoped, tag = 'input window, operand 1, single buffered']
    #allocation7 [shape = 's32[1]{0}', space=sflag, size = 0x4, scoped, tag = 'scoped memory for tpu_custom_call.1']
    #allocation8 [shape = 'u8[4096]{0}', space=vmem, size = 0x1000, scoped, tag = 'input window, operand 2, single buffered']
    #allocation9 [shape = 'u8[4096]{0}', space=vmem, size = 0x1000, scoped, tag = 'input window, operand 3, single buffered']
    #allocation10 [shape = 's32[1]{0}', space=sflag, size = 0x4, scoped, tag = 'scoped memory for tpu_custom_call.1']
    #allocation11 [shape = 'u8[1024]{0}', space=vmem, size = 0x400, scoped, tag = 'output window, operand 0, single buffered']
    %12 = vsyncpa [#allocation4], 0
    %13 = vsyncpa [#allocation7], 0
    %14 = vsyncpa [#allocation10], 0
    %15 = vsyncpa [#allocation5], 0
    // Predicated region
    $region2: #{tpu_custom_call.1} parent=1 // pred_check
      _
    $region3: #{tpu_custom_call.1} parent=1 // pred_check_branch
      %17 = sbr.rel (0) target = $region5
    $region4: #{tpu_custom_call.1} parent=1 // pred_region
      %s19 = ssub.s32 256, 256
      %20 = vsyncadd [#allocation4], %s19
      %s21 = sshll.u32 [#allocation3], 4
      %s22 = int_to_ptr.vmem [resolvable:$true] %s21
      %27 = dma.hbm_to_vmem [thread:$0]  %s0, 256, %s22, [#allocation4], 128, 128, 8
    $region5: #{tpu_custom_call.1} parent=1 // pred_fallthru
      _
    // Predicated region
    $region6: #{tpu_custom_call.1} parent=1 // pred_check
      _
    $region7: #{tpu_custom_call.1} parent=1 // pred_check_branch
      %29 = sbr.rel (0) target = $region9
    $region8: #{tpu_custom_call.1} parent=1 // pred_region
      %s31 = ssub.s32 512, 512
      %32 = vsyncadd [#allocation7], %s31
      %s34 = sshll.u32 [#allocation6], 4
      %s35 = int_to_ptr.vmem [resolvable:$true] %s34
      %37 = dma.hbm_to_vmem [thread:$0]  %s1, 512, %s35, [#allocation7]
    $region9: #{tpu_custom_call.1} parent=1 // pred_fallthru
      _
    // Predicated region
    $region10: #{tpu_custom_call.1} parent=1 // pred_check
      _
    $region11: #{tpu_custom_call.1} parent=1 // pred_check_branch
      %39 = sbr.rel (0) target = $region13
    $region12: #{tpu_custom_call.1} parent=1 // pred_region
      %s41 = ssub.s32 128, 128
      %42 = vsyncadd [#allocation7], %s41
      %s44 = sshll.u32 [#allocation8], 4
      %s45 = int_to_ptr.vmem [resolvable:$true] %s44
      %47 = dma.hbm_to_vmem [thread:$0]  %s2, 128, %s45, [#allocation7]
    $region13: #{tpu_custom_call.1} parent=1 // pred_fallthru
      _
    // Predicated region
    $region14: #{tpu_custom_call.1} parent=1 // pred_check
      _
    $region15: #{tpu_custom_call.1} parent=1 // pred_check_branch
      %49 = sbr.rel (0) target = $region17
    $region16: #{tpu_custom_call.1} parent=1 // pred_region
      %s51 = ssub.s32 128, 128
      %52 = vsyncadd [#allocation10], %s51
      %s54 = sshll.u32 [#allocation9], 4
      %s55 = int_to_ptr.vmem [resolvable:$true] %s54
      %57 = dma.hbm_to_vmem [thread:$0]  %s3, 128, %s55, [#allocation10]
    $region17: #{tpu_custom_call.1} parent=1 // pred_fallthru
      _
    // Predicated region
    $region18: #{tpu_custom_call.1} parent=1 // pred_check
      _
    $region19: #{tpu_custom_call.1} parent=1 // pred_check_branch
      %59 = sbr.rel (0) target = $region21
    $region20: #{tpu_custom_call.1} parent=1 // pred_region
      _
    $region21: #{tpu_custom_call.1} parent=1 // pred_fallthru
      _
    // Predicated region
    $region22: #{tpu_custom_call.1} parent=1 // pred_check
      _
    $region23: #{tpu_custom_call.1} parent=1 // pred_check_branch
      %61 = sbr.rel (0) target = $region25
    $region24: #{tpu_custom_call.1} parent=1 // pred_region
      %62 = dma.done [#allocation4], 256
    $region25: #{tpu_custom_call.1} parent=1 // pred_fallthru
      _
    // Predicated region
    $region26: #{tpu_custom_call.1} parent=1 // pred_check
      _
    $region27: #{tpu_custom_call.1} parent=1 // pred_check_branch
      %64 = sbr.rel (0) target = $region29
    $region28: #{tpu_custom_call.1} parent=1 // pred_region
      %65 = dma.done [#allocation7], 512
    $region29: #{tpu_custom_call.1} parent=1 // pred_fallthru
      _
    // Predicated region
    $region30: #{tpu_custom_call.1} parent=1 // pred_check
      _
    $region31: #{tpu_custom_call.1} parent=1 // pred_check_branch
      %67 = sbr.rel (0) target = $region33
    $region32: #{tpu_custom_call.1} parent=1 // pred_region
      %68 = dma.done [#allocation7], 128
    $region33: #{tpu_custom_call.1} parent=1 // pred_fallthru
      _
    // Predicated region
    $region34: #{tpu_custom_call.1} parent=1 // pred_check
      _
    $region35: #{tpu_custom_call.1} parent=1 // pred_check_branch
      %70 = sbr.rel (0) target = $region37
    $region36: #{tpu_custom_call.1} parent=1 // pred_region
      %71 = dma.done [#allocation10], 128
    $region37: #{tpu_custom_call.1} parent=1 // pred_fallthru
      _
    %v72 = vld [vmem:[#allocation3] sm:$0xff]
    %v73 = vld [vmem:[#allocation3 + $0x8] sm:$0xff]
    %v76 = vcombine.high %v72, %v72
    %v77 = vcombine.high %v73, %v73
    %vm80 = vcmask 1043456
    %v81 = vsel %vm80, %v72, 0.0
    %v82 = vsel %vm80, %v76, 0.0
    %v83 = vadd.f32 %v81, %v82
    %84 = vadd.xlane.f32.xlu0 %v83
    %v85 = vpop.xlane.xlu0 %84
    %v86 = vsel %vm80, %v73, 0.0
    %v87 = vsel %vm80, %v77, 0.0
    %v88 = vadd.f32 %v86, %v87
    %89 = vadd.xlane.f32.xlu0 %v88
    %v90 = vpop.xlane.xlu0 %89
    %v91 = vld [vmem:[#allocation8] sm:$0xff]
    %v92 = vld [vmem:[#allocation6] ss:$4 sm:$0xff]
    %v93 = vlaneseq
    %v94 = vshrl.u32 %v93, 7
    %v95 = vsub.s32 0, %v94
    %v96 = vrot.slane %v85, %v95
    %v97 = vlaneseq
    %v98 = vshrl.u32 %v97, 7
    %v99 = vsub.s32 0, %v98
    %v100 = vrot.slane %v90, %v99
    %v102 = vlaneseq
    %v103 = vshrl.u32 %v102, 7
    %v104 = vsub.s32 0, %v103
    %v105 = vrot.slane %v92, %v104
    %v106 = vlaneseq
    %v107 = vshrl.u32 %v106, 7
    %v108 = vsub.s32 1, %v107
    %v109 = vrot.slane %v92, %v108
    %v110 = vlaneseq
    %v111 = vshrl.u32 %v110, 7
    %v112 = vsub.s32 2, %v111
    %v113 = vrot.slane %v92, %v112
    %v114 = vlaneseq
    %v115 = vshrl.u32 %v114, 7
    %v116 = vsub.s32 3, %v115
    %v117 = vrot.slane %v92, %v116
    %v118 = vlaneseq
    %v119 = vshrl.u32 %v118, 7
    %v120 = vsub.s32 4, %v119
    %v121 = vrot.slane %v92, %v120
    %v122 = vlaneseq
    %v123 = vshrl.u32 %v122, 7
    %v124 = vsub.s32 5, %v123
    %v125 = vrot.slane %v92, %v124
    %v126 = vlaneseq
    %v127 = vshrl.u32 %v126, 7
    %v128 = vsub.s32 6, %v127
    %v129 = vrot.slane %v92, %v128
    %v130 = vlaneseq
    %v131 = vshrl.u32 %v130, 7
    %v132 = vsub.s32 7, %v131
    %v133 = vrot.slane %v92, %v132
    %135 = vbcast.lane.b32.xlu0 %v105, 256
    %v136 = vpop.permute.xlu0 %135
    %s138 = sor.u32 256, 8
    %139 = vbcast.lane.b32.xlu0 %v105, %s138
    %v140 = vpop.permute.xlu0 %139
    %s142 = sor.u32 256, 16
    %143 = vbcast.lane.b32.xlu0 %v105, %s142
    %v144 = vpop.permute.xlu0 %143
    %s146 = sor.u32 256, 24
    %147 = vbcast.lane.b32.xlu0 %v105, %s146
    %v148 = vpop.permute.xlu0 %147
    %s150 = sor.u32 256, 32
    %151 = vbcast.lane.b32.xlu0 %v105, %s150
    %v152 = vpop.permute.xlu0 %151
    %s154 = sor.u32 256, 40
    %155 = vbcast.lane.b32.xlu0 %v105, %s154
    %v156 = vpop.permute.xlu0 %155
    %s158 = sor.u32 256, 48
    %159 = vbcast.lane.b32.xlu0 %v105, %s158
    %v160 = vpop.permute.xlu0 %159
    %s162 = sor.u32 256, 56
    %163 = vbcast.lane.b32.xlu0 %v105, %s162
    %v164 = vpop.permute.xlu0 %163
    %s166 = sor.u32 256, 64
    %167 = vbcast.lane.b32.xlu0 %v105, %s166
    %v168 = vpop.permute.xlu0 %167
    %s170 = sor.u32 256, 72
    %171 = vbcast.lane.b32.xlu0 %v105, %s170
    %v172 = vpop.permute.xlu0 %171
    %s174 = sor.u32 256, 80
    %175 = vbcast.lane.b32.xlu0 %v105, %s174
    %v176 = vpop.permute.xlu0 %175
    %s178 = sor.u32 256, 88
    %179 = vbcast.lane.b32.xlu0 %v105, %s178
    %v180 = vpop.permute.xlu0 %179
    %s182 = sor.u32 256, 96
    %183 = vbcast.lane.b32.xlu0 %v105, %s182
    %v184 = vpop.permute.xlu0 %183
    %s186 = sor.u32 256, 104
    %187 = vbcast.lane.b32.xlu0 %v105, %s186
    %v188 = vpop.permute.xlu0 %187
    %s190 = sor.u32 256, 112
    %191 = vbcast.lane.b32.xlu0 %v105, %s190
    %v192 = vpop.permute.xlu0 %191
    %s194 = sor.u32 256, 120
    %195 = vbcast.lane.b32.xlu0 %v105, %s194
    %v196 = vpop.permute.xlu0 %195
    %198 = vbcast.lane.b32.xlu0 %v109, 256
    %v199 = vpop.permute.xlu0 %198
    %s201 = sor.u32 256, 8
    %202 = vbcast.lane.b32.xlu0 %v109, %s201
    %v203 = vpop.permute.xlu0 %202
    %s205 = sor.u32 256, 16
    %206 = vbcast.lane.b32.xlu0 %v109, %s205
    %v207 = vpop.permute.xlu0 %206
    %s209 = sor.u32 256, 24
    %210 = vbcast.lane.b32.xlu0 %v109, %s209
    %v211 = vpop.permute.xlu0 %210
    %s213 = sor.u32 256, 32
    %214 = vbcast.lane.b32.xlu0 %v109, %s213
    %v215 = vpop.permute.xlu0 %214
    %s217 = sor.u32 256, 40
    %218 = vbcast.lane.b32.xlu0 %v109, %s217
    %v219 = vpop.permute.xlu0 %218
    %s221 = sor.u32 256, 48
    %222 = vbcast.lane.b32.xlu0 %v109, %s221
    %v223 = vpop.permute.xlu0 %222
    %s225 = sor.u32 256, 56
    %226 = vbcast.lane.b32.xlu0 %v109, %s225
    %v227 = vpop.permute.xlu0 %226
    %s229 = sor.u32 256, 64
    %230 = vbcast.lane.b32.xlu0 %v109, %s229
    %v231 = vpop.permute.xlu0 %230
    %s233 = sor.u32 256, 72
    %234 = vbcast.lane.b32.xlu0 %v109, %s233
    %v235 = vpop.permute.xlu0 %234
    %s237 = sor.u32 256, 80
    %238 = vbcast.lane.b32.xlu0 %v109, %s237
    %v239 = vpop.permute.xlu0 %238
    %s241 = sor.u32 256, 88
    %242 = vbcast.lane.b32.xlu0 %v109, %s241
    %v243 = vpop.permute.xlu0 %242
    %s245 = sor.u32 256, 96
    %246 = vbcast.lane.b32.xlu0 %v109, %s245
    %v247 = vpop.permute.xlu0 %246
    %s249 = sor.u32 256, 104
    %250 = vbcast.lane.b32.xlu0 %v109, %s249
    %v251 = vpop.permute.xlu0 %250
    %s253 = sor.u32 256, 112
    %254 = vbcast.lane.b32.xlu0 %v109, %s253
    %v255 = vpop.permute.xlu0 %254
    %s257 = sor.u32 256, 120
    %258 = vbcast.lane.b32.xlu0 %v109, %s257
    %v259 = vpop.permute.xlu0 %258
    %261 = vbcast.lane.b32.xlu0 %v113, 256
    %v262 = vpop.permute.xlu0 %261
    %s264 = sor.u32 256, 8
    %265 = vbcast.lane.b32.xlu0 %v113, %s264
    %v266 = vpop.permute.xlu0 %265
    %s268 = sor.u32 256, 16
    %269 = vbcast.lane.b32.xlu0 %v113, %s268
    %v270 = vpop.permute.xlu0 %269
    %s272 = sor.u32 256, 24
    %273 = vbcast.lane.b32.xlu0 %v113, %s272
    %v274 = vpop.permute.xlu0 %273
    %s276 = sor.u32 256, 32
    %277 = vbcast.lane.b32.xlu0 %v113, %s276
    %v278 = vpop.permute.xlu0 %277
    %s280 = sor.u32 256, 40
    %281 = vbcast.lane.b32.xlu0 %v113, %s280
    %v282 = vpop.permute.xlu0 %281
    %s284 = sor.u32 256, 48
    %285 = vbcast.lane.b32.xlu0 %v113, %s284
    %v286 = vpop.permute.xlu0 %285
    %s288 = sor.u32 256, 56
    %289 = vbcast.lane.b32.xlu0 %v113, %s288
    %v290 = vpop.permute.xlu0 %289
    %s292 = sor.u32 256, 64
    %293 = vbcast.lane.b32.xlu0 %v113, %s292
    %v294 = vpop.permute.xlu0 %293
    %s296 = sor.u32 256, 72
    %297 = vbcast.lane.b32.xlu0 %v113, %s296
    %v298 = vpop.permute.xlu0 %297
    %s300 = sor.u32 256, 80
    %301 = vbcast.lane.b32.xlu0 %v113, %s300
    %v302 = vpop.permute.xlu0 %301
    %s304 = sor.u32 256, 88
    %305 = vbcast.lane.b32.xlu0 %v113, %s304
    %v306 = vpop.permute.xlu0 %305
    %s308 = sor.u32 256, 96
    %309 = vbcast.lane.b32.xlu0 %v113, %s308
    %v310 = vpop.permute.xlu0 %309
    %s312 = sor.u32 256, 104
    %313 = vbcast.lane.b32.xlu0 %v113, %s312
    %v314 = vpop.permute.xlu0 %313
    %s316 = sor.u32 256, 112
    %317 = vbcast.lane.b32.xlu0 %v113, %s316
    %v318 = vpop.permute.xlu0 %317
    %s320 = sor.u32 256, 120
    %321 = vbcast.lane.b32.xlu0 %v113, %s320
    %v322 = vpop.permute.xlu0 %321
    %324 = vbcast.lane.b32.xlu0 %v117, 256
    %v325 = vpop.permute.xlu0 %324
    %s327 = sor.u32 256, 8
    %328 = vbcast.lane.b32.xlu0 %v117, %s327
    %v329 = vpop.permute.xlu0 %328
    %s331 = sor.u32 256, 16
    %332 = vbcast.lane.b32.xlu0 %v117, %s331
    %v333 = vpop.permute.xlu0 %332
    %s335 = sor.u32 256, 24
    %336 = vbcast.lane.b32.xlu0 %v117, %s335
    %v337 = vpop.permute.xlu0 %336
    %s339 = sor.u32 256, 32
    %340 = vbcast.lane.b32.xlu0 %v117, %s339
    %v341 = vpop.permute.xlu0 %340
    %s343 = sor.u32 256, 40
    %344 = vbcast.lane.b32.xlu0 %v117, %s343
    %v345 = vpop.permute.xlu0 %344
    %s347 = sor.u32 256, 48
    %348 = vbcast.lane.b32.xlu0 %v117, %s347
    %v349 = vpop.permute.xlu0 %348
    %s351 = sor.u32 256, 56
    %352 = vbcast.lane.b32.xlu0 %v117, %s351
    %v353 = vpop.permute.xlu0 %352
    %s355 = sor.u32 256, 64
    %356 = vbcast.lane.b32.xlu0 %v117, %s355
    %v357 = vpop.permute.xlu0 %356
    %s359 = sor.u32 256, 72
    %360 = vbcast.lane.b32.xlu0 %v117, %s359
    %v361 = vpop.permute.xlu0 %360
    %s363 = sor.u32 256, 80
    %364 = vbcast.lane.b32.xlu0 %v117, %s363
    %v365 = vpop.permute.xlu0 %364
    %s367 = sor.u32 256, 88
    %368 = vbcast.lane.b32.xlu0 %v117, %s367
    %v369 = vpop.permute.xlu0 %368
    %s371 = sor.u32 256, 96
    %372 = vbcast.lane.b32.xlu0 %v117, %s371
    %v373 = vpop.permute.xlu0 %372
    %s375 = sor.u32 256, 104
    %376 = vbcast.lane.b32.xlu0 %v117, %s375
    %v377 = vpop.permute.xlu0 %376
    %s379 = sor.u32 256, 112
    %380 = vbcast.lane.b32.xlu0 %v117, %s379
    %v381 = vpop.permute.xlu0 %380
    %s383 = sor.u32 256, 120
    %384 = vbcast.lane.b32.xlu0 %v117, %s383
    %v385 = vpop.permute.xlu0 %384
    %387 = vbcast.lane.b32.xlu0 %v121, 256
    %v388 = vpop.permute.xlu0 %387
    %s390 = sor.u32 256, 8
    %391 = vbcast.lane.b32.xlu0 %v121, %s390
    %v392 = vpop.permute.xlu0 %391
    %s394 = sor.u32 256, 16
    %395 = vbcast.lane.b32.xlu0 %v121, %s394
    %v396 = vpop.permute.xlu0 %395
    %s398 = sor.u32 256, 24
    %399 = vbcast.lane.b32.xlu0 %v121, %s398
    %v400 = vpop.permute.xlu0 %399
    %s402 = sor.u32 256, 32
    %403 = vbcast.lane.b32.xlu0 %v121, %s402
    %v404 = vpop.permute.xlu0 %403
    %s406 = sor.u32 256, 40
    %407 = vbcast.lane.b32.xlu0 %v121, %s406
    %v408 = vpop.permute.xlu0 %407
    %s410 = sor.u32 256, 48
    %411 = vbcast.lane.b32.xlu0 %v121, %s410
    %v412 = vpop.permute.xlu0 %411
    %s414 = sor.u32 256, 56
    %415 = vbcast.lane.b32.xlu0 %v121, %s414
    %v416 = vpop.permute.xlu0 %415
    %s418 = sor.u32 256, 64
    %419 = vbcast.lane.b32.xlu0 %v121, %s418
    %v420 = vpop.permute.xlu0 %419
    %s422 = sor.u32 256, 72
    %423 = vbcast.lane.b32.xlu0 %v121, %s422
    %v424 = vpop.permute.xlu0 %423
    %s426 = sor.u32 256, 80
    %427 = vbcast.lane.b32.xlu0 %v121, %s426
    %v428 = vpop.permute.xlu0 %427
    %s430 = sor.u32 256, 88
    %431 = vbcast.lane.b32.xlu0 %v121, %s430
    %v432 = vpop.permute.xlu0 %431
    %s434 = sor.u32 256, 96
    %435 = vbcast.lane.b32.xlu0 %v121, %s434
    %v436 = vpop.permute.xlu0 %435
    %s438 = sor.u32 256, 104
    %439 = vbcast.lane.b32.xlu0 %v121, %s438
    %v440 = vpop.permute.xlu0 %439
    %s442 = sor.u32 256, 112
    %443 = vbcast.lane.b32.xlu0 %v121, %s442
    %v444 = vpop.permute.xlu0 %443
    %s446 = sor.u32 256, 120
    %447 = vbcast.lane.b32.xlu0 %v121, %s446
    %v448 = vpop.permute.xlu0 %447
    %450 = vbcast.lane.b32.xlu0 %v125, 256
    %v451 = vpop.permute.xlu0 %450
    %s453 = sor.u32 256, 8
    %454 = vbcast.lane.b32.xlu0 %v125, %s453
    %v455 = vpop.permute.xlu0 %454
    %s457 = sor.u32 256, 16
    %458 = vbcast.lane.b32.xlu0 %v125, %s457
    %v459 = vpop.permute.xlu0 %458
    %s461 = sor.u32 256, 24
    %462 = vbcast.lane.b32.xlu0 %v125, %s461
    %v463 = vpop.permute.xlu0 %462
    %s465 = sor.u32 256, 32
    %466 = vbcast.lane.b32.xlu0 %v125, %s465
    %v467 = vpop.permute.xlu0 %466
    %s469 = sor.u32 256, 40
    %470 = vbcast.lane.b32.xlu0 %v125, %s469
    %v471 = vpop.permute.xlu0 %470
    %s473 = sor.u32 256, 48
    %474 = vbcast.lane.b32.xlu0 %v125, %s473
    %v475 = vpop.permute.xlu0 %474
    %s477 = sor.u32 256, 56
    %478 = vbcast.lane.b32.xlu0 %v125, %s477
    %v479 = vpop.permute.xlu0 %478
    %s481 = sor.u32 256, 64
    %482 = vbcast.lane.b32.xlu0 %v125, %s481
    %v483 = vpop.permute.xlu0 %482
    %s485 = sor.u32 256, 72
    %486 = vbcast.lane.b32.xlu0 %v125, %s485
    %v487 = vpop.permute.xlu0 %486
    %s489 = sor.u32 256, 80
    %490 = vbcast.lane.b32.xlu0 %v125, %s489
    %v491 = vpop.permute.xlu0 %490
    %s493 = sor.u32 256, 88
    %494 = vbcast.lane.b32.xlu0 %v125, %s493
    %v495 = vpop.permute.xlu0 %494
    %s497 = sor.u32 256, 96
    %498 = vbcast.lane.b32.xlu0 %v125, %s497
    %v499 = vpop.permute.xlu0 %498
    %s501 = sor.u32 256, 104
    %502 = vbcast.lane.b32.xlu0 %v125, %s501
    %v503 = vpop.permute.xlu0 %502
    %s505 = sor.u32 256, 112
    %506 = vbcast.lane.b32.xlu0 %v125, %s505
    %v507 = vpop.permute.xlu0 %506
    %s509 = sor.u32 256, 120
    %510 = vbcast.lane.b32.xlu0 %v125, %s509
    %v511 = vpop.permute.xlu0 %510
    %513 = vbcast.lane.b32.xlu0 %v129, 256
    %v514 = vpop.permute.xlu0 %513
    %s516 = sor.u32 256, 8
    %517 = vbcast.lane.b32.xlu0 %v129, %s516
    %v518 = vpop.permute.xlu0 %517
    %s520 = sor.u32 256, 16
    %521 = vbcast.lane.b32.xlu0 %v129, %s520
    %v522 = vpop.permute.xlu0 %521
    %s524 = sor.u32 256, 24
    %525 = vbcast.lane.b32.xlu0 %v129, %s524
    %v526 = vpop.permute.xlu0 %525
    %s528 = sor.u32 256, 32
    %529 = vbcast.lane.b32.xlu0 %v129, %s528
    %v530 = vpop.permute.xlu0 %529
    %s532 = sor.u32 256, 40
    %533 = vbcast.lane.b32.xlu0 %v129, %s532
    %v534 = vpop.permute.xlu0 %533
    %s536 = sor.u32 256, 48
    %537 = vbcast.lane.b32.xlu0 %v129, %s536
    %v538 = vpop.permute.xlu0 %537
    %s540 = sor.u32 256, 56
    %541 = vbcast.lane.b32.xlu0 %v129, %s540
    %v542 = vpop.permute.xlu0 %541
    %s544 = sor.u32 256, 64
    %545 = vbcast.lane.b32.xlu0 %v129, %s544
    %v546 = vpop.permute.xlu0 %545
    %s548 = sor.u32 256, 72
    %549 = vbcast.lane.b32.xlu0 %v129, %s548
    %v550 = vpop.permute.xlu0 %549
    %s552 = sor.u32 256, 80
    %553 = vbcast.lane.b32.xlu0 %v129, %s552
    %v554 = vpop.permute.xlu0 %553
    %s556 = sor.u32 256, 88
    %557 = vbcast.lane.b32.xlu0 %v129, %s556
    %v558 = vpop.permute.xlu0 %557
    %s560 = sor.u32 256, 96
    %561 = vbcast.lane.b32.xlu0 %v129, %s560
    %v562 = vpop.permute.xlu0 %561
    %s564 = sor.u32 256, 104
    %565 = vbcast.lane.b32.xlu0 %v129, %s564
    %v566 = vpop.permute.xlu0 %565
    %s568 = sor.u32 256, 112
    %569 = vbcast.lane.b32.xlu0 %v129, %s568
    %v570 = vpop.permute.xlu0 %569
    %s572 = sor.u32 256, 120
    %573 = vbcast.lane.b32.xlu0 %v129, %s572
    %v574 = vpop.permute.xlu0 %573
    %576 = vbcast.lane.b32.xlu0 %v133, 256
    %v577 = vpop.permute.xlu0 %576
    %s579 = sor.u32 256, 8
    %580 = vbcast.lane.b32.xlu0 %v133, %s579
    %v581 = vpop.permute.xlu0 %580
    %s583 = sor.u32 256, 16
    %584 = vbcast.lane.b32.xlu0 %v133, %s583
    %v585 = vpop.permute.xlu0 %584
    %s587 = sor.u32 256, 24
    %588 = vbcast.lane.b32.xlu0 %v133, %s587
    %v589 = vpop.permute.xlu0 %588
    %s591 = sor.u32 256, 32
    %592 = vbcast.lane.b32.xlu0 %v133, %s591
    %v593 = vpop.permute.xlu0 %592
    %s595 = sor.u32 256, 40
    %596 = vbcast.lane.b32.xlu0 %v133, %s595
    %v597 = vpop.permute.xlu0 %596
    %s599 = sor.u32 256, 48
    %600 = vbcast.lane.b32.xlu0 %v133, %s599
    %v601 = vpop.permute.xlu0 %600
    %s603 = sor.u32 256, 56
    %604 = vbcast.lane.b32.xlu0 %v133, %s603
    %v605 = vpop.permute.xlu0 %604
    %s607 = sor.u32 256, 64
    %608 = vbcast.lane.b32.xlu0 %v133, %s607
    %v609 = vpop.permute.xlu0 %608
    %s611 = sor.u32 256, 72
    %612 = vbcast.lane.b32.xlu0 %v133, %s611
    %v613 = vpop.permute.xlu0 %612
    %s615 = sor.u32 256, 80
    %616 = vbcast.lane.b32.xlu0 %v133, %s615
    %v617 = vpop.permute.xlu0 %616
    %s619 = sor.u32 256, 88
    %620 = vbcast.lane.b32.xlu0 %v133, %s619
    %v621 = vpop.permute.xlu0 %620
    %s623 = sor.u32 256, 96
    %624 = vbcast.lane.b32.xlu0 %v133, %s623
    %v625 = vpop.permute.xlu0 %624
    %s627 = sor.u32 256, 104
    %628 = vbcast.lane.b32.xlu0 %v133, %s627
    %v629 = vpop.permute.xlu0 %628
    %s631 = sor.u32 256, 112
    %632 = vbcast.lane.b32.xlu0 %v133, %s631
    %v633 = vpop.permute.xlu0 %632
    %s635 = sor.u32 256, 120
    %636 = vbcast.lane.b32.xlu0 %v133, %s635
    %v637 = vpop.permute.xlu0 %636
    %v766 = vmul.f32 %v96, %v136
    %v767 = vmul.f32 %v96, %v140
    %v768 = vmul.f32 %v96, %v144
    %v769 = vmul.f32 %v96, %v148
    %v770 = vmul.f32 %v96, %v152
    %v771 = vmul.f32 %v96, %v156
    %v772 = vmul.f32 %v96, %v160
    %v773 = vmul.f32 %v96, %v164
    %v774 = vmul.f32 %v96, %v168
    %v775 = vmul.f32 %v96, %v172
    %v776 = vmul.f32 %v96, %v176
    %v777 = vmul.f32 %v96, %v180
    %v778 = vmul.f32 %v96, %v184
    %v779 = vmul.f32 %v96, %v188
    %v780 = vmul.f32 %v96, %v192
    %v781 = vmul.f32 %v96, %v196
    %v782 = vmul.f32 %v96, %v199
    %v783 = vmul.f32 %v96, %v203
    %v784 = vmul.f32 %v96, %v207
    %v785 = vmul.f32 %v96, %v211
    %v786 = vmul.f32 %v96, %v215
    %v787 = vmul.f32 %v96, %v219
    %v788 = vmul.f32 %v96, %v223
    %v789 = vmul.f32 %v96, %v227
    %v790 = vmul.f32 %v96, %v231
    %v791 = vmul.f32 %v96, %v235
    %v792 = vmul.f32 %v96, %v239
    %v793 = vmul.f32 %v96, %v243
    %v794 = vmul.f32 %v96, %v247
    %v795 = vmul.f32 %v96, %v251
    %v796 = vmul.f32 %v96, %v255
    %v797 = vmul.f32 %v96, %v259
    %v798 = vmul.f32 %v96, %v262
    %v799 = vmul.f32 %v96, %v266
    %v800 = vmul.f32 %v96, %v270
    %v801 = vmul.f32 %v96, %v274
    %v802 = vmul.f32 %v96, %v278
    %v803 = vmul.f32 %v96, %v282
    %v804 = vmul.f32 %v96, %v286
    %v805 = vmul.f32 %v96, %v290
    %v806 = vmul.f32 %v96, %v294
    %v807 = vmul.f32 %v96, %v298
    %v808 = vmul.f32 %v96, %v302
    %v809 = vmul.f32 %v96, %v306
    %v810 = vmul.f32 %v96, %v310
    %v811 = vmul.f32 %v96, %v314
    %v812 = vmul.f32 %v96, %v318
    %v813 = vmul.f32 %v96, %v322
    %v814 = vmul.f32 %v96, %v325
    %v815 = vmul.f32 %v96, %v329
    %v816 = vmul.f32 %v96, %v333
    %v817 = vmul.f32 %v96, %v337
    %v818 = vmul.f32 %v96, %v341
    %v819 = vmul.f32 %v96, %v345
    %v820 = vmul.f32 %v96, %v349
    %v821 = vmul.f32 %v96, %v353
    %v822 = vmul.f32 %v96, %v357
    %v823 = vmul.f32 %v96, %v361
    %v824 = vmul.f32 %v96, %v365
    %v825 = vmul.f32 %v96, %v369
    %v826 = vmul.f32 %v96, %v373
    %v827 = vmul.f32 %v96, %v377
    %v828 = vmul.f32 %v96, %v381
    %v829 = vmul.f32 %v96, %v385
    %v830 = vmul.f32 %v96, %v388
    %v831 = vmul.f32 %v96, %v392
    %v832 = vmul.f32 %v96, %v396
    %v833 = vmul.f32 %v96, %v400
    %v834 = vmul.f32 %v96, %v404
    %v835 = vmul.f32 %v96, %v408
    %v836 = vmul.f32 %v96, %v412
    %v837 = vmul.f32 %v96, %v416
    %v838 = vmul.f32 %v96, %v420
    %v839 = vmul.f32 %v96, %v424
    %v840 = vmul.f32 %v96, %v428
    %v841 = vmul.f32 %v96, %v432
    %v842 = vmul.f32 %v96, %v436
    %v843 = vmul.f32 %v96, %v440
    %v844 = vmul.f32 %v96, %v444
    %v845 = vmul.f32 %v96, %v448
    %v846 = vmul.f32 %v96, %v451
    %v847 = vmul.f32 %v96, %v455
    %v848 = vmul.f32 %v96, %v459
    %v849 = vmul.f32 %v96, %v463
    %v850 = vmul.f32 %v96, %v467
    %v851 = vmul.f32 %v96, %v471
    %v852 = vmul.f32 %v96, %v475
    %v853 = vmul.f32 %v96, %v479
    %v854 = vmul.f32 %v96, %v483
    %v855 = vmul.f32 %v96, %v487
    %v856 = vmul.f32 %v96, %v491
    %v857 = vmul.f32 %v96, %v495
    %v858 = vmul.f32 %v96, %v499
    %v859 = vmul.f32 %v96, %v503
    %v860 = vmul.f32 %v96, %v507
    %v861 = vmul.f32 %v96, %v511
    %v862 = vmul.f32 %v96, %v514
    %v863 = vmul.f32 %v96, %v518
    %v864 = vmul.f32 %v96, %v522
    %v865 = vmul.f32 %v96, %v526
    %v866 = vmul.f32 %v96, %v530
    %v867 = vmul.f32 %v96, %v534
    %v868 = vmul.f32 %v96, %v538
    %v869 = vmul.f32 %v96, %v542
    %v870 = vmul.f32 %v96, %v546
    %v871 = vmul.f32 %v96, %v550
    %v872 = vmul.f32 %v96, %v554
    %v873 = vmul.f32 %v96, %v558
    %v874 = vmul.f32 %v96, %v562
    %v875 = vmul.f32 %v96, %v566
    %v876 = vmul.f32 %v96, %v570
    %v877 = vmul.f32 %v96, %v574
    %v878 = vmul.f32 %v96, %v577
    %v879 = vmul.f32 %v96, %v581
    %v880 = vmul.f32 %v96, %v585
    %v881 = vmul.f32 %v96, %v589
    %v882 = vmul.f32 %v96, %v593
    %v883 = vmul.f32 %v96, %v597
    %v884 = vmul.f32 %v96, %v601
    %v885 = vmul.f32 %v96, %v605
    %v886 = vmul.f32 %v96, %v609
    %v887 = vmul.f32 %v96, %v613
    %v888 = vmul.f32 %v96, %v617
    %v889 = vmul.f32 %v96, %v621
    %v890 = vmul.f32 %v96, %v625
    %v891 = vmul.f32 %v96, %v629
    %v892 = vmul.f32 %v96, %v633
    %v893 = vmul.f32 %v96, %v637
    %v894 = vmul.f32 %v100, %v136
    %v895 = vmul.f32 %v100, %v140
    %v896 = vmul.f32 %v100, %v144
    %v897 = vmul.f32 %v100, %v148
    %v898 = vmul.f32 %v100, %v152
    %v899 = vmul.f32 %v100, %v156
    %v900 = vmul.f32 %v100, %v160
    %v901 = vmul.f32 %v100, %v164
    %v902 = vmul.f32 %v100, %v168
    %v903 = vmul.f32 %v100, %v172
    %v904 = vmul.f32 %v100, %v176
    %v905 = vmul.f32 %v100, %v180
    %v906 = vmul.f32 %v100, %v184
    %v907 = vmul.f32 %v100, %v188
    %v908 = vmul.f32 %v100, %v192
    %v909 = vmul.f32 %v100, %v196
    %v910 = vmul.f32 %v100, %v199
    %v911 = vmul.f32 %v100, %v203
    %v912 = vmul.f32 %v100, %v207
    %v913 = vmul.f32 %v100, %v211
    %v914 = vmul.f32 %v100, %v215
    %v915 = vmul.f32 %v100, %v219
    %v916 = vmul.f32 %v100, %v223
    %v917 = vmul.f32 %v100, %v227
    %v918 = vmul.f32 %v100, %v231
    %v919 = vmul.f32 %v100, %v235
    %v920 = vmul.f32 %v100, %v239
    %v921 = vmul.f32 %v100, %v243
    %v922 = vmul.f32 %v100, %v247
    %v923 = vmul.f32 %v100, %v251
    %v924 = vmul.f32 %v100, %v255
    %v925 = vmul.f32 %v100, %v259
    %v926 = vmul.f32 %v100, %v262
    %v927 = vmul.f32 %v100, %v266
    %v928 = vmul.f32 %v100, %v270
    %v929 = vmul.f32 %v100, %v274
    %v930 = vmul.f32 %v100, %v278
    %v931 = vmul.f32 %v100, %v282
    %v932 = vmul.f32 %v100, %v286
    %v933 = vmul.f32 %v100, %v290
    %v934 = vmul.f32 %v100, %v294
    %v935 = vmul.f32 %v100, %v298
    %v936 = vmul.f32 %v100, %v302
    %v937 = vmul.f32 %v100, %v306
    %v938 = vmul.f32 %v100, %v310
    %v939 = vmul.f32 %v100, %v314
    %v940 = vmul.f32 %v100, %v318
    %v941 = vmul.f32 %v100, %v322
    %v942 = vmul.f32 %v100, %v325
    %v943 = vmul.f32 %v100, %v329
    %v944 = vmul.f32 %v100, %v333
    %v945 = vmul.f32 %v100, %v337
    %v946 = vmul.f32 %v100, %v341
    %v947 = vmul.f32 %v100, %v345
    %v948 = vmul.f32 %v100, %v349
    %v949 = vmul.f32 %v100, %v353
    %v950 = vmul.f32 %v100, %v357
    %v951 = vmul.f32 %v100, %v361
    %v952 = vmul.f32 %v100, %v365
    %v953 = vmul.f32 %v100, %v369
    %v954 = vmul.f32 %v100, %v373
    %v955 = vmul.f32 %v100, %v377
    %v956 = vmul.f32 %v100, %v381
    %v957 = vmul.f32 %v100, %v385
    %v958 = vmul.f32 %v100, %v388
    %v959 = vmul.f32 %v100, %v392
    %v960 = vmul.f32 %v100, %v396
    %v961 = vmul.f32 %v100, %v400
    %v962 = vmul.f32 %v100, %v404
    %v963 = vmul.f32 %v100, %v408
    %v964 = vmul.f32 %v100, %v412
    %v965 = vmul.f32 %v100, %v416
    %v966 = vmul.f32 %v100, %v420
    %v967 = vmul.f32 %v100, %v424
    %v968 = vmul.f32 %v100, %v428
    %v969 = vmul.f32 %v100, %v432
    %v970 = vmul.f32 %v100, %v436
    %v971 = vmul.f32 %v100, %v440
    %v972 = vmul.f32 %v100, %v444
    %v973 = vmul.f32 %v100, %v448
    %v974 = vmul.f32 %v100, %v451
    %v975 = vmul.f32 %v100, %v455
    %v976 = vmul.f32 %v100, %v459
    %v977 = vmul.f32 %v100, %v463
    %v978 = vmul.f32 %v100, %v467
    %v979 = vmul.f32 %v100, %v471
    %v980 = vmul.f32 %v100, %v475
    %v981 = vmul.f32 %v100, %v479
    %v982 = vmul.f32 %v100, %v483
    %v983 = vmul.f32 %v100, %v487
    %v984 = vmul.f32 %v100, %v491
    %v985 = vmul.f32 %v100, %v495
    %v986 = vmul.f32 %v100, %v499
    %v987 = vmul.f32 %v100, %v503
    %v988 = vmul.f32 %v100, %v507
    %v989 = vmul.f32 %v100, %v511
    %v990 = vmul.f32 %v100, %v514
    %v991 = vmul.f32 %v100, %v518
    %v992 = vmul.f32 %v100, %v522
    %v993 = vmul.f32 %v100, %v526
    %v994 = vmul.f32 %v100, %v530
    %v995 = vmul.f32 %v100, %v534
    %v996 = vmul.f32 %v100, %v538
    %v997 = vmul.f32 %v100, %v542
    %v998 = vmul.f32 %v100, %v546
    %v999 = vmul.f32 %v100, %v550
    %v1000 = vmul.f32 %v100, %v554
    %v1001 = vmul.f32 %v100, %v558
    %v1002 = vmul.f32 %v100, %v562
    %v1003 = vmul.f32 %v100, %v566
    %v1004 = vmul.f32 %v100, %v570
    %v1005 = vmul.f32 %v100, %v574
    %v1006 = vmul.f32 %v100, %v577
    %v1007 = vmul.f32 %v100, %v581
    %v1008 = vmul.f32 %v100, %v585
    %v1009 = vmul.f32 %v100, %v589
    %v1010 = vmul.f32 %v100, %v593
    %v1011 = vmul.f32 %v100, %v597
    %v1012 = vmul.f32 %v100, %v601
    %v1013 = vmul.f32 %v100, %v605
    %v1014 = vmul.f32 %v100, %v609
    %v1015 = vmul.f32 %v100, %v613
    %v1016 = vmul.f32 %v100, %v617
    %v1017 = vmul.f32 %v100, %v621
    %v1018 = vmul.f32 %v100, %v625
    %v1019 = vmul.f32 %v100, %v629
    %v1020 = vmul.f32 %v100, %v633
    %v1021 = vmul.f32 %v100, %v637
    %v1023 = vlaneseq
    %v1024 = vshrl.u32 %v1023, 7
    %v1025 = vsub.s32 0, %v1024
    %v1026 = vrot.slane %v91, %v1025
    %v1027 = vlaneseq
    %v1028 = vshrl.u32 %v1027, 7
    %v1029 = vsub.s32 1, %v1028
    %v1030 = vrot.slane %v91, %v1029
    %v1031 = vlaneseq
    %v1032 = vshrl.u32 %v1031, 7
    %v1033 = vsub.s32 2, %v1032
    %v1034 = vrot.slane %v91, %v1033
    %v1035 = vlaneseq
    %v1036 = vshrl.u32 %v1035, 7
    %v1037 = vsub.s32 3, %v1036
    %v1038 = vrot.slane %v91, %v1037
    %v1039 = vlaneseq
    %v1040 = vshrl.u32 %v1039, 7
    %v1041 = vsub.s32 4, %v1040
    %v1042 = vrot.slane %v91, %v1041
    %v1043 = vlaneseq
    %v1044 = vshrl.u32 %v1043, 7
    %v1045 = vsub.s32 5, %v1044
    %v1046 = vrot.slane %v91, %v1045
    %v1047 = vlaneseq
    %v1048 = vshrl.u32 %v1047, 7
    %v1049 = vsub.s32 6, %v1048
    %v1050 = vrot.slane %v91, %v1049
    %v1051 = vlaneseq
    %v1052 = vshrl.u32 %v1051, 7
    %v1053 = vsub.s32 7, %v1052
    %v1054 = vrot.slane %v91, %v1053
    %1319 = vset.pattern.permute.xlu0 0
    %1320 = vperm.xlu0 %1319, %v766
    %v1321 = vpop.permute.xlu0 %1320
    %1322 = vset.pattern.permute.xlu0 0
    %1323 = vperm.xlu0 %1322, %v767
    %v1324 = vpop.permute.xlu0 %1323
    %1325 = vset.pattern.permute.xlu0 0
    %1326 = vperm.xlu0 %1325, %v768
    %v1327 = vpop.permute.xlu0 %1326
    %1328 = vset.pattern.permute.xlu0 0
    %1329 = vperm.xlu0 %1328, %v769
    %v1330 = vpop.permute.xlu0 %1329
    %1331 = vset.pattern.permute.xlu0 0
    %1332 = vperm.xlu0 %1331, %v770
    %v1333 = vpop.permute.xlu0 %1332
    %1334 = vset.pattern.permute.xlu0 0
    %1335 = vperm.xlu0 %1334, %v771
    %v1336 = vpop.permute.xlu0 %1335
    %1337 = vset.pattern.permute.xlu0 0
    %1338 = vperm.xlu0 %1337, %v772
    %v1339 = vpop.permute.xlu0 %1338
    %1340 = vset.pattern.permute.xlu0 0
    %1341 = vperm.xlu0 %1340, %v773
    %v1342 = vpop.permute.xlu0 %1341
    %1343 = vset.pattern.permute.xlu0 0
    %1344 = vperm.xlu0 %1343, %v774
    %v1345 = vpop.permute.xlu0 %1344
    %1346 = vset.pattern.permute.xlu0 0
    %1347 = vperm.xlu0 %1346, %v775
    %v1348 = vpop.permute.xlu0 %1347
    %1349 = vset.pattern.permute.xlu0 0
    %1350 = vperm.xlu0 %1349, %v776
    %v1351 = vpop.permute.xlu0 %1350
    %1352 = vset.pattern.permute.xlu0 0
    %1353 = vperm.xlu0 %1352, %v777
    %v1354 = vpop.permute.xlu0 %1353
    %1355 = vset.pattern.permute.xlu0 0
    %1356 = vperm.xlu0 %1355, %v778
    %v1357 = vpop.permute.xlu0 %1356
    %1358 = vset.pattern.permute.xlu0 0
    %1359 = vperm.xlu0 %1358, %v779
    %v1360 = vpop.permute.xlu0 %1359
    %1361 = vset.pattern.permute.xlu0 0
    %1362 = vperm.xlu0 %1361, %v780
    %v1363 = vpop.permute.xlu0 %1362
    %1364 = vset.pattern.permute.xlu0 0
    %1365 = vperm.xlu0 %1364, %v781
    %v1366 = vpop.permute.xlu0 %1365
    %1367 = vset.pattern.permute.xlu0 0
    %1368 = vperm.xlu0 %1367, %v782
    %v1369 = vpop.permute.xlu0 %1368
    %1370 = vset.pattern.permute.xlu0 0
    %1371 = vperm.xlu0 %1370, %v783
    %v1372 = vpop.permute.xlu0 %1371
    %1373 = vset.pattern.permute.xlu0 0
    %1374 = vperm.xlu0 %1373, %v784
    %v1375 = vpop.permute.xlu0 %1374
    %1376 = vset.pattern.permute.xlu0 0
    %1377 = vperm.xlu0 %1376, %v785
    %v1378 = vpop.permute.xlu0 %1377
    %1379 = vset.pattern.permute.xlu0 0
    %1380 = vperm.xlu0 %1379, %v786
    %v1381 = vpop.permute.xlu0 %1380
    %1382 = vset.pattern.permute.xlu0 0
    %1383 = vperm.xlu0 %1382, %v787
    %v1384 = vpop.permute.xlu0 %1383
    %1385 = vset.pattern.permute.xlu0 0
    %1386 = vperm.xlu0 %1385, %v788
    %v1387 = vpop.permute.xlu0 %1386
    %1388 = vset.pattern.permute.xlu0 0
    %1389 = vperm.xlu0 %1388, %v789
    %v1390 = vpop.permute.xlu0 %1389
    %1391 = vset.pattern.permute.xlu0 0
    %1392 = vperm.xlu0 %1391, %v790
    %v1393 = vpop.permute.xlu0 %1392
    %1394 = vset.pattern.permute.xlu0 0
    %1395 = vperm.xlu0 %1394, %v791
    %v1396 = vpop.permute.xlu0 %1395
    %1397 = vset.pattern.permute.xlu0 0
    %1398 = vperm.xlu0 %1397, %v792
    %v1399 = vpop.permute.xlu0 %1398
    %1400 = vset.pattern.permute.xlu0 0
    %1401 = vperm.xlu0 %1400, %v793
    %v1402 = vpop.permute.xlu0 %1401
    %1403 = vset.pattern.permute.xlu0 0
    %1404 = vperm.xlu0 %1403, %v794
    %v1405 = vpop.permute.xlu0 %1404
    %1406 = vset.pattern.permute.xlu0 0
    %1407 = vperm.xlu0 %1406, %v795
    %v1408 = vpop.permute.xlu0 %1407
    %1409 = vset.pattern.permute.xlu0 0
    %1410 = vperm.xlu0 %1409, %v796
    %v1411 = vpop.permute.xlu0 %1410
    %1412 = vset.pattern.permute.xlu0 0
    %1413 = vperm.xlu0 %1412, %v797
    %v1414 = vpop.permute.xlu0 %1413
    %1415 = vset.pattern.permute.xlu0 0
    %1416 = vperm.xlu0 %1415, %v798
    %v1417 = vpop.permute.xlu0 %1416
    %1418 = vset.pattern.permute.xlu0 0
    %1419 = vperm.xlu0 %1418, %v799
    %v1420 = vpop.permute.xlu0 %1419
    %1421 = vset.pattern.permute.xlu0 0
    %1422 = vperm.xlu0 %1421, %v800
    %v1423 = vpop.permute.xlu0 %1422
    %1424 = vset.pattern.permute.xlu0 0
    %1425 = vperm.xlu0 %1424, %v801
    %v1426 = vpop.permute.xlu0 %1425
    %1427 = vset.pattern.permute.xlu0 0
    %1428 = vperm.xlu0 %1427, %v802
    %v1429 = vpop.permute.xlu0 %1428
    %1430 = vset.pattern.permute.xlu0 0
    %1431 = vperm.xlu0 %1430, %v803
    %v1432 = vpop.permute.xlu0 %1431
    %1433 = vset.pattern.permute.xlu0 0
    %1434 = vperm.xlu0 %1433, %v804
    %v1435 = vpop.permute.xlu0 %1434
    %1436 = vset.pattern.permute.xlu0 0
    %1437 = vperm.xlu0 %1436, %v805
    %v1438 = vpop.permute.xlu0 %1437
    %1439 = vset.pattern.permute.xlu0 0
    %1440 = vperm.xlu0 %1439, %v806
    %v1441 = vpop.permute.xlu0 %1440
    %1442 = vset.pattern.permute.xlu0 0
    %1443 = vperm.xlu0 %1442, %v807
    %v1444 = vpop.permute.xlu0 %1443
    %1445 = vset.pattern.permute.xlu0 0
    %1446 = vperm.xlu0 %1445, %v808
    %v1447 = vpop.permute.xlu0 %1446
    %1448 = vset.pattern.permute.xlu0 0
    %1449 = vperm.xlu0 %1448, %v809
    %v1450 = vpop.permute.xlu0 %1449
    %1451 = vset.pattern.permute.xlu0 0
    %1452 = vperm.xlu0 %1451, %v810
    %v1453 = vpop.permute.xlu0 %1452
    %1454 = vset.pattern.permute.xlu0 0
    %1455 = vperm.xlu0 %1454, %v811
    %v1456 = vpop.permute.xlu0 %1455
    %1457 = vset.pattern.permute.xlu0 0
    %1458 = vperm.xlu0 %1457, %v812
    %v1459 = vpop.permute.xlu0 %1458
    %1460 = vset.pattern.permute.xlu0 0
    %1461 = vperm.xlu0 %1460, %v813
    %v1462 = vpop.permute.xlu0 %1461
    %1463 = vset.pattern.permute.xlu0 0
    %1464 = vperm.xlu0 %1463, %v814
    %v1465 = vpop.permute.xlu0 %1464
    %1466 = vset.pattern.permute.xlu0 0
    %1467 = vperm.xlu0 %1466, %v815
    %v1468 = vpop.permute.xlu0 %1467
    %1469 = vset.pattern.permute.xlu0 0
    %1470 = vperm.xlu0 %1469, %v816
    %v1471 = vpop.permute.xlu0 %1470
    %1472 = vset.pattern.permute.xlu0 0
    %1473 = vperm.xlu0 %1472, %v817
    %v1474 = vpop.permute.xlu0 %1473
    %1475 = vset.pattern.permute.xlu0 0
    %1476 = vperm.xlu0 %1475, %v818
    %v1477 = vpop.permute.xlu0 %1476
    %1478 = vset.pattern.permute.xlu0 0
    %1479 = vperm.xlu0 %1478, %v819
    %v1480 = vpop.permute.xlu0 %1479
    %1481 = vset.pattern.permute.xlu0 0
    %1482 = vperm.xlu0 %1481, %v820
    %v1483 = vpop.permute.xlu0 %1482
    %1484 = vset.pattern.permute.xlu0 0
    %1485 = vperm.xlu0 %1484, %v821
    %v1486 = vpop.permute.xlu0 %1485
    %1487 = vset.pattern.permute.xlu0 0
    %1488 = vperm.xlu0 %1487, %v822
    %v1489 = vpop.permute.xlu0 %1488
    %1490 = vset.pattern.permute.xlu0 0
    %1491 = vperm.xlu0 %1490, %v823
    %v1492 = vpop.permute.xlu0 %1491
    %1493 = vset.pattern.permute.xlu0 0
    %1494 = vperm.xlu0 %1493, %v824
    %v1495 = vpop.permute.xlu0 %1494
    %1496 = vset.pattern.permute.xlu0 0
    %1497 = vperm.xlu0 %1496, %v825
    %v1498 = vpop.permute.xlu0 %1497
    %1499 = vset.pattern.permute.xlu0 0
    %1500 = vperm.xlu0 %1499, %v826
    %v1501 = vpop.permute.xlu0 %1500
    %1502 = vset.pattern.permute.xlu0 0
    %1503 = vperm.xlu0 %1502, %v827
    %v1504 = vpop.permute.xlu0 %1503
    %1505 = vset.pattern.permute.xlu0 0
    %1506 = vperm.xlu0 %1505, %v828
    %v1507 = vpop.permute.xlu0 %1506
    %1508 = vset.pattern.permute.xlu0 0
    %1509 = vperm.xlu0 %1508, %v829
    %v1510 = vpop.permute.xlu0 %1509
    %1511 = vset.pattern.permute.xlu0 0
    %1512 = vperm.xlu0 %1511, %v830
    %v1513 = vpop.permute.xlu0 %1512
    %1514 = vset.pattern.permute.xlu0 0
    %1515 = vperm.xlu0 %1514, %v831
    %v1516 = vpop.permute.xlu0 %1515
    %1517 = vset.pattern.permute.xlu0 0
    %1518 = vperm.xlu0 %1517, %v832
    %v1519 = vpop.permute.xlu0 %1518
    %1520 = vset.pattern.permute.xlu0 0
    %1521 = vperm.xlu0 %1520, %v833
    %v1522 = vpop.permute.xlu0 %1521
    %1523 = vset.pattern.permute.xlu0 0
    %1524 = vperm.xlu0 %1523, %v834
    %v1525 = vpop.permute.xlu0 %1524
    %1526 = vset.pattern.permute.xlu0 0
    %1527 = vperm.xlu0 %1526, %v835
    %v1528 = vpop.permute.xlu0 %1527
    %1529 = vset.pattern.permute.xlu0 0
    %1530 = vperm.xlu0 %1529, %v836
    %v1531 = vpop.permute.xlu0 %1530
    %1532 = vset.pattern.permute.xlu0 0
    %1533 = vperm.xlu0 %1532, %v837
    %v1534 = vpop.permute.xlu0 %1533
    %1535 = vset.pattern.permute.xlu0 0
    %1536 = vperm.xlu0 %1535, %v838
    %v1537 = vpop.permute.xlu0 %1536
    %1538 = vset.pattern.permute.xlu0 0
    %1539 = vperm.xlu0 %1538, %v839
    %v1540 = vpop.permute.xlu0 %1539
    %1541 = vset.pattern.permute.xlu0 0
    %1542 = vperm.xlu0 %1541, %v840
    %v1543 = vpop.permute.xlu0 %1542
    %1544 = vset.pattern.permute.xlu0 0
    %1545 = vperm.xlu0 %1544, %v841
    %v1546 = vpop.permute.xlu0 %1545
    %1547 = vset.pattern.permute.xlu0 0
    %1548 = vperm.xlu0 %1547, %v842
    %v1549 = vpop.permute.xlu0 %1548
    %1550 = vset.pattern.permute.xlu0 0
    %1551 = vperm.xlu0 %1550, %v843
    %v1552 = vpop.permute.xlu0 %1551
    %1553 = vset.pattern.permute.xlu0 0
    %1554 = vperm.xlu0 %1553, %v844
    %v1555 = vpop.permute.xlu0 %1554
    %1556 = vset.pattern.permute.xlu0 0
    %1557 = vperm.xlu0 %1556, %v845
    %v1558 = vpop.permute.xlu0 %1557
    %1559 = vset.pattern.permute.xlu0 0
    %1560 = vperm.xlu0 %1559, %v846
    %v1561 = vpop.permute.xlu0 %1560
    %1562 = vset.pattern.permute.xlu0 0
    %1563 = vperm.xlu0 %1562, %v847
    %v1564 = vpop.permute.xlu0 %1563
    %1565 = vset.pattern.permute.xlu0 0
    %1566 = vperm.xlu0 %1565, %v848
    %v1567 = vpop.permute.xlu0 %1566
    %1568 = vset.pattern.permute.xlu0 0
    %1569 = vperm.xlu0 %1568, %v849
    %v1570 = vpop.permute.xlu0 %1569
    %1571 = vset.pattern.permute.xlu0 0
    %1572 = vperm.xlu0 %1571, %v850
    %v1573 = vpop.permute.xlu0 %1572
    %1574 = vset.pattern.permute.xlu0 0
    %1575 = vperm.xlu0 %1574, %v851
    %v1576 = vpop.permute.xlu0 %1575
    %1577 = vset.pattern.permute.xlu0 0
    %1578 = vperm.xlu0 %1577, %v852
    %v1579 = vpop.permute.xlu0 %1578
    %1580 = vset.pattern.permute.xlu0 0
    %1581 = vperm.xlu0 %1580, %v853
    %v1582 = vpop.permute.xlu0 %1581
    %1583 = vset.pattern.permute.xlu0 0
    %1584 = vperm.xlu0 %1583, %v854
    %v1585 = vpop.permute.xlu0 %1584
    %1586 = vset.pattern.permute.xlu0 0
    %1587 = vperm.xlu0 %1586, %v855
    %v1588 = vpop.permute.xlu0 %1587
    %1589 = vset.pattern.permute.xlu0 0
    %1590 = vperm.xlu0 %1589, %v856
    %v1591 = vpop.permute.xlu0 %1590
    %1592 = vset.pattern.permute.xlu0 0
    %1593 = vperm.xlu0 %1592, %v857
    %v1594 = vpop.permute.xlu0 %1593
    %1595 = vset.pattern.permute.xlu0 0
    %1596 = vperm.xlu0 %1595, %v858
    %v1597 = vpop.permute.xlu0 %1596
    %1598 = vset.pattern.permute.xlu0 0
    %1599 = vperm.xlu0 %1598, %v859
    %v1600 = vpop.permute.xlu0 %1599
    %1601 = vset.pattern.permute.xlu0 0
    %1602 = vperm.xlu0 %1601, %v860
    %v1603 = vpop.permute.xlu0 %1602
    %1604 = vset.pattern.permute.xlu0 0
    %1605 = vperm.xlu0 %1604, %v861
    %v1606 = vpop.permute.xlu0 %1605
    %1607 = vset.pattern.permute.xlu0 0
    %1608 = vperm.xlu0 %1607, %v862
    %v1609 = vpop.permute.xlu0 %1608
    %1610 = vset.pattern.permute.xlu0 0
    %1611 = vperm.xlu0 %1610, %v863
    %v1612 = vpop.permute.xlu0 %1611
    %1613 = vset.pattern.permute.xlu0 0
    %1614 = vperm.xlu0 %1613, %v864
    %v1615 = vpop.permute.xlu0 %1614
    %1616 = vset.pattern.permute.xlu0 0
    %1617 = vperm.xlu0 %1616, %v865
    %v1618 = vpop.permute.xlu0 %1617
    %1619 = vset.pattern.permute.xlu0 0
    %1620 = vperm.xlu0 %1619, %v866
    %v1621 = vpop.permute.xlu0 %1620
    %1622 = vset.pattern.permute.xlu0 0
    %1623 = vperm.xlu0 %1622, %v867
    %v1624 = vpop.permute.xlu0 %1623
    %1625 = vset.pattern.permute.xlu0 0
    %1626 = vperm.xlu0 %1625, %v868
    %v1627 = vpop.permute.xlu0 %1626
    %1628 = vset.pattern.permute.xlu0 0
    %1629 = vperm.xlu0 %1628, %v869
    %v1630 = vpop.permute.xlu0 %1629
    %1631 = vset.pattern.permute.xlu0 0
    %1632 = vperm.xlu0 %1631, %v870
    %v1633 = vpop.permute.xlu0 %1632
    %1634 = vset.pattern.permute.xlu0 0
    %1635 = vperm.xlu0 %1634, %v871
    %v1636 = vpop.permute.xlu0 %1635
    %1637 = vset.pattern.permute.xlu0 0
    %1638 = vperm.xlu0 %1637, %v872
    %v1639 = vpop.permute.xlu0 %1638
    %1640 = vset.pattern.permute.xlu0 0
    %1641 = vperm.xlu0 %1640, %v873
    %v1642 = vpop.permute.xlu0 %1641
    %1643 = vset.pattern.permute.xlu0 0
    %1644 = vperm.xlu0 %1643, %v874
    %v1645 = vpop.permute.xlu0 %1644
    %1646 = vset.pattern.permute.xlu0 0
    %1647 = vperm.xlu0 %1646, %v875
    %v1648 = vpop.permute.xlu0 %1647
    %1649 = vset.pattern.permute.xlu0 0
    %1650 = vperm.xlu0 %1649, %v876
    %v1651 = vpop.permute.xlu0 %1650
    %1652 = vset.pattern.permute.xlu0 0
    %1653 = vperm.xlu0 %1652, %v877
    %v1654 = vpop.permute.xlu0 %1653
    %1655 = vset.pattern.permute.xlu0 0
    %1656 = vperm.xlu0 %1655, %v878
    %v1657 = vpop.permute.xlu0 %1656
    %1658 = vset.pattern.permute.xlu0 0
    %1659 = vperm.xlu0 %1658, %v879
    %v1660 = vpop.permute.xlu0 %1659
    %1661 = vset.pattern.permute.xlu0 0
    %1662 = vperm.xlu0 %1661, %v880
    %v1663 = vpop.permute.xlu0 %1662
    %1664 = vset.pattern.permute.xlu0 0
    %1665 = vperm.xlu0 %1664, %v881
    %v1666 = vpop.permute.xlu0 %1665
    %1667 = vset.pattern.permute.xlu0 0
    %1668 = vperm.xlu0 %1667, %v882
    %v1669 = vpop.permute.xlu0 %1668
    %1670 = vset.pattern.permute.xlu0 0
    %1671 = vperm.xlu0 %1670, %v883
    %v1672 = vpop.permute.xlu0 %1671
    %1673 = vset.pattern.permute.xlu0 0
    %1674 = vperm.xlu0 %1673, %v884
    %v1675 = vpop.permute.xlu0 %1674
    %1676 = vset.pattern.permute.xlu0 0
    %1677 = vperm.xlu0 %1676, %v885
    %v1678 = vpop.permute.xlu0 %1677
    %1679 = vset.pattern.permute.xlu0 0
    %1680 = vperm.xlu0 %1679, %v886
    %v1681 = vpop.permute.xlu0 %1680
    %1682 = vset.pattern.permute.xlu0 0
    %1683 = vperm.xlu0 %1682, %v887
    %v1684 = vpop.permute.xlu0 %1683
    %1685 = vset.pattern.permute.xlu0 0
    %1686 = vperm.xlu0 %1685, %v888
    %v1687 = vpop.permute.xlu0 %1686
    %1688 = vset.pattern.permute.xlu0 0
    %1689 = vperm.xlu0 %1688, %v889
    %v1690 = vpop.permute.xlu0 %1689
    %1691 = vset.pattern.permute.xlu0 0
    %1692 = vperm.xlu0 %1691, %v890
    %v1693 = vpop.permute.xlu0 %1692
    %1694 = vset.pattern.permute.xlu0 0
    %1695 = vperm.xlu0 %1694, %v891
    %v1696 = vpop.permute.xlu0 %1695
    %1697 = vset.pattern.permute.xlu0 0
    %1698 = vperm.xlu0 %1697, %v892
    %v1699 = vpop.permute.xlu0 %1698
    %1700 = vset.pattern.permute.xlu0 0
    %1701 = vperm.xlu0 %1700, %v893
    %v1702 = vpop.permute.xlu0 %1701
    %1703 = vset.pattern.permute.xlu0 0
    %1704 = vperm.xlu0 %1703, %v894
    %v1705 = vpop.permute.xlu0 %1704
    %1706 = vset.pattern.permute.xlu0 0
    %1707 = vperm.xlu0 %1706, %v895
    %v1708 = vpop.permute.xlu0 %1707
    %1709 = vset.pattern.permute.xlu0 0
    %1710 = vperm.xlu0 %1709, %v896
    %v1711 = vpop.permute.xlu0 %1710
    %1712 = vset.pattern.permute.xlu0 0
    %1713 = vperm.xlu0 %1712, %v897
    %v1714 = vpop.permute.xlu0 %1713
    %1715 = vset.pattern.permute.xlu0 0
    %1716 = vperm.xlu0 %1715, %v898
    %v1717 = vpop.permute.xlu0 %1716
    %1718 = vset.pattern.permute.xlu0 0
    %1719 = vperm.xlu0 %1718, %v899
    %v1720 = vpop.permute.xlu0 %1719
    %1721 = vset.pattern.permute.xlu0 0
    %1722 = vperm.xlu0 %1721, %v900
    %v1723 = vpop.permute.xlu0 %1722
    %1724 = vset.pattern.permute.xlu0 0
    %1725 = vperm.xlu0 %1724, %v901
    %v1726 = vpop.permute.xlu0 %1725
    %1727 = vset.pattern.permute.xlu0 0
    %1728 = vperm.xlu0 %1727, %v902
    %v1729 = vpop.permute.xlu0 %1728
    %1730 = vset.pattern.permute.xlu0 0
    %1731 = vperm.xlu0 %1730, %v903
    %v1732 = vpop.permute.xlu0 %1731
    %1733 = vset.pattern.permute.xlu0 0
    %1734 = vperm.xlu0 %1733, %v904
    %v1735 = vpop.permute.xlu0 %1734
    %1736 = vset.pattern.permute.xlu0 0
    %1737 = vperm.xlu0 %1736, %v905
    %v1738 = vpop.permute.xlu0 %1737
    %1739 = vset.pattern.permute.xlu0 0
    %1740 = vperm.xlu0 %1739, %v906
    %v1741 = vpop.permute.xlu0 %1740
    %1742 = vset.pattern.permute.xlu0 0
    %1743 = vperm.xlu0 %1742, %v907
    %v1744 = vpop.permute.xlu0 %1743
    %1745 = vset.pattern.permute.xlu0 0
    %1746 = vperm.xlu0 %1745, %v908
    %v1747 = vpop.permute.xlu0 %1746
    %1748 = vset.pattern.permute.xlu0 0
    %1749 = vperm.xlu0 %1748, %v909
    %v1750 = vpop.permute.xlu0 %1749
    %1751 = vset.pattern.permute.xlu0 0
    %1752 = vperm.xlu0 %1751, %v910
    %v1753 = vpop.permute.xlu0 %1752
    %1754 = vset.pattern.permute.xlu0 0
    %1755 = vperm.xlu0 %1754, %v911
    %v1756 = vpop.permute.xlu0 %1755
    %1757 = vset.pattern.permute.xlu0 0
    %1758 = vperm.xlu0 %1757, %v912
    %v1759 = vpop.permute.xlu0 %1758
    %1760 = vset.pattern.permute.xlu0 0
    %1761 = vperm.xlu0 %1760, %v913
    %v1762 = vpop.permute.xlu0 %1761
    %1763 = vset.pattern.permute.xlu0 0
    %1764 = vperm.xlu0 %1763, %v914
    %v1765 = vpop.permute.xlu0 %1764
    %1766 = vset.pattern.permute.xlu0 0
    %1767 = vperm.xlu0 %1766, %v915
    %v1768 = vpop.permute.xlu0 %1767
    %1769 = vset.pattern.permute.xlu0 0
    %1770 = vperm.xlu0 %1769, %v916
    %v1771 = vpop.permute.xlu0 %1770
    %1772 = vset.pattern.permute.xlu0 0
    %1773 = vperm.xlu0 %1772, %v917
    %v1774 = vpop.permute.xlu0 %1773
    %1775 = vset.pattern.permute.xlu0 0
    %1776 = vperm.xlu0 %1775, %v918
    %v1777 = vpop.permute.xlu0 %1776
    %1778 = vset.pattern.permute.xlu0 0
    %1779 = vperm.xlu0 %1778, %v919
    %v1780 = vpop.permute.xlu0 %1779
    %1781 = vset.pattern.permute.xlu0 0
    %1782 = vperm.xlu0 %1781, %v920
    %v1783 = vpop.permute.xlu0 %1782
    %1784 = vset.pattern.permute.xlu0 0
    %1785 = vperm.xlu0 %1784, %v921
    %v1786 = vpop.permute.xlu0 %1785
    %1787 = vset.pattern.permute.xlu0 0
    %1788 = vperm.xlu0 %1787, %v922
    %v1789 = vpop.permute.xlu0 %1788
    %1790 = vset.pattern.permute.xlu0 0
    %1791 = vperm.xlu0 %1790, %v923
    %v1792 = vpop.permute.xlu0 %1791
    %1793 = vset.pattern.permute.xlu0 0
    %1794 = vperm.xlu0 %1793, %v924
    %v1795 = vpop.permute.xlu0 %1794
    %1796 = vset.pattern.permute.xlu0 0
    %1797 = vperm.xlu0 %1796, %v925
    %v1798 = vpop.permute.xlu0 %1797
    %1799 = vset.pattern.permute.xlu0 0
    %1800 = vperm.xlu0 %1799, %v926
    %v1801 = vpop.permute.xlu0 %1800
    %1802 = vset.pattern.permute.xlu0 0
    %1803 = vperm.xlu0 %1802, %v927
    %v1804 = vpop.permute.xlu0 %1803
    %1805 = vset.pattern.permute.xlu0 0
    %1806 = vperm.xlu0 %1805, %v928
    %v1807 = vpop.permute.xlu0 %1806
    %1808 = vset.pattern.permute.xlu0 0
    %1809 = vperm.xlu0 %1808, %v929
    %v1810 = vpop.permute.xlu0 %1809
    %1811 = vset.pattern.permute.xlu0 0
    %1812 = vperm.xlu0 %1811, %v930
    %v1813 = vpop.permute.xlu0 %1812
    %1814 = vset.pattern.permute.xlu0 0
    %1815 = vperm.xlu0 %1814, %v931
    %v1816 = vpop.permute.xlu0 %1815
    %1817 = vset.pattern.permute.xlu0 0
    %1818 = vperm.xlu0 %1817, %v932
    %v1819 = vpop.permute.xlu0 %1818
    %1820 = vset.pattern.permute.xlu0 0
    %1821 = vperm.xlu0 %1820, %v933
    %v1822 = vpop.permute.xlu0 %1821
    %1823 = vset.pattern.permute.xlu0 0
    %1824 = vperm.xlu0 %1823, %v934
    %v1825 = vpop.permute.xlu0 %1824
    %1826 = vset.pattern.permute.xlu0 0
    %1827 = vperm.xlu0 %1826, %v935
    %v1828 = vpop.permute.xlu0 %1827
    %1829 = vset.pattern.permute.xlu0 0
    %1830 = vperm.xlu0 %1829, %v936
    %v1831 = vpop.permute.xlu0 %1830
    %1832 = vset.pattern.permute.xlu0 0
    %1833 = vperm.xlu0 %1832, %v937
    %v1834 = vpop.permute.xlu0 %1833
    %1835 = vset.pattern.permute.xlu0 0
    %1836 = vperm.xlu0 %1835, %v938
    %v1837 = vpop.permute.xlu0 %1836
    %1838 = vset.pattern.permute.xlu0 0
    %1839 = vperm.xlu0 %1838, %v939
    %v1840 = vpop.permute.xlu0 %1839
    %1841 = vset.pattern.permute.xlu0 0
    %1842 = vperm.xlu0 %1841, %v940
    %v1843 = vpop.permute.xlu0 %1842
    %1844 = vset.pattern.permute.xlu0 0
    %1845 = vperm.xlu0 %1844, %v941
    %v1846 = vpop.permute.xlu0 %1845
    %1847 = vset.pattern.permute.xlu0 0
    %1848 = vperm.xlu0 %1847, %v942
    %v1849 = vpop.permute.xlu0 %1848
    %1850 = vset.pattern.permute.xlu0 0
    %1851 = vperm.xlu0 %1850, %v943
    %v1852 = vpop.permute.xlu0 %1851
    %1853 = vset.pattern.permute.xlu0 0
    %1854 = vperm.xlu0 %1853, %v944
    %v1855 = vpop.permute.xlu0 %1854
    %1856 = vset.pattern.permute.xlu0 0
    %1857 = vperm.xlu0 %1856, %v945
    %v1858 = vpop.permute.xlu0 %1857
    %1859 = vset.pattern.permute.xlu0 0
    %1860 = vperm.xlu0 %1859, %v946
    %v1861 = vpop.permute.xlu0 %1860
    %1862 = vset.pattern.permute.xlu0 0
    %1863 = vperm.xlu0 %1862, %v947
    %v1864 = vpop.permute.xlu0 %1863
    %1865 = vset.pattern.permute.xlu0 0
    %1866 = vperm.xlu0 %1865, %v948
    %v1867 = vpop.permute.xlu0 %1866
    %1868 = vset.pattern.permute.xlu0 0
    %1869 = vperm.xlu0 %1868, %v949
    %v1870 = vpop.permute.xlu0 %1869
    %1871 = vset.pattern.permute.xlu0 0
    %1872 = vperm.xlu0 %1871, %v950
    %v1873 = vpop.permute.xlu0 %1872
    %1874 = vset.pattern.permute.xlu0 0
    %1875 = vperm.xlu0 %1874, %v951
    %v1876 = vpop.permute.xlu0 %1875
    %1877 = vset.pattern.permute.xlu0 0
    %1878 = vperm.xlu0 %1877, %v952
    %v1879 = vpop.permute.xlu0 %1878
    %1880 = vset.pattern.permute.xlu0 0
    %1881 = vperm.xlu0 %1880, %v953
    %v1882 = vpop.permute.xlu0 %1881
    %1883 = vset.pattern.permute.xlu0 0
    %1884 = vperm.xlu0 %1883, %v954
    %v1885 = vpop.permute.xlu0 %1884
    %1886 = vset.pattern.permute.xlu0 0
    %1887 = vperm.xlu0 %1886, %v955
    %v1888 = vpop.permute.xlu0 %1887
    %1889 = vset.pattern.permute.xlu0 0
    %1890 = vperm.xlu0 %1889, %v956
    %v1891 = vpop.permute.xlu0 %1890
    %1892 = vset.pattern.permute.xlu0 0
    %1893 = vperm.xlu0 %1892, %v957
    %v1894 = vpop.permute.xlu0 %1893
    %1895 = vset.pattern.permute.xlu0 0
    %1896 = vperm.xlu0 %1895, %v958
    %v1897 = vpop.permute.xlu0 %1896
    %1898 = vset.pattern.permute.xlu0 0
    %1899 = vperm.xlu0 %1898, %v959
    %v1900 = vpop.permute.xlu0 %1899
    %1901 = vset.pattern.permute.xlu0 0
    %1902 = vperm.xlu0 %1901, %v960
    %v1903 = vpop.permute.xlu0 %1902
    %1904 = vset.pattern.permute.xlu0 0
    %1905 = vperm.xlu0 %1904, %v961
    %v1906 = vpop.permute.xlu0 %1905
    %1907 = vset.pattern.permute.xlu0 0
    %1908 = vperm.xlu0 %1907, %v962
    %v1909 = vpop.permute.xlu0 %1908
    %1910 = vset.pattern.permute.xlu0 0
    %1911 = vperm.xlu0 %1910, %v963
    %v1912 = vpop.permute.xlu0 %1911
    %1913 = vset.pattern.permute.xlu0 0
    %1914 = vperm.xlu0 %1913, %v964
    %v1915 = vpop.permute.xlu0 %1914
    %1916 = vset.pattern.permute.xlu0 0
    %1917 = vperm.xlu0 %1916, %v965
    %v1918 = vpop.permute.xlu0 %1917
    %1919 = vset.pattern.permute.xlu0 0
    %1920 = vperm.xlu0 %1919, %v966
    %v1921 = vpop.permute.xlu0 %1920
    %1922 = vset.pattern.permute.xlu0 0
    %1923 = vperm.xlu0 %1922, %v967
    %v1924 = vpop.permute.xlu0 %1923
    %1925 = vset.pattern.permute.xlu0 0
    %1926 = vperm.xlu0 %1925, %v968
    %v1927 = vpop.permute.xlu0 %1926
    %1928 = vset.pattern.permute.xlu0 0
    %1929 = vperm.xlu0 %1928, %v969
    %v1930 = vpop.permute.xlu0 %1929
    %1931 = vset.pattern.permute.xlu0 0
    %1932 = vperm.xlu0 %1931, %v970
    %v1933 = vpop.permute.xlu0 %1932
    %1934 = vset.pattern.permute.xlu0 0
    %1935 = vperm.xlu0 %1934, %v971
    %v1936 = vpop.permute.xlu0 %1935
    %1937 = vset.pattern.permute.xlu0 0
    %1938 = vperm.xlu0 %1937, %v972
    %v1939 = vpop.permute.xlu0 %1938
    %1940 = vset.pattern.permute.xlu0 0
    %1941 = vperm.xlu0 %1940, %v973
    %v1942 = vpop.permute.xlu0 %1941
    %1943 = vset.pattern.permute.xlu0 0
    %1944 = vperm.xlu0 %1943, %v974
    %v1945 = vpop.permute.xlu0 %1944
    %1946 = vset.pattern.permute.xlu0 0
    %1947 = vperm.xlu0 %1946, %v975
    %v1948 = vpop.permute.xlu0 %1947
    %1949 = vset.pattern.permute.xlu0 0
    %1950 = vperm.xlu0 %1949, %v976
    %v1951 = vpop.permute.xlu0 %1950
    %1952 = vset.pattern.permute.xlu0 0
    %1953 = vperm.xlu0 %1952, %v977
    %v1954 = vpop.permute.xlu0 %1953
    %1955 = vset.pattern.permute.xlu0 0
    %1956 = vperm.xlu0 %1955, %v978
    %v1957 = vpop.permute.xlu0 %1956
    %1958 = vset.pattern.permute.xlu0 0
    %1959 = vperm.xlu0 %1958, %v979
    %v1960 = vpop.permute.xlu0 %1959
    %1961 = vset.pattern.permute.xlu0 0
    %1962 = vperm.xlu0 %1961, %v980
    %v1963 = vpop.permute.xlu0 %1962
    %1964 = vset.pattern.permute.xlu0 0
    %1965 = vperm.xlu0 %1964, %v981
    %v1966 = vpop.permute.xlu0 %1965
    %1967 = vset.pattern.permute.xlu0 0
    %1968 = vperm.xlu0 %1967, %v982
    %v1969 = vpop.permute.xlu0 %1968
    %1970 = vset.pattern.permute.xlu0 0
    %1971 = vperm.xlu0 %1970, %v983
    %v1972 = vpop.permute.xlu0 %1971
    %1973 = vset.pattern.permute.xlu0 0
    %1974 = vperm.xlu0 %1973, %v984
    %v1975 = vpop.permute.xlu0 %1974
    %1976 = vset.pattern.permute.xlu0 0
    %1977 = vperm.xlu0 %1976, %v985
    %v1978 = vpop.permute.xlu0 %1977
    %1979 = vset.pattern.permute.xlu0 0
    %1980 = vperm.xlu0 %1979, %v986
    %v1981 = vpop.permute.xlu0 %1980
    %1982 = vset.pattern.permute.xlu0 0
    %1983 = vperm.xlu0 %1982, %v987
    %v1984 = vpop.permute.xlu0 %1983
    %1985 = vset.pattern.permute.xlu0 0
    %1986 = vperm.xlu0 %1985, %v988
    %v1987 = vpop.permute.xlu0 %1986
    %1988 = vset.pattern.permute.xlu0 0
    %1989 = vperm.xlu0 %1988, %v989
    %v1990 = vpop.permute.xlu0 %1989
    %1991 = vset.pattern.permute.xlu0 0
    %1992 = vperm.xlu0 %1991, %v990
    %v1993 = vpop.permute.xlu0 %1992
    %1994 = vset.pattern.permute.xlu0 0
    %1995 = vperm.xlu0 %1994, %v991
    %v1996 = vpop.permute.xlu0 %1995
    %1997 = vset.pattern.permute.xlu0 0
    %1998 = vperm.xlu0 %1997, %v992
    %v1999 = vpop.permute.xlu0 %1998
    %2000 = vset.pattern.permute.xlu0 0
    %2001 = vperm.xlu0 %2000, %v993
    %v2002 = vpop.permute.xlu0 %2001
    %2003 = vset.pattern.permute.xlu0 0
    %2004 = vperm.xlu0 %2003, %v994
    %v2005 = vpop.permute.xlu0 %2004
    %2006 = vset.pattern.permute.xlu0 0
    %2007 = vperm.xlu0 %2006, %v995
    %v2008 = vpop.permute.xlu0 %2007
    %2009 = vset.pattern.permute.xlu0 0
    %2010 = vperm.xlu0 %2009, %v996
    %v2011 = vpop.permute.xlu0 %2010
    %2012 = vset.pattern.permute.xlu0 0
    %2013 = vperm.xlu0 %2012, %v997
    %v2014 = vpop.permute.xlu0 %2013
    %2015 = vset.pattern.permute.xlu0 0
    %2016 = vperm.xlu0 %2015, %v998
    %v2017 = vpop.permute.xlu0 %2016
    %2018 = vset.pattern.permute.xlu0 0
    %2019 = vperm.xlu0 %2018, %v999
    %v2020 = vpop.permute.xlu0 %2019
    %2021 = vset.pattern.permute.xlu0 0
    %2022 = vperm.xlu0 %2021, %v1000
    %v2023 = vpop.permute.xlu0 %2022
    %2024 = vset.pattern.permute.xlu0 0
    %2025 = vperm.xlu0 %2024, %v1001
    %v2026 = vpop.permute.xlu0 %2025
    %2027 = vset.pattern.permute.xlu0 0
    %2028 = vperm.xlu0 %2027, %v1002
    %v2029 = vpop.permute.xlu0 %2028
    %2030 = vset.pattern.permute.xlu0 0
    %2031 = vperm.xlu0 %2030, %v1003
    %v2032 = vpop.permute.xlu0 %2031
    %2033 = vset.pattern.permute.xlu0 0
    %2034 = vperm.xlu0 %2033, %v1004
    %v2035 = vpop.permute.xlu0 %2034
    %2036 = vset.pattern.permute.xlu0 0
    %2037 = vperm.xlu0 %2036, %v1005
    %v2038 = vpop.permute.xlu0 %2037
    %2039 = vset.pattern.permute.xlu0 0
    %2040 = vperm.xlu0 %2039, %v1006
    %v2041 = vpop.permute.xlu0 %2040
    %2042 = vset.pattern.permute.xlu0 0
    %2043 = vperm.xlu0 %2042, %v1007
    %v2044 = vpop.permute.xlu0 %2043
    %2045 = vset.pattern.permute.xlu0 0
    %2046 = vperm.xlu0 %2045, %v1008
    %v2047 = vpop.permute.xlu0 %2046
    %2048 = vset.pattern.permute.xlu0 0
    %2049 = vperm.xlu0 %2048, %v1009
    %v2050 = vpop.permute.xlu0 %2049
    %2051 = vset.pattern.permute.xlu0 0
    %2052 = vperm.xlu0 %2051, %v1010
    %v2053 = vpop.permute.xlu0 %2052
    %2054 = vset.pattern.permute.xlu0 0
    %2055 = vperm.xlu0 %2054, %v1011
    %v2056 = vpop.permute.xlu0 %2055
    %2057 = vset.pattern.permute.xlu0 0
    %2058 = vperm.xlu0 %2057, %v1012
    %v2059 = vpop.permute.xlu0 %2058
    %2060 = vset.pattern.permute.xlu0 0
    %2061 = vperm.xlu0 %2060, %v1013
    %v2062 = vpop.permute.xlu0 %2061
    %2063 = vset.pattern.permute.xlu0 0
    %2064 = vperm.xlu0 %2063, %v1014
    %v2065 = vpop.permute.xlu0 %2064
    %2066 = vset.pattern.permute.xlu0 0
    %2067 = vperm.xlu0 %2066, %v1015
    %v2068 = vpop.permute.xlu0 %2067
    %2069 = vset.pattern.permute.xlu0 0
    %2070 = vperm.xlu0 %2069, %v1016
    %v2071 = vpop.permute.xlu0 %2070
    %2072 = vset.pattern.permute.xlu0 0
    %2073 = vperm.xlu0 %2072, %v1017
    %v2074 = vpop.permute.xlu0 %2073
    %2075 = vset.pattern.permute.xlu0 0
    %2076 = vperm.xlu0 %2075, %v1018
    %v2077 = vpop.permute.xlu0 %2076
    %2078 = vset.pattern.permute.xlu0 0
    %2079 = vperm.xlu0 %2078, %v1019
    %v2080 = vpop.permute.xlu0 %2079
    %2081 = vset.pattern.permute.xlu0 0
    %2082 = vperm.xlu0 %2081, %v1020
    %v2083 = vpop.permute.xlu0 %2082
    %2084 = vset.pattern.permute.xlu0 0
    %2085 = vperm.xlu0 %2084, %v1021
    %v2086 = vpop.permute.xlu0 %2085
    %v2087 = vlaneseq
    %v2088 = vand.u32 %v2087, 127
    %v2089 = vlaneseq
    %v2090 = vshrl.u32 %v2089, 7
    %v2091 = vsub.s32 %v2088, %v2090
    %v2092 = vrot.slane %v1321, %v2091
    %v2093 = vadd.s32 %v2088, 4294967288
    %v2094 = vlaneseq
    %v2095 = vshrl.u32 %v2094, 7
    %v2096 = vsub.s32 %v2093, %v2095
    %v2097 = vrot.slane %v1324, %v2096
    %vm2098 = vcmask 130112
    %v2099 = vsel %vm2098, %v2097, %v2092
    %v2100 = vadd.s32 %v2088, 4294967280
    %v2101 = vlaneseq
    %v2102 = vshrl.u32 %v2101, 7
    %v2103 = vsub.s32 %v2100, %v2102
    %v2104 = vrot.slane %v1327, %v2103
    %vm2105 = vcmask 195712
    %v2106 = vsel %vm2105, %v2104, %v2099
    %v2107 = vadd.s32 %v2088, 4294967272
    %v2108 = vlaneseq
    %v2109 = vshrl.u32 %v2108, 7
    %v2110 = vsub.s32 %v2107, %v2109
    %v2111 = vrot.slane %v1330, %v2110
    %vm2112 = vcmask 261312
    %v2113 = vsel %vm2112, %v2111, %v2106
    %v2114 = vadd.s32 %v2088, 4294967264
    %v2115 = vlaneseq
    %v2116 = vshrl.u32 %v2115, 7
    %v2117 = vsub.s32 %v2114, %v2116
    %v2118 = vrot.slane %v1333, %v2117
    %vm2119 = vcmask 326912
    %v2120 = vsel %vm2119, %v2118, %v2113
    %v2121 = vadd.s32 %v2088, 4294967256
    %v2122 = vlaneseq
    %v2123 = vshrl.u32 %v2122, 7
    %v2124 = vsub.s32 %v2121, %v2123
    %v2125 = vrot.slane %v1336, %v2124
    %vm2126 = vcmask 392512
    %v2127 = vsel %vm2126, %v2125, %v2120
    %v2128 = vadd.s32 %v2088, 4294967248
    %v2129 = vlaneseq
    %v2130 = vshrl.u32 %v2129, 7
    %v2131 = vsub.s32 %v2128, %v2130
    %v2132 = vrot.slane %v1339, %v2131
    %vm2133 = vcmask 458112
    %v2134 = vsel %vm2133, %v2132, %v2127
    %v2135 = vadd.s32 %v2088, 4294967240
    %v2136 = vlaneseq
    %v2137 = vshrl.u32 %v2136, 7
    %v2138 = vsub.s32 %v2135, %v2137
    %v2139 = vrot.slane %v1342, %v2138
    %vm2140 = vcmask 523712
    %v2141 = vsel %vm2140, %v2139, %v2134
    %v2142 = vadd.s32 %v2088, 4294967232
    %v2143 = vlaneseq
    %v2144 = vshrl.u32 %v2143, 7
    %v2145 = vsub.s32 %v2142, %v2144
    %v2146 = vrot.slane %v1345, %v2145
    %vm2147 = vcmask 589312
    %v2148 = vsel %vm2147, %v2146, %v2141
    %v2149 = vadd.s32 %v2088, 4294967224
    %v2150 = vlaneseq
    %v2151 = vshrl.u32 %v2150, 7
    %v2152 = vsub.s32 %v2149, %v2151
    %v2153 = vrot.slane %v1348, %v2152
    %vm2154 = vcmask 654912
    %v2155 = vsel %vm2154, %v2153, %v2148
    %v2156 = vadd.s32 %v2088, 4294967216
    %v2157 = vlaneseq
    %v2158 = vshrl.u32 %v2157, 7
    %v2159 = vsub.s32 %v2156, %v2158
    %v2160 = vrot.slane %v1351, %v2159
    %vm2161 = vcmask 720512
    %v2162 = vsel %vm2161, %v2160, %v2155
    %v2163 = vadd.s32 %v2088, 4294967208
    %v2164 = vlaneseq
    %v2165 = vshrl.u32 %v2164, 7
    %v2166 = vsub.s32 %v2163, %v2165
    %v2167 = vrot.slane %v1354, %v2166
    %vm2168 = vcmask 786112
    %v2169 = vsel %vm2168, %v2167, %v2162
    %v2170 = vadd.s32 %v2088, 4294967200
    %v2171 = vlaneseq
    %v2172 = vshrl.u32 %v2171, 7
    %v2173 = vsub.s32 %v2170, %v2172
    %v2174 = vrot.slane %v1357, %v2173
    %vm2175 = vcmask 851712
    %v2176 = vsel %vm2175, %v2174, %v2169
    %v2177 = vadd.s32 %v2088, 4294967192
    %v2178 = vlaneseq
    %v2179 = vshrl.u32 %v2178, 7
    %v2180 = vsub.s32 %v2177, %v2179
    %v2181 = vrot.slane %v1360, %v2180
    %vm2182 = vcmask 917312
    %v2183 = vsel %vm2182, %v2181, %v2176
    %v2184 = vadd.s32 %v2088, 4294967184
    %v2185 = vlaneseq
    %v2186 = vshrl.u32 %v2185, 7
    %v2187 = vsub.s32 %v2184, %v2186
    %v2188 = vrot.slane %v1363, %v2187
    %vm2189 = vcmask 982912
    %v2190 = vsel %vm2189, %v2188, %v2183
    %v2191 = vadd.s32 %v2088, 4294967176
    %v2192 = vlaneseq
    %v2193 = vshrl.u32 %v2192, 7
    %v2194 = vsub.s32 %v2191, %v2193
    %v2195 = vrot.slane %v1366, %v2194
    %vm2196 = vcmask 1048512
    %v2197 = vsel %vm2196, %v2195, %v2190
    %v2198 = vlaneseq
    %v2199 = vshrl.u32 %v2198, 7
    %v2200 = vsub.s32 %v2088, %v2199
    %v2201 = vrot.slane %v1369, %v2200
    %v2202 = vlaneseq
    %v2203 = vshrl.u32 %v2202, 7
    %v2204 = vsub.s32 %v2093, %v2203
    %v2205 = vrot.slane %v1372, %v2204
    %v2206 = vsel %vm2098, %v2205, %v2201
    %v2207 = vlaneseq
    %v2208 = vshrl.u32 %v2207, 7
    %v2209 = vsub.s32 %v2100, %v2208
    %v2210 = vrot.slane %v1375, %v2209
    %v2211 = vsel %vm2105, %v2210, %v2206
    %v2212 = vlaneseq
    %v2213 = vshrl.u32 %v2212, 7
    %v2214 = vsub.s32 %v2107, %v2213
    %v2215 = vrot.slane %v1378, %v2214
    %v2216 = vsel %vm2112, %v2215, %v2211
    %v2217 = vlaneseq
    %v2218 = vshrl.u32 %v2217, 7
    %v2219 = vsub.s32 %v2114, %v2218
    %v2220 = vrot.slane %v1381, %v2219
    %v2221 = vsel %vm2119, %v2220, %v2216
    %v2222 = vlaneseq
    %v2223 = vshrl.u32 %v2222, 7
    %v2224 = vsub.s32 %v2121, %v2223
    %v2225 = vrot.slane %v1384, %v2224
    %v2226 = vsel %vm2126, %v2225, %v2221
    %v2227 = vlaneseq
    %v2228 = vshrl.u32 %v2227, 7
    %v2229 = vsub.s32 %v2128, %v2228
    %v2230 = vrot.slane %v1387, %v2229
    %v2231 = vsel %vm2133, %v2230, %v2226
    %v2232 = vlaneseq
    %v2233 = vshrl.u32 %v2232, 7
    %v2234 = vsub.s32 %v2135, %v2233
    %v2235 = vrot.slane %v1390, %v2234
    %v2236 = vsel %vm2140, %v2235, %v2231
    %v2237 = vlaneseq
    %v2238 = vshrl.u32 %v2237, 7
    %v2239 = vsub.s32 %v2142, %v2238
    %v2240 = vrot.slane %v1393, %v2239
    %v2241 = vsel %vm2147, %v2240, %v2236
    %v2242 = vlaneseq
    %v2243 = vshrl.u32 %v2242, 7
    %v2244 = vsub.s32 %v2149, %v2243
    %v2245 = vrot.slane %v1396, %v2244
    %v2246 = vsel %vm2154, %v2245, %v2241
    %v2247 = vlaneseq
    %v2248 = vshrl.u32 %v2247, 7
    %v2249 = vsub.s32 %v2156, %v2248
    %v2250 = vrot.slane %v1399, %v2249
    %v2251 = vsel %vm2161, %v2250, %v2246
    %v2252 = vlaneseq
    %v2253 = vshrl.u32 %v2252, 7
    %v2254 = vsub.s32 %v2163, %v2253
    %v2255 = vrot.slane %v1402, %v2254
    %v2256 = vsel %vm2168, %v2255, %v2251
    %v2257 = vlaneseq
    %v2258 = vshrl.u32 %v2257, 7
    %v2259 = vsub.s32 %v2170, %v2258
    %v2260 = vrot.slane %v1405, %v2259
    %v2261 = vsel %vm2175, %v2260, %v2256
    %v2262 = vlaneseq
    %v2263 = vshrl.u32 %v2262, 7
    %v2264 = vsub.s32 %v2177, %v2263
    %v2265 = vrot.slane %v1408, %v2264
    %v2266 = vsel %vm2182, %v2265, %v2261
    %v2267 = vlaneseq
    %v2268 = vshrl.u32 %v2267, 7
    %v2269 = vsub.s32 %v2184, %v2268
    %v2270 = vrot.slane %v1411, %v2269
    %v2271 = vsel %vm2189, %v2270, %v2266
    %v2272 = vlaneseq
    %v2273 = vshrl.u32 %v2272, 7
    %v2274 = vsub.s32 %v2191, %v2273
    %v2275 = vrot.slane %v1414, %v2274
    %v2276 = vsel %vm2196, %v2275, %v2271
    %v2277 = vlaneseq
    %v2278 = vshrl.u32 %v2277, 7
    %v2279 = vsub.s32 %v2088, %v2278
    %v2280 = vrot.slane %v1417, %v2279
    %v2281 = vlaneseq
    %v2282 = vshrl.u32 %v2281, 7
    %v2283 = vsub.s32 %v2093, %v2282
    %v2284 = vrot.slane %v1420, %v2283
    %v2285 = vsel %vm2098, %v2284, %v2280
    %v2286 = vlaneseq
    %v2287 = vshrl.u32 %v2286, 7
    %v2288 = vsub.s32 %v2100, %v2287
    %v2289 = vrot.slane %v1423, %v2288
    %v2290 = vsel %vm2105, %v2289, %v2285
    %v2291 = vlaneseq
    %v2292 = vshrl.u32 %v2291, 7
    %v2293 = vsub.s32 %v2107, %v2292
    %v2294 = vrot.slane %v1426, %v2293
    %v2295 = vsel %vm2112, %v2294, %v2290
    %v2296 = vlaneseq
    %v2297 = vshrl.u32 %v2296, 7
    %v2298 = vsub.s32 %v2114, %v2297
    %v2299 = vrot.slane %v1429, %v2298
    %v2300 = vsel %vm2119, %v2299, %v2295
    %v2301 = vlaneseq
    %v2302 = vshrl.u32 %v2301, 7
    %v2303 = vsub.s32 %v2121, %v2302
    %v2304 = vrot.slane %v1432, %v2303
    %v2305 = vsel %vm2126, %v2304, %v2300
    %v2306 = vlaneseq
    %v2307 = vshrl.u32 %v2306, 7
    %v2308 = vsub.s32 %v2128, %v2307
    %v2309 = vrot.slane %v1435, %v2308
    %v2310 = vsel %vm2133, %v2309, %v2305
    %v2311 = vlaneseq
    %v2312 = vshrl.u32 %v2311, 7
    %v2313 = vsub.s32 %v2135, %v2312
    %v2314 = vrot.slane %v1438, %v2313
    %v2315 = vsel %vm2140, %v2314, %v2310
    %v2316 = vlaneseq
    %v2317 = vshrl.u32 %v2316, 7
    %v2318 = vsub.s32 %v2142, %v2317
    %v2319 = vrot.slane %v1441, %v2318
    %v2320 = vsel %vm2147, %v2319, %v2315
    %v2321 = vlaneseq
    %v2322 = vshrl.u32 %v2321, 7
    %v2323 = vsub.s32 %v2149, %v2322
    %v2324 = vrot.slane %v1444, %v2323
    %v2325 = vsel %vm2154, %v2324, %v2320
    %v2326 = vlaneseq
    %v2327 = vshrl.u32 %v2326, 7
    %v2328 = vsub.s32 %v2156, %v2327
    %v2329 = vrot.slane %v1447, %v2328
    %v2330 = vsel %vm2161, %v2329, %v2325
    %v2331 = vlaneseq
    %v2332 = vshrl.u32 %v2331, 7
    %v2333 = vsub.s32 %v2163, %v2332
    %v2334 = vrot.slane %v1450, %v2333
    %v2335 = vsel %vm2168, %v2334, %v2330
    %v2336 = vlaneseq
    %v2337 = vshrl.u32 %v2336, 7
    %v2338 = vsub.s32 %v2170, %v2337
    %v2339 = vrot.slane %v1453, %v2338
    %v2340 = vsel %vm2175, %v2339, %v2335
    %v2341 = vlaneseq
    %v2342 = vshrl.u32 %v2341, 7
    %v2343 = vsub.s32 %v2177, %v2342
    %v2344 = vrot.slane %v1456, %v2343
    %v2345 = vsel %vm2182, %v2344, %v2340
    %v2346 = vlaneseq
    %v2347 = vshrl.u32 %v2346, 7
    %v2348 = vsub.s32 %v2184, %v2347
    %v2349 = vrot.slane %v1459, %v2348
    %v2350 = vsel %vm2189, %v2349, %v2345
    %v2351 = vlaneseq
    %v2352 = vshrl.u32 %v2351, 7
    %v2353 = vsub.s32 %v2191, %v2352
    %v2354 = vrot.slane %v1462, %v2353
    %v2355 = vsel %vm2196, %v2354, %v2350
    %v2356 = vlaneseq
    %v2357 = vshrl.u32 %v2356, 7
    %v2358 = vsub.s32 %v2088, %v2357
    %v2359 = vrot.slane %v1465, %v2358
    %v2360 = vlaneseq
    %v2361 = vshrl.u32 %v2360, 7
    %v2362 = vsub.s32 %v2093, %v2361
    %v2363 = vrot.slane %v1468, %v2362
    %v2364 = vsel %vm2098, %v2363, %v2359
    %v2365 = vlaneseq
    %v2366 = vshrl.u32 %v2365, 7
    %v2367 = vsub.s32 %v2100, %v2366
    %v2368 = vrot.slane %v1471, %v2367
    %v2369 = vsel %vm2105, %v2368, %v2364
    %v2370 = vlaneseq
    %v2371 = vshrl.u32 %v2370, 7
    %v2372 = vsub.s32 %v2107, %v2371
    %v2373 = vrot.slane %v1474, %v2372
    %v2374 = vsel %vm2112, %v2373, %v2369
    %v2375 = vlaneseq
    %v2376 = vshrl.u32 %v2375, 7
    %v2377 = vsub.s32 %v2114, %v2376
    %v2378 = vrot.slane %v1477, %v2377
    %v2379 = vsel %vm2119, %v2378, %v2374
    %v2380 = vlaneseq
    %v2381 = vshrl.u32 %v2380, 7
    %v2382 = vsub.s32 %v2121, %v2381
    %v2383 = vrot.slane %v1480, %v2382
    %v2384 = vsel %vm2126, %v2383, %v2379
    %v2385 = vlaneseq
    %v2386 = vshrl.u32 %v2385, 7
    %v2387 = vsub.s32 %v2128, %v2386
    %v2388 = vrot.slane %v1483, %v2387
    %v2389 = vsel %vm2133, %v2388, %v2384
    %v2390 = vlaneseq
    %v2391 = vshrl.u32 %v2390, 7
    %v2392 = vsub.s32 %v2135, %v2391
    %v2393 = vrot.slane %v1486, %v2392
    %v2394 = vsel %vm2140, %v2393, %v2389
    %v2395 = vlaneseq
    %v2396 = vshrl.u32 %v2395, 7
    %v2397 = vsub.s32 %v2142, %v2396
    %v2398 = vrot.slane %v1489, %v2397
    %v2399 = vsel %vm2147, %v2398, %v2394
    %v2400 = vlaneseq
    %v2401 = vshrl.u32 %v2400, 7
    %v2402 = vsub.s32 %v2149, %v2401
    %v2403 = vrot.slane %v1492, %v2402
    %v2404 = vsel %vm2154, %v2403, %v2399
    %v2405 = vlaneseq
    %v2406 = vshrl.u32 %v2405, 7
    %v2407 = vsub.s32 %v2156, %v2406
    %v2408 = vrot.slane %v1495, %v2407
    %v2409 = vsel %vm2161, %v2408, %v2404
    %v2410 = vlaneseq
    %v2411 = vshrl.u32 %v2410, 7
    %v2412 = vsub.s32 %v2163, %v2411
    %v2413 = vrot.slane %v1498, %v2412
    %v2414 = vsel %vm2168, %v2413, %v2409
    %v2415 = vlaneseq
    %v2416 = vshrl.u32 %v2415, 7
    %v2417 = vsub.s32 %v2170, %v2416
    %v2418 = vrot.slane %v1501, %v2417
    %v2419 = vsel %vm2175, %v2418, %v2414
    %v2420 = vlaneseq
    %v2421 = vshrl.u32 %v2420, 7
    %v2422 = vsub.s32 %v2177, %v2421
    %v2423 = vrot.slane %v1504, %v2422
    %v2424 = vsel %vm2182, %v2423, %v2419
    %v2425 = vlaneseq
    %v2426 = vshrl.u32 %v2425, 7
    %v2427 = vsub.s32 %v2184, %v2426
    %v2428 = vrot.slane %v1507, %v2427
    %v2429 = vsel %vm2189, %v2428, %v2424
    %v2430 = vlaneseq
    %v2431 = vshrl.u32 %v2430, 7
    %v2432 = vsub.s32 %v2191, %v2431
    %v2433 = vrot.slane %v1510, %v2432
    %v2434 = vsel %vm2196, %v2433, %v2429
    %v2435 = vlaneseq
    %v2436 = vshrl.u32 %v2435, 7
    %v2437 = vsub.s32 %v2088, %v2436
    %v2438 = vrot.slane %v1513, %v2437
    %v2439 = vlaneseq
    %v2440 = vshrl.u32 %v2439, 7
    %v2441 = vsub.s32 %v2093, %v2440
    %v2442 = vrot.slane %v1516, %v2441
    %v2443 = vsel %vm2098, %v2442, %v2438
    %v2444 = vlaneseq
    %v2445 = vshrl.u32 %v2444, 7
    %v2446 = vsub.s32 %v2100, %v2445
    %v2447 = vrot.slane %v1519, %v2446
    %v2448 = vsel %vm2105, %v2447, %v2443
    %v2449 = vlaneseq
    %v2450 = vshrl.u32 %v2449, 7
    %v2451 = vsub.s32 %v2107, %v2450
    %v2452 = vrot.slane %v1522, %v2451
    %v2453 = vsel %vm2112, %v2452, %v2448
    %v2454 = vlaneseq
    %v2455 = vshrl.u32 %v2454, 7
    %v2456 = vsub.s32 %v2114, %v2455
    %v2457 = vrot.slane %v1525, %v2456
    %v2458 = vsel %vm2119, %v2457, %v2453
    %v2459 = vlaneseq
    %v2460 = vshrl.u32 %v2459, 7
    %v2461 = vsub.s32 %v2121, %v2460
    %v2462 = vrot.slane %v1528, %v2461
    %v2463 = vsel %vm2126, %v2462, %v2458
    %v2464 = vlaneseq
    %v2465 = vshrl.u32 %v2464, 7
    %v2466 = vsub.s32 %v2128, %v2465
    %v2467 = vrot.slane %v1531, %v2466
    %v2468 = vsel %vm2133, %v2467, %v2463
    %v2469 = vlaneseq
    %v2470 = vshrl.u32 %v2469, 7
    %v2471 = vsub.s32 %v2135, %v2470
    %v2472 = vrot.slane %v1534, %v2471
    %v2473 = vsel %vm2140, %v2472, %v2468
    %v2474 = vlaneseq
    %v2475 = vshrl.u32 %v2474, 7
    %v2476 = vsub.s32 %v2142, %v2475
    %v2477 = vrot.slane %v1537, %v2476
    %v2478 = vsel %vm2147, %v2477, %v2473
    %v2479 = vlaneseq
    %v2480 = vshrl.u32 %v2479, 7
    %v2481 = vsub.s32 %v2149, %v2480
    %v2482 = vrot.slane %v1540, %v2481
    %v2483 = vsel %vm2154, %v2482, %v2478
    %v2484 = vlaneseq
    %v2485 = vshrl.u32 %v2484, 7
    %v2486 = vsub.s32 %v2156, %v2485
    %v2487 = vrot.slane %v1543, %v2486
    %v2488 = vsel %vm2161, %v2487, %v2483
    %v2489 = vlaneseq
    %v2490 = vshrl.u32 %v2489, 7
    %v2491 = vsub.s32 %v2163, %v2490
    %v2492 = vrot.slane %v1546, %v2491
    %v2493 = vsel %vm2168, %v2492, %v2488
    %v2494 = vlaneseq
    %v2495 = vshrl.u32 %v2494, 7
    %v2496 = vsub.s32 %v2170, %v2495
    %v2497 = vrot.slane %v1549, %v2496
    %v2498 = vsel %vm2175, %v2497, %v2493
    %v2499 = vlaneseq
    %v2500 = vshrl.u32 %v2499, 7
    %v2501 = vsub.s32 %v2177, %v2500
    %v2502 = vrot.slane %v1552, %v2501
    %v2503 = vsel %vm2182, %v2502, %v2498
    %v2504 = vlaneseq
    %v2505 = vshrl.u32 %v2504, 7
    %v2506 = vsub.s32 %v2184, %v2505
    %v2507 = vrot.slane %v1555, %v2506
    %v2508 = vsel %vm2189, %v2507, %v2503
    %v2509 = vlaneseq
    %v2510 = vshrl.u32 %v2509, 7
    %v2511 = vsub.s32 %v2191, %v2510
    %v2512 = vrot.slane %v1558, %v2511
    %v2513 = vsel %vm2196, %v2512, %v2508
    %v2514 = vlaneseq
    %v2515 = vshrl.u32 %v2514, 7
    %v2516 = vsub.s32 %v2088, %v2515
    %v2517 = vrot.slane %v1561, %v2516
    %v2518 = vlaneseq
    %v2519 = vshrl.u32 %v2518, 7
    %v2520 = vsub.s32 %v2093, %v2519
    %v2521 = vrot.slane %v1564, %v2520
    %v2522 = vsel %vm2098, %v2521, %v2517
    %v2523 = vlaneseq
    %v2524 = vshrl.u32 %v2523, 7
    %v2525 = vsub.s32 %v2100, %v2524
    %v2526 = vrot.slane %v1567, %v2525
    %v2527 = vsel %vm2105, %v2526, %v2522
    %v2528 = vlaneseq
    %v2529 = vshrl.u32 %v2528, 7
    %v2530 = vsub.s32 %v2107, %v2529
    %v2531 = vrot.slane %v1570, %v2530
    %v2532 = vsel %vm2112, %v2531, %v2527
    %v2533 = vlaneseq
    %v2534 = vshrl.u32 %v2533, 7
    %v2535 = vsub.s32 %v2114, %v2534
    %v2536 = vrot.slane %v1573, %v2535
    %v2537 = vsel %vm2119, %v2536, %v2532
    %v2538 = vlaneseq
    %v2539 = vshrl.u32 %v2538, 7
    %v2540 = vsub.s32 %v2121, %v2539
    %v2541 = vrot.slane %v1576, %v2540
    %v2542 = vsel %vm2126, %v2541, %v2537
    %v2543 = vlaneseq
    %v2544 = vshrl.u32 %v2543, 7
    %v2545 = vsub.s32 %v2128, %v2544
    %v2546 = vrot.slane %v1579, %v2545
    %v2547 = vsel %vm2133, %v2546, %v2542
    %v2548 = vlaneseq
    %v2549 = vshrl.u32 %v2548, 7
    %v2550 = vsub.s32 %v2135, %v2549
    %v2551 = vrot.slane %v1582, %v2550
    %v2552 = vsel %vm2140, %v2551, %v2547
    %v2553 = vlaneseq
    %v2554 = vshrl.u32 %v2553, 7
    %v2555 = vsub.s32 %v2142, %v2554
    %v2556 = vrot.slane %v1585, %v2555
    %v2557 = vsel %vm2147, %v2556, %v2552
    %v2558 = vlaneseq
    %v2559 = vshrl.u32 %v2558, 7
    %v2560 = vsub.s32 %v2149, %v2559
    %v2561 = vrot.slane %v1588, %v2560
    %v2562 = vsel %vm2154, %v2561, %v2557
    %v2563 = vlaneseq
    %v2564 = vshrl.u32 %v2563, 7
    %v2565 = vsub.s32 %v2156, %v2564
    %v2566 = vrot.slane %v1591, %v2565
    %v2567 = vsel %vm2161, %v2566, %v2562
    %v2568 = vlaneseq
    %v2569 = vshrl.u32 %v2568, 7
    %v2570 = vsub.s32 %v2163, %v2569
    %v2571 = vrot.slane %v1594, %v2570
    %v2572 = vsel %vm2168, %v2571, %v2567
    %v2573 = vlaneseq
    %v2574 = vshrl.u32 %v2573, 7
    %v2575 = vsub.s32 %v2170, %v2574
    %v2576 = vrot.slane %v1597, %v2575
    %v2577 = vsel %vm2175, %v2576, %v2572
    %v2578 = vlaneseq
    %v2579 = vshrl.u32 %v2578, 7
    %v2580 = vsub.s32 %v2177, %v2579
    %v2581 = vrot.slane %v1600, %v2580
    %v2582 = vsel %vm2182, %v2581, %v2577
    %v2583 = vlaneseq
    %v2584 = vshrl.u32 %v2583, 7
    %v2585 = vsub.s32 %v2184, %v2584
    %v2586 = vrot.slane %v1603, %v2585
    %v2587 = vsel %vm2189, %v2586, %v2582
    %v2588 = vlaneseq
    %v2589 = vshrl.u32 %v2588, 7
    %v2590 = vsub.s32 %v2191, %v2589
    %v2591 = vrot.slane %v1606, %v2590
    %v2592 = vsel %vm2196, %v2591, %v2587
    %v2593 = vlaneseq
    %v2594 = vshrl.u32 %v2593, 7
    %v2595 = vsub.s32 %v2088, %v2594
    %v2596 = vrot.slane %v1609, %v2595
    %v2597 = vlaneseq
    %v2598 = vshrl.u32 %v2597, 7
    %v2599 = vsub.s32 %v2093, %v2598
    %v2600 = vrot.slane %v1612, %v2599
    %v2601 = vsel %vm2098, %v2600, %v2596
    %v2602 = vlaneseq
    %v2603 = vshrl.u32 %v2602, 7
    %v2604 = vsub.s32 %v2100, %v2603
    %v2605 = vrot.slane %v1615, %v2604
    %v2606 = vsel %vm2105, %v2605, %v2601
    %v2607 = vlaneseq
    %v2608 = vshrl.u32 %v2607, 7
    %v2609 = vsub.s32 %v2107, %v2608
    %v2610 = vrot.slane %v1618, %v2609
    %v2611 = vsel %vm2112, %v2610, %v2606
    %v2612 = vlaneseq
    %v2613 = vshrl.u32 %v2612, 7
    %v2614 = vsub.s32 %v2114, %v2613
    %v2615 = vrot.slane %v1621, %v2614
    %v2616 = vsel %vm2119, %v2615, %v2611
    %v2617 = vlaneseq
    %v2618 = vshrl.u32 %v2617, 7
    %v2619 = vsub.s32 %v2121, %v2618
    %v2620 = vrot.slane %v1624, %v2619
    %v2621 = vsel %vm2126, %v2620, %v2616
    %v2622 = vlaneseq
    %v2623 = vshrl.u32 %v2622, 7
    %v2624 = vsub.s32 %v2128, %v2623
    %v2625 = vrot.slane %v1627, %v2624
    %v2626 = vsel %vm2133, %v2625, %v2621
    %v2627 = vlaneseq
    %v2628 = vshrl.u32 %v2627, 7
    %v2629 = vsub.s32 %v2135, %v2628
    %v2630 = vrot.slane %v1630, %v2629
    %v2631 = vsel %vm2140, %v2630, %v2626
    %v2632 = vlaneseq
    %v2633 = vshrl.u32 %v2632, 7
    %v2634 = vsub.s32 %v2142, %v2633
    %v2635 = vrot.slane %v1633, %v2634
    %v2636 = vsel %vm2147, %v2635, %v2631
    %v2637 = vlaneseq
    %v2638 = vshrl.u32 %v2637, 7
    %v2639 = vsub.s32 %v2149, %v2638
    %v2640 = vrot.slane %v1636, %v2639
    %v2641 = vsel %vm2154, %v2640, %v2636
    %v2642 = vlaneseq
    %v2643 = vshrl.u32 %v2642, 7
    %v2644 = vsub.s32 %v2156, %v2643
    %v2645 = vrot.slane %v1639, %v2644
    %v2646 = vsel %vm2161, %v2645, %v2641
    %v2647 = vlaneseq
    %v2648 = vshrl.u32 %v2647, 7
    %v2649 = vsub.s32 %v2163, %v2648
    %v2650 = vrot.slane %v1642, %v2649
    %v2651 = vsel %vm2168, %v2650, %v2646
    %v2652 = vlaneseq
    %v2653 = vshrl.u32 %v2652, 7
    %v2654 = vsub.s32 %v2170, %v2653
    %v2655 = vrot.slane %v1645, %v2654
    %v2656 = vsel %vm2175, %v2655, %v2651
    %v2657 = vlaneseq
    %v2658 = vshrl.u32 %v2657, 7
    %v2659 = vsub.s32 %v2177, %v2658
    %v2660 = vrot.slane %v1648, %v2659
    %v2661 = vsel %vm2182, %v2660, %v2656
    %v2662 = vlaneseq
    %v2663 = vshrl.u32 %v2662, 7
    %v2664 = vsub.s32 %v2184, %v2663
    %v2665 = vrot.slane %v1651, %v2664
    %v2666 = vsel %vm2189, %v2665, %v2661
    %v2667 = vlaneseq
    %v2668 = vshrl.u32 %v2667, 7
    %v2669 = vsub.s32 %v2191, %v2668
    %v2670 = vrot.slane %v1654, %v2669
    %v2671 = vsel %vm2196, %v2670, %v2666
    %v2672 = vlaneseq
    %v2673 = vshrl.u32 %v2672, 7
    %v2674 = vsub.s32 %v2088, %v2673
    %v2675 = vrot.slane %v1657, %v2674
    %v2676 = vlaneseq
    %v2677 = vshrl.u32 %v2676, 7
    %v2678 = vsub.s32 %v2093, %v2677
    %v2679 = vrot.slane %v1660, %v2678
    %v2680 = vsel %vm2098, %v2679, %v2675
    %v2681 = vlaneseq
    %v2682 = vshrl.u32 %v2681, 7
    %v2683 = vsub.s32 %v2100, %v2682
    %v2684 = vrot.slane %v1663, %v2683
    %v2685 = vsel %vm2105, %v2684, %v2680
    %v2686 = vlaneseq
    %v2687 = vshrl.u32 %v2686, 7
    %v2688 = vsub.s32 %v2107, %v2687
    %v2689 = vrot.slane %v1666, %v2688
    %v2690 = vsel %vm2112, %v2689, %v2685
    %v2691 = vlaneseq
    %v2692 = vshrl.u32 %v2691, 7
    %v2693 = vsub.s32 %v2114, %v2692
    %v2694 = vrot.slane %v1669, %v2693
    %v2695 = vsel %vm2119, %v2694, %v2690
    %v2696 = vlaneseq
    %v2697 = vshrl.u32 %v2696, 7
    %v2698 = vsub.s32 %v2121, %v2697
    %v2699 = vrot.slane %v1672, %v2698
    %v2700 = vsel %vm2126, %v2699, %v2695
    %v2701 = vlaneseq
    %v2702 = vshrl.u32 %v2701, 7
    %v2703 = vsub.s32 %v2128, %v2702
    %v2704 = vrot.slane %v1675, %v2703
    %v2705 = vsel %vm2133, %v2704, %v2700
    %v2706 = vlaneseq
    %v2707 = vshrl.u32 %v2706, 7
    %v2708 = vsub.s32 %v2135, %v2707
    %v2709 = vrot.slane %v1678, %v2708
    %v2710 = vsel %vm2140, %v2709, %v2705
    %v2711 = vlaneseq
    %v2712 = vshrl.u32 %v2711, 7
    %v2713 = vsub.s32 %v2142, %v2712
    %v2714 = vrot.slane %v1681, %v2713
    %v2715 = vsel %vm2147, %v2714, %v2710
    %v2716 = vlaneseq
    %v2717 = vshrl.u32 %v2716, 7
    %v2718 = vsub.s32 %v2149, %v2717
    %v2719 = vrot.slane %v1684, %v2718
    %v2720 = vsel %vm2154, %v2719, %v2715
    %v2721 = vlaneseq
    %v2722 = vshrl.u32 %v2721, 7
    %v2723 = vsub.s32 %v2156, %v2722
    %v2724 = vrot.slane %v1687, %v2723
    %v2725 = vsel %vm2161, %v2724, %v2720
    %v2726 = vlaneseq
    %v2727 = vshrl.u32 %v2726, 7
    %v2728 = vsub.s32 %v2163, %v2727
    %v2729 = vrot.slane %v1690, %v2728
    %v2730 = vsel %vm2168, %v2729, %v2725
    %v2731 = vlaneseq
    %v2732 = vshrl.u32 %v2731, 7
    %v2733 = vsub.s32 %v2170, %v2732
    %v2734 = vrot.slane %v1693, %v2733
    %v2735 = vsel %vm2175, %v2734, %v2730
    %v2736 = vlaneseq
    %v2737 = vshrl.u32 %v2736, 7
    %v2738 = vsub.s32 %v2177, %v2737
    %v2739 = vrot.slane %v1696, %v2738
    %v2740 = vsel %vm2182, %v2739, %v2735
    %v2741 = vlaneseq
    %v2742 = vshrl.u32 %v2741, 7
    %v2743 = vsub.s32 %v2184, %v2742
    %v2744 = vrot.slane %v1699, %v2743
    %v2745 = vsel %vm2189, %v2744, %v2740
    %v2746 = vlaneseq
    %v2747 = vshrl.u32 %v2746, 7
    %v2748 = vsub.s32 %v2191, %v2747
    %v2749 = vrot.slane %v1702, %v2748
    %v2750 = vsel %vm2196, %v2749, %v2745
    %v2751 = vlaneseq
    %v2752 = vshrl.u32 %v2751, 7
    %v2753 = vsub.s32 %v2088, %v2752
    %v2754 = vrot.slane %v1705, %v2753
    %v2755 = vlaneseq
    %v2756 = vshrl.u32 %v2755, 7
    %v2757 = vsub.s32 %v2093, %v2756
    %v2758 = vrot.slane %v1708, %v2757
    %v2759 = vsel %vm2098, %v2758, %v2754
    %v2760 = vlaneseq
    %v2761 = vshrl.u32 %v2760, 7
    %v2762 = vsub.s32 %v2100, %v2761
    %v2763 = vrot.slane %v1711, %v2762
    %v2764 = vsel %vm2105, %v2763, %v2759
    %v2765 = vlaneseq
    %v2766 = vshrl.u32 %v2765, 7
    %v2767 = vsub.s32 %v2107, %v2766
    %v2768 = vrot.slane %v1714, %v2767
    %v2769 = vsel %vm2112, %v2768, %v2764
    %v2770 = vlaneseq
    %v2771 = vshrl.u32 %v2770, 7
    %v2772 = vsub.s32 %v2114, %v2771
    %v2773 = vrot.slane %v1717, %v2772
    %v2774 = vsel %vm2119, %v2773, %v2769
    %v2775 = vlaneseq
    %v2776 = vshrl.u32 %v2775, 7
    %v2777 = vsub.s32 %v2121, %v2776
    %v2778 = vrot.slane %v1720, %v2777
    %v2779 = vsel %vm2126, %v2778, %v2774
    %v2780 = vlaneseq
    %v2781 = vshrl.u32 %v2780, 7
    %v2782 = vsub.s32 %v2128, %v2781
    %v2783 = vrot.slane %v1723, %v2782
    %v2784 = vsel %vm2133, %v2783, %v2779
    %v2785 = vlaneseq
    %v2786 = vshrl.u32 %v2785, 7
    %v2787 = vsub.s32 %v2135, %v2786
    %v2788 = vrot.slane %v1726, %v2787
    %v2789 = vsel %vm2140, %v2788, %v2784
    %v2790 = vlaneseq
    %v2791 = vshrl.u32 %v2790, 7
    %v2792 = vsub.s32 %v2142, %v2791
    %v2793 = vrot.slane %v1729, %v2792
    %v2794 = vsel %vm2147, %v2793, %v2789
    %v2795 = vlaneseq
    %v2796 = vshrl.u32 %v2795, 7
    %v2797 = vsub.s32 %v2149, %v2796
    %v2798 = vrot.slane %v1732, %v2797
    %v2799 = vsel %vm2154, %v2798, %v2794
    %v2800 = vlaneseq
    %v2801 = vshrl.u32 %v2800, 7
    %v2802 = vsub.s32 %v2156, %v2801
    %v2803 = vrot.slane %v1735, %v2802
    %v2804 = vsel %vm2161, %v2803, %v2799
    %v2805 = vlaneseq
    %v2806 = vshrl.u32 %v2805, 7
    %v2807 = vsub.s32 %v2163, %v2806
    %v2808 = vrot.slane %v1738, %v2807
    %v2809 = vsel %vm2168, %v2808, %v2804
    %v2810 = vlaneseq
    %v2811 = vshrl.u32 %v2810, 7
    %v2812 = vsub.s32 %v2170, %v2811
    %v2813 = vrot.slane %v1741, %v2812
    %v2814 = vsel %vm2175, %v2813, %v2809
    %v2815 = vlaneseq
    %v2816 = vshrl.u32 %v2815, 7
    %v2817 = vsub.s32 %v2177, %v2816
    %v2818 = vrot.slane %v1744, %v2817
    %v2819 = vsel %vm2182, %v2818, %v2814
    %v2820 = vlaneseq
    %v2821 = vshrl.u32 %v2820, 7
    %v2822 = vsub.s32 %v2184, %v2821
    %v2823 = vrot.slane %v1747, %v2822
    %v2824 = vsel %vm2189, %v2823, %v2819
    %v2825 = vlaneseq
    %v2826 = vshrl.u32 %v2825, 7
    %v2827 = vsub.s32 %v2191, %v2826
    %v2828 = vrot.slane %v1750, %v2827
    %v2829 = vsel %vm2196, %v2828, %v2824
    %v2830 = vlaneseq
    %v2831 = vshrl.u32 %v2830, 7
    %v2832 = vsub.s32 %v2088, %v2831
    %v2833 = vrot.slane %v1753, %v2832
    %v2834 = vlaneseq
    %v2835 = vshrl.u32 %v2834, 7
    %v2836 = vsub.s32 %v2093, %v2835
    %v2837 = vrot.slane %v1756, %v2836
    %v2838 = vsel %vm2098, %v2837, %v2833
    %v2839 = vlaneseq
    %v2840 = vshrl.u32 %v2839, 7
    %v2841 = vsub.s32 %v2100, %v2840
    %v2842 = vrot.slane %v1759, %v2841
    %v2843 = vsel %vm2105, %v2842, %v2838
    %v2844 = vlaneseq
    %v2845 = vshrl.u32 %v2844, 7
    %v2846 = vsub.s32 %v2107, %v2845
    %v2847 = vrot.slane %v1762, %v2846
    %v2848 = vsel %vm2112, %v2847, %v2843
    %v2849 = vlaneseq
    %v2850 = vshrl.u32 %v2849, 7
    %v2851 = vsub.s32 %v2114, %v2850
    %v2852 = vrot.slane %v1765, %v2851
    %v2853 = vsel %vm2119, %v2852, %v2848
    %v2854 = vlaneseq
    %v2855 = vshrl.u32 %v2854, 7
    %v2856 = vsub.s32 %v2121, %v2855
    %v2857 = vrot.slane %v1768, %v2856
    %v2858 = vsel %vm2126, %v2857, %v2853
    %v2859 = vlaneseq
    %v2860 = vshrl.u32 %v2859, 7
    %v2861 = vsub.s32 %v2128, %v2860
    %v2862 = vrot.slane %v1771, %v2861
    %v2863 = vsel %vm2133, %v2862, %v2858
    %v2864 = vlaneseq
    %v2865 = vshrl.u32 %v2864, 7
    %v2866 = vsub.s32 %v2135, %v2865
    %v2867 = vrot.slane %v1774, %v2866
    %v2868 = vsel %vm2140, %v2867, %v2863
    %v2869 = vlaneseq
    %v2870 = vshrl.u32 %v2869, 7
    %v2871 = vsub.s32 %v2142, %v2870
    %v2872 = vrot.slane %v1777, %v2871
    %v2873 = vsel %vm2147, %v2872, %v2868
    %v2874 = vlaneseq
    %v2875 = vshrl.u32 %v2874, 7
    %v2876 = vsub.s32 %v2149, %v2875
    %v2877 = vrot.slane %v1780, %v2876
    %v2878 = vsel %vm2154, %v2877, %v2873
    %v2879 = vlaneseq
    %v2880 = vshrl.u32 %v2879, 7
    %v2881 = vsub.s32 %v2156, %v2880
    %v2882 = vrot.slane %v1783, %v2881
    %v2883 = vsel %vm2161, %v2882, %v2878
    %v2884 = vlaneseq
    %v2885 = vshrl.u32 %v2884, 7
    %v2886 = vsub.s32 %v2163, %v2885
    %v2887 = vrot.slane %v1786, %v2886
    %v2888 = vsel %vm2168, %v2887, %v2883
    %v2889 = vlaneseq
    %v2890 = vshrl.u32 %v2889, 7
    %v2891 = vsub.s32 %v2170, %v2890
    %v2892 = vrot.slane %v1789, %v2891
    %v2893 = vsel %vm2175, %v2892, %v2888
    %v2894 = vlaneseq
    %v2895 = vshrl.u32 %v2894, 7
    %v2896 = vsub.s32 %v2177, %v2895
    %v2897 = vrot.slane %v1792, %v2896
    %v2898 = vsel %vm2182, %v2897, %v2893
    %v2899 = vlaneseq
    %v2900 = vshrl.u32 %v2899, 7
    %v2901 = vsub.s32 %v2184, %v2900
    %v2902 = vrot.slane %v1795, %v2901
    %v2903 = vsel %vm2189, %v2902, %v2898
    %v2904 = vlaneseq
    %v2905 = vshrl.u32 %v2904, 7
    %v2906 = vsub.s32 %v2191, %v2905
    %v2907 = vrot.slane %v1798, %v2906
    %v2908 = vsel %vm2196, %v2907, %v2903
    %v2909 = vlaneseq
    %v2910 = vshrl.u32 %v2909, 7
    %v2911 = vsub.s32 %v2088, %v2910
    %v2912 = vrot.slane %v1801, %v2911
    %v2913 = vlaneseq
    %v2914 = vshrl.u32 %v2913, 7
    %v2915 = vsub.s32 %v2093, %v2914
    %v2916 = vrot.slane %v1804, %v2915
    %v2917 = vsel %vm2098, %v2916, %v2912
    %v2918 = vlaneseq
    %v2919 = vshrl.u32 %v2918, 7
    %v2920 = vsub.s32 %v2100, %v2919
    %v2921 = vrot.slane %v1807, %v2920
    %v2922 = vsel %vm2105, %v2921, %v2917
    %v2923 = vlaneseq
    %v2924 = vshrl.u32 %v2923, 7
    %v2925 = vsub.s32 %v2107, %v2924
    %v2926 = vrot.slane %v1810, %v2925
    %v2927 = vsel %vm2112, %v2926, %v2922
    %v2928 = vlaneseq
    %v2929 = vshrl.u32 %v2928, 7
    %v2930 = vsub.s32 %v2114, %v2929
    %v2931 = vrot.slane %v1813, %v2930
    %v2932 = vsel %vm2119, %v2931, %v2927
    %v2933 = vlaneseq
    %v2934 = vshrl.u32 %v2933, 7
    %v2935 = vsub.s32 %v2121, %v2934
    %v2936 = vrot.slane %v1816, %v2935
    %v2937 = vsel %vm2126, %v2936, %v2932
    %v2938 = vlaneseq
    %v2939 = vshrl.u32 %v2938, 7
    %v2940 = vsub.s32 %v2128, %v2939
    %v2941 = vrot.slane %v1819, %v2940
    %v2942 = vsel %vm2133, %v2941, %v2937
    %v2943 = vlaneseq
    %v2944 = vshrl.u32 %v2943, 7
    %v2945 = vsub.s32 %v2135, %v2944
    %v2946 = vrot.slane %v1822, %v2945
    %v2947 = vsel %vm2140, %v2946, %v2942
    %v2948 = vlaneseq
    %v2949 = vshrl.u32 %v2948, 7
    %v2950 = vsub.s32 %v2142, %v2949
    %v2951 = vrot.slane %v1825, %v2950
    %v2952 = vsel %vm2147, %v2951, %v2947
    %v2953 = vlaneseq
    %v2954 = vshrl.u32 %v2953, 7
    %v2955 = vsub.s32 %v2149, %v2954
    %v2956 = vrot.slane %v1828, %v2955
    %v2957 = vsel %vm2154, %v2956, %v2952
    %v2958 = vlaneseq
    %v2959 = vshrl.u32 %v2958, 7
    %v2960 = vsub.s32 %v2156, %v2959
    %v2961 = vrot.slane %v1831, %v2960
    %v2962 = vsel %vm2161, %v2961, %v2957
    %v2963 = vlaneseq
    %v2964 = vshrl.u32 %v2963, 7
    %v2965 = vsub.s32 %v2163, %v2964
    %v2966 = vrot.slane %v1834, %v2965
    %v2967 = vsel %vm2168, %v2966, %v2962
    %v2968 = vlaneseq
    %v2969 = vshrl.u32 %v2968, 7
    %v2970 = vsub.s32 %v2170, %v2969
    %v2971 = vrot.slane %v1837, %v2970
    %v2972 = vsel %vm2175, %v2971, %v2967
    %v2973 = vlaneseq
    %v2974 = vshrl.u32 %v2973, 7
    %v2975 = vsub.s32 %v2177, %v2974
    %v2976 = vrot.slane %v1840, %v2975
    %v2977 = vsel %vm2182, %v2976, %v2972
    %v2978 = vlaneseq
    %v2979 = vshrl.u32 %v2978, 7
    %v2980 = vsub.s32 %v2184, %v2979
    %v2981 = vrot.slane %v1843, %v2980
    %v2982 = vsel %vm2189, %v2981, %v2977
    %v2983 = vlaneseq
    %v2984 = vshrl.u32 %v2983, 7
    %v2985 = vsub.s32 %v2191, %v2984
    %v2986 = vrot.slane %v1846, %v2985
    %v2987 = vsel %vm2196, %v2986, %v2982
    %v2988 = vlaneseq
    %v2989 = vshrl.u32 %v2988, 7
    %v2990 = vsub.s32 %v2088, %v2989
    %v2991 = vrot.slane %v1849, %v2990
    %v2992 = vlaneseq
    %v2993 = vshrl.u32 %v2992, 7
    %v2994 = vsub.s32 %v2093, %v2993
    %v2995 = vrot.slane %v1852, %v2994
    %v2996 = vsel %vm2098, %v2995, %v2991
    %v2997 = vlaneseq
    %v2998 = vshrl.u32 %v2997, 7
    %v2999 = vsub.s32 %v2100, %v2998
    %v3000 = vrot.slane %v1855, %v2999
    %v3001 = vsel %vm2105, %v3000, %v2996
    %v3002 = vlaneseq
    %v3003 = vshrl.u32 %v3002, 7
    %v3004 = vsub.s32 %v2107, %v3003
    %v3005 = vrot.slane %v1858, %v3004
    %v3006 = vsel %vm2112, %v3005, %v3001
    %v3007 = vlaneseq
    %v3008 = vshrl.u32 %v3007, 7
    %v3009 = vsub.s32 %v2114, %v3008
    %v3010 = vrot.slane %v1861, %v3009
    %v3011 = vsel %vm2119, %v3010, %v3006
    %v3012 = vlaneseq
    %v3013 = vshrl.u32 %v3012, 7
    %v3014 = vsub.s32 %v2121, %v3013
    %v3015 = vrot.slane %v1864, %v3014
    %v3016 = vsel %vm2126, %v3015, %v3011
    %v3017 = vlaneseq
    %v3018 = vshrl.u32 %v3017, 7
    %v3019 = vsub.s32 %v2128, %v3018
    %v3020 = vrot.slane %v1867, %v3019
    %v3021 = vsel %vm2133, %v3020, %v3016
    %v3022 = vlaneseq
    %v3023 = vshrl.u32 %v3022, 7
    %v3024 = vsub.s32 %v2135, %v3023
    %v3025 = vrot.slane %v1870, %v3024
    %v3026 = vsel %vm2140, %v3025, %v3021
    %v3027 = vlaneseq
    %v3028 = vshrl.u32 %v3027, 7
    %v3029 = vsub.s32 %v2142, %v3028
    %v3030 = vrot.slane %v1873, %v3029
    %v3031 = vsel %vm2147, %v3030, %v3026
    %v3032 = vlaneseq
    %v3033 = vshrl.u32 %v3032, 7
    %v3034 = vsub.s32 %v2149, %v3033
    %v3035 = vrot.slane %v1876, %v3034
    %v3036 = vsel %vm2154, %v3035, %v3031
    %v3037 = vlaneseq
    %v3038 = vshrl.u32 %v3037, 7
    %v3039 = vsub.s32 %v2156, %v3038
    %v3040 = vrot.slane %v1879, %v3039
    %v3041 = vsel %vm2161, %v3040, %v3036
    %v3042 = vlaneseq
    %v3043 = vshrl.u32 %v3042, 7
    %v3044 = vsub.s32 %v2163, %v3043
    %v3045 = vrot.slane %v1882, %v3044
    %v3046 = vsel %vm2168, %v3045, %v3041
    %v3047 = vlaneseq
    %v3048 = vshrl.u32 %v3047, 7
    %v3049 = vsub.s32 %v2170, %v3048
    %v3050 = vrot.slane %v1885, %v3049
    %v3051 = vsel %vm2175, %v3050, %v3046
    %v3052 = vlaneseq
    %v3053 = vshrl.u32 %v3052, 7
    %v3054 = vsub.s32 %v2177, %v3053
    %v3055 = vrot.slane %v1888, %v3054
    %v3056 = vsel %vm2182, %v3055, %v3051
    %v3057 = vlaneseq
    %v3058 = vshrl.u32 %v3057, 7
    %v3059 = vsub.s32 %v2184, %v3058
    %v3060 = vrot.slane %v1891, %v3059
    %v3061 = vsel %vm2189, %v3060, %v3056
    %v3062 = vlaneseq
    %v3063 = vshrl.u32 %v3062, 7
    %v3064 = vsub.s32 %v2191, %v3063
    %v3065 = vrot.slane %v1894, %v3064
    %v3066 = vsel %vm2196, %v3065, %v3061
    %v3067 = vlaneseq
    %v3068 = vshrl.u32 %v3067, 7
    %v3069 = vsub.s32 %v2088, %v3068
    %v3070 = vrot.slane %v1897, %v3069
    %v3071 = vlaneseq
    %v3072 = vshrl.u32 %v3071, 7
    %v3073 = vsub.s32 %v2093, %v3072
    %v3074 = vrot.slane %v1900, %v3073
    %v3075 = vsel %vm2098, %v3074, %v3070
    %v3076 = vlaneseq
    %v3077 = vshrl.u32 %v3076, 7
    %v3078 = vsub.s32 %v2100, %v3077
    %v3079 = vrot.slane %v1903, %v3078
    %v3080 = vsel %vm2105, %v3079, %v3075
    %v3081 = vlaneseq
    %v3082 = vshrl.u32 %v3081, 7
    %v3083 = vsub.s32 %v2107, %v3082
    %v3084 = vrot.slane %v1906, %v3083
    %v3085 = vsel %vm2112, %v3084, %v3080
    %v3086 = vlaneseq
    %v3087 = vshrl.u32 %v3086, 7
    %v3088 = vsub.s32 %v2114, %v3087
    %v3089 = vrot.slane %v1909, %v3088
    %v3090 = vsel %vm2119, %v3089, %v3085
    %v3091 = vlaneseq
    %v3092 = vshrl.u32 %v3091, 7
    %v3093 = vsub.s32 %v2121, %v3092
    %v3094 = vrot.slane %v1912, %v3093
    %v3095 = vsel %vm2126, %v3094, %v3090
    %v3096 = vlaneseq
    %v3097 = vshrl.u32 %v3096, 7
    %v3098 = vsub.s32 %v2128, %v3097
    %v3099 = vrot.slane %v1915, %v3098
    %v3100 = vsel %vm2133, %v3099, %v3095
    %v3101 = vlaneseq
    %v3102 = vshrl.u32 %v3101, 7
    %v3103 = vsub.s32 %v2135, %v3102
    %v3104 = vrot.slane %v1918, %v3103
    %v3105 = vsel %vm2140, %v3104, %v3100
    %v3106 = vlaneseq
    %v3107 = vshrl.u32 %v3106, 7
    %v3108 = vsub.s32 %v2142, %v3107
    %v3109 = vrot.slane %v1921, %v3108
    %v3110 = vsel %vm2147, %v3109, %v3105
    %v3111 = vlaneseq
    %v3112 = vshrl.u32 %v3111, 7
    %v3113 = vsub.s32 %v2149, %v3112
    %v3114 = vrot.slane %v1924, %v3113
    %v3115 = vsel %vm2154, %v3114, %v3110
    %v3116 = vlaneseq
    %v3117 = vshrl.u32 %v3116, 7
    %v3118 = vsub.s32 %v2156, %v3117
    %v3119 = vrot.slane %v1927, %v3118
    %v3120 = vsel %vm2161, %v3119, %v3115
    %v3121 = vlaneseq
    %v3122 = vshrl.u32 %v3121, 7
    %v3123 = vsub.s32 %v2163, %v3122
    %v3124 = vrot.slane %v1930, %v3123
    %v3125 = vsel %vm2168, %v3124, %v3120
    %v3126 = vlaneseq
    %v3127 = vshrl.u32 %v3126, 7
    %v3128 = vsub.s32 %v2170, %v3127
    %v3129 = vrot.slane %v1933, %v3128
    %v3130 = vsel %vm2175, %v3129, %v3125
    %v3131 = vlaneseq
    %v3132 = vshrl.u32 %v3131, 7
    %v3133 = vsub.s32 %v2177, %v3132
    %v3134 = vrot.slane %v1936, %v3133
    %v3135 = vsel %vm2182, %v3134, %v3130
    %v3136 = vlaneseq
    %v3137 = vshrl.u32 %v3136, 7
    %v3138 = vsub.s32 %v2184, %v3137
    %v3139 = vrot.slane %v1939, %v3138
    %v3140 = vsel %vm2189, %v3139, %v3135
    %v3141 = vlaneseq
    %v3142 = vshrl.u32 %v3141, 7
    %v3143 = vsub.s32 %v2191, %v3142
    %v3144 = vrot.slane %v1942, %v3143
    %v3145 = vsel %vm2196, %v3144, %v3140
    %v3146 = vlaneseq
    %v3147 = vshrl.u32 %v3146, 7
    %v3148 = vsub.s32 %v2088, %v3147
    %v3149 = vrot.slane %v1945, %v3148
    %v3150 = vlaneseq
    %v3151 = vshrl.u32 %v3150, 7
    %v3152 = vsub.s32 %v2093, %v3151
    %v3153 = vrot.slane %v1948, %v3152
    %v3154 = vsel %vm2098, %v3153, %v3149
    %v3155 = vlaneseq
    %v3156 = vshrl.u32 %v3155, 7
    %v3157 = vsub.s32 %v2100, %v3156
    %v3158 = vrot.slane %v1951, %v3157
    %v3159 = vsel %vm2105, %v3158, %v3154
    %v3160 = vlaneseq
    %v3161 = vshrl.u32 %v3160, 7
    %v3162 = vsub.s32 %v2107, %v3161
    %v3163 = vrot.slane %v1954, %v3162
    %v3164 = vsel %vm2112, %v3163, %v3159
    %v3165 = vlaneseq
    %v3166 = vshrl.u32 %v3165, 7
    %v3167 = vsub.s32 %v2114, %v3166
    %v3168 = vrot.slane %v1957, %v3167
    %v3169 = vsel %vm2119, %v3168, %v3164
    %v3170 = vlaneseq
    %v3171 = vshrl.u32 %v3170, 7
    %v3172 = vsub.s32 %v2121, %v3171
    %v3173 = vrot.slane %v1960, %v3172
    %v3174 = vsel %vm2126, %v3173, %v3169
    %v3175 = vlaneseq
    %v3176 = vshrl.u32 %v3175, 7
    %v3177 = vsub.s32 %v2128, %v3176
    %v3178 = vrot.slane %v1963, %v3177
    %v3179 = vsel %vm2133, %v3178, %v3174
    %v3180 = vlaneseq
    %v3181 = vshrl.u32 %v3180, 7
    %v3182 = vsub.s32 %v2135, %v3181
    %v3183 = vrot.slane %v1966, %v3182
    %v3184 = vsel %vm2140, %v3183, %v3179
    %v3185 = vlaneseq
    %v3186 = vshrl.u32 %v3185, 7
    %v3187 = vsub.s32 %v2142, %v3186
    %v3188 = vrot.slane %v1969, %v3187
    %v3189 = vsel %vm2147, %v3188, %v3184
    %v3190 = vlaneseq
    %v3191 = vshrl.u32 %v3190, 7
    %v3192 = vsub.s32 %v2149, %v3191
    %v3193 = vrot.slane %v1972, %v3192
    %v3194 = vsel %vm2154, %v3193, %v3189
    %v3195 = vlaneseq
    %v3196 = vshrl.u32 %v3195, 7
    %v3197 = vsub.s32 %v2156, %v3196
    %v3198 = vrot.slane %v1975, %v3197
    %v3199 = vsel %vm2161, %v3198, %v3194
    %v3200 = vlaneseq
    %v3201 = vshrl.u32 %v3200, 7
    %v3202 = vsub.s32 %v2163, %v3201
    %v3203 = vrot.slane %v1978, %v3202
    %v3204 = vsel %vm2168, %v3203, %v3199
    %v3205 = vlaneseq
    %v3206 = vshrl.u32 %v3205, 7
    %v3207 = vsub.s32 %v2170, %v3206
    %v3208 = vrot.slane %v1981, %v3207
    %v3209 = vsel %vm2175, %v3208, %v3204
    %v3210 = vlaneseq
    %v3211 = vshrl.u32 %v3210, 7
    %v3212 = vsub.s32 %v2177, %v3211
    %v3213 = vrot.slane %v1984, %v3212
    %v3214 = vsel %vm2182, %v3213, %v3209
    %v3215 = vlaneseq
    %v3216 = vshrl.u32 %v3215, 7
    %v3217 = vsub.s32 %v2184, %v3216
    %v3218 = vrot.slane %v1987, %v3217
    %v3219 = vsel %vm2189, %v3218, %v3214
    %v3220 = vlaneseq
    %v3221 = vshrl.u32 %v3220, 7
    %v3222 = vsub.s32 %v2191, %v3221
    %v3223 = vrot.slane %v1990, %v3222
    %v3224 = vsel %vm2196, %v3223, %v3219
    %v3225 = vlaneseq
    %v3226 = vshrl.u32 %v3225, 7
    %v3227 = vsub.s32 %v2088, %v3226
    %v3228 = vrot.slane %v1993, %v3227
    %v3229 = vlaneseq
    %v3230 = vshrl.u32 %v3229, 7
    %v3231 = vsub.s32 %v2093, %v3230
    %v3232 = vrot.slane %v1996, %v3231
    %v3233 = vsel %vm2098, %v3232, %v3228
    %v3234 = vlaneseq
    %v3235 = vshrl.u32 %v3234, 7
    %v3236 = vsub.s32 %v2100, %v3235
    %v3237 = vrot.slane %v1999, %v3236
    %v3238 = vsel %vm2105, %v3237, %v3233
    %v3239 = vlaneseq
    %v3240 = vshrl.u32 %v3239, 7
    %v3241 = vsub.s32 %v2107, %v3240
    %v3242 = vrot.slane %v2002, %v3241
    %v3243 = vsel %vm2112, %v3242, %v3238
    %v3244 = vlaneseq
    %v3245 = vshrl.u32 %v3244, 7
    %v3246 = vsub.s32 %v2114, %v3245
    %v3247 = vrot.slane %v2005, %v3246
    %v3248 = vsel %vm2119, %v3247, %v3243
    %v3249 = vlaneseq
    %v3250 = vshrl.u32 %v3249, 7
    %v3251 = vsub.s32 %v2121, %v3250
    %v3252 = vrot.slane %v2008, %v3251
    %v3253 = vsel %vm2126, %v3252, %v3248
    %v3254 = vlaneseq
    %v3255 = vshrl.u32 %v3254, 7
    %v3256 = vsub.s32 %v2128, %v3255
    %v3257 = vrot.slane %v2011, %v3256
    %v3258 = vsel %vm2133, %v3257, %v3253
    %v3259 = vlaneseq
    %v3260 = vshrl.u32 %v3259, 7
    %v3261 = vsub.s32 %v2135, %v3260
    %v3262 = vrot.slane %v2014, %v3261
    %v3263 = vsel %vm2140, %v3262, %v3258
    %v3264 = vlaneseq
    %v3265 = vshrl.u32 %v3264, 7
    %v3266 = vsub.s32 %v2142, %v3265
    %v3267 = vrot.slane %v2017, %v3266
    %v3268 = vsel %vm2147, %v3267, %v3263
    %v3269 = vlaneseq
    %v3270 = vshrl.u32 %v3269, 7
    %v3271 = vsub.s32 %v2149, %v3270
    %v3272 = vrot.slane %v2020, %v3271
    %v3273 = vsel %vm2154, %v3272, %v3268
    %v3274 = vlaneseq
    %v3275 = vshrl.u32 %v3274, 7
    %v3276 = vsub.s32 %v2156, %v3275
    %v3277 = vrot.slane %v2023, %v3276
    %v3278 = vsel %vm2161, %v3277, %v3273
    %v3279 = vlaneseq
    %v3280 = vshrl.u32 %v3279, 7
    %v3281 = vsub.s32 %v2163, %v3280
    %v3282 = vrot.slane %v2026, %v3281
    %v3283 = vsel %vm2168, %v3282, %v3278
    %v3284 = vlaneseq
    %v3285 = vshrl.u32 %v3284, 7
    %v3286 = vsub.s32 %v2170, %v3285
    %v3287 = vrot.slane %v2029, %v3286
    %v3288 = vsel %vm2175, %v3287, %v3283
    %v3289 = vlaneseq
    %v3290 = vshrl.u32 %v3289, 7
    %v3291 = vsub.s32 %v2177, %v3290
    %v3292 = vrot.slane %v2032, %v3291
    %v3293 = vsel %vm2182, %v3292, %v3288
    %v3294 = vlaneseq
    %v3295 = vshrl.u32 %v3294, 7
    %v3296 = vsub.s32 %v2184, %v3295
    %v3297 = vrot.slane %v2035, %v3296
    %v3298 = vsel %vm2189, %v3297, %v3293
    %v3299 = vlaneseq
    %v3300 = vshrl.u32 %v3299, 7
    %v3301 = vsub.s32 %v2191, %v3300
    %v3302 = vrot.slane %v2038, %v3301
    %v3303 = vsel %vm2196, %v3302, %v3298
    %v3304 = vlaneseq
    %v3305 = vshrl.u32 %v3304, 7
    %v3306 = vsub.s32 %v2088, %v3305
    %v3307 = vrot.slane %v2041, %v3306
    %v3308 = vlaneseq
    %v3309 = vshrl.u32 %v3308, 7
    %v3310 = vsub.s32 %v2093, %v3309
    %v3311 = vrot.slane %v2044, %v3310
    %v3312 = vsel %vm2098, %v3311, %v3307
    %v3313 = vlaneseq
    %v3314 = vshrl.u32 %v3313, 7
    %v3315 = vsub.s32 %v2100, %v3314
    %v3316 = vrot.slane %v2047, %v3315
    %v3317 = vsel %vm2105, %v3316, %v3312
    %v3318 = vlaneseq
    %v3319 = vshrl.u32 %v3318, 7
    %v3320 = vsub.s32 %v2107, %v3319
    %v3321 = vrot.slane %v2050, %v3320
    %v3322 = vsel %vm2112, %v3321, %v3317
    %v3323 = vlaneseq
    %v3324 = vshrl.u32 %v3323, 7
    %v3325 = vsub.s32 %v2114, %v3324
    %v3326 = vrot.slane %v2053, %v3325
    %v3327 = vsel %vm2119, %v3326, %v3322
    %v3328 = vlaneseq
    %v3329 = vshrl.u32 %v3328, 7
    %v3330 = vsub.s32 %v2121, %v3329
    %v3331 = vrot.slane %v2056, %v3330
    %v3332 = vsel %vm2126, %v3331, %v3327
    %v3333 = vlaneseq
    %v3334 = vshrl.u32 %v3333, 7
    %v3335 = vsub.s32 %v2128, %v3334
    %v3336 = vrot.slane %v2059, %v3335
    %v3337 = vsel %vm2133, %v3336, %v3332
    %v3338 = vlaneseq
    %v3339 = vshrl.u32 %v3338, 7
    %v3340 = vsub.s32 %v2135, %v3339
    %v3341 = vrot.slane %v2062, %v3340
    %v3342 = vsel %vm2140, %v3341, %v3337
    %v3343 = vlaneseq
    %v3344 = vshrl.u32 %v3343, 7
    %v3345 = vsub.s32 %v2142, %v3344
    %v3346 = vrot.slane %v2065, %v3345
    %v3347 = vsel %vm2147, %v3346, %v3342
    %v3348 = vlaneseq
    %v3349 = vshrl.u32 %v3348, 7
    %v3350 = vsub.s32 %v2149, %v3349
    %v3351 = vrot.slane %v2068, %v3350
    %v3352 = vsel %vm2154, %v3351, %v3347
    %v3353 = vlaneseq
    %v3354 = vshrl.u32 %v3353, 7
    %v3355 = vsub.s32 %v2156, %v3354
    %v3356 = vrot.slane %v2071, %v3355
    %v3357 = vsel %vm2161, %v3356, %v3352
    %v3358 = vlaneseq
    %v3359 = vshrl.u32 %v3358, 7
    %v3360 = vsub.s32 %v2163, %v3359
    %v3361 = vrot.slane %v2074, %v3360
    %v3362 = vsel %vm2168, %v3361, %v3357
    %v3363 = vlaneseq
    %v3364 = vshrl.u32 %v3363, 7
    %v3365 = vsub.s32 %v2170, %v3364
    %v3366 = vrot.slane %v2077, %v3365
    %v3367 = vsel %vm2175, %v3366, %v3362
    %v3368 = vlaneseq
    %v3369 = vshrl.u32 %v3368, 7
    %v3370 = vsub.s32 %v2177, %v3369
    %v3371 = vrot.slane %v2080, %v3370
    %v3372 = vsel %vm2182, %v3371, %v3367
    %v3373 = vlaneseq
    %v3374 = vshrl.u32 %v3373, 7
    %v3375 = vsub.s32 %v2184, %v3374
    %v3376 = vrot.slane %v2083, %v3375
    %v3377 = vsel %vm2189, %v3376, %v3372
    %v3378 = vlaneseq
    %v3379 = vshrl.u32 %v3378, 7
    %v3380 = vsub.s32 %v2191, %v3379
    %v3381 = vrot.slane %v2086, %v3380
    %v3382 = vsel %vm2196, %v3381, %v3377
    %vm3383 = vcmask 1041409
    %v3384 = vsel %vm3383, %v2829, %v2197
    %v3385 = vsel %vm3383, %v2908, %v2276
    %v3386 = vsel %vm3383, %v2987, %v2355
    %v3387 = vsel %vm3383, %v3066, %v2434
    %v3388 = vsel %vm3383, %v3145, %v2513
    %v3389 = vsel %vm3383, %v3224, %v2592
    %v3390 = vsel %vm3383, %v3303, %v2671
    %v3391 = vsel %vm3383, %v3382, %v2750
    %v3400 = vadd.f32 %v1026, %v3384
    %v3401 = vadd.f32 %v1030, %v3385
    %v3402 = vadd.f32 %v1034, %v3386
    %v3403 = vadd.f32 %v1038, %v3387
    %v3404 = vadd.f32 %v1042, %v3388
    %v3405 = vadd.f32 %v1046, %v3389
    %v3406 = vadd.f32 %v1050, %v3390
    %v3407 = vadd.f32 %v1054, %v3391
    %s3408 = scalar_lea.vmem [#allocation6], 1
    %v3409 = vld [vmem:[%s3408] ss:$4 sm:$0xff]
    %v3410 = vlaneseq
    %v3411 = vshrl.u32 %v3410, 7
    %v3412 = vsub.s32 1, %v3411
    %v3413 = vrot.slane %v85, %v3412
    %v3414 = vlaneseq
    %v3415 = vshrl.u32 %v3414, 7
    %v3416 = vsub.s32 1, %v3415
    %v3417 = vrot.slane %v90, %v3416
    %v3419 = vlaneseq
    %v3420 = vshrl.u32 %v3419, 7
    %v3421 = vsub.s32 0, %v3420
    %v3422 = vrot.slane %v3409, %v3421
    %v3423 = vlaneseq
    %v3424 = vshrl.u32 %v3423, 7
    %v3425 = vsub.s32 1, %v3424
    %v3426 = vrot.slane %v3409, %v3425
    %v3427 = vlaneseq
    %v3428 = vshrl.u32 %v3427, 7
    %v3429 = vsub.s32 2, %v3428
    %v3430 = vrot.slane %v3409, %v3429
    %v3431 = vlaneseq
    %v3432 = vshrl.u32 %v3431, 7
    %v3433 = vsub.s32 3, %v3432
    %v3434 = vrot.slane %v3409, %v3433
    %v3435 = vlaneseq
    %v3436 = vshrl.u32 %v3435, 7
    %v3437 = vsub.s32 4, %v3436
    %v3438 = vrot.slane %v3409, %v3437
    %v3439 = vlaneseq
    %v3440 = vshrl.u32 %v3439, 7
    %v3441 = vsub.s32 5, %v3440
    %v3442 = vrot.slane %v3409, %v3441
    %v3443 = vlaneseq
    %v3444 = vshrl.u32 %v3443, 7
    %v3445 = vsub.s32 6, %v3444
    %v3446 = vrot.slane %v3409, %v3445
    %v3447 = vlaneseq
    %v3448 = vshrl.u32 %v3447, 7
    %v3449 = vsub.s32 7, %v3448
    %v3450 = vrot.slane %v3409, %v3449
    %3452 = vbcast.lane.b32.xlu0 %v3422, 256
    %v3453 = vpop.permute.xlu0 %3452
    %s3455 = sor.u32 256, 8
    %3456 = vbcast.lane.b32.xlu0 %v3422, %s3455
    %v3457 = vpop.permute.xlu0 %3456
    %s3459 = sor.u32 256, 16
    %3460 = vbcast.lane.b32.xlu0 %v3422, %s3459
    %v3461 = vpop.permute.xlu0 %3460
    %s3463 = sor.u32 256, 24
    %3464 = vbcast.lane.b32.xlu0 %v3422, %s3463
    %v3465 = vpop.permute.xlu0 %3464
    %s3467 = sor.u32 256, 32
    %3468 = vbcast.lane.b32.xlu0 %v3422, %s3467
    %v3469 = vpop.permute.xlu0 %3468
    %s3471 = sor.u32 256, 40
    %3472 = vbcast.lane.b32.xlu0 %v3422, %s3471
    %v3473 = vpop.permute.xlu0 %3472
    %s3475 = sor.u32 256, 48
    %3476 = vbcast.lane.b32.xlu0 %v3422, %s3475
    %v3477 = vpop.permute.xlu0 %3476
    %s3479 = sor.u32 256, 56
    %3480 = vbcast.lane.b32.xlu0 %v3422, %s3479
    %v3481 = vpop.permute.xlu0 %3480
    %s3483 = sor.u32 256, 64
    %3484 = vbcast.lane.b32.xlu0 %v3422, %s3483
    %v3485 = vpop.permute.xlu0 %3484
    %s3487 = sor.u32 256, 72
    %3488 = vbcast.lane.b32.xlu0 %v3422, %s3487
    %v3489 = vpop.permute.xlu0 %3488
    %s3491 = sor.u32 256, 80
    %3492 = vbcast.lane.b32.xlu0 %v3422, %s3491
    %v3493 = vpop.permute.xlu0 %3492
    %s3495 = sor.u32 256, 88
    %3496 = vbcast.lane.b32.xlu0 %v3422, %s3495
    %v3497 = vpop.permute.xlu0 %3496
    %s3499 = sor.u32 256, 96
    %3500 = vbcast.lane.b32.xlu0 %v3422, %s3499
    %v3501 = vpop.permute.xlu0 %3500
    %s3503 = sor.u32 256, 104
    %3504 = vbcast.lane.b32.xlu0 %v3422, %s3503
    %v3505 = vpop.permute.xlu0 %3504
    %s3507 = sor.u32 256, 112
    %3508 = vbcast.lane.b32.xlu0 %v3422, %s3507
    %v3509 = vpop.permute.xlu0 %3508
    %s3511 = sor.u32 256, 120
    %3512 = vbcast.lane.b32.xlu0 %v3422, %s3511
    %v3513 = vpop.permute.xlu0 %3512
    %3515 = vbcast.lane.b32.xlu0 %v3426, 256
    %v3516 = vpop.permute.xlu0 %3515
    %s3518 = sor.u32 256, 8
    %3519 = vbcast.lane.b32.xlu0 %v3426, %s3518
    %v3520 = vpop.permute.xlu0 %3519
    %s3522 = sor.u32 256, 16
    %3523 = vbcast.lane.b32.xlu0 %v3426, %s3522
    %v3524 = vpop.permute.xlu0 %3523
    %s3526 = sor.u32 256, 24
    %3527 = vbcast.lane.b32.xlu0 %v3426, %s3526
    %v3528 = vpop.permute.xlu0 %3527
    %s3530 = sor.u32 256, 32
    %3531 = vbcast.lane.b32.xlu0 %v3426, %s3530
    %v3532 = vpop.permute.xlu0 %3531
    %s3534 = sor.u32 256, 40
    %3535 = vbcast.lane.b32.xlu0 %v3426, %s3534
    %v3536 = vpop.permute.xlu0 %3535
    %s3538 = sor.u32 256, 48
    %3539 = vbcast.lane.b32.xlu0 %v3426, %s3538
    %v3540 = vpop.permute.xlu0 %3539
    %s3542 = sor.u32 256, 56
    %3543 = vbcast.lane.b32.xlu0 %v3426, %s3542
    %v3544 = vpop.permute.xlu0 %3543
    %s3546 = sor.u32 256, 64
    %3547 = vbcast.lane.b32.xlu0 %v3426, %s3546
    %v3548 = vpop.permute.xlu0 %3547
    %s3550 = sor.u32 256, 72
    %3551 = vbcast.lane.b32.xlu0 %v3426, %s3550
    %v3552 = vpop.permute.xlu0 %3551
    %s3554 = sor.u32 256, 80
    %3555 = vbcast.lane.b32.xlu0 %v3426, %s3554
    %v3556 = vpop.permute.xlu0 %3555
    %s3558 = sor.u32 256, 88
    %3559 = vbcast.lane.b32.xlu0 %v3426, %s3558
    %v3560 = vpop.permute.xlu0 %3559
    %s3562 = sor.u32 256, 96
    %3563 = vbcast.lane.b32.xlu0 %v3426, %s3562
    %v3564 = vpop.permute.xlu0 %3563
    %s3566 = sor.u32 256, 104
    %3567 = vbcast.lane.b32.xlu0 %v3426, %s3566
    %v3568 = vpop.permute.xlu0 %3567
    %s3570 = sor.u32 256, 112
    %3571 = vbcast.lane.b32.xlu0 %v3426, %s3570
    %v3572 = vpop.permute.xlu0 %3571
    %s3574 = sor.u32 256, 120
    %3575 = vbcast.lane.b32.xlu0 %v3426, %s3574
    %v3576 = vpop.permute.xlu0 %3575
    %3578 = vbcast.lane.b32.xlu0 %v3430, 256
    %v3579 = vpop.permute.xlu0 %3578
    %s3581 = sor.u32 256, 8
    %3582 = vbcast.lane.b32.xlu0 %v3430, %s3581
    %v3583 = vpop.permute.xlu0 %3582
    %s3585 = sor.u32 256, 16
    %3586 = vbcast.lane.b32.xlu0 %v3430, %s3585
    %v3587 = vpop.permute.xlu0 %3586
    %s3589 = sor.u32 256, 24
    %3590 = vbcast.lane.b32.xlu0 %v3430, %s3589
    %v3591 = vpop.permute.xlu0 %3590
    %s3593 = sor.u32 256, 32
    %3594 = vbcast.lane.b32.xlu0 %v3430, %s3593
    %v3595 = vpop.permute.xlu0 %3594
    %s3597 = sor.u32 256, 40
    %3598 = vbcast.lane.b32.xlu0 %v3430, %s3597
    %v3599 = vpop.permute.xlu0 %3598
    %s3601 = sor.u32 256, 48
    %3602 = vbcast.lane.b32.xlu0 %v3430, %s3601
    %v3603 = vpop.permute.xlu0 %3602
    %s3605 = sor.u32 256, 56
    %3606 = vbcast.lane.b32.xlu0 %v3430, %s3605
    %v3607 = vpop.permute.xlu0 %3606
    %s3609 = sor.u32 256, 64
    %3610 = vbcast.lane.b32.xlu0 %v3430, %s3609
    %v3611 = vpop.permute.xlu0 %3610
    %s3613 = sor.u32 256, 72
    %3614 = vbcast.lane.b32.xlu0 %v3430, %s3613
    %v3615 = vpop.permute.xlu0 %3614
    %s3617 = sor.u32 256, 80
    %3618 = vbcast.lane.b32.xlu0 %v3430, %s3617
    %v3619 = vpop.permute.xlu0 %3618
    %s3621 = sor.u32 256, 88
    %3622 = vbcast.lane.b32.xlu0 %v3430, %s3621
    %v3623 = vpop.permute.xlu0 %3622
    %s3625 = sor.u32 256, 96
    %3626 = vbcast.lane.b32.xlu0 %v3430, %s3625
    %v3627 = vpop.permute.xlu0 %3626
    %s3629 = sor.u32 256, 104
    %3630 = vbcast.lane.b32.xlu0 %v3430, %s3629
    %v3631 = vpop.permute.xlu0 %3630
    %s3633 = sor.u32 256, 112
    %3634 = vbcast.lane.b32.xlu0 %v3430, %s3633
    %v3635 = vpop.permute.xlu0 %3634
    %s3637 = sor.u32 256, 120
    %3638 = vbcast.lane.b32.xlu0 %v3430, %s3637
    %v3639 = vpop.permute.xlu0 %3638
    %3641 = vbcast.lane.b32.xlu0 %v3434, 256
    %v3642 = vpop.permute.xlu0 %3641
    %s3644 = sor.u32 256, 8
    %3645 = vbcast.lane.b32.xlu0 %v3434, %s3644
    %v3646 = vpop.permute.xlu0 %3645
    %s3648 = sor.u32 256, 16
    %3649 = vbcast.lane.b32.xlu0 %v3434, %s3648
    %v3650 = vpop.permute.xlu0 %3649
    %s3652 = sor.u32 256, 24
    %3653 = vbcast.lane.b32.xlu0 %v3434, %s3652
    %v3654 = vpop.permute.xlu0 %3653
    %s3656 = sor.u32 256, 32
    %3657 = vbcast.lane.b32.xlu0 %v3434, %s3656
    %v3658 = vpop.permute.xlu0 %3657
    %s3660 = sor.u32 256, 40
    %3661 = vbcast.lane.b32.xlu0 %v3434, %s3660
    %v3662 = vpop.permute.xlu0 %3661
    %s3664 = sor.u32 256, 48
    %3665 = vbcast.lane.b32.xlu0 %v3434, %s3664
    %v3666 = vpop.permute.xlu0 %3665
    %s3668 = sor.u32 256, 56
    %3669 = vbcast.lane.b32.xlu0 %v3434, %s3668
    %v3670 = vpop.permute.xlu0 %3669
    %s3672 = sor.u32 256, 64
    %3673 = vbcast.lane.b32.xlu0 %v3434, %s3672
    %v3674 = vpop.permute.xlu0 %3673
    %s3676 = sor.u32 256, 72
    %3677 = vbcast.lane.b32.xlu0 %v3434, %s3676
    %v3678 = vpop.permute.xlu0 %3677
    %s3680 = sor.u32 256, 80
    %3681 = vbcast.lane.b32.xlu0 %v3434, %s3680
    %v3682 = vpop.permute.xlu0 %3681
    %s3684 = sor.u32 256, 88
    %3685 = vbcast.lane.b32.xlu0 %v3434, %s3684
    %v3686 = vpop.permute.xlu0 %3685
    %s3688 = sor.u32 256, 96
    %3689 = vbcast.lane.b32.xlu0 %v3434, %s3688
    %v3690 = vpop.permute.xlu0 %3689
    %s3692 = sor.u32 256, 104
    %3693 = vbcast.lane.b32.xlu0 %v3434, %s3692
    %v3694 = vpop.permute.xlu0 %3693
    %s3696 = sor.u32 256, 112
    %3697 = vbcast.lane.b32.xlu0 %v3434, %s3696
    %v3698 = vpop.permute.xlu0 %3697
    %s3700 = sor.u32 256, 120
    %3701 = vbcast.lane.b32.xlu0 %v3434, %s3700
    %v3702 = vpop.permute.xlu0 %3701
    %3704 = vbcast.lane.b32.xlu0 %v3438, 256
    %v3705 = vpop.permute.xlu0 %3704
    %s3707 = sor.u32 256, 8
    %3708 = vbcast.lane.b32.xlu0 %v3438, %s3707
    %v3709 = vpop.permute.xlu0 %3708
    %s3711 = sor.u32 256, 16
    %3712 = vbcast.lane.b32.xlu0 %v3438, %s3711
    %v3713 = vpop.permute.xlu0 %3712
    %s3715 = sor.u32 256, 24
    %3716 = vbcast.lane.b32.xlu0 %v3438, %s3715
    %v3717 = vpop.permute.xlu0 %3716
    %s3719 = sor.u32 256, 32
    %3720 = vbcast.lane.b32.xlu0 %v3438, %s3719
    %v3721 = vpop.permute.xlu0 %3720
    %s3723 = sor.u32 256, 40
    %3724 = vbcast.lane.b32.xlu0 %v3438, %s3723
    %v3725 = vpop.permute.xlu0 %3724
    %s3727 = sor.u32 256, 48
    %3728 = vbcast.lane.b32.xlu0 %v3438, %s3727
    %v3729 = vpop.permute.xlu0 %3728
    %s3731 = sor.u32 256, 56
    %3732 = vbcast.lane.b32.xlu0 %v3438, %s3731
    %v3733 = vpop.permute.xlu0 %3732
    %s3735 = sor.u32 256, 64
    %3736 = vbcast.lane.b32.xlu0 %v3438, %s3735
    %v3737 = vpop.permute.xlu0 %3736
    %s3739 = sor.u32 256, 72
    %3740 = vbcast.lane.b32.xlu0 %v3438, %s3739
    %v3741 = vpop.permute.xlu0 %3740
    %s3743 = sor.u32 256, 80
    %3744 = vbcast.lane.b32.xlu0 %v3438, %s3743
    %v3745 = vpop.permute.xlu0 %3744
    %s3747 = sor.u32 256, 88
    %3748 = vbcast.lane.b32.xlu0 %v3438, %s3747
    %v3749 = vpop.permute.xlu0 %3748
    %s3751 = sor.u32 256, 96
    %3752 = vbcast.lane.b32.xlu0 %v3438, %s3751
    %v3753 = vpop.permute.xlu0 %3752
    %s3755 = sor.u32 256, 104
    %3756 = vbcast.lane.b32.xlu0 %v3438, %s3755
    %v3757 = vpop.permute.xlu0 %3756
    %s3759 = sor.u32 256, 112
    %3760 = vbcast.lane.b32.xlu0 %v3438, %s3759
    %v3761 = vpop.permute.xlu0 %3760
    %s3763 = sor.u32 256, 120
    %3764 = vbcast.lane.b32.xlu0 %v3438, %s3763
    %v3765 = vpop.permute.xlu0 %3764
    %3767 = vbcast.lane.b32.xlu0 %v3442, 256
    %v3768 = vpop.permute.xlu0 %3767
    %s3770 = sor.u32 256, 8
    %3771 = vbcast.lane.b32.xlu0 %v3442, %s3770
    %v3772 = vpop.permute.xlu0 %3771
    %s3774 = sor.u32 256, 16
    %3775 = vbcast.lane.b32.xlu0 %v3442, %s3774
    %v3776 = vpop.permute.xlu0 %3775
    %s3778 = sor.u32 256, 24
    %3779 = vbcast.lane.b32.xlu0 %v3442, %s3778
    %v3780 = vpop.permute.xlu0 %3779
    %s3782 = sor.u32 256, 32
    %3783 = vbcast.lane.b32.xlu0 %v3442, %s3782
    %v3784 = vpop.permute.xlu0 %3783
    %s3786 = sor.u32 256, 40
    %3787 = vbcast.lane.b32.xlu0 %v3442, %s3786
    %v3788 = vpop.permute.xlu0 %3787
    %s3790 = sor.u32 256, 48
    %3791 = vbcast.lane.b32.xlu0 %v3442, %s3790
    %v3792 = vpop.permute.xlu0 %3791
    %s3794 = sor.u32 256, 56
    %3795 = vbcast.lane.b32.xlu0 %v3442, %s3794
    %v3796 = vpop.permute.xlu0 %3795
    %s3798 = sor.u32 256, 64
    %3799 = vbcast.lane.b32.xlu0 %v3442, %s3798
    %v3800 = vpop.permute.xlu0 %3799
    %s3802 = sor.u32 256, 72
    %3803 = vbcast.lane.b32.xlu0 %v3442, %s3802
    %v3804 = vpop.permute.xlu0 %3803
    %s3806 = sor.u32 256, 80
    %3807 = vbcast.lane.b32.xlu0 %v3442, %s3806
    %v3808 = vpop.permute.xlu0 %3807
    %s3810 = sor.u32 256, 88
    %3811 = vbcast.lane.b32.xlu0 %v3442, %s3810
    %v3812 = vpop.permute.xlu0 %3811
    %s3814 = sor.u32 256, 96
    %3815 = vbcast.lane.b32.xlu0 %v3442, %s3814
    %v3816 = vpop.permute.xlu0 %3815
    %s3818 = sor.u32 256, 104
    %3819 = vbcast.lane.b32.xlu0 %v3442, %s3818
    %v3820 = vpop.permute.xlu0 %3819
    %s3822 = sor.u32 256, 112
    %3823 = vbcast.lane.b32.xlu0 %v3442, %s3822
    %v3824 = vpop.permute.xlu0 %3823
    %s3826 = sor.u32 256, 120
    %3827 = vbcast.lane.b32.xlu0 %v3442, %s3826
    %v3828 = vpop.permute.xlu0 %3827
    %3830 = vbcast.lane.b32.xlu0 %v3446, 256
    %v3831 = vpop.permute.xlu0 %3830
    %s3833 = sor.u32 256, 8
    %3834 = vbcast.lane.b32.xlu0 %v3446, %s3833
    %v3835 = vpop.permute.xlu0 %3834
    %s3837 = sor.u32 256, 16
    %3838 = vbcast.lane.b32.xlu0 %v3446, %s3837
    %v3839 = vpop.permute.xlu0 %3838
    %s3841 = sor.u32 256, 24
    %3842 = vbcast.lane.b32.xlu0 %v3446, %s3841
    %v3843 = vpop.permute.xlu0 %3842
    %s3845 = sor.u32 256, 32
    %3846 = vbcast.lane.b32.xlu0 %v3446, %s3845
    %v3847 = vpop.permute.xlu0 %3846
    %s3849 = sor.u32 256, 40
    %3850 = vbcast.lane.b32.xlu0 %v3446, %s3849
    %v3851 = vpop.permute.xlu0 %3850
    %s3853 = sor.u32 256, 48
    %3854 = vbcast.lane.b32.xlu0 %v3446, %s3853
    %v3855 = vpop.permute.xlu0 %3854
    %s3857 = sor.u32 256, 56
    %3858 = vbcast.lane.b32.xlu0 %v3446, %s3857
    %v3859 = vpop.permute.xlu0 %3858
    %s3861 = sor.u32 256, 64
    %3862 = vbcast.lane.b32.xlu0 %v3446, %s3861
    %v3863 = vpop.permute.xlu0 %3862
    %s3865 = sor.u32 256, 72
    %3866 = vbcast.lane.b32.xlu0 %v3446, %s3865
    %v3867 = vpop.permute.xlu0 %3866
    %s3869 = sor.u32 256, 80
    %3870 = vbcast.lane.b32.xlu0 %v3446, %s3869
    %v3871 = vpop.permute.xlu0 %3870
    %s3873 = sor.u32 256, 88
    %3874 = vbcast.lane.b32.xlu0 %v3446, %s3873
    %v3875 = vpop.permute.xlu0 %3874
    %s3877 = sor.u32 256, 96
    %3878 = vbcast.lane.b32.xlu0 %v3446, %s3877
    %v3879 = vpop.permute.xlu0 %3878
    %s3881 = sor.u32 256, 104
    %3882 = vbcast.lane.b32.xlu0 %v3446, %s3881
    %v3883 = vpop.permute.xlu0 %3882
    %s3885 = sor.u32 256, 112
    %3886 = vbcast.lane.b32.xlu0 %v3446, %s3885
    %v3887 = vpop.permute.xlu0 %3886
    %s3889 = sor.u32 256, 120
    %3890 = vbcast.lane.b32.xlu0 %v3446, %s3889
    %v3891 = vpop.permute.xlu0 %3890
    %3893 = vbcast.lane.b32.xlu0 %v3450, 256
    %v3894 = vpop.permute.xlu0 %3893
    %s3896 = sor.u32 256, 8
    %3897 = vbcast.lane.b32.xlu0 %v3450, %s3896
    %v3898 = vpop.permute.xlu0 %3897
    %s3900 = sor.u32 256, 16
    %3901 = vbcast.lane.b32.xlu0 %v3450, %s3900
    %v3902 = vpop.permute.xlu0 %3901
    %s3904 = sor.u32 256, 24
    %3905 = vbcast.lane.b32.xlu0 %v3450, %s3904
    %v3906 = vpop.permute.xlu0 %3905
    %s3908 = sor.u32 256, 32
    %3909 = vbcast.lane.b32.xlu0 %v3450, %s3908
    %v3910 = vpop.permute.xlu0 %3909
    %s3912 = sor.u32 256, 40
    %3913 = vbcast.lane.b32.xlu0 %v3450, %s3912
    %v3914 = vpop.permute.xlu0 %3913
    %s3916 = sor.u32 256, 48
    %3917 = vbcast.lane.b32.xlu0 %v3450, %s3916
    %v3918 = vpop.permute.xlu0 %3917
    %s3920 = sor.u32 256, 56
    %3921 = vbcast.lane.b32.xlu0 %v3450, %s3920
    %v3922 = vpop.permute.xlu0 %3921
    %s3924 = sor.u32 256, 64
    %3925 = vbcast.lane.b32.xlu0 %v3450, %s3924
    %v3926 = vpop.permute.xlu0 %3925
    %s3928 = sor.u32 256, 72
    %3929 = vbcast.lane.b32.xlu0 %v3450, %s3928
    %v3930 = vpop.permute.xlu0 %3929
    %s3932 = sor.u32 256, 80
    %3933 = vbcast.lane.b32.xlu0 %v3450, %s3932
    %v3934 = vpop.permute.xlu0 %3933
    %s3936 = sor.u32 256, 88
    %3937 = vbcast.lane.b32.xlu0 %v3450, %s3936
    %v3938 = vpop.permute.xlu0 %3937
    %s3940 = sor.u32 256, 96
    %3941 = vbcast.lane.b32.xlu0 %v3450, %s3940
    %v3942 = vpop.permute.xlu0 %3941
    %s3944 = sor.u32 256, 104
    %3945 = vbcast.lane.b32.xlu0 %v3450, %s3944
    %v3946 = vpop.permute.xlu0 %3945
    %s3948 = sor.u32 256, 112
    %3949 = vbcast.lane.b32.xlu0 %v3450, %s3948
    %v3950 = vpop.permute.xlu0 %3949
    %s3952 = sor.u32 256, 120
    %3953 = vbcast.lane.b32.xlu0 %v3450, %s3952
    %v3954 = vpop.permute.xlu0 %3953
    %v4083 = vmul.f32 %v3413, %v3453
    %v4084 = vmul.f32 %v3413, %v3457
    %v4085 = vmul.f32 %v3413, %v3461
    %v4086 = vmul.f32 %v3413, %v3465
    %v4087 = vmul.f32 %v3413, %v3469
    %v4088 = vmul.f32 %v3413, %v3473
    %v4089 = vmul.f32 %v3413, %v3477
    %v4090 = vmul.f32 %v3413, %v3481
    %v4091 = vmul.f32 %v3413, %v3485
    %v4092 = vmul.f32 %v3413, %v3489
    %v4093 = vmul.f32 %v3413, %v3493
    %v4094 = vmul.f32 %v3413, %v3497
    %v4095 = vmul.f32 %v3413, %v3501
    %v4096 = vmul.f32 %v3413, %v3505
    %v4097 = vmul.f32 %v3413, %v3509
    %v4098 = vmul.f32 %v3413, %v3513
    %v4099 = vmul.f32 %v3413, %v3516
    %v4100 = vmul.f32 %v3413, %v3520
    %v4101 = vmul.f32 %v3413, %v3524
    %v4102 = vmul.f32 %v3413, %v3528
    %v4103 = vmul.f32 %v3413, %v3532
    %v4104 = vmul.f32 %v3413, %v3536
    %v4105 = vmul.f32 %v3413, %v3540
    %v4106 = vmul.f32 %v3413, %v3544
    %v4107 = vmul.f32 %v3413, %v3548
    %v4108 = vmul.f32 %v3413, %v3552
    %v4109 = vmul.f32 %v3413, %v3556
    %v4110 = vmul.f32 %v3413, %v3560
    %v4111 = vmul.f32 %v3413, %v3564
    %v4112 = vmul.f32 %v3413, %v3568
    %v4113 = vmul.f32 %v3413, %v3572
    %v4114 = vmul.f32 %v3413, %v3576
    %v4115 = vmul.f32 %v3413, %v3579
    %v4116 = vmul.f32 %v3413, %v3583
    %v4117 = vmul.f32 %v3413, %v3587
    %v4118 = vmul.f32 %v3413, %v3591
    %v4119 = vmul.f32 %v3413, %v3595
    %v4120 = vmul.f32 %v3413, %v3599
    %v4121 = vmul.f32 %v3413, %v3603
    %v4122 = vmul.f32 %v3413, %v3607
    %v4123 = vmul.f32 %v3413, %v3611
    %v4124 = vmul.f32 %v3413, %v3615
    %v4125 = vmul.f32 %v3413, %v3619
    %v4126 = vmul.f32 %v3413, %v3623
    %v4127 = vmul.f32 %v3413, %v3627
    %v4128 = vmul.f32 %v3413, %v3631
    %v4129 = vmul.f32 %v3413, %v3635
    %v4130 = vmul.f32 %v3413, %v3639
    %v4131 = vmul.f32 %v3413, %v3642
    %v4132 = vmul.f32 %v3413, %v3646
    %v4133 = vmul.f32 %v3413, %v3650
    %v4134 = vmul.f32 %v3413, %v3654
    %v4135 = vmul.f32 %v3413, %v3658
    %v4136 = vmul.f32 %v3413, %v3662
    %v4137 = vmul.f32 %v3413, %v3666
    %v4138 = vmul.f32 %v3413, %v3670
    %v4139 = vmul.f32 %v3413, %v3674
    %v4140 = vmul.f32 %v3413, %v3678
    %v4141 = vmul.f32 %v3413, %v3682
    %v4142 = vmul.f32 %v3413, %v3686
    %v4143 = vmul.f32 %v3413, %v3690
    %v4144 = vmul.f32 %v3413, %v3694
    %v4145 = vmul.f32 %v3413, %v3698
    %v4146 = vmul.f32 %v3413, %v3702
    %v4147 = vmul.f32 %v3413, %v3705
    %v4148 = vmul.f32 %v3413, %v3709
    %v4149 = vmul.f32 %v3413, %v3713
    %v4150 = vmul.f32 %v3413, %v3717
    %v4151 = vmul.f32 %v3413, %v3721
    %v4152 = vmul.f32 %v3413, %v3725
    %v4153 = vmul.f32 %v3413, %v3729
    %v4154 = vmul.f32 %v3413, %v3733
    %v4155 = vmul.f32 %v3413, %v3737
    %v4156 = vmul.f32 %v3413, %v3741
    %v4157 = vmul.f32 %v3413, %v3745
    %v4158 = vmul.f32 %v3413, %v3749
    %v4159 = vmul.f32 %v3413, %v3753
    %v4160 = vmul.f32 %v3413, %v3757
    %v4161 = vmul.f32 %v3413, %v3761
    %v4162 = vmul.f32 %v3413, %v3765
    %v4163 = vmul.f32 %v3413, %v3768
    %v4164 = vmul.f32 %v3413, %v3772
    %v4165 = vmul.f32 %v3413, %v3776
    %v4166 = vmul.f32 %v3413, %v3780
    %v4167 = vmul.f32 %v3413, %v3784
    %v4168 = vmul.f32 %v3413, %v3788
    %v4169 = vmul.f32 %v3413, %v3792
    %v4170 = vmul.f32 %v3413, %v3796
    %v4171 = vmul.f32 %v3413, %v3800
    %v4172 = vmul.f32 %v3413, %v3804
    %v4173 = vmul.f32 %v3413, %v3808
    %v4174 = vmul.f32 %v3413, %v3812
    %v4175 = vmul.f32 %v3413, %v3816
    %v4176 = vmul.f32 %v3413, %v3820
    %v4177 = vmul.f32 %v3413, %v3824
    %v4178 = vmul.f32 %v3413, %v3828
    %v4179 = vmul.f32 %v3413, %v3831
    %v4180 = vmul.f32 %v3413, %v3835
    %v4181 = vmul.f32 %v3413, %v3839
    %v4182 = vmul.f32 %v3413, %v3843
    %v4183 = vmul.f32 %v3413, %v3847
    %v4184 = vmul.f32 %v3413, %v3851
    %v4185 = vmul.f32 %v3413, %v3855
    %v4186 = vmul.f32 %v3413, %v3859
    %v4187 = vmul.f32 %v3413, %v3863
    %v4188 = vmul.f32 %v3413, %v3867
    %v4189 = vmul.f32 %v3413, %v3871
    %v4190 = vmul.f32 %v3413, %v3875
    %v4191 = vmul.f32 %v3413, %v3879
    %v4192 = vmul.f32 %v3413, %v3883
    %v4193 = vmul.f32 %v3413, %v3887
    %v4194 = vmul.f32 %v3413, %v3891
    %v4195 = vmul.f32 %v3413, %v3894
    %v4196 = vmul.f32 %v3413, %v3898
    %v4197 = vmul.f32 %v3413, %v3902
    %v4198 = vmul.f32 %v3413, %v3906
    %v4199 = vmul.f32 %v3413, %v3910
    %v4200 = vmul.f32 %v3413, %v3914
    %v4201 = vmul.f32 %v3413, %v3918
    %v4202 = vmul.f32 %v3413, %v3922
    %v4203 = vmul.f32 %v3413, %v3926
    %v4204 = vmul.f32 %v3413, %v3930
    %v4205 = vmul.f32 %v3413, %v3934
    %v4206 = vmul.f32 %v3413, %v3938
    %v4207 = vmul.f32 %v3413, %v3942
    %v4208 = vmul.f32 %v3413, %v3946
    %v4209 = vmul.f32 %v3413, %v3950
    %v4210 = vmul.f32 %v3413, %v3954
    %v4211 = vmul.f32 %v3417, %v3453
    %v4212 = vmul.f32 %v3417, %v3457
    %v4213 = vmul.f32 %v3417, %v3461
    %v4214 = vmul.f32 %v3417, %v3465
    %v4215 = vmul.f32 %v3417, %v3469
    %v4216 = vmul.f32 %v3417, %v3473
    %v4217 = vmul.f32 %v3417, %v3477
    %v4218 = vmul.f32 %v3417, %v3481
    %v4219 = vmul.f32 %v3417, %v3485
    %v4220 = vmul.f32 %v3417, %v3489
    %v4221 = vmul.f32 %v3417, %v3493
    %v4222 = vmul.f32 %v3417, %v3497
    %v4223 = vmul.f32 %v3417, %v3501
    %v4224 = vmul.f32 %v3417, %v3505
    %v4225 = vmul.f32 %v3417, %v3509
    %v4226 = vmul.f32 %v3417, %v3513
    %v4227 = vmul.f32 %v3417, %v3516
    %v4228 = vmul.f32 %v3417, %v3520
    %v4229 = vmul.f32 %v3417, %v3524
    %v4230 = vmul.f32 %v3417, %v3528
    %v4231 = vmul.f32 %v3417, %v3532
    %v4232 = vmul.f32 %v3417, %v3536
    %v4233 = vmul.f32 %v3417, %v3540
    %v4234 = vmul.f32 %v3417, %v3544
    %v4235 = vmul.f32 %v3417, %v3548
    %v4236 = vmul.f32 %v3417, %v3552
    %v4237 = vmul.f32 %v3417, %v3556
    %v4238 = vmul.f32 %v3417, %v3560
    %v4239 = vmul.f32 %v3417, %v3564
    %v4240 = vmul.f32 %v3417, %v3568
    %v4241 = vmul.f32 %v3417, %v3572
    %v4242 = vmul.f32 %v3417, %v3576
    %v4243 = vmul.f32 %v3417, %v3579
    %v4244 = vmul.f32 %v3417, %v3583
    %v4245 = vmul.f32 %v3417, %v3587
    %v4246 = vmul.f32 %v3417, %v3591
    %v4247 = vmul.f32 %v3417, %v3595
    %v4248 = vmul.f32 %v3417, %v3599
    %v4249 = vmul.f32 %v3417, %v3603
    %v4250 = vmul.f32 %v3417, %v3607
    %v4251 = vmul.f32 %v3417, %v3611
    %v4252 = vmul.f32 %v3417, %v3615
    %v4253 = vmul.f32 %v3417, %v3619
    %v4254 = vmul.f32 %v3417, %v3623
    %v4255 = vmul.f32 %v3417, %v3627
    %v4256 = vmul.f32 %v3417, %v3631
    %v4257 = vmul.f32 %v3417, %v3635
    %v4258 = vmul.f32 %v3417, %v3639
    %v4259 = vmul.f32 %v3417, %v3642
    %v4260 = vmul.f32 %v3417, %v3646
    %v4261 = vmul.f32 %v3417, %v3650
    %v4262 = vmul.f32 %v3417, %v3654
    %v4263 = vmul.f32 %v3417, %v3658
    %v4264 = vmul.f32 %v3417, %v3662
    %v4265 = vmul.f32 %v3417, %v3666
    %v4266 = vmul.f32 %v3417, %v3670
    %v4267 = vmul.f32 %v3417, %v3674
    %v4268 = vmul.f32 %v3417, %v3678
    %v4269 = vmul.f32 %v3417, %v3682
    %v4270 = vmul.f32 %v3417, %v3686
    %v4271 = vmul.f32 %v3417, %v3690
    %v4272 = vmul.f32 %v3417, %v3694
    %v4273 = vmul.f32 %v3417, %v3698
    %v4274 = vmul.f32 %v3417, %v3702
    %v4275 = vmul.f32 %v3417, %v3705
    %v4276 = vmul.f32 %v3417, %v3709
    %v4277 = vmul.f32 %v3417, %v3713
    %v4278 = vmul.f32 %v3417, %v3717
    %v4279 = vmul.f32 %v3417, %v3721
    %v4280 = vmul.f32 %v3417, %v3725
    %v4281 = vmul.f32 %v3417, %v3729
    %v4282 = vmul.f32 %v3417, %v3733
    %v4283 = vmul.f32 %v3417, %v3737
    %v4284 = vmul.f32 %v3417, %v3741
    %v4285 = vmul.f32 %v3417, %v3745
    %v4286 = vmul.f32 %v3417, %v3749
    %v4287 = vmul.f32 %v3417, %v3753
    %v4288 = vmul.f32 %v3417, %v3757
    %v4289 = vmul.f32 %v3417, %v3761
    %v4290 = vmul.f32 %v3417, %v3765
    %v4291 = vmul.f32 %v3417, %v3768
    %v4292 = vmul.f32 %v3417, %v3772
    %v4293 = vmul.f32 %v3417, %v3776
    %v4294 = vmul.f32 %v3417, %v3780
    %v4295 = vmul.f32 %v3417, %v3784
    %v4296 = vmul.f32 %v3417, %v3788
    %v4297 = vmul.f32 %v3417, %v3792
    %v4298 = vmul.f32 %v3417, %v3796
    %v4299 = vmul.f32 %v3417, %v3800
    %v4300 = vmul.f32 %v3417, %v3804
    %v4301 = vmul.f32 %v3417, %v3808
    %v4302 = vmul.f32 %v3417, %v3812
    %v4303 = vmul.f32 %v3417, %v3816
    %v4304 = vmul.f32 %v3417, %v3820
    %v4305 = vmul.f32 %v3417, %v3824
    %v4306 = vmul.f32 %v3417, %v3828
    %v4307 = vmul.f32 %v3417, %v3831
    %v4308 = vmul.f32 %v3417, %v3835
    %v4309 = vmul.f32 %v3417, %v3839
    %v4310 = vmul.f32 %v3417, %v3843
    %v4311 = vmul.f32 %v3417, %v3847
    %v4312 = vmul.f32 %v3417, %v3851
    %v4313 = vmul.f32 %v3417, %v3855
    %v4314 = vmul.f32 %v3417, %v3859
    %v4315 = vmul.f32 %v3417, %v3863
    %v4316 = vmul.f32 %v3417, %v3867
    %v4317 = vmul.f32 %v3417, %v3871
    %v4318 = vmul.f32 %v3417, %v3875
    %v4319 = vmul.f32 %v3417, %v3879
    %v4320 = vmul.f32 %v3417, %v3883
    %v4321 = vmul.f32 %v3417, %v3887
    %v4322 = vmul.f32 %v3417, %v3891
    %v4323 = vmul.f32 %v3417, %v3894
    %v4324 = vmul.f32 %v3417, %v3898
    %v4325 = vmul.f32 %v3417, %v3902
    %v4326 = vmul.f32 %v3417, %v3906
    %v4327 = vmul.f32 %v3417, %v3910
    %v4328 = vmul.f32 %v3417, %v3914
    %v4329 = vmul.f32 %v3417, %v3918
    %v4330 = vmul.f32 %v3417, %v3922
    %v4331 = vmul.f32 %v3417, %v3926
    %v4332 = vmul.f32 %v3417, %v3930
    %v4333 = vmul.f32 %v3417, %v3934
    %v4334 = vmul.f32 %v3417, %v3938
    %v4335 = vmul.f32 %v3417, %v3942
    %v4336 = vmul.f32 %v3417, %v3946
    %v4337 = vmul.f32 %v3417, %v3950
    %v4338 = vmul.f32 %v3417, %v3954
    %4595 = vset.pattern.permute.xlu0 0
    %4596 = vperm.xlu0 %4595, %v4083
    %v4597 = vpop.permute.xlu0 %4596
    %4598 = vset.pattern.permute.xlu0 0
    %4599 = vperm.xlu0 %4598, %v4084
    %v4600 = vpop.permute.xlu0 %4599
    %4601 = vset.pattern.permute.xlu0 0
    %4602 = vperm.xlu0 %4601, %v4085
    %v4603 = vpop.permute.xlu0 %4602
    %4604 = vset.pattern.permute.xlu0 0
    %4605 = vperm.xlu0 %4604, %v4086
    %v4606 = vpop.permute.xlu0 %4605
    %4607 = vset.pattern.permute.xlu0 0
    %4608 = vperm.xlu0 %4607, %v4087
    %v4609 = vpop.permute.xlu0 %4608
    %4610 = vset.pattern.permute.xlu0 0
    %4611 = vperm.xlu0 %4610, %v4088
    %v4612 = vpop.permute.xlu0 %4611
    %4613 = vset.pattern.permute.xlu0 0
    %4614 = vperm.xlu0 %4613, %v4089
    %v4615 = vpop.permute.xlu0 %4614
    %4616 = vset.pattern.permute.xlu0 0
    %4617 = vperm.xlu0 %4616, %v4090
    %v4618 = vpop.permute.xlu0 %4617
    %4619 = vset.pattern.permute.xlu0 0
    %4620 = vperm.xlu0 %4619, %v4091
    %v4621 = vpop.permute.xlu0 %4620
    %4622 = vset.pattern.permute.xlu0 0
    %4623 = vperm.xlu0 %4622, %v4092
    %v4624 = vpop.permute.xlu0 %4623
    %4625 = vset.pattern.permute.xlu0 0
    %4626 = vperm.xlu0 %4625, %v4093
    %v4627 = vpop.permute.xlu0 %4626
    %4628 = vset.pattern.permute.xlu0 0
    %4629 = vperm.xlu0 %4628, %v4094
    %v4630 = vpop.permute.xlu0 %4629
    %4631 = vset.pattern.permute.xlu0 0
    %4632 = vperm.xlu0 %4631, %v4095
    %v4633 = vpop.permute.xlu0 %4632
    %4634 = vset.pattern.permute.xlu0 0
    %4635 = vperm.xlu0 %4634, %v4096
    %v4636 = vpop.permute.xlu0 %4635
    %4637 = vset.pattern.permute.xlu0 0
    %4638 = vperm.xlu0 %4637, %v4097
    %v4639 = vpop.permute.xlu0 %4638
    %4640 = vset.pattern.permute.xlu0 0
    %4641 = vperm.xlu0 %4640, %v4098
    %v4642 = vpop.permute.xlu0 %4641
    %4643 = vset.pattern.permute.xlu0 0
    %4644 = vperm.xlu0 %4643, %v4099
    %v4645 = vpop.permute.xlu0 %4644
    %4646 = vset.pattern.permute.xlu0 0
    %4647 = vperm.xlu0 %4646, %v4100
    %v4648 = vpop.permute.xlu0 %4647
    %4649 = vset.pattern.permute.xlu0 0
    %4650 = vperm.xlu0 %4649, %v4101
    %v4651 = vpop.permute.xlu0 %4650
    %4652 = vset.pattern.permute.xlu0 0
    %4653 = vperm.xlu0 %4652, %v4102
    %v4654 = vpop.permute.xlu0 %4653
    %4655 = vset.pattern.permute.xlu0 0
    %4656 = vperm.xlu0 %4655, %v4103
    %v4657 = vpop.permute.xlu0 %4656
    %4658 = vset.pattern.permute.xlu0 0
    %4659 = vperm.xlu0 %4658, %v4104
    %v4660 = vpop.permute.xlu0 %4659
    %4661 = vset.pattern.permute.xlu0 0
    %4662 = vperm.xlu0 %4661, %v4105
    %v4663 = vpop.permute.xlu0 %4662
    %4664 = vset.pattern.permute.xlu0 0
    %4665 = vperm.xlu0 %4664, %v4106
    %v4666 = vpop.permute.xlu0 %4665
    %4667 = vset.pattern.permute.xlu0 0
    %4668 = vperm.xlu0 %4667, %v4107
    %v4669 = vpop.permute.xlu0 %4668
    %4670 = vset.pattern.permute.xlu0 0
    %4671 = vperm.xlu0 %4670, %v4108
    %v4672 = vpop.permute.xlu0 %4671
    %4673 = vset.pattern.permute.xlu0 0
    %4674 = vperm.xlu0 %4673, %v4109
    %v4675 = vpop.permute.xlu0 %4674
    %4676 = vset.pattern.permute.xlu0 0
    %4677 = vperm.xlu0 %4676, %v4110
    %v4678 = vpop.permute.xlu0 %4677
    %4679 = vset.pattern.permute.xlu0 0
    %4680 = vperm.xlu0 %4679, %v4111
    %v4681 = vpop.permute.xlu0 %4680
    %4682 = vset.pattern.permute.xlu0 0
    %4683 = vperm.xlu0 %4682, %v4112
    %v4684 = vpop.permute.xlu0 %4683
    %4685 = vset.pattern.permute.xlu0 0
    %4686 = vperm.xlu0 %4685, %v4113
    %v4687 = vpop.permute.xlu0 %4686
    %4688 = vset.pattern.permute.xlu0 0
    %4689 = vperm.xlu0 %4688, %v4114
    %v4690 = vpop.permute.xlu0 %4689
    %4691 = vset.pattern.permute.xlu0 0
    %4692 = vperm.xlu0 %4691, %v4115
    %v4693 = vpop.permute.xlu0 %4692
    %4694 = vset.pattern.permute.xlu0 0
    %4695 = vperm.xlu0 %4694, %v4116
    %v4696 = vpop.permute.xlu0 %4695
    %4697 = vset.pattern.permute.xlu0 0
    %4698 = vperm.xlu0 %4697, %v4117
    %v4699 = vpop.permute.xlu0 %4698
    %4700 = vset.pattern.permute.xlu0 0
    %4701 = vperm.xlu0 %4700, %v4118
    %v4702 = vpop.permute.xlu0 %4701
    %4703 = vset.pattern.permute.xlu0 0
    %4704 = vperm.xlu0 %4703, %v4119
    %v4705 = vpop.permute.xlu0 %4704
    %4706 = vset.pattern.permute.xlu0 0
    %4707 = vperm.xlu0 %4706, %v4120
    %v4708 = vpop.permute.xlu0 %4707
    %4709 = vset.pattern.permute.xlu0 0
    %4710 = vperm.xlu0 %4709, %v4121
    %v4711 = vpop.permute.xlu0 %4710
    %4712 = vset.pattern.permute.xlu0 0
    %4713 = vperm.xlu0 %4712, %v4122
    %v4714 = vpop.permute.xlu0 %4713
    %4715 = vset.pattern.permute.xlu0 0
    %4716 = vperm.xlu0 %4715, %v4123
    %v4717 = vpop.permute.xlu0 %4716
    %4718 = vset.pattern.permute.xlu0 0
    %4719 = vperm.xlu0 %4718, %v4124
    %v4720 = vpop.permute.xlu0 %4719
    %4721 = vset.pattern.permute.xlu0 0
    %4722 = vperm.xlu0 %4721, %v4125
    %v4723 = vpop.permute.xlu0 %4722
    %4724 = vset.pattern.permute.xlu0 0
    %4725 = vperm.xlu0 %4724, %v4126
    %v4726 = vpop.permute.xlu0 %4725
    %4727 = vset.pattern.permute.xlu0 0
    %4728 = vperm.xlu0 %4727, %v4127
    %v4729 = vpop.permute.xlu0 %4728
    %4730 = vset.pattern.permute.xlu0 0
    %4731 = vperm.xlu0 %4730, %v4128
    %v4732 = vpop.permute.xlu0 %4731
    %4733 = vset.pattern.permute.xlu0 0
    %4734 = vperm.xlu0 %4733, %v4129
    %v4735 = vpop.permute.xlu0 %4734
    %4736 = vset.pattern.permute.xlu0 0
    %4737 = vperm.xlu0 %4736, %v4130
    %v4738 = vpop.permute.xlu0 %4737
    %4739 = vset.pattern.permute.xlu0 0
    %4740 = vperm.xlu0 %4739, %v4131
    %v4741 = vpop.permute.xlu0 %4740
    %4742 = vset.pattern.permute.xlu0 0
    %4743 = vperm.xlu0 %4742, %v4132
    %v4744 = vpop.permute.xlu0 %4743
    %4745 = vset.pattern.permute.xlu0 0
    %4746 = vperm.xlu0 %4745, %v4133
    %v4747 = vpop.permute.xlu0 %4746
    %4748 = vset.pattern.permute.xlu0 0
    %4749 = vperm.xlu0 %4748, %v4134
    %v4750 = vpop.permute.xlu0 %4749
    %4751 = vset.pattern.permute.xlu0 0
    %4752 = vperm.xlu0 %4751, %v4135
    %v4753 = vpop.permute.xlu0 %4752
    %4754 = vset.pattern.permute.xlu0 0
    %4755 = vperm.xlu0 %4754, %v4136
    %v4756 = vpop.permute.xlu0 %4755
    %4757 = vset.pattern.permute.xlu0 0
    %4758 = vperm.xlu0 %4757, %v4137
    %v4759 = vpop.permute.xlu0 %4758
    %4760 = vset.pattern.permute.xlu0 0
    %4761 = vperm.xlu0 %4760, %v4138
    %v4762 = vpop.permute.xlu0 %4761
    %4763 = vset.pattern.permute.xlu0 0
    %4764 = vperm.xlu0 %4763, %v4139
    %v4765 = vpop.permute.xlu0 %4764
    %4766 = vset.pattern.permute.xlu0 0
    %4767 = vperm.xlu0 %4766, %v4140
    %v4768 = vpop.permute.xlu0 %4767
    %4769 = vset.pattern.permute.xlu0 0
    %4770 = vperm.xlu0 %4769, %v4141
    %v4771 = vpop.permute.xlu0 %4770
    %4772 = vset.pattern.permute.xlu0 0
    %4773 = vperm.xlu0 %4772, %v4142
    %v4774 = vpop.permute.xlu0 %4773
    %4775 = vset.pattern.permute.xlu0 0
    %4776 = vperm.xlu0 %4775, %v4143
    %v4777 = vpop.permute.xlu0 %4776
    %4778 = vset.pattern.permute.xlu0 0
    %4779 = vperm.xlu0 %4778, %v4144
    %v4780 = vpop.permute.xlu0 %4779
    %4781 = vset.pattern.permute.xlu0 0
    %4782 = vperm.xlu0 %4781, %v4145
    %v4783 = vpop.permute.xlu0 %4782
    %4784 = vset.pattern.permute.xlu0 0
    %4785 = vperm.xlu0 %4784, %v4146
    %v4786 = vpop.permute.xlu0 %4785
    %4787 = vset.pattern.permute.xlu0 0
    %4788 = vperm.xlu0 %4787, %v4147
    %v4789 = vpop.permute.xlu0 %4788
    %4790 = vset.pattern.permute.xlu0 0
    %4791 = vperm.xlu0 %4790, %v4148
    %v4792 = vpop.permute.xlu0 %4791
    %4793 = vset.pattern.permute.xlu0 0
    %4794 = vperm.xlu0 %4793, %v4149
    %v4795 = vpop.permute.xlu0 %4794
    %4796 = vset.pattern.permute.xlu0 0
    %4797 = vperm.xlu0 %4796, %v4150
    %v4798 = vpop.permute.xlu0 %4797
    %4799 = vset.pattern.permute.xlu0 0
    %4800 = vperm.xlu0 %4799, %v4151
    %v4801 = vpop.permute.xlu0 %4800
    %4802 = vset.pattern.permute.xlu0 0
    %4803 = vperm.xlu0 %4802, %v4152
    %v4804 = vpop.permute.xlu0 %4803
    %4805 = vset.pattern.permute.xlu0 0
    %4806 = vperm.xlu0 %4805, %v4153
    %v4807 = vpop.permute.xlu0 %4806
    %4808 = vset.pattern.permute.xlu0 0
    %4809 = vperm.xlu0 %4808, %v4154
    %v4810 = vpop.permute.xlu0 %4809
    %4811 = vset.pattern.permute.xlu0 0
    %4812 = vperm.xlu0 %4811, %v4155
    %v4813 = vpop.permute.xlu0 %4812
    %4814 = vset.pattern.permute.xlu0 0
    %4815 = vperm.xlu0 %4814, %v4156
    %v4816 = vpop.permute.xlu0 %4815
    %4817 = vset.pattern.permute.xlu0 0
    %4818 = vperm.xlu0 %4817, %v4157
    %v4819 = vpop.permute.xlu0 %4818
    %4820 = vset.pattern.permute.xlu0 0
    %4821 = vperm.xlu0 %4820, %v4158
    %v4822 = vpop.permute.xlu0 %4821
    %4823 = vset.pattern.permute.xlu0 0
    %4824 = vperm.xlu0 %4823, %v4159
    %v4825 = vpop.permute.xlu0 %4824
    %4826 = vset.pattern.permute.xlu0 0
    %4827 = vperm.xlu0 %4826, %v4160
    %v4828 = vpop.permute.xlu0 %4827
    %4829 = vset.pattern.permute.xlu0 0
    %4830 = vperm.xlu0 %4829, %v4161
    %v4831 = vpop.permute.xlu0 %4830
    %4832 = vset.pattern.permute.xlu0 0
    %4833 = vperm.xlu0 %4832, %v4162
    %v4834 = vpop.permute.xlu0 %4833
    %4835 = vset.pattern.permute.xlu0 0
    %4836 = vperm.xlu0 %4835, %v4163
    %v4837 = vpop.permute.xlu0 %4836
    %4838 = vset.pattern.permute.xlu0 0
    %4839 = vperm.xlu0 %4838, %v4164
    %v4840 = vpop.permute.xlu0 %4839
    %4841 = vset.pattern.permute.xlu0 0
    %4842 = vperm.xlu0 %4841, %v4165
    %v4843 = vpop.permute.xlu0 %4842
    %4844 = vset.pattern.permute.xlu0 0
    %4845 = vperm.xlu0 %4844, %v4166
    %v4846 = vpop.permute.xlu0 %4845
    %4847 = vset.pattern.permute.xlu0 0
    %4848 = vperm.xlu0 %4847, %v4167
    %v4849 = vpop.permute.xlu0 %4848
    %4850 = vset.pattern.permute.xlu0 0
    %4851 = vperm.xlu0 %4850, %v4168
    %v4852 = vpop.permute.xlu0 %4851
    %4853 = vset.pattern.permute.xlu0 0
    %4854 = vperm.xlu0 %4853, %v4169
    %v4855 = vpop.permute.xlu0 %4854
    %4856 = vset.pattern.permute.xlu0 0
    %4857 = vperm.xlu0 %4856, %v4170
    %v4858 = vpop.permute.xlu0 %4857
    %4859 = vset.pattern.permute.xlu0 0
    %4860 = vperm.xlu0 %4859, %v4171
    %v4861 = vpop.permute.xlu0 %4860
    %4862 = vset.pattern.permute.xlu0 0
    %4863 = vperm.xlu0 %4862, %v4172
    %v4864 = vpop.permute.xlu0 %4863
    %4865 = vset.pattern.permute.xlu0 0
    %4866 = vperm.xlu0 %4865, %v4173
    %v4867 = vpop.permute.xlu0 %4866
    %4868 = vset.pattern.permute.xlu0 0
    %4869 = vperm.xlu0 %4868, %v4174
    %v4870 = vpop.permute.xlu0 %4869
    %4871 = vset.pattern.permute.xlu0 0
    %4872 = vperm.xlu0 %4871, %v4175
    %v4873 = vpop.permute.xlu0 %4872
    %4874 = vset.pattern.permute.xlu0 0
    %4875 = vperm.xlu0 %4874, %v4176
    %v4876 = vpop.permute.xlu0 %4875
    %4877 = vset.pattern.permute.xlu0 0
    %4878 = vperm.xlu0 %4877, %v4177
    %v4879 = vpop.permute.xlu0 %4878
    %4880 = vset.pattern.permute.xlu0 0
    %4881 = vperm.xlu0 %4880, %v4178
    %v4882 = vpop.permute.xlu0 %4881
    %4883 = vset.pattern.permute.xlu0 0
    %4884 = vperm.xlu0 %4883, %v4179
    %v4885 = vpop.permute.xlu0 %4884
    %4886 = vset.pattern.permute.xlu0 0
    %4887 = vperm.xlu0 %4886, %v4180
    %v4888 = vpop.permute.xlu0 %4887
    %4889 = vset.pattern.permute.xlu0 0
    %4890 = vperm.xlu0 %4889, %v4181
    %v4891 = vpop.permute.xlu0 %4890
    %4892 = vset.pattern.permute.xlu0 0
    %4893 = vperm.xlu0 %4892, %v4182
    %v4894 = vpop.permute.xlu0 %4893
    %4895 = vset.pattern.permute.xlu0 0
    %4896 = vperm.xlu0 %4895, %v4183
    %v4897 = vpop.permute.xlu0 %4896
    %4898 = vset.pattern.permute.xlu0 0
    %4899 = vperm.xlu0 %4898, %v4184
    %v4900 = vpop.permute.xlu0 %4899
    %4901 = vset.pattern.permute.xlu0 0
    %4902 = vperm.xlu0 %4901, %v4185
    %v4903 = vpop.permute.xlu0 %4902
    %4904 = vset.pattern.permute.xlu0 0
    %4905 = vperm.xlu0 %4904, %v4186
    %v4906 = vpop.permute.xlu0 %4905
    %4907 = vset.pattern.permute.xlu0 0
    %4908 = vperm.xlu0 %4907, %v4187
    %v4909 = vpop.permute.xlu0 %4908
    %4910 = vset.pattern.permute.xlu0 0
    %4911 = vperm.xlu0 %4910, %v4188
    %v4912 = vpop.permute.xlu0 %4911
    %4913 = vset.pattern.permute.xlu0 0
    %4914 = vperm.xlu0 %4913, %v4189
    %v4915 = vpop.permute.xlu0 %4914
    %4916 = vset.pattern.permute.xlu0 0
    %4917 = vperm.xlu0 %4916, %v4190
    %v4918 = vpop.permute.xlu0 %4917
    %4919 = vset.pattern.permute.xlu0 0
    %4920 = vperm.xlu0 %4919, %v4191
    %v4921 = vpop.permute.xlu0 %4920
    %4922 = vset.pattern.permute.xlu0 0
    %4923 = vperm.xlu0 %4922, %v4192
    %v4924 = vpop.permute.xlu0 %4923
    %4925 = vset.pattern.permute.xlu0 0
    %4926 = vperm.xlu0 %4925, %v4193
    %v4927 = vpop.permute.xlu0 %4926
    %4928 = vset.pattern.permute.xlu0 0
    %4929 = vperm.xlu0 %4928, %v4194
    %v4930 = vpop.permute.xlu0 %4929
    %4931 = vset.pattern.permute.xlu0 0
    %4932 = vperm.xlu0 %4931, %v4195
    %v4933 = vpop.permute.xlu0 %4932
    %4934 = vset.pattern.permute.xlu0 0
    %4935 = vperm.xlu0 %4934, %v4196
    %v4936 = vpop.permute.xlu0 %4935
    %4937 = vset.pattern.permute.xlu0 0
    %4938 = vperm.xlu0 %4937, %v4197
    %v4939 = vpop.permute.xlu0 %4938
    %4940 = vset.pattern.permute.xlu0 0
    %4941 = vperm.xlu0 %4940, %v4198
    %v4942 = vpop.permute.xlu0 %4941
    %4943 = vset.pattern.permute.xlu0 0
    %4944 = vperm.xlu0 %4943, %v4199
    %v4945 = vpop.permute.xlu0 %4944
    %4946 = vset.pattern.permute.xlu0 0
    %4947 = vperm.xlu0 %4946, %v4200
    %v4948 = vpop.permute.xlu0 %4947
    %4949 = vset.pattern.permute.xlu0 0
    %4950 = vperm.xlu0 %4949, %v4201
    %v4951 = vpop.permute.xlu0 %4950
    %4952 = vset.pattern.permute.xlu0 0
    %4953 = vperm.xlu0 %4952, %v4202
    %v4954 = vpop.permute.xlu0 %4953
    %4955 = vset.pattern.permute.xlu0 0
    %4956 = vperm.xlu0 %4955, %v4203
    %v4957 = vpop.permute.xlu0 %4956
    %4958 = vset.pattern.permute.xlu0 0
    %4959 = vperm.xlu0 %4958, %v4204
    %v4960 = vpop.permute.xlu0 %4959
    %4961 = vset.pattern.permute.xlu0 0
    %4962 = vperm.xlu0 %4961, %v4205
    %v4963 = vpop.permute.xlu0 %4962
    %4964 = vset.pattern.permute.xlu0 0
    %4965 = vperm.xlu0 %4964, %v4206
    %v4966 = vpop.permute.xlu0 %4965
    %4967 = vset.pattern.permute.xlu0 0
    %4968 = vperm.xlu0 %4967, %v4207
    %v4969 = vpop.permute.xlu0 %4968
    %4970 = vset.pattern.permute.xlu0 0
    %4971 = vperm.xlu0 %4970, %v4208
    %v4972 = vpop.permute.xlu0 %4971
    %4973 = vset.pattern.permute.xlu0 0
    %4974 = vperm.xlu0 %4973, %v4209
    %v4975 = vpop.permute.xlu0 %4974
    %4976 = vset.pattern.permute.xlu0 0
    %4977 = vperm.xlu0 %4976, %v4210
    %v4978 = vpop.permute.xlu0 %4977
    %4979 = vset.pattern.permute.xlu0 0
    %4980 = vperm.xlu0 %4979, %v4211
    %v4981 = vpop.permute.xlu0 %4980
    %4982 = vset.pattern.permute.xlu0 0
    %4983 = vperm.xlu0 %4982, %v4212
    %v4984 = vpop.permute.xlu0 %4983
    %4985 = vset.pattern.permute.xlu0 0
    %4986 = vperm.xlu0 %4985, %v4213
    %v4987 = vpop.permute.xlu0 %4986
    %4988 = vset.pattern.permute.xlu0 0
    %4989 = vperm.xlu0 %4988, %v4214
    %v4990 = vpop.permute.xlu0 %4989
    %4991 = vset.pattern.permute.xlu0 0
    %4992 = vperm.xlu0 %4991, %v4215
    %v4993 = vpop.permute.xlu0 %4992
    %4994 = vset.pattern.permute.xlu0 0
    %4995 = vperm.xlu0 %4994, %v4216
    %v4996 = vpop.permute.xlu0 %4995
    %4997 = vset.pattern.permute.xlu0 0
    %4998 = vperm.xlu0 %4997, %v4217
    %v4999 = vpop.permute.xlu0 %4998
    %5000 = vset.pattern.permute.xlu0 0
    %5001 = vperm.xlu0 %5000, %v4218
    %v5002 = vpop.permute.xlu0 %5001
    %5003 = vset.pattern.permute.xlu0 0
    %5004 = vperm.xlu0 %5003, %v4219
    %v5005 = vpop.permute.xlu0 %5004
    %5006 = vset.pattern.permute.xlu0 0
    %5007 = vperm.xlu0 %5006, %v4220
    %v5008 = vpop.permute.xlu0 %5007
    %5009 = vset.pattern.permute.xlu0 0
    %5010 = vperm.xlu0 %5009, %v4221
    %v5011 = vpop.permute.xlu0 %5010
    %5012 = vset.pattern.permute.xlu0 0
    %5013 = vperm.xlu0 %5012, %v4222
    %v5014 = vpop.permute.xlu0 %5013
    %5015 = vset.pattern.permute.xlu0 0
    %5016 = vperm.xlu0 %5015, %v4223
    %v5017 = vpop.permute.xlu0 %5016
    %5018 = vset.pattern.permute.xlu0 0
    %5019 = vperm.xlu0 %5018, %v4224
    %v5020 = vpop.permute.xlu0 %5019
    %5021 = vset.pattern.permute.xlu0 0
    %5022 = vperm.xlu0 %5021, %v4225
    %v5023 = vpop.permute.xlu0 %5022
    %5024 = vset.pattern.permute.xlu0 0
    %5025 = vperm.xlu0 %5024, %v4226
    %v5026 = vpop.permute.xlu0 %5025
    %5027 = vset.pattern.permute.xlu0 0
    %5028 = vperm.xlu0 %5027, %v4227
    %v5029 = vpop.permute.xlu0 %5028
    %5030 = vset.pattern.permute.xlu0 0
    %5031 = vperm.xlu0 %5030, %v4228
    %v5032 = vpop.permute.xlu0 %5031
    %5033 = vset.pattern.permute.xlu0 0
    %5034 = vperm.xlu0 %5033, %v4229
    %v5035 = vpop.permute.xlu0 %5034
    %5036 = vset.pattern.permute.xlu0 0
    %5037 = vperm.xlu0 %5036, %v4230
    %v5038 = vpop.permute.xlu0 %5037
    %5039 = vset.pattern.permute.xlu0 0
    %5040 = vperm.xlu0 %5039, %v4231
    %v5041 = vpop.permute.xlu0 %5040
    %5042 = vset.pattern.permute.xlu0 0
    %5043 = vperm.xlu0 %5042, %v4232
    %v5044 = vpop.permute.xlu0 %5043
    %5045 = vset.pattern.permute.xlu0 0
    %5046 = vperm.xlu0 %5045, %v4233
    %v5047 = vpop.permute.xlu0 %5046
    %5048 = vset.pattern.permute.xlu0 0
    %5049 = vperm.xlu0 %5048, %v4234
    %v5050 = vpop.permute.xlu0 %5049
    %5051 = vset.pattern.permute.xlu0 0
    %5052 = vperm.xlu0 %5051, %v4235
    %v5053 = vpop.permute.xlu0 %5052
    %5054 = vset.pattern.permute.xlu0 0
    %5055 = vperm.xlu0 %5054, %v4236
    %v5056 = vpop.permute.xlu0 %5055
    %5057 = vset.pattern.permute.xlu0 0
    %5058 = vperm.xlu0 %5057, %v4237
    %v5059 = vpop.permute.xlu0 %5058
    %5060 = vset.pattern.permute.xlu0 0
    %5061 = vperm.xlu0 %5060, %v4238
    %v5062 = vpop.permute.xlu0 %5061
    %5063 = vset.pattern.permute.xlu0 0
    %5064 = vperm.xlu0 %5063, %v4239
    %v5065 = vpop.permute.xlu0 %5064
    %5066 = vset.pattern.permute.xlu0 0
    %5067 = vperm.xlu0 %5066, %v4240
    %v5068 = vpop.permute.xlu0 %5067
    %5069 = vset.pattern.permute.xlu0 0
    %5070 = vperm.xlu0 %5069, %v4241
    %v5071 = vpop.permute.xlu0 %5070
    %5072 = vset.pattern.permute.xlu0 0
    %5073 = vperm.xlu0 %5072, %v4242
    %v5074 = vpop.permute.xlu0 %5073
    %5075 = vset.pattern.permute.xlu0 0
    %5076 = vperm.xlu0 %5075, %v4243
    %v5077 = vpop.permute.xlu0 %5076
    %5078 = vset.pattern.permute.xlu0 0
    %5079 = vperm.xlu0 %5078, %v4244
    %v5080 = vpop.permute.xlu0 %5079
    %5081 = vset.pattern.permute.xlu0 0
    %5082 = vperm.xlu0 %5081, %v4245
    %v5083 = vpop.permute.xlu0 %5082
    %5084 = vset.pattern.permute.xlu0 0
    %5085 = vperm.xlu0 %5084, %v4246
    %v5086 = vpop.permute.xlu0 %5085
    %5087 = vset.pattern.permute.xlu0 0
    %5088 = vperm.xlu0 %5087, %v4247
    %v5089 = vpop.permute.xlu0 %5088
    %5090 = vset.pattern.permute.xlu0 0
    %5091 = vperm.xlu0 %5090, %v4248
    %v5092 = vpop.permute.xlu0 %5091
    %5093 = vset.pattern.permute.xlu0 0
    %5094 = vperm.xlu0 %5093, %v4249
    %v5095 = vpop.permute.xlu0 %5094
    %5096 = vset.pattern.permute.xlu0 0
    %5097 = vperm.xlu0 %5096, %v4250
    %v5098 = vpop.permute.xlu0 %5097
    %5099 = vset.pattern.permute.xlu0 0
    %5100 = vperm.xlu0 %5099, %v4251
    %v5101 = vpop.permute.xlu0 %5100
    %5102 = vset.pattern.permute.xlu0 0
    %5103 = vperm.xlu0 %5102, %v4252
    %v5104 = vpop.permute.xlu0 %5103
    %5105 = vset.pattern.permute.xlu0 0
    %5106 = vperm.xlu0 %5105, %v4253
    %v5107 = vpop.permute.xlu0 %5106
    %5108 = vset.pattern.permute.xlu0 0
    %5109 = vperm.xlu0 %5108, %v4254
    %v5110 = vpop.permute.xlu0 %5109
    %5111 = vset.pattern.permute.xlu0 0
    %5112 = vperm.xlu0 %5111, %v4255
    %v5113 = vpop.permute.xlu0 %5112
    %5114 = vset.pattern.permute.xlu0 0
    %5115 = vperm.xlu0 %5114, %v4256
    %v5116 = vpop.permute.xlu0 %5115
    %5117 = vset.pattern.permute.xlu0 0
    %5118 = vperm.xlu0 %5117, %v4257
    %v5119 = vpop.permute.xlu0 %5118
    %5120 = vset.pattern.permute.xlu0 0
    %5121 = vperm.xlu0 %5120, %v4258
    %v5122 = vpop.permute.xlu0 %5121
    %5123 = vset.pattern.permute.xlu0 0
    %5124 = vperm.xlu0 %5123, %v4259
    %v5125 = vpop.permute.xlu0 %5124
    %5126 = vset.pattern.permute.xlu0 0
    %5127 = vperm.xlu0 %5126, %v4260
    %v5128 = vpop.permute.xlu0 %5127
    %5129 = vset.pattern.permute.xlu0 0
    %5130 = vperm.xlu0 %5129, %v4261
    %v5131 = vpop.permute.xlu0 %5130
    %5132 = vset.pattern.permute.xlu0 0
    %5133 = vperm.xlu0 %5132, %v4262
    %v5134 = vpop.permute.xlu0 %5133
    %5135 = vset.pattern.permute.xlu0 0
    %5136 = vperm.xlu0 %5135, %v4263
    %v5137 = vpop.permute.xlu0 %5136
    %5138 = vset.pattern.permute.xlu0 0
    %5139 = vperm.xlu0 %5138, %v4264
    %v5140 = vpop.permute.xlu0 %5139
    %5141 = vset.pattern.permute.xlu0 0
    %5142 = vperm.xlu0 %5141, %v4265
    %v5143 = vpop.permute.xlu0 %5142
    %5144 = vset.pattern.permute.xlu0 0
    %5145 = vperm.xlu0 %5144, %v4266
    %v5146 = vpop.permute.xlu0 %5145
    %5147 = vset.pattern.permute.xlu0 0
    %5148 = vperm.xlu0 %5147, %v4267
    %v5149 = vpop.permute.xlu0 %5148
    %5150 = vset.pattern.permute.xlu0 0
    %5151 = vperm.xlu0 %5150, %v4268
    %v5152 = vpop.permute.xlu0 %5151
    %5153 = vset.pattern.permute.xlu0 0
    %5154 = vperm.xlu0 %5153, %v4269
    %v5155 = vpop.permute.xlu0 %5154
    %5156 = vset.pattern.permute.xlu0 0
    %5157 = vperm.xlu0 %5156, %v4270
    %v5158 = vpop.permute.xlu0 %5157
    %5159 = vset.pattern.permute.xlu0 0
    %5160 = vperm.xlu0 %5159, %v4271
    %v5161 = vpop.permute.xlu0 %5160
    %5162 = vset.pattern.permute.xlu0 0
    %5163 = vperm.xlu0 %5162, %v4272
    %v5164 = vpop.permute.xlu0 %5163
    %5165 = vset.pattern.permute.xlu0 0
    %5166 = vperm.xlu0 %5165, %v4273
    %v5167 = vpop.permute.xlu0 %5166
    %5168 = vset.pattern.permute.xlu0 0
    %5169 = vperm.xlu0 %5168, %v4274
    %v5170 = vpop.permute.xlu0 %5169
    %5171 = vset.pattern.permute.xlu0 0
    %5172 = vperm.xlu0 %5171, %v4275
    %v5173 = vpop.permute.xlu0 %5172
    %5174 = vset.pattern.permute.xlu0 0
    %5175 = vperm.xlu0 %5174, %v4276
    %v5176 = vpop.permute.xlu0 %5175
    %5177 = vset.pattern.permute.xlu0 0
    %5178 = vperm.xlu0 %5177, %v4277
    %v5179 = vpop.permute.xlu0 %5178
    %5180 = vset.pattern.permute.xlu0 0
    %5181 = vperm.xlu0 %5180, %v4278
    %v5182 = vpop.permute.xlu0 %5181
    %5183 = vset.pattern.permute.xlu0 0
    %5184 = vperm.xlu0 %5183, %v4279
    %v5185 = vpop.permute.xlu0 %5184
    %5186 = vset.pattern.permute.xlu0 0
    %5187 = vperm.xlu0 %5186, %v4280
    %v5188 = vpop.permute.xlu0 %5187
    %5189 = vset.pattern.permute.xlu0 0
    %5190 = vperm.xlu0 %5189, %v4281
    %v5191 = vpop.permute.xlu0 %5190
    %5192 = vset.pattern.permute.xlu0 0
    %5193 = vperm.xlu0 %5192, %v4282
    %v5194 = vpop.permute.xlu0 %5193
    %5195 = vset.pattern.permute.xlu0 0
    %5196 = vperm.xlu0 %5195, %v4283
    %v5197 = vpop.permute.xlu0 %5196
    %5198 = vset.pattern.permute.xlu0 0
    %5199 = vperm.xlu0 %5198, %v4284
    %v5200 = vpop.permute.xlu0 %5199
    %5201 = vset.pattern.permute.xlu0 0
    %5202 = vperm.xlu0 %5201, %v4285
    %v5203 = vpop.permute.xlu0 %5202
    %5204 = vset.pattern.permute.xlu0 0
    %5205 = vperm.xlu0 %5204, %v4286
    %v5206 = vpop.permute.xlu0 %5205
    %5207 = vset.pattern.permute.xlu0 0
    %5208 = vperm.xlu0 %5207, %v4287
    %v5209 = vpop.permute.xlu0 %5208
    %5210 = vset.pattern.permute.xlu0 0
    %5211 = vperm.xlu0 %5210, %v4288
    %v5212 = vpop.permute.xlu0 %5211
    %5213 = vset.pattern.permute.xlu0 0
    %5214 = vperm.xlu0 %5213, %v4289
    %v5215 = vpop.permute.xlu0 %5214
    %5216 = vset.pattern.permute.xlu0 0
    %5217 = vperm.xlu0 %5216, %v4290
    %v5218 = vpop.permute.xlu0 %5217
    %5219 = vset.pattern.permute.xlu0 0
    %5220 = vperm.xlu0 %5219, %v4291
    %v5221 = vpop.permute.xlu0 %5220
    %5222 = vset.pattern.permute.xlu0 0
    %5223 = vperm.xlu0 %5222, %v4292
    %v5224 = vpop.permute.xlu0 %5223
    %5225 = vset.pattern.permute.xlu0 0
    %5226 = vperm.xlu0 %5225, %v4293
    %v5227 = vpop.permute.xlu0 %5226
    %5228 = vset.pattern.permute.xlu0 0
    %5229 = vperm.xlu0 %5228, %v4294
    %v5230 = vpop.permute.xlu0 %5229
    %5231 = vset.pattern.permute.xlu0 0
    %5232 = vperm.xlu0 %5231, %v4295
    %v5233 = vpop.permute.xlu0 %5232
    %5234 = vset.pattern.permute.xlu0 0
    %5235 = vperm.xlu0 %5234, %v4296
    %v5236 = vpop.permute.xlu0 %5235
    %5237 = vset.pattern.permute.xlu0 0
    %5238 = vperm.xlu0 %5237, %v4297
    %v5239 = vpop.permute.xlu0 %5238
    %5240 = vset.pattern.permute.xlu0 0
    %5241 = vperm.xlu0 %5240, %v4298
    %v5242 = vpop.permute.xlu0 %5241
    %5243 = vset.pattern.permute.xlu0 0
    %5244 = vperm.xlu0 %5243, %v4299
    %v5245 = vpop.permute.xlu0 %5244
    %5246 = vset.pattern.permute.xlu0 0
    %5247 = vperm.xlu0 %5246, %v4300
    %v5248 = vpop.permute.xlu0 %5247
    %5249 = vset.pattern.permute.xlu0 0
    %5250 = vperm.xlu0 %5249, %v4301
    %v5251 = vpop.permute.xlu0 %5250
    %5252 = vset.pattern.permute.xlu0 0
    %5253 = vperm.xlu0 %5252, %v4302
    %v5254 = vpop.permute.xlu0 %5253
    %5255 = vset.pattern.permute.xlu0 0
    %5256 = vperm.xlu0 %5255, %v4303
    %v5257 = vpop.permute.xlu0 %5256
    %5258 = vset.pattern.permute.xlu0 0
    %5259 = vperm.xlu0 %5258, %v4304
    %v5260 = vpop.permute.xlu0 %5259
    %5261 = vset.pattern.permute.xlu0 0
    %5262 = vperm.xlu0 %5261, %v4305
    %v5263 = vpop.permute.xlu0 %5262
    %5264 = vset.pattern.permute.xlu0 0
    %5265 = vperm.xlu0 %5264, %v4306
    %v5266 = vpop.permute.xlu0 %5265
    %5267 = vset.pattern.permute.xlu0 0
    %5268 = vperm.xlu0 %5267, %v4307
    %v5269 = vpop.permute.xlu0 %5268
    %5270 = vset.pattern.permute.xlu0 0
    %5271 = vperm.xlu0 %5270, %v4308
    %v5272 = vpop.permute.xlu0 %5271
    %5273 = vset.pattern.permute.xlu0 0
    %5274 = vperm.xlu0 %5273, %v4309
    %v5275 = vpop.permute.xlu0 %5274
    %5276 = vset.pattern.permute.xlu0 0
    %5277 = vperm.xlu0 %5276, %v4310
    %v5278 = vpop.permute.xlu0 %5277
    %5279 = vset.pattern.permute.xlu0 0
    %5280 = vperm.xlu0 %5279, %v4311
    %v5281 = vpop.permute.xlu0 %5280
    %5282 = vset.pattern.permute.xlu0 0
    %5283 = vperm.xlu0 %5282, %v4312
    %v5284 = vpop.permute.xlu0 %5283
    %5285 = vset.pattern.permute.xlu0 0
    %5286 = vperm.xlu0 %5285, %v4313
    %v5287 = vpop.permute.xlu0 %5286
    %5288 = vset.pattern.permute.xlu0 0
    %5289 = vperm.xlu0 %5288, %v4314
    %v5290 = vpop.permute.xlu0 %5289
    %5291 = vset.pattern.permute.xlu0 0
    %5292 = vperm.xlu0 %5291, %v4315
    %v5293 = vpop.permute.xlu0 %5292
    %5294 = vset.pattern.permute.xlu0 0
    %5295 = vperm.xlu0 %5294, %v4316
    %v5296 = vpop.permute.xlu0 %5295
    %5297 = vset.pattern.permute.xlu0 0
    %5298 = vperm.xlu0 %5297, %v4317
    %v5299 = vpop.permute.xlu0 %5298
    %5300 = vset.pattern.permute.xlu0 0
    %5301 = vperm.xlu0 %5300, %v4318
    %v5302 = vpop.permute.xlu0 %5301
    %5303 = vset.pattern.permute.xlu0 0
    %5304 = vperm.xlu0 %5303, %v4319
    %v5305 = vpop.permute.xlu0 %5304
    %5306 = vset.pattern.permute.xlu0 0
    %5307 = vperm.xlu0 %5306, %v4320
    %v5308 = vpop.permute.xlu0 %5307
    %5309 = vset.pattern.permute.xlu0 0
    %5310 = vperm.xlu0 %5309, %v4321
    %v5311 = vpop.permute.xlu0 %5310
    %5312 = vset.pattern.permute.xlu0 0
    %5313 = vperm.xlu0 %5312, %v4322
    %v5314 = vpop.permute.xlu0 %5313
    %5315 = vset.pattern.permute.xlu0 0
    %5316 = vperm.xlu0 %5315, %v4323
    %v5317 = vpop.permute.xlu0 %5316
    %5318 = vset.pattern.permute.xlu0 0
    %5319 = vperm.xlu0 %5318, %v4324
    %v5320 = vpop.permute.xlu0 %5319
    %5321 = vset.pattern.permute.xlu0 0
    %5322 = vperm.xlu0 %5321, %v4325
    %v5323 = vpop.permute.xlu0 %5322
    %5324 = vset.pattern.permute.xlu0 0
    %5325 = vperm.xlu0 %5324, %v4326
    %v5326 = vpop.permute.xlu0 %5325
    %5327 = vset.pattern.permute.xlu0 0
    %5328 = vperm.xlu0 %5327, %v4327
    %v5329 = vpop.permute.xlu0 %5328
    %5330 = vset.pattern.permute.xlu0 0
    %5331 = vperm.xlu0 %5330, %v4328
    %v5332 = vpop.permute.xlu0 %5331
    %5333 = vset.pattern.permute.xlu0 0
    %5334 = vperm.xlu0 %5333, %v4329
    %v5335 = vpop.permute.xlu0 %5334
    %5336 = vset.pattern.permute.xlu0 0
    %5337 = vperm.xlu0 %5336, %v4330
    %v5338 = vpop.permute.xlu0 %5337
    %5339 = vset.pattern.permute.xlu0 0
    %5340 = vperm.xlu0 %5339, %v4331
    %v5341 = vpop.permute.xlu0 %5340
    %5342 = vset.pattern.permute.xlu0 0
    %5343 = vperm.xlu0 %5342, %v4332
    %v5344 = vpop.permute.xlu0 %5343
    %5345 = vset.pattern.permute.xlu0 0
    %5346 = vperm.xlu0 %5345, %v4333
    %v5347 = vpop.permute.xlu0 %5346
    %5348 = vset.pattern.permute.xlu0 0
    %5349 = vperm.xlu0 %5348, %v4334
    %v5350 = vpop.permute.xlu0 %5349
    %5351 = vset.pattern.permute.xlu0 0
    %5352 = vperm.xlu0 %5351, %v4335
    %v5353 = vpop.permute.xlu0 %5352
    %5354 = vset.pattern.permute.xlu0 0
    %5355 = vperm.xlu0 %5354, %v4336
    %v5356 = vpop.permute.xlu0 %5355
    %5357 = vset.pattern.permute.xlu0 0
    %5358 = vperm.xlu0 %5357, %v4337
    %v5359 = vpop.permute.xlu0 %5358
    %5360 = vset.pattern.permute.xlu0 0
    %5361 = vperm.xlu0 %5360, %v4338
    %v5362 = vpop.permute.xlu0 %5361
    %v5363 = vlaneseq
    %v5364 = vshrl.u32 %v5363, 7
    %v5365 = vsub.s32 %v2088, %v5364
    %v5366 = vrot.slane %v4597, %v5365
    %v5367 = vlaneseq
    %v5368 = vshrl.u32 %v5367, 7
    %v5369 = vsub.s32 %v2093, %v5368
    %v5370 = vrot.slane %v4600, %v5369
    %v5371 = vsel %vm2098, %v5370, %v5366
    %v5372 = vlaneseq
    %v5373 = vshrl.u32 %v5372, 7
    %v5374 = vsub.s32 %v2100, %v5373
    %v5375 = vrot.slane %v4603, %v5374
    %v5376 = vsel %vm2105, %v5375, %v5371
    %v5377 = vlaneseq
    %v5378 = vshrl.u32 %v5377, 7
    %v5379 = vsub.s32 %v2107, %v5378
    %v5380 = vrot.slane %v4606, %v5379
    %v5381 = vsel %vm2112, %v5380, %v5376
    %v5382 = vlaneseq
    %v5383 = vshrl.u32 %v5382, 7
    %v5384 = vsub.s32 %v2114, %v5383
    %v5385 = vrot.slane %v4609, %v5384
    %v5386 = vsel %vm2119, %v5385, %v5381
    %v5387 = vlaneseq
    %v5388 = vshrl.u32 %v5387, 7
    %v5389 = vsub.s32 %v2121, %v5388
    %v5390 = vrot.slane %v4612, %v5389
    %v5391 = vsel %vm2126, %v5390, %v5386
    %v5392 = vlaneseq
    %v5393 = vshrl.u32 %v5392, 7
    %v5394 = vsub.s32 %v2128, %v5393
    %v5395 = vrot.slane %v4615, %v5394
    %v5396 = vsel %vm2133, %v5395, %v5391
    %v5397 = vlaneseq
    %v5398 = vshrl.u32 %v5397, 7
    %v5399 = vsub.s32 %v2135, %v5398
    %v5400 = vrot.slane %v4618, %v5399
    %v5401 = vsel %vm2140, %v5400, %v5396
    %v5402 = vlaneseq
    %v5403 = vshrl.u32 %v5402, 7
    %v5404 = vsub.s32 %v2142, %v5403
    %v5405 = vrot.slane %v4621, %v5404
    %v5406 = vsel %vm2147, %v5405, %v5401
    %v5407 = vlaneseq
    %v5408 = vshrl.u32 %v5407, 7
    %v5409 = vsub.s32 %v2149, %v5408
    %v5410 = vrot.slane %v4624, %v5409
    %v5411 = vsel %vm2154, %v5410, %v5406
    %v5412 = vlaneseq
    %v5413 = vshrl.u32 %v5412, 7
    %v5414 = vsub.s32 %v2156, %v5413
    %v5415 = vrot.slane %v4627, %v5414
    %v5416 = vsel %vm2161, %v5415, %v5411
    %v5417 = vlaneseq
    %v5418 = vshrl.u32 %v5417, 7
    %v5419 = vsub.s32 %v2163, %v5418
    %v5420 = vrot.slane %v4630, %v5419
    %v5421 = vsel %vm2168, %v5420, %v5416
    %v5422 = vlaneseq
    %v5423 = vshrl.u32 %v5422, 7
    %v5424 = vsub.s32 %v2170, %v5423
    %v5425 = vrot.slane %v4633, %v5424
    %v5426 = vsel %vm2175, %v5425, %v5421
    %v5427 = vlaneseq
    %v5428 = vshrl.u32 %v5427, 7
    %v5429 = vsub.s32 %v2177, %v5428
    %v5430 = vrot.slane %v4636, %v5429
    %v5431 = vsel %vm2182, %v5430, %v5426
    %v5432 = vlaneseq
    %v5433 = vshrl.u32 %v5432, 7
    %v5434 = vsub.s32 %v2184, %v5433
    %v5435 = vrot.slane %v4639, %v5434
    %v5436 = vsel %vm2189, %v5435, %v5431
    %v5437 = vlaneseq
    %v5438 = vshrl.u32 %v5437, 7
    %v5439 = vsub.s32 %v2191, %v5438
    %v5440 = vrot.slane %v4642, %v5439
    %v5441 = vsel %vm2196, %v5440, %v5436
    %v5442 = vlaneseq
    %v5443 = vshrl.u32 %v5442, 7
    %v5444 = vsub.s32 %v2088, %v5443
    %v5445 = vrot.slane %v4645, %v5444
    %v5446 = vlaneseq
    %v5447 = vshrl.u32 %v5446, 7
    %v5448 = vsub.s32 %v2093, %v5447
    %v5449 = vrot.slane %v4648, %v5448
    %v5450 = vsel %vm2098, %v5449, %v5445
    %v5451 = vlaneseq
    %v5452 = vshrl.u32 %v5451, 7
    %v5453 = vsub.s32 %v2100, %v5452
    %v5454 = vrot.slane %v4651, %v5453
    %v5455 = vsel %vm2105, %v5454, %v5450
    %v5456 = vlaneseq
    %v5457 = vshrl.u32 %v5456, 7
    %v5458 = vsub.s32 %v2107, %v5457
    %v5459 = vrot.slane %v4654, %v5458
    %v5460 = vsel %vm2112, %v5459, %v5455
    %v5461 = vlaneseq
    %v5462 = vshrl.u32 %v5461, 7
    %v5463 = vsub.s32 %v2114, %v5462
    %v5464 = vrot.slane %v4657, %v5463
    %v5465 = vsel %vm2119, %v5464, %v5460
    %v5466 = vlaneseq
    %v5467 = vshrl.u32 %v5466, 7
    %v5468 = vsub.s32 %v2121, %v5467
    %v5469 = vrot.slane %v4660, %v5468
    %v5470 = vsel %vm2126, %v5469, %v5465
    %v5471 = vlaneseq
    %v5472 = vshrl.u32 %v5471, 7
    %v5473 = vsub.s32 %v2128, %v5472
    %v5474 = vrot.slane %v4663, %v5473
    %v5475 = vsel %vm2133, %v5474, %v5470
    %v5476 = vlaneseq
    %v5477 = vshrl.u32 %v5476, 7
    %v5478 = vsub.s32 %v2135, %v5477
    %v5479 = vrot.slane %v4666, %v5478
    %v5480 = vsel %vm2140, %v5479, %v5475
    %v5481 = vlaneseq
    %v5482 = vshrl.u32 %v5481, 7
    %v5483 = vsub.s32 %v2142, %v5482
    %v5484 = vrot.slane %v4669, %v5483
    %v5485 = vsel %vm2147, %v5484, %v5480
    %v5486 = vlaneseq
    %v5487 = vshrl.u32 %v5486, 7
    %v5488 = vsub.s32 %v2149, %v5487
    %v5489 = vrot.slane %v4672, %v5488
    %v5490 = vsel %vm2154, %v5489, %v5485
    %v5491 = vlaneseq
    %v5492 = vshrl.u32 %v5491, 7
    %v5493 = vsub.s32 %v2156, %v5492
    %v5494 = vrot.slane %v4675, %v5493
    %v5495 = vsel %vm2161, %v5494, %v5490
    %v5496 = vlaneseq
    %v5497 = vshrl.u32 %v5496, 7
    %v5498 = vsub.s32 %v2163, %v5497
    %v5499 = vrot.slane %v4678, %v5498
    %v5500 = vsel %vm2168, %v5499, %v5495
    %v5501 = vlaneseq
    %v5502 = vshrl.u32 %v5501, 7
    %v5503 = vsub.s32 %v2170, %v5502
    %v5504 = vrot.slane %v4681, %v5503
    %v5505 = vsel %vm2175, %v5504, %v5500
    %v5506 = vlaneseq
    %v5507 = vshrl.u32 %v5506, 7
    %v5508 = vsub.s32 %v2177, %v5507
    %v5509 = vrot.slane %v4684, %v5508
    %v5510 = vsel %vm2182, %v5509, %v5505
    %v5511 = vlaneseq
    %v5512 = vshrl.u32 %v5511, 7
    %v5513 = vsub.s32 %v2184, %v5512
    %v5514 = vrot.slane %v4687, %v5513
    %v5515 = vsel %vm2189, %v5514, %v5510
    %v5516 = vlaneseq
    %v5517 = vshrl.u32 %v5516, 7
    %v5518 = vsub.s32 %v2191, %v5517
    %v5519 = vrot.slane %v4690, %v5518
    %v5520 = vsel %vm2196, %v5519, %v5515
    %v5521 = vlaneseq
    %v5522 = vshrl.u32 %v5521, 7
    %v5523 = vsub.s32 %v2088, %v5522
    %v5524 = vrot.slane %v4693, %v5523
    %v5525 = vlaneseq
    %v5526 = vshrl.u32 %v5525, 7
    %v5527 = vsub.s32 %v2093, %v5526
    %v5528 = vrot.slane %v4696, %v5527
    %v5529 = vsel %vm2098, %v5528, %v5524
    %v5530 = vlaneseq
    %v5531 = vshrl.u32 %v5530, 7
    %v5532 = vsub.s32 %v2100, %v5531
    %v5533 = vrot.slane %v4699, %v5532
    %v5534 = vsel %vm2105, %v5533, %v5529
    %v5535 = vlaneseq
    %v5536 = vshrl.u32 %v5535, 7
    %v5537 = vsub.s32 %v2107, %v5536
    %v5538 = vrot.slane %v4702, %v5537
    %v5539 = vsel %vm2112, %v5538, %v5534
    %v5540 = vlaneseq
    %v5541 = vshrl.u32 %v5540, 7
    %v5542 = vsub.s32 %v2114, %v5541
    %v5543 = vrot.slane %v4705, %v5542
    %v5544 = vsel %vm2119, %v5543, %v5539
    %v5545 = vlaneseq
    %v5546 = vshrl.u32 %v5545, 7
    %v5547 = vsub.s32 %v2121, %v5546
    %v5548 = vrot.slane %v4708, %v5547
    %v5549 = vsel %vm2126, %v5548, %v5544
    %v5550 = vlaneseq
    %v5551 = vshrl.u32 %v5550, 7
    %v5552 = vsub.s32 %v2128, %v5551
    %v5553 = vrot.slane %v4711, %v5552
    %v5554 = vsel %vm2133, %v5553, %v5549
    %v5555 = vlaneseq
    %v5556 = vshrl.u32 %v5555, 7
    %v5557 = vsub.s32 %v2135, %v5556
    %v5558 = vrot.slane %v4714, %v5557
    %v5559 = vsel %vm2140, %v5558, %v5554
    %v5560 = vlaneseq
    %v5561 = vshrl.u32 %v5560, 7
    %v5562 = vsub.s32 %v2142, %v5561
    %v5563 = vrot.slane %v4717, %v5562
    %v5564 = vsel %vm2147, %v5563, %v5559
    %v5565 = vlaneseq
    %v5566 = vshrl.u32 %v5565, 7
    %v5567 = vsub.s32 %v2149, %v5566
    %v5568 = vrot.slane %v4720, %v5567
    %v5569 = vsel %vm2154, %v5568, %v5564
    %v5570 = vlaneseq
    %v5571 = vshrl.u32 %v5570, 7
    %v5572 = vsub.s32 %v2156, %v5571
    %v5573 = vrot.slane %v4723, %v5572
    %v5574 = vsel %vm2161, %v5573, %v5569
    %v5575 = vlaneseq
    %v5576 = vshrl.u32 %v5575, 7
    %v5577 = vsub.s32 %v2163, %v5576
    %v5578 = vrot.slane %v4726, %v5577
    %v5579 = vsel %vm2168, %v5578, %v5574
    %v5580 = vlaneseq
    %v5581 = vshrl.u32 %v5580, 7
    %v5582 = vsub.s32 %v2170, %v5581
    %v5583 = vrot.slane %v4729, %v5582
    %v5584 = vsel %vm2175, %v5583, %v5579
    %v5585 = vlaneseq
    %v5586 = vshrl.u32 %v5585, 7
    %v5587 = vsub.s32 %v2177, %v5586
    %v5588 = vrot.slane %v4732, %v5587
    %v5589 = vsel %vm2182, %v5588, %v5584
    %v5590 = vlaneseq
    %v5591 = vshrl.u32 %v5590, 7
    %v5592 = vsub.s32 %v2184, %v5591
    %v5593 = vrot.slane %v4735, %v5592
    %v5594 = vsel %vm2189, %v5593, %v5589
    %v5595 = vlaneseq
    %v5596 = vshrl.u32 %v5595, 7
    %v5597 = vsub.s32 %v2191, %v5596
    %v5598 = vrot.slane %v4738, %v5597
    %v5599 = vsel %vm2196, %v5598, %v5594
    %v5600 = vlaneseq
    %v5601 = vshrl.u32 %v5600, 7
    %v5602 = vsub.s32 %v2088, %v5601
    %v5603 = vrot.slane %v4741, %v5602
    %v5604 = vlaneseq
    %v5605 = vshrl.u32 %v5604, 7
    %v5606 = vsub.s32 %v2093, %v5605
    %v5607 = vrot.slane %v4744, %v5606
    %v5608 = vsel %vm2098, %v5607, %v5603
    %v5609 = vlaneseq
    %v5610 = vshrl.u32 %v5609, 7
    %v5611 = vsub.s32 %v2100, %v5610
    %v5612 = vrot.slane %v4747, %v5611
    %v5613 = vsel %vm2105, %v5612, %v5608
    %v5614 = vlaneseq
    %v5615 = vshrl.u32 %v5614, 7
    %v5616 = vsub.s32 %v2107, %v5615
    %v5617 = vrot.slane %v4750, %v5616
    %v5618 = vsel %vm2112, %v5617, %v5613
    %v5619 = vlaneseq
    %v5620 = vshrl.u32 %v5619, 7
    %v5621 = vsub.s32 %v2114, %v5620
    %v5622 = vrot.slane %v4753, %v5621
    %v5623 = vsel %vm2119, %v5622, %v5618
    %v5624 = vlaneseq
    %v5625 = vshrl.u32 %v5624, 7
    %v5626 = vsub.s32 %v2121, %v5625
    %v5627 = vrot.slane %v4756, %v5626
    %v5628 = vsel %vm2126, %v5627, %v5623
    %v5629 = vlaneseq
    %v5630 = vshrl.u32 %v5629, 7
    %v5631 = vsub.s32 %v2128, %v5630
    %v5632 = vrot.slane %v4759, %v5631
    %v5633 = vsel %vm2133, %v5632, %v5628
    %v5634 = vlaneseq
    %v5635 = vshrl.u32 %v5634, 7
    %v5636 = vsub.s32 %v2135, %v5635
    %v5637 = vrot.slane %v4762, %v5636
    %v5638 = vsel %vm2140, %v5637, %v5633
    %v5639 = vlaneseq
    %v5640 = vshrl.u32 %v5639, 7
    %v5641 = vsub.s32 %v2142, %v5640
    %v5642 = vrot.slane %v4765, %v5641
    %v5643 = vsel %vm2147, %v5642, %v5638
    %v5644 = vlaneseq
    %v5645 = vshrl.u32 %v5644, 7
    %v5646 = vsub.s32 %v2149, %v5645
    %v5647 = vrot.slane %v4768, %v5646
    %v5648 = vsel %vm2154, %v5647, %v5643
    %v5649 = vlaneseq
    %v5650 = vshrl.u32 %v5649, 7
    %v5651 = vsub.s32 %v2156, %v5650
    %v5652 = vrot.slane %v4771, %v5651
    %v5653 = vsel %vm2161, %v5652, %v5648
    %v5654 = vlaneseq
    %v5655 = vshrl.u32 %v5654, 7
    %v5656 = vsub.s32 %v2163, %v5655
    %v5657 = vrot.slane %v4774, %v5656
    %v5658 = vsel %vm2168, %v5657, %v5653
    %v5659 = vlaneseq
    %v5660 = vshrl.u32 %v5659, 7
    %v5661 = vsub.s32 %v2170, %v5660
    %v5662 = vrot.slane %v4777, %v5661
    %v5663 = vsel %vm2175, %v5662, %v5658
    %v5664 = vlaneseq
    %v5665 = vshrl.u32 %v5664, 7
    %v5666 = vsub.s32 %v2177, %v5665
    %v5667 = vrot.slane %v4780, %v5666
    %v5668 = vsel %vm2182, %v5667, %v5663
    %v5669 = vlaneseq
    %v5670 = vshrl.u32 %v5669, 7
    %v5671 = vsub.s32 %v2184, %v5670
    %v5672 = vrot.slane %v4783, %v5671
    %v5673 = vsel %vm2189, %v5672, %v5668
    %v5674 = vlaneseq
    %v5675 = vshrl.u32 %v5674, 7
    %v5676 = vsub.s32 %v2191, %v5675
    %v5677 = vrot.slane %v4786, %v5676
    %v5678 = vsel %vm2196, %v5677, %v5673
    %v5679 = vlaneseq
    %v5680 = vshrl.u32 %v5679, 7
    %v5681 = vsub.s32 %v2088, %v5680
    %v5682 = vrot.slane %v4789, %v5681
    %v5683 = vlaneseq
    %v5684 = vshrl.u32 %v5683, 7
    %v5685 = vsub.s32 %v2093, %v5684
    %v5686 = vrot.slane %v4792, %v5685
    %v5687 = vsel %vm2098, %v5686, %v5682
    %v5688 = vlaneseq
    %v5689 = vshrl.u32 %v5688, 7
    %v5690 = vsub.s32 %v2100, %v5689
    %v5691 = vrot.slane %v4795, %v5690
    %v5692 = vsel %vm2105, %v5691, %v5687
    %v5693 = vlaneseq
    %v5694 = vshrl.u32 %v5693, 7
    %v5695 = vsub.s32 %v2107, %v5694
    %v5696 = vrot.slane %v4798, %v5695
    %v5697 = vsel %vm2112, %v5696, %v5692
    %v5698 = vlaneseq
    %v5699 = vshrl.u32 %v5698, 7
    %v5700 = vsub.s32 %v2114, %v5699
    %v5701 = vrot.slane %v4801, %v5700
    %v5702 = vsel %vm2119, %v5701, %v5697
    %v5703 = vlaneseq
    %v5704 = vshrl.u32 %v5703, 7
    %v5705 = vsub.s32 %v2121, %v5704
    %v5706 = vrot.slane %v4804, %v5705
    %v5707 = vsel %vm2126, %v5706, %v5702
    %v5708 = vlaneseq
    %v5709 = vshrl.u32 %v5708, 7
    %v5710 = vsub.s32 %v2128, %v5709
    %v5711 = vrot.slane %v4807, %v5710
    %v5712 = vsel %vm2133, %v5711, %v5707
    %v5713 = vlaneseq
    %v5714 = vshrl.u32 %v5713, 7
    %v5715 = vsub.s32 %v2135, %v5714
    %v5716 = vrot.slane %v4810, %v5715
    %v5717 = vsel %vm2140, %v5716, %v5712
    %v5718 = vlaneseq
    %v5719 = vshrl.u32 %v5718, 7
    %v5720 = vsub.s32 %v2142, %v5719
    %v5721 = vrot.slane %v4813, %v5720
    %v5722 = vsel %vm2147, %v5721, %v5717
    %v5723 = vlaneseq
    %v5724 = vshrl.u32 %v5723, 7
    %v5725 = vsub.s32 %v2149, %v5724
    %v5726 = vrot.slane %v4816, %v5725
    %v5727 = vsel %vm2154, %v5726, %v5722
    %v5728 = vlaneseq
    %v5729 = vshrl.u32 %v5728, 7
    %v5730 = vsub.s32 %v2156, %v5729
    %v5731 = vrot.slane %v4819, %v5730
    %v5732 = vsel %vm2161, %v5731, %v5727
    %v5733 = vlaneseq
    %v5734 = vshrl.u32 %v5733, 7
    %v5735 = vsub.s32 %v2163, %v5734
    %v5736 = vrot.slane %v4822, %v5735
    %v5737 = vsel %vm2168, %v5736, %v5732
    %v5738 = vlaneseq
    %v5739 = vshrl.u32 %v5738, 7
    %v5740 = vsub.s32 %v2170, %v5739
    %v5741 = vrot.slane %v4825, %v5740
    %v5742 = vsel %vm2175, %v5741, %v5737
    %v5743 = vlaneseq
    %v5744 = vshrl.u32 %v5743, 7
    %v5745 = vsub.s32 %v2177, %v5744
    %v5746 = vrot.slane %v4828, %v5745
    %v5747 = vsel %vm2182, %v5746, %v5742
    %v5748 = vlaneseq
    %v5749 = vshrl.u32 %v5748, 7
    %v5750 = vsub.s32 %v2184, %v5749
    %v5751 = vrot.slane %v4831, %v5750
    %v5752 = vsel %vm2189, %v5751, %v5747
    %v5753 = vlaneseq
    %v5754 = vshrl.u32 %v5753, 7
    %v5755 = vsub.s32 %v2191, %v5754
    %v5756 = vrot.slane %v4834, %v5755
    %v5757 = vsel %vm2196, %v5756, %v5752
    %v5758 = vlaneseq
    %v5759 = vshrl.u32 %v5758, 7
    %v5760 = vsub.s32 %v2088, %v5759
    %v5761 = vrot.slane %v4837, %v5760
    %v5762 = vlaneseq
    %v5763 = vshrl.u32 %v5762, 7
    %v5764 = vsub.s32 %v2093, %v5763
    %v5765 = vrot.slane %v4840, %v5764
    %v5766 = vsel %vm2098, %v5765, %v5761
    %v5767 = vlaneseq
    %v5768 = vshrl.u32 %v5767, 7
    %v5769 = vsub.s32 %v2100, %v5768
    %v5770 = vrot.slane %v4843, %v5769
    %v5771 = vsel %vm2105, %v5770, %v5766
    %v5772 = vlaneseq
    %v5773 = vshrl.u32 %v5772, 7
    %v5774 = vsub.s32 %v2107, %v5773
    %v5775 = vrot.slane %v4846, %v5774
    %v5776 = vsel %vm2112, %v5775, %v5771
    %v5777 = vlaneseq
    %v5778 = vshrl.u32 %v5777, 7
    %v5779 = vsub.s32 %v2114, %v5778
    %v5780 = vrot.slane %v4849, %v5779
    %v5781 = vsel %vm2119, %v5780, %v5776
    %v5782 = vlaneseq
    %v5783 = vshrl.u32 %v5782, 7
    %v5784 = vsub.s32 %v2121, %v5783
    %v5785 = vrot.slane %v4852, %v5784
    %v5786 = vsel %vm2126, %v5785, %v5781
    %v5787 = vlaneseq
    %v5788 = vshrl.u32 %v5787, 7
    %v5789 = vsub.s32 %v2128, %v5788
    %v5790 = vrot.slane %v4855, %v5789
    %v5791 = vsel %vm2133, %v5790, %v5786
    %v5792 = vlaneseq
    %v5793 = vshrl.u32 %v5792, 7
    %v5794 = vsub.s32 %v2135, %v5793
    %v5795 = vrot.slane %v4858, %v5794
    %v5796 = vsel %vm2140, %v5795, %v5791
    %v5797 = vlaneseq
    %v5798 = vshrl.u32 %v5797, 7
    %v5799 = vsub.s32 %v2142, %v5798
    %v5800 = vrot.slane %v4861, %v5799
    %v5801 = vsel %vm2147, %v5800, %v5796
    %v5802 = vlaneseq
    %v5803 = vshrl.u32 %v5802, 7
    %v5804 = vsub.s32 %v2149, %v5803
    %v5805 = vrot.slane %v4864, %v5804
    %v5806 = vsel %vm2154, %v5805, %v5801
    %v5807 = vlaneseq
    %v5808 = vshrl.u32 %v5807, 7
    %v5809 = vsub.s32 %v2156, %v5808
    %v5810 = vrot.slane %v4867, %v5809
    %v5811 = vsel %vm2161, %v5810, %v5806
    %v5812 = vlaneseq
    %v5813 = vshrl.u32 %v5812, 7
    %v5814 = vsub.s32 %v2163, %v5813
    %v5815 = vrot.slane %v4870, %v5814
    %v5816 = vsel %vm2168, %v5815, %v5811
    %v5817 = vlaneseq
    %v5818 = vshrl.u32 %v5817, 7
    %v5819 = vsub.s32 %v2170, %v5818
    %v5820 = vrot.slane %v4873, %v5819
    %v5821 = vsel %vm2175, %v5820, %v5816
    %v5822 = vlaneseq
    %v5823 = vshrl.u32 %v5822, 7
    %v5824 = vsub.s32 %v2177, %v5823
    %v5825 = vrot.slane %v4876, %v5824
    %v5826 = vsel %vm2182, %v5825, %v5821
    %v5827 = vlaneseq
    %v5828 = vshrl.u32 %v5827, 7
    %v5829 = vsub.s32 %v2184, %v5828
    %v5830 = vrot.slane %v4879, %v5829
    %v5831 = vsel %vm2189, %v5830, %v5826
    %v5832 = vlaneseq
    %v5833 = vshrl.u32 %v5832, 7
    %v5834 = vsub.s32 %v2191, %v5833
    %v5835 = vrot.slane %v4882, %v5834
    %v5836 = vsel %vm2196, %v5835, %v5831
    %v5837 = vlaneseq
    %v5838 = vshrl.u32 %v5837, 7
    %v5839 = vsub.s32 %v2088, %v5838
    %v5840 = vrot.slane %v4885, %v5839
    %v5841 = vlaneseq
    %v5842 = vshrl.u32 %v5841, 7
    %v5843 = vsub.s32 %v2093, %v5842
    %v5844 = vrot.slane %v4888, %v5843
    %v5845 = vsel %vm2098, %v5844, %v5840
    %v5846 = vlaneseq
    %v5847 = vshrl.u32 %v5846, 7
    %v5848 = vsub.s32 %v2100, %v5847
    %v5849 = vrot.slane %v4891, %v5848
    %v5850 = vsel %vm2105, %v5849, %v5845
    %v5851 = vlaneseq
    %v5852 = vshrl.u32 %v5851, 7
    %v5853 = vsub.s32 %v2107, %v5852
    %v5854 = vrot.slane %v4894, %v5853
    %v5855 = vsel %vm2112, %v5854, %v5850
    %v5856 = vlaneseq
    %v5857 = vshrl.u32 %v5856, 7
    %v5858 = vsub.s32 %v2114, %v5857
    %v5859 = vrot.slane %v4897, %v5858
    %v5860 = vsel %vm2119, %v5859, %v5855
    %v5861 = vlaneseq
    %v5862 = vshrl.u32 %v5861, 7
    %v5863 = vsub.s32 %v2121, %v5862
    %v5864 = vrot.slane %v4900, %v5863
    %v5865 = vsel %vm2126, %v5864, %v5860
    %v5866 = vlaneseq
    %v5867 = vshrl.u32 %v5866, 7
    %v5868 = vsub.s32 %v2128, %v5867
    %v5869 = vrot.slane %v4903, %v5868
    %v5870 = vsel %vm2133, %v5869, %v5865
    %v5871 = vlaneseq
    %v5872 = vshrl.u32 %v5871, 7
    %v5873 = vsub.s32 %v2135, %v5872
    %v5874 = vrot.slane %v4906, %v5873
    %v5875 = vsel %vm2140, %v5874, %v5870
    %v5876 = vlaneseq
    %v5877 = vshrl.u32 %v5876, 7
    %v5878 = vsub.s32 %v2142, %v5877
    %v5879 = vrot.slane %v4909, %v5878
    %v5880 = vsel %vm2147, %v5879, %v5875
    %v5881 = vlaneseq
    %v5882 = vshrl.u32 %v5881, 7
    %v5883 = vsub.s32 %v2149, %v5882
    %v5884 = vrot.slane %v4912, %v5883
    %v5885 = vsel %vm2154, %v5884, %v5880
    %v5886 = vlaneseq
    %v5887 = vshrl.u32 %v5886, 7
    %v5888 = vsub.s32 %v2156, %v5887
    %v5889 = vrot.slane %v4915, %v5888
    %v5890 = vsel %vm2161, %v5889, %v5885
    %v5891 = vlaneseq
    %v5892 = vshrl.u32 %v5891, 7
    %v5893 = vsub.s32 %v2163, %v5892
    %v5894 = vrot.slane %v4918, %v5893
    %v5895 = vsel %vm2168, %v5894, %v5890
    %v5896 = vlaneseq
    %v5897 = vshrl.u32 %v5896, 7
    %v5898 = vsub.s32 %v2170, %v5897
    %v5899 = vrot.slane %v4921, %v5898
    %v5900 = vsel %vm2175, %v5899, %v5895
    %v5901 = vlaneseq
    %v5902 = vshrl.u32 %v5901, 7
    %v5903 = vsub.s32 %v2177, %v5902
    %v5904 = vrot.slane %v4924, %v5903
    %v5905 = vsel %vm2182, %v5904, %v5900
    %v5906 = vlaneseq
    %v5907 = vshrl.u32 %v5906, 7
    %v5908 = vsub.s32 %v2184, %v5907
    %v5909 = vrot.slane %v4927, %v5908
    %v5910 = vsel %vm2189, %v5909, %v5905
    %v5911 = vlaneseq
    %v5912 = vshrl.u32 %v5911, 7
    %v5913 = vsub.s32 %v2191, %v5912
    %v5914 = vrot.slane %v4930, %v5913
    %v5915 = vsel %vm2196, %v5914, %v5910
    %v5916 = vlaneseq
    %v5917 = vshrl.u32 %v5916, 7
    %v5918 = vsub.s32 %v2088, %v5917
    %v5919 = vrot.slane %v4933, %v5918
    %v5920 = vlaneseq
    %v5921 = vshrl.u32 %v5920, 7
    %v5922 = vsub.s32 %v2093, %v5921
    %v5923 = vrot.slane %v4936, %v5922
    %v5924 = vsel %vm2098, %v5923, %v5919
    %v5925 = vlaneseq
    %v5926 = vshrl.u32 %v5925, 7
    %v5927 = vsub.s32 %v2100, %v5926
    %v5928 = vrot.slane %v4939, %v5927
    %v5929 = vsel %vm2105, %v5928, %v5924
    %v5930 = vlaneseq
    %v5931 = vshrl.u32 %v5930, 7
    %v5932 = vsub.s32 %v2107, %v5931
    %v5933 = vrot.slane %v4942, %v5932
    %v5934 = vsel %vm2112, %v5933, %v5929
    %v5935 = vlaneseq
    %v5936 = vshrl.u32 %v5935, 7
    %v5937 = vsub.s32 %v2114, %v5936
    %v5938 = vrot.slane %v4945, %v5937
    %v5939 = vsel %vm2119, %v5938, %v5934
    %v5940 = vlaneseq
    %v5941 = vshrl.u32 %v5940, 7
    %v5942 = vsub.s32 %v2121, %v5941
    %v5943 = vrot.slane %v4948, %v5942
    %v5944 = vsel %vm2126, %v5943, %v5939
    %v5945 = vlaneseq
    %v5946 = vshrl.u32 %v5945, 7
    %v5947 = vsub.s32 %v2128, %v5946
    %v5948 = vrot.slane %v4951, %v5947
    %v5949 = vsel %vm2133, %v5948, %v5944
    %v5950 = vlaneseq
    %v5951 = vshrl.u32 %v5950, 7
    %v5952 = vsub.s32 %v2135, %v5951
    %v5953 = vrot.slane %v4954, %v5952
    %v5954 = vsel %vm2140, %v5953, %v5949
    %v5955 = vlaneseq
    %v5956 = vshrl.u32 %v5955, 7
    %v5957 = vsub.s32 %v2142, %v5956
    %v5958 = vrot.slane %v4957, %v5957
    %v5959 = vsel %vm2147, %v5958, %v5954
    %v5960 = vlaneseq
    %v5961 = vshrl.u32 %v5960, 7
    %v5962 = vsub.s32 %v2149, %v5961
    %v5963 = vrot.slane %v4960, %v5962
    %v5964 = vsel %vm2154, %v5963, %v5959
    %v5965 = vlaneseq
    %v5966 = vshrl.u32 %v5965, 7
    %v5967 = vsub.s32 %v2156, %v5966
    %v5968 = vrot.slane %v4963, %v5967
    %v5969 = vsel %vm2161, %v5968, %v5964
    %v5970 = vlaneseq
    %v5971 = vshrl.u32 %v5970, 7
    %v5972 = vsub.s32 %v2163, %v5971
    %v5973 = vrot.slane %v4966, %v5972
    %v5974 = vsel %vm2168, %v5973, %v5969
    %v5975 = vlaneseq
    %v5976 = vshrl.u32 %v5975, 7
    %v5977 = vsub.s32 %v2170, %v5976
    %v5978 = vrot.slane %v4969, %v5977
    %v5979 = vsel %vm2175, %v5978, %v5974
    %v5980 = vlaneseq
    %v5981 = vshrl.u32 %v5980, 7
    %v5982 = vsub.s32 %v2177, %v5981
    %v5983 = vrot.slane %v4972, %v5982
    %v5984 = vsel %vm2182, %v5983, %v5979
    %v5985 = vlaneseq
    %v5986 = vshrl.u32 %v5985, 7
    %v5987 = vsub.s32 %v2184, %v5986
    %v5988 = vrot.slane %v4975, %v5987
    %v5989 = vsel %vm2189, %v5988, %v5984
    %v5990 = vlaneseq
    %v5991 = vshrl.u32 %v5990, 7
    %v5992 = vsub.s32 %v2191, %v5991
    %v5993 = vrot.slane %v4978, %v5992
    %v5994 = vsel %vm2196, %v5993, %v5989
    %v5995 = vlaneseq
    %v5996 = vshrl.u32 %v5995, 7
    %v5997 = vsub.s32 %v2088, %v5996
    %v5998 = vrot.slane %v4981, %v5997
    %v5999 = vlaneseq
    %v6000 = vshrl.u32 %v5999, 7
    %v6001 = vsub.s32 %v2093, %v6000
    %v6002 = vrot.slane %v4984, %v6001
    %v6003 = vsel %vm2098, %v6002, %v5998
    %v6004 = vlaneseq
    %v6005 = vshrl.u32 %v6004, 7
    %v6006 = vsub.s32 %v2100, %v6005
    %v6007 = vrot.slane %v4987, %v6006
    %v6008 = vsel %vm2105, %v6007, %v6003
    %v6009 = vlaneseq
    %v6010 = vshrl.u32 %v6009, 7
    %v6011 = vsub.s32 %v2107, %v6010
    %v6012 = vrot.slane %v4990, %v6011
    %v6013 = vsel %vm2112, %v6012, %v6008
    %v6014 = vlaneseq
    %v6015 = vshrl.u32 %v6014, 7
    %v6016 = vsub.s32 %v2114, %v6015
    %v6017 = vrot.slane %v4993, %v6016
    %v6018 = vsel %vm2119, %v6017, %v6013
    %v6019 = vlaneseq
    %v6020 = vshrl.u32 %v6019, 7
    %v6021 = vsub.s32 %v2121, %v6020
    %v6022 = vrot.slane %v4996, %v6021
    %v6023 = vsel %vm2126, %v6022, %v6018
    %v6024 = vlaneseq
    %v6025 = vshrl.u32 %v6024, 7
    %v6026 = vsub.s32 %v2128, %v6025
    %v6027 = vrot.slane %v4999, %v6026
    %v6028 = vsel %vm2133, %v6027, %v6023
    %v6029 = vlaneseq
    %v6030 = vshrl.u32 %v6029, 7
    %v6031 = vsub.s32 %v2135, %v6030
    %v6032 = vrot.slane %v5002, %v6031
    %v6033 = vsel %vm2140, %v6032, %v6028
    %v6034 = vlaneseq
    %v6035 = vshrl.u32 %v6034, 7
    %v6036 = vsub.s32 %v2142, %v6035
    %v6037 = vrot.slane %v5005, %v6036
    %v6038 = vsel %vm2147, %v6037, %v6033
    %v6039 = vlaneseq
    %v6040 = vshrl.u32 %v6039, 7
    %v6041 = vsub.s32 %v2149, %v6040
    %v6042 = vrot.slane %v5008, %v6041
    %v6043 = vsel %vm2154, %v6042, %v6038
    %v6044 = vlaneseq
    %v6045 = vshrl.u32 %v6044, 7
    %v6046 = vsub.s32 %v2156, %v6045
    %v6047 = vrot.slane %v5011, %v6046
    %v6048 = vsel %vm2161, %v6047, %v6043
    %v6049 = vlaneseq
    %v6050 = vshrl.u32 %v6049, 7
    %v6051 = vsub.s32 %v2163, %v6050
    %v6052 = vrot.slane %v5014, %v6051
    %v6053 = vsel %vm2168, %v6052, %v6048
    %v6054 = vlaneseq
    %v6055 = vshrl.u32 %v6054, 7
    %v6056 = vsub.s32 %v2170, %v6055
    %v6057 = vrot.slane %v5017, %v6056
    %v6058 = vsel %vm2175, %v6057, %v6053
    %v6059 = vlaneseq
    %v6060 = vshrl.u32 %v6059, 7
    %v6061 = vsub.s32 %v2177, %v6060
    %v6062 = vrot.slane %v5020, %v6061
    %v6063 = vsel %vm2182, %v6062, %v6058
    %v6064 = vlaneseq
    %v6065 = vshrl.u32 %v6064, 7
    %v6066 = vsub.s32 %v2184, %v6065
    %v6067 = vrot.slane %v5023, %v6066
    %v6068 = vsel %vm2189, %v6067, %v6063
    %v6069 = vlaneseq
    %v6070 = vshrl.u32 %v6069, 7
    %v6071 = vsub.s32 %v2191, %v6070
    %v6072 = vrot.slane %v5026, %v6071
    %v6073 = vsel %vm2196, %v6072, %v6068
    %v6074 = vlaneseq
    %v6075 = vshrl.u32 %v6074, 7
    %v6076 = vsub.s32 %v2088, %v6075
    %v6077 = vrot.slane %v5029, %v6076
    %v6078 = vlaneseq
    %v6079 = vshrl.u32 %v6078, 7
    %v6080 = vsub.s32 %v2093, %v6079
    %v6081 = vrot.slane %v5032, %v6080
    %v6082 = vsel %vm2098, %v6081, %v6077
    %v6083 = vlaneseq
    %v6084 = vshrl.u32 %v6083, 7
    %v6085 = vsub.s32 %v2100, %v6084
    %v6086 = vrot.slane %v5035, %v6085
    %v6087 = vsel %vm2105, %v6086, %v6082
    %v6088 = vlaneseq
    %v6089 = vshrl.u32 %v6088, 7
    %v6090 = vsub.s32 %v2107, %v6089
    %v6091 = vrot.slane %v5038, %v6090
    %v6092 = vsel %vm2112, %v6091, %v6087
    %v6093 = vlaneseq
    %v6094 = vshrl.u32 %v6093, 7
    %v6095 = vsub.s32 %v2114, %v6094
    %v6096 = vrot.slane %v5041, %v6095
    %v6097 = vsel %vm2119, %v6096, %v6092
    %v6098 = vlaneseq
    %v6099 = vshrl.u32 %v6098, 7
    %v6100 = vsub.s32 %v2121, %v6099
    %v6101 = vrot.slane %v5044, %v6100
    %v6102 = vsel %vm2126, %v6101, %v6097
    %v6103 = vlaneseq
    %v6104 = vshrl.u32 %v6103, 7
    %v6105 = vsub.s32 %v2128, %v6104
    %v6106 = vrot.slane %v5047, %v6105
    %v6107 = vsel %vm2133, %v6106, %v6102
    %v6108 = vlaneseq
    %v6109 = vshrl.u32 %v6108, 7
    %v6110 = vsub.s32 %v2135, %v6109
    %v6111 = vrot.slane %v5050, %v6110
    %v6112 = vsel %vm2140, %v6111, %v6107
    %v6113 = vlaneseq
    %v6114 = vshrl.u32 %v6113, 7
    %v6115 = vsub.s32 %v2142, %v6114
    %v6116 = vrot.slane %v5053, %v6115
    %v6117 = vsel %vm2147, %v6116, %v6112
    %v6118 = vlaneseq
    %v6119 = vshrl.u32 %v6118, 7
    %v6120 = vsub.s32 %v2149, %v6119
    %v6121 = vrot.slane %v5056, %v6120
    %v6122 = vsel %vm2154, %v6121, %v6117
    %v6123 = vlaneseq
    %v6124 = vshrl.u32 %v6123, 7
    %v6125 = vsub.s32 %v2156, %v6124
    %v6126 = vrot.slane %v5059, %v6125
    %v6127 = vsel %vm2161, %v6126, %v6122
    %v6128 = vlaneseq
    %v6129 = vshrl.u32 %v6128, 7
    %v6130 = vsub.s32 %v2163, %v6129
    %v6131 = vrot.slane %v5062, %v6130
    %v6132 = vsel %vm2168, %v6131, %v6127
    %v6133 = vlaneseq
    %v6134 = vshrl.u32 %v6133, 7
    %v6135 = vsub.s32 %v2170, %v6134
    %v6136 = vrot.slane %v5065, %v6135
    %v6137 = vsel %vm2175, %v6136, %v6132
    %v6138 = vlaneseq
    %v6139 = vshrl.u32 %v6138, 7
    %v6140 = vsub.s32 %v2177, %v6139
    %v6141 = vrot.slane %v5068, %v6140
    %v6142 = vsel %vm2182, %v6141, %v6137
    %v6143 = vlaneseq
    %v6144 = vshrl.u32 %v6143, 7
    %v6145 = vsub.s32 %v2184, %v6144
    %v6146 = vrot.slane %v5071, %v6145
    %v6147 = vsel %vm2189, %v6146, %v6142
    %v6148 = vlaneseq
    %v6149 = vshrl.u32 %v6148, 7
    %v6150 = vsub.s32 %v2191, %v6149
    %v6151 = vrot.slane %v5074, %v6150
    %v6152 = vsel %vm2196, %v6151, %v6147
    %v6153 = vlaneseq
    %v6154 = vshrl.u32 %v6153, 7
    %v6155 = vsub.s32 %v2088, %v6154
    %v6156 = vrot.slane %v5077, %v6155
    %v6157 = vlaneseq
    %v6158 = vshrl.u32 %v6157, 7
    %v6159 = vsub.s32 %v2093, %v6158
    %v6160 = vrot.slane %v5080, %v6159
    %v6161 = vsel %vm2098, %v6160, %v6156
    %v6162 = vlaneseq
    %v6163 = vshrl.u32 %v6162, 7
    %v6164 = vsub.s32 %v2100, %v6163
    %v6165 = vrot.slane %v5083, %v6164
    %v6166 = vsel %vm2105, %v6165, %v6161
    %v6167 = vlaneseq
    %v6168 = vshrl.u32 %v6167, 7
    %v6169 = vsub.s32 %v2107, %v6168
    %v6170 = vrot.slane %v5086, %v6169
    %v6171 = vsel %vm2112, %v6170, %v6166
    %v6172 = vlaneseq
    %v6173 = vshrl.u32 %v6172, 7
    %v6174 = vsub.s32 %v2114, %v6173
    %v6175 = vrot.slane %v5089, %v6174
    %v6176 = vsel %vm2119, %v6175, %v6171
    %v6177 = vlaneseq
    %v6178 = vshrl.u32 %v6177, 7
    %v6179 = vsub.s32 %v2121, %v6178
    %v6180 = vrot.slane %v5092, %v6179
    %v6181 = vsel %vm2126, %v6180, %v6176
    %v6182 = vlaneseq
    %v6183 = vshrl.u32 %v6182, 7
    %v6184 = vsub.s32 %v2128, %v6183
    %v6185 = vrot.slane %v5095, %v6184
    %v6186 = vsel %vm2133, %v6185, %v6181
    %v6187 = vlaneseq
    %v6188 = vshrl.u32 %v6187, 7
    %v6189 = vsub.s32 %v2135, %v6188
    %v6190 = vrot.slane %v5098, %v6189
    %v6191 = vsel %vm2140, %v6190, %v6186
    %v6192 = vlaneseq
    %v6193 = vshrl.u32 %v6192, 7
    %v6194 = vsub.s32 %v2142, %v6193
    %v6195 = vrot.slane %v5101, %v6194
    %v6196 = vsel %vm2147, %v6195, %v6191
    %v6197 = vlaneseq
    %v6198 = vshrl.u32 %v6197, 7
    %v6199 = vsub.s32 %v2149, %v6198
    %v6200 = vrot.slane %v5104, %v6199
    %v6201 = vsel %vm2154, %v6200, %v6196
    %v6202 = vlaneseq
    %v6203 = vshrl.u32 %v6202, 7
    %v6204 = vsub.s32 %v2156, %v6203
    %v6205 = vrot.slane %v5107, %v6204
    %v6206 = vsel %vm2161, %v6205, %v6201
    %v6207 = vlaneseq
    %v6208 = vshrl.u32 %v6207, 7
    %v6209 = vsub.s32 %v2163, %v6208
    %v6210 = vrot.slane %v5110, %v6209
    %v6211 = vsel %vm2168, %v6210, %v6206
    %v6212 = vlaneseq
    %v6213 = vshrl.u32 %v6212, 7
    %v6214 = vsub.s32 %v2170, %v6213
    %v6215 = vrot.slane %v5113, %v6214
    %v6216 = vsel %vm2175, %v6215, %v6211
    %v6217 = vlaneseq
    %v6218 = vshrl.u32 %v6217, 7
    %v6219 = vsub.s32 %v2177, %v6218
    %v6220 = vrot.slane %v5116, %v6219
    %v6221 = vsel %vm2182, %v6220, %v6216
    %v6222 = vlaneseq
    %v6223 = vshrl.u32 %v6222, 7
    %v6224 = vsub.s32 %v2184, %v6223
    %v6225 = vrot.slane %v5119, %v6224
    %v6226 = vsel %vm2189, %v6225, %v6221
    %v6227 = vlaneseq
    %v6228 = vshrl.u32 %v6227, 7
    %v6229 = vsub.s32 %v2191, %v6228
    %v6230 = vrot.slane %v5122, %v6229
    %v6231 = vsel %vm2196, %v6230, %v6226
    %v6232 = vlaneseq
    %v6233 = vshrl.u32 %v6232, 7
    %v6234 = vsub.s32 %v2088, %v6233
    %v6235 = vrot.slane %v5125, %v6234
    %v6236 = vlaneseq
    %v6237 = vshrl.u32 %v6236, 7
    %v6238 = vsub.s32 %v2093, %v6237
    %v6239 = vrot.slane %v5128, %v6238
    %v6240 = vsel %vm2098, %v6239, %v6235
    %v6241 = vlaneseq
    %v6242 = vshrl.u32 %v6241, 7
    %v6243 = vsub.s32 %v2100, %v6242
    %v6244 = vrot.slane %v5131, %v6243
    %v6245 = vsel %vm2105, %v6244, %v6240
    %v6246 = vlaneseq
    %v6247 = vshrl.u32 %v6246, 7
    %v6248 = vsub.s32 %v2107, %v6247
    %v6249 = vrot.slane %v5134, %v6248
    %v6250 = vsel %vm2112, %v6249, %v6245
    %v6251 = vlaneseq
    %v6252 = vshrl.u32 %v6251, 7
    %v6253 = vsub.s32 %v2114, %v6252
    %v6254 = vrot.slane %v5137, %v6253
    %v6255 = vsel %vm2119, %v6254, %v6250
    %v6256 = vlaneseq
    %v6257 = vshrl.u32 %v6256, 7
    %v6258 = vsub.s32 %v2121, %v6257
    %v6259 = vrot.slane %v5140, %v6258
    %v6260 = vsel %vm2126, %v6259, %v6255
    %v6261 = vlaneseq
    %v6262 = vshrl.u32 %v6261, 7
    %v6263 = vsub.s32 %v2128, %v6262
    %v6264 = vrot.slane %v5143, %v6263
    %v6265 = vsel %vm2133, %v6264, %v6260
    %v6266 = vlaneseq
    %v6267 = vshrl.u32 %v6266, 7
    %v6268 = vsub.s32 %v2135, %v6267
    %v6269 = vrot.slane %v5146, %v6268
    %v6270 = vsel %vm2140, %v6269, %v6265
    %v6271 = vlaneseq
    %v6272 = vshrl.u32 %v6271, 7
    %v6273 = vsub.s32 %v2142, %v6272
    %v6274 = vrot.slane %v5149, %v6273
    %v6275 = vsel %vm2147, %v6274, %v6270
    %v6276 = vlaneseq
    %v6277 = vshrl.u32 %v6276, 7
    %v6278 = vsub.s32 %v2149, %v6277
    %v6279 = vrot.slane %v5152, %v6278
    %v6280 = vsel %vm2154, %v6279, %v6275
    %v6281 = vlaneseq
    %v6282 = vshrl.u32 %v6281, 7
    %v6283 = vsub.s32 %v2156, %v6282
    %v6284 = vrot.slane %v5155, %v6283
    %v6285 = vsel %vm2161, %v6284, %v6280
    %v6286 = vlaneseq
    %v6287 = vshrl.u32 %v6286, 7
    %v6288 = vsub.s32 %v2163, %v6287
    %v6289 = vrot.slane %v5158, %v6288
    %v6290 = vsel %vm2168, %v6289, %v6285
    %v6291 = vlaneseq
    %v6292 = vshrl.u32 %v6291, 7
    %v6293 = vsub.s32 %v2170, %v6292
    %v6294 = vrot.slane %v5161, %v6293
    %v6295 = vsel %vm2175, %v6294, %v6290
    %v6296 = vlaneseq
    %v6297 = vshrl.u32 %v6296, 7
    %v6298 = vsub.s32 %v2177, %v6297
    %v6299 = vrot.slane %v5164, %v6298
    %v6300 = vsel %vm2182, %v6299, %v6295
    %v6301 = vlaneseq
    %v6302 = vshrl.u32 %v6301, 7
    %v6303 = vsub.s32 %v2184, %v6302
    %v6304 = vrot.slane %v5167, %v6303
    %v6305 = vsel %vm2189, %v6304, %v6300
    %v6306 = vlaneseq
    %v6307 = vshrl.u32 %v6306, 7
    %v6308 = vsub.s32 %v2191, %v6307
    %v6309 = vrot.slane %v5170, %v6308
    %v6310 = vsel %vm2196, %v6309, %v6305
    %v6311 = vlaneseq
    %v6312 = vshrl.u32 %v6311, 7
    %v6313 = vsub.s32 %v2088, %v6312
    %v6314 = vrot.slane %v5173, %v6313
    %v6315 = vlaneseq
    %v6316 = vshrl.u32 %v6315, 7
    %v6317 = vsub.s32 %v2093, %v6316
    %v6318 = vrot.slane %v5176, %v6317
    %v6319 = vsel %vm2098, %v6318, %v6314
    %v6320 = vlaneseq
    %v6321 = vshrl.u32 %v6320, 7
    %v6322 = vsub.s32 %v2100, %v6321
    %v6323 = vrot.slane %v5179, %v6322
    %v6324 = vsel %vm2105, %v6323, %v6319
    %v6325 = vlaneseq
    %v6326 = vshrl.u32 %v6325, 7
    %v6327 = vsub.s32 %v2107, %v6326
    %v6328 = vrot.slane %v5182, %v6327
    %v6329 = vsel %vm2112, %v6328, %v6324
    %v6330 = vlaneseq
    %v6331 = vshrl.u32 %v6330, 7
    %v6332 = vsub.s32 %v2114, %v6331
    %v6333 = vrot.slane %v5185, %v6332
    %v6334 = vsel %vm2119, %v6333, %v6329
    %v6335 = vlaneseq
    %v6336 = vshrl.u32 %v6335, 7
    %v6337 = vsub.s32 %v2121, %v6336
    %v6338 = vrot.slane %v5188, %v6337
    %v6339 = vsel %vm2126, %v6338, %v6334
    %v6340 = vlaneseq
    %v6341 = vshrl.u32 %v6340, 7
    %v6342 = vsub.s32 %v2128, %v6341
    %v6343 = vrot.slane %v5191, %v6342
    %v6344 = vsel %vm2133, %v6343, %v6339
    %v6345 = vlaneseq
    %v6346 = vshrl.u32 %v6345, 7
    %v6347 = vsub.s32 %v2135, %v6346
    %v6348 = vrot.slane %v5194, %v6347
    %v6349 = vsel %vm2140, %v6348, %v6344
    %v6350 = vlaneseq
    %v6351 = vshrl.u32 %v6350, 7
    %v6352 = vsub.s32 %v2142, %v6351
    %v6353 = vrot.slane %v5197, %v6352
    %v6354 = vsel %vm2147, %v6353, %v6349
    %v6355 = vlaneseq
    %v6356 = vshrl.u32 %v6355, 7
    %v6357 = vsub.s32 %v2149, %v6356
    %v6358 = vrot.slane %v5200, %v6357
    %v6359 = vsel %vm2154, %v6358, %v6354
    %v6360 = vlaneseq
    %v6361 = vshrl.u32 %v6360, 7
    %v6362 = vsub.s32 %v2156, %v6361
    %v6363 = vrot.slane %v5203, %v6362
    %v6364 = vsel %vm2161, %v6363, %v6359
    %v6365 = vlaneseq
    %v6366 = vshrl.u32 %v6365, 7
    %v6367 = vsub.s32 %v2163, %v6366
    %v6368 = vrot.slane %v5206, %v6367
    %v6369 = vsel %vm2168, %v6368, %v6364
    %v6370 = vlaneseq
    %v6371 = vshrl.u32 %v6370, 7
    %v6372 = vsub.s32 %v2170, %v6371
    %v6373 = vrot.slane %v5209, %v6372
    %v6374 = vsel %vm2175, %v6373, %v6369
    %v6375 = vlaneseq
    %v6376 = vshrl.u32 %v6375, 7
    %v6377 = vsub.s32 %v2177, %v6376
    %v6378 = vrot.slane %v5212, %v6377
    %v6379 = vsel %vm2182, %v6378, %v6374
    %v6380 = vlaneseq
    %v6381 = vshrl.u32 %v6380, 7
    %v6382 = vsub.s32 %v2184, %v6381
    %v6383 = vrot.slane %v5215, %v6382
    %v6384 = vsel %vm2189, %v6383, %v6379
    %v6385 = vlaneseq
    %v6386 = vshrl.u32 %v6385, 7
    %v6387 = vsub.s32 %v2191, %v6386
    %v6388 = vrot.slane %v5218, %v6387
    %v6389 = vsel %vm2196, %v6388, %v6384
    %v6390 = vlaneseq
    %v6391 = vshrl.u32 %v6390, 7
    %v6392 = vsub.s32 %v2088, %v6391
    %v6393 = vrot.slane %v5221, %v6392
    %v6394 = vlaneseq
    %v6395 = vshrl.u32 %v6394, 7
    %v6396 = vsub.s32 %v2093, %v6395
    %v6397 = vrot.slane %v5224, %v6396
    %v6398 = vsel %vm2098, %v6397, %v6393
    %v6399 = vlaneseq
    %v6400 = vshrl.u32 %v6399, 7
    %v6401 = vsub.s32 %v2100, %v6400
    %v6402 = vrot.slane %v5227, %v6401
    %v6403 = vsel %vm2105, %v6402, %v6398
    %v6404 = vlaneseq
    %v6405 = vshrl.u32 %v6404, 7
    %v6406 = vsub.s32 %v2107, %v6405
    %v6407 = vrot.slane %v5230, %v6406
    %v6408 = vsel %vm2112, %v6407, %v6403
    %v6409 = vlaneseq
    %v6410 = vshrl.u32 %v6409, 7
    %v6411 = vsub.s32 %v2114, %v6410
    %v6412 = vrot.slane %v5233, %v6411
    %v6413 = vsel %vm2119, %v6412, %v6408
    %v6414 = vlaneseq
    %v6415 = vshrl.u32 %v6414, 7
    %v6416 = vsub.s32 %v2121, %v6415
    %v6417 = vrot.slane %v5236, %v6416
    %v6418 = vsel %vm2126, %v6417, %v6413
    %v6419 = vlaneseq
    %v6420 = vshrl.u32 %v6419, 7
    %v6421 = vsub.s32 %v2128, %v6420
    %v6422 = vrot.slane %v5239, %v6421
    %v6423 = vsel %vm2133, %v6422, %v6418
    %v6424 = vlaneseq
    %v6425 = vshrl.u32 %v6424, 7
    %v6426 = vsub.s32 %v2135, %v6425
    %v6427 = vrot.slane %v5242, %v6426
    %v6428 = vsel %vm2140, %v6427, %v6423
    %v6429 = vlaneseq
    %v6430 = vshrl.u32 %v6429, 7
    %v6431 = vsub.s32 %v2142, %v6430
    %v6432 = vrot.slane %v5245, %v6431
    %v6433 = vsel %vm2147, %v6432, %v6428
    %v6434 = vlaneseq
    %v6435 = vshrl.u32 %v6434, 7
    %v6436 = vsub.s32 %v2149, %v6435
    %v6437 = vrot.slane %v5248, %v6436
    %v6438 = vsel %vm2154, %v6437, %v6433
    %v6439 = vlaneseq
    %v6440 = vshrl.u32 %v6439, 7
    %v6441 = vsub.s32 %v2156, %v6440
    %v6442 = vrot.slane %v5251, %v6441
    %v6443 = vsel %vm2161, %v6442, %v6438
    %v6444 = vlaneseq
    %v6445 = vshrl.u32 %v6444, 7
    %v6446 = vsub.s32 %v2163, %v6445
    %v6447 = vrot.slane %v5254, %v6446
    %v6448 = vsel %vm2168, %v6447, %v6443
    %v6449 = vlaneseq
    %v6450 = vshrl.u32 %v6449, 7
    %v6451 = vsub.s32 %v2170, %v6450
    %v6452 = vrot.slane %v5257, %v6451
    %v6453 = vsel %vm2175, %v6452, %v6448
    %v6454 = vlaneseq
    %v6455 = vshrl.u32 %v6454, 7
    %v6456 = vsub.s32 %v2177, %v6455
    %v6457 = vrot.slane %v5260, %v6456
    %v6458 = vsel %vm2182, %v6457, %v6453
    %v6459 = vlaneseq
    %v6460 = vshrl.u32 %v6459, 7
    %v6461 = vsub.s32 %v2184, %v6460
    %v6462 = vrot.slane %v5263, %v6461
    %v6463 = vsel %vm2189, %v6462, %v6458
    %v6464 = vlaneseq
    %v6465 = vshrl.u32 %v6464, 7
    %v6466 = vsub.s32 %v2191, %v6465
    %v6467 = vrot.slane %v5266, %v6466
    %v6468 = vsel %vm2196, %v6467, %v6463
    %v6469 = vlaneseq
    %v6470 = vshrl.u32 %v6469, 7
    %v6471 = vsub.s32 %v2088, %v6470
    %v6472 = vrot.slane %v5269, %v6471
    %v6473 = vlaneseq
    %v6474 = vshrl.u32 %v6473, 7
    %v6475 = vsub.s32 %v2093, %v6474
    %v6476 = vrot.slane %v5272, %v6475
    %v6477 = vsel %vm2098, %v6476, %v6472
    %v6478 = vlaneseq
    %v6479 = vshrl.u32 %v6478, 7
    %v6480 = vsub.s32 %v2100, %v6479
    %v6481 = vrot.slane %v5275, %v6480
    %v6482 = vsel %vm2105, %v6481, %v6477
    %v6483 = vlaneseq
    %v6484 = vshrl.u32 %v6483, 7
    %v6485 = vsub.s32 %v2107, %v6484
    %v6486 = vrot.slane %v5278, %v6485
    %v6487 = vsel %vm2112, %v6486, %v6482
    %v6488 = vlaneseq
    %v6489 = vshrl.u32 %v6488, 7
    %v6490 = vsub.s32 %v2114, %v6489
    %v6491 = vrot.slane %v5281, %v6490
    %v6492 = vsel %vm2119, %v6491, %v6487
    %v6493 = vlaneseq
    %v6494 = vshrl.u32 %v6493, 7
    %v6495 = vsub.s32 %v2121, %v6494
    %v6496 = vrot.slane %v5284, %v6495
    %v6497 = vsel %vm2126, %v6496, %v6492
    %v6498 = vlaneseq
    %v6499 = vshrl.u32 %v6498, 7
    %v6500 = vsub.s32 %v2128, %v6499
    %v6501 = vrot.slane %v5287, %v6500
    %v6502 = vsel %vm2133, %v6501, %v6497
    %v6503 = vlaneseq
    %v6504 = vshrl.u32 %v6503, 7
    %v6505 = vsub.s32 %v2135, %v6504
    %v6506 = vrot.slane %v5290, %v6505
    %v6507 = vsel %vm2140, %v6506, %v6502
    %v6508 = vlaneseq
    %v6509 = vshrl.u32 %v6508, 7
    %v6510 = vsub.s32 %v2142, %v6509
    %v6511 = vrot.slane %v5293, %v6510
    %v6512 = vsel %vm2147, %v6511, %v6507
    %v6513 = vlaneseq
    %v6514 = vshrl.u32 %v6513, 7
    %v6515 = vsub.s32 %v2149, %v6514
    %v6516 = vrot.slane %v5296, %v6515
    %v6517 = vsel %vm2154, %v6516, %v6512
    %v6518 = vlaneseq
    %v6519 = vshrl.u32 %v6518, 7
    %v6520 = vsub.s32 %v2156, %v6519
    %v6521 = vrot.slane %v5299, %v6520
    %v6522 = vsel %vm2161, %v6521, %v6517
    %v6523 = vlaneseq
    %v6524 = vshrl.u32 %v6523, 7
    %v6525 = vsub.s32 %v2163, %v6524
    %v6526 = vrot.slane %v5302, %v6525
    %v6527 = vsel %vm2168, %v6526, %v6522
    %v6528 = vlaneseq
    %v6529 = vshrl.u32 %v6528, 7
    %v6530 = vsub.s32 %v2170, %v6529
    %v6531 = vrot.slane %v5305, %v6530
    %v6532 = vsel %vm2175, %v6531, %v6527
    %v6533 = vlaneseq
    %v6534 = vshrl.u32 %v6533, 7
    %v6535 = vsub.s32 %v2177, %v6534
    %v6536 = vrot.slane %v5308, %v6535
    %v6537 = vsel %vm2182, %v6536, %v6532
    %v6538 = vlaneseq
    %v6539 = vshrl.u32 %v6538, 7
    %v6540 = vsub.s32 %v2184, %v6539
    %v6541 = vrot.slane %v5311, %v6540
    %v6542 = vsel %vm2189, %v6541, %v6537
    %v6543 = vlaneseq
    %v6544 = vshrl.u32 %v6543, 7
    %v6545 = vsub.s32 %v2191, %v6544
    %v6546 = vrot.slane %v5314, %v6545
    %v6547 = vsel %vm2196, %v6546, %v6542
    %v6548 = vlaneseq
    %v6549 = vshrl.u32 %v6548, 7
    %v6550 = vsub.s32 %v2088, %v6549
    %v6551 = vrot.slane %v5317, %v6550
    %v6552 = vlaneseq
    %v6553 = vshrl.u32 %v6552, 7
    %v6554 = vsub.s32 %v2093, %v6553
    %v6555 = vrot.slane %v5320, %v6554
    %v6556 = vsel %vm2098, %v6555, %v6551
    %v6557 = vlaneseq
    %v6558 = vshrl.u32 %v6557, 7
    %v6559 = vsub.s32 %v2100, %v6558
    %v6560 = vrot.slane %v5323, %v6559
    %v6561 = vsel %vm2105, %v6560, %v6556
    %v6562 = vlaneseq
    %v6563 = vshrl.u32 %v6562, 7
    %v6564 = vsub.s32 %v2107, %v6563
    %v6565 = vrot.slane %v5326, %v6564
    %v6566 = vsel %vm2112, %v6565, %v6561
    %v6567 = vlaneseq
    %v6568 = vshrl.u32 %v6567, 7
    %v6569 = vsub.s32 %v2114, %v6568
    %v6570 = vrot.slane %v5329, %v6569
    %v6571 = vsel %vm2119, %v6570, %v6566
    %v6572 = vlaneseq
    %v6573 = vshrl.u32 %v6572, 7
    %v6574 = vsub.s32 %v2121, %v6573
    %v6575 = vrot.slane %v5332, %v6574
    %v6576 = vsel %vm2126, %v6575, %v6571
    %v6577 = vlaneseq
    %v6578 = vshrl.u32 %v6577, 7
    %v6579 = vsub.s32 %v2128, %v6578
    %v6580 = vrot.slane %v5335, %v6579
    %v6581 = vsel %vm2133, %v6580, %v6576
    %v6582 = vlaneseq
    %v6583 = vshrl.u32 %v6582, 7
    %v6584 = vsub.s32 %v2135, %v6583
    %v6585 = vrot.slane %v5338, %v6584
    %v6586 = vsel %vm2140, %v6585, %v6581
    %v6587 = vlaneseq
    %v6588 = vshrl.u32 %v6587, 7
    %v6589 = vsub.s32 %v2142, %v6588
    %v6590 = vrot.slane %v5341, %v6589
    %v6591 = vsel %vm2147, %v6590, %v6586
    %v6592 = vlaneseq
    %v6593 = vshrl.u32 %v6592, 7
    %v6594 = vsub.s32 %v2149, %v6593
    %v6595 = vrot.slane %v5344, %v6594
    %v6596 = vsel %vm2154, %v6595, %v6591
    %v6597 = vlaneseq
    %v6598 = vshrl.u32 %v6597, 7
    %v6599 = vsub.s32 %v2156, %v6598
    %v6600 = vrot.slane %v5347, %v6599
    %v6601 = vsel %vm2161, %v6600, %v6596
    %v6602 = vlaneseq
    %v6603 = vshrl.u32 %v6602, 7
    %v6604 = vsub.s32 %v2163, %v6603
    %v6605 = vrot.slane %v5350, %v6604
    %v6606 = vsel %vm2168, %v6605, %v6601
    %v6607 = vlaneseq
    %v6608 = vshrl.u32 %v6607, 7
    %v6609 = vsub.s32 %v2170, %v6608
    %v6610 = vrot.slane %v5353, %v6609
    %v6611 = vsel %vm2175, %v6610, %v6606
    %v6612 = vlaneseq
    %v6613 = vshrl.u32 %v6612, 7
    %v6614 = vsub.s32 %v2177, %v6613
    %v6615 = vrot.slane %v5356, %v6614
    %v6616 = vsel %vm2182, %v6615, %v6611
    %v6617 = vlaneseq
    %v6618 = vshrl.u32 %v6617, 7
    %v6619 = vsub.s32 %v2184, %v6618
    %v6620 = vrot.slane %v5359, %v6619
    %v6621 = vsel %vm2189, %v6620, %v6616
    %v6622 = vlaneseq
    %v6623 = vshrl.u32 %v6622, 7
    %v6624 = vsub.s32 %v2191, %v6623
    %v6625 = vrot.slane %v5362, %v6624
    %v6626 = vsel %vm2196, %v6625, %v6621
    %v6627 = vsel %vm3383, %v6073, %v5441
    %v6628 = vsel %vm3383, %v6152, %v5520
    %v6629 = vsel %vm3383, %v6231, %v5599
    %v6630 = vsel %vm3383, %v6310, %v5678
    %v6631 = vsel %vm3383, %v6389, %v5757
    %v6632 = vsel %vm3383, %v6468, %v5836
    %v6633 = vsel %vm3383, %v6547, %v5915
    %v6634 = vsel %vm3383, %v6626, %v5994
    %v6643 = vadd.f32 %v3400, %v6627
    %v6644 = vadd.f32 %v3401, %v6628
    %v6645 = vadd.f32 %v3402, %v6629
    %v6646 = vadd.f32 %v3403, %v6630
    %v6647 = vadd.f32 %v3404, %v6631
    %v6648 = vadd.f32 %v3405, %v6632
    %v6649 = vadd.f32 %v3406, %v6633
    %v6650 = vadd.f32 %v3407, %v6634
    %s6651 = scalar_lea.vmem [#allocation6], 2
    %v6652 = vld [vmem:[%s6651] ss:$4 sm:$0xff]
    %v6653 = vlaneseq
    %v6654 = vshrl.u32 %v6653, 7
    %v6655 = vsub.s32 2, %v6654
    %v6656 = vrot.slane %v85, %v6655
    %v6657 = vlaneseq
    %v6658 = vshrl.u32 %v6657, 7
    %v6659 = vsub.s32 2, %v6658
    %v6660 = vrot.slane %v90, %v6659
    %v6662 = vlaneseq
    %v6663 = vshrl.u32 %v6662, 7
    %v6664 = vsub.s32 0, %v6663
    %v6665 = vrot.slane %v6652, %v6664
    %v6666 = vlaneseq
    %v6667 = vshrl.u32 %v6666, 7
    %v6668 = vsub.s32 1, %v6667
    %v6669 = vrot.slane %v6652, %v6668
    %v6670 = vlaneseq
    %v6671 = vshrl.u32 %v6670, 7
    %v6672 = vsub.s32 2, %v6671
    %v6673 = vrot.slane %v6652, %v6672
    %v6674 = vlaneseq
    %v6675 = vshrl.u32 %v6674, 7
    %v6676 = vsub.s32 3, %v6675
    %v6677 = vrot.slane %v6652, %v6676
    %v6678 = vlaneseq
    %v6679 = vshrl.u32 %v6678, 7
    %v6680 = vsub.s32 4, %v6679
    %v6681 = vrot.slane %v6652, %v6680
    %v6682 = vlaneseq
    %v6683 = vshrl.u32 %v6682, 7
    %v6684 = vsub.s32 5, %v6683
    %v6685 = vrot.slane %v6652, %v6684
    %v6686 = vlaneseq
    %v6687 = vshrl.u32 %v6686, 7
    %v6688 = vsub.s32 6, %v6687
    %v6689 = vrot.slane %v6652, %v6688
    %v6690 = vlaneseq
    %v6691 = vshrl.u32 %v6690, 7
    %v6692 = vsub.s32 7, %v6691
    %v6693 = vrot.slane %v6652, %v6692
    %6695 = vbcast.lane.b32.xlu0 %v6665, 256
    %v6696 = vpop.permute.xlu0 %6695
    %s6698 = sor.u32 256, 8
    %6699 = vbcast.lane.b32.xlu0 %v6665, %s6698
    %v6700 = vpop.permute.xlu0 %6699
    %s6702 = sor.u32 256, 16
    %6703 = vbcast.lane.b32.xlu0 %v6665, %s6702
    %v6704 = vpop.permute.xlu0 %6703
    %s6706 = sor.u32 256, 24
    %6707 = vbcast.lane.b32.xlu0 %v6665, %s6706
    %v6708 = vpop.permute.xlu0 %6707
    %s6710 = sor.u32 256, 32
    %6711 = vbcast.lane.b32.xlu0 %v6665, %s6710
    %v6712 = vpop.permute.xlu0 %6711
    %s6714 = sor.u32 256, 40
    %6715 = vbcast.lane.b32.xlu0 %v6665, %s6714
    %v6716 = vpop.permute.xlu0 %6715
    %s6718 = sor.u32 256, 48
    %6719 = vbcast.lane.b32.xlu0 %v6665, %s6718
    %v6720 = vpop.permute.xlu0 %6719
    %s6722 = sor.u32 256, 56
    %6723 = vbcast.lane.b32.xlu0 %v6665, %s6722
    %v6724 = vpop.permute.xlu0 %6723
    %s6726 = sor.u32 256, 64
    %6727 = vbcast.lane.b32.xlu0 %v6665, %s6726
    %v6728 = vpop.permute.xlu0 %6727
    %s6730 = sor.u32 256, 72
    %6731 = vbcast.lane.b32.xlu0 %v6665, %s6730
    %v6732 = vpop.permute.xlu0 %6731
    %s6734 = sor.u32 256, 80
    %6735 = vbcast.lane.b32.xlu0 %v6665, %s6734
    %v6736 = vpop.permute.xlu0 %6735
    %s6738 = sor.u32 256, 88
    %6739 = vbcast.lane.b32.xlu0 %v6665, %s6738
    %v6740 = vpop.permute.xlu0 %6739
    %s6742 = sor.u32 256, 96
    %6743 = vbcast.lane.b32.xlu0 %v6665, %s6742
    %v6744 = vpop.permute.xlu0 %6743
    %s6746 = sor.u32 256, 104
    %6747 = vbcast.lane.b32.xlu0 %v6665, %s6746
    %v6748 = vpop.permute.xlu0 %6747
    %s6750 = sor.u32 256, 112
    %6751 = vbcast.lane.b32.xlu0 %v6665, %s6750
    %v6752 = vpop.permute.xlu0 %6751
    %s6754 = sor.u32 256, 120
    %6755 = vbcast.lane.b32.xlu0 %v6665, %s6754
    %v6756 = vpop.permute.xlu0 %6755
    %6758 = vbcast.lane.b32.xlu0 %v6669, 256
    %v6759 = vpop.permute.xlu0 %6758
    %s6761 = sor.u32 256, 8
    %6762 = vbcast.lane.b32.xlu0 %v6669, %s6761
    %v6763 = vpop.permute.xlu0 %6762
    %s6765 = sor.u32 256, 16
    %6766 = vbcast.lane.b32.xlu0 %v6669, %s6765
    %v6767 = vpop.permute.xlu0 %6766
    %s6769 = sor.u32 256, 24
    %6770 = vbcast.lane.b32.xlu0 %v6669, %s6769
    %v6771 = vpop.permute.xlu0 %6770
    %s6773 = sor.u32 256, 32
    %6774 = vbcast.lane.b32.xlu0 %v6669, %s6773
    %v6775 = vpop.permute.xlu0 %6774
    %s6777 = sor.u32 256, 40
    %6778 = vbcast.lane.b32.xlu0 %v6669, %s6777
    %v6779 = vpop.permute.xlu0 %6778
    %s6781 = sor.u32 256, 48
    %6782 = vbcast.lane.b32.xlu0 %v6669, %s6781
    %v6783 = vpop.permute.xlu0 %6782
    %s6785 = sor.u32 256, 56
    %6786 = vbcast.lane.b32.xlu0 %v6669, %s6785
    %v6787 = vpop.permute.xlu0 %6786
    %s6789 = sor.u32 256, 64
    %6790 = vbcast.lane.b32.xlu0 %v6669, %s6789
    %v6791 = vpop.permute.xlu0 %6790
    %s6793 = sor.u32 256, 72
    %6794 = vbcast.lane.b32.xlu0 %v6669, %s6793
    %v6795 = vpop.permute.xlu0 %6794
    %s6797 = sor.u32 256, 80
    %6798 = vbcast.lane.b32.xlu0 %v6669, %s6797
    %v6799 = vpop.permute.xlu0 %6798
    %s6801 = sor.u32 256, 88
    %6802 = vbcast.lane.b32.xlu0 %v6669, %s6801
    %v6803 = vpop.permute.xlu0 %6802
    %s6805 = sor.u32 256, 96
    %6806 = vbcast.lane.b32.xlu0 %v6669, %s6805
    %v6807 = vpop.permute.xlu0 %6806
    %s6809 = sor.u32 256, 104
    %6810 = vbcast.lane.b32.xlu0 %v6669, %s6809
    %v6811 = vpop.permute.xlu0 %6810
    %s6813 = sor.u32 256, 112
    %6814 = vbcast.lane.b32.xlu0 %v6669, %s6813
    %v6815 = vpop.permute.xlu0 %6814
    %s6817 = sor.u32 256, 120
    %6818 = vbcast.lane.b32.xlu0 %v6669, %s6817
    %v6819 = vpop.permute.xlu0 %6818
    %6821 = vbcast.lane.b32.xlu0 %v6673, 256
    %v6822 = vpop.permute.xlu0 %6821
    %s6824 = sor.u32 256, 8
    %6825 = vbcast.lane.b32.xlu0 %v6673, %s6824
    %v6826 = vpop.permute.xlu0 %6825
    %s6828 = sor.u32 256, 16
    %6829 = vbcast.lane.b32.xlu0 %v6673, %s6828
    %v6830 = vpop.permute.xlu0 %6829
    %s6832 = sor.u32 256, 24
    %6833 = vbcast.lane.b32.xlu0 %v6673, %s6832
    %v6834 = vpop.permute.xlu0 %6833
    %s6836 = sor.u32 256, 32
    %6837 = vbcast.lane.b32.xlu0 %v6673, %s6836
    %v6838 = vpop.permute.xlu0 %6837
    %s6840 = sor.u32 256, 40
    %6841 = vbcast.lane.b32.xlu0 %v6673, %s6840
    %v6842 = vpop.permute.xlu0 %6841
    %s6844 = sor.u32 256, 48
    %6845 = vbcast.lane.b32.xlu0 %v6673, %s6844
    %v6846 = vpop.permute.xlu0 %6845
    %s6848 = sor.u32 256, 56
    %6849 = vbcast.lane.b32.xlu0 %v6673, %s6848
    %v6850 = vpop.permute.xlu0 %6849
    %s6852 = sor.u32 256, 64
    %6853 = vbcast.lane.b32.xlu0 %v6673, %s6852
    %v6854 = vpop.permute.xlu0 %6853
    %s6856 = sor.u32 256, 72
    %6857 = vbcast.lane.b32.xlu0 %v6673, %s6856
    %v6858 = vpop.permute.xlu0 %6857
    %s6860 = sor.u32 256, 80
    %6861 = vbcast.lane.b32.xlu0 %v6673, %s6860
    %v6862 = vpop.permute.xlu0 %6861
    %s6864 = sor.u32 256, 88
    %6865 = vbcast.lane.b32.xlu0 %v6673, %s6864
    %v6866 = vpop.permute.xlu0 %6865
    %s6868 = sor.u32 256, 96
    %6869 = vbcast.lane.b32.xlu0 %v6673, %s6868
    %v6870 = vpop.permute.xlu0 %6869
    %s6872 = sor.u32 256, 104
    %6873 = vbcast.lane.b32.xlu0 %v6673, %s6872
    %v6874 = vpop.permute.xlu0 %6873
    %s6876 = sor.u32 256, 112
    %6877 = vbcast.lane.b32.xlu0 %v6673, %s6876
    %v6878 = vpop.permute.xlu0 %6877
    %s6880 = sor.u32 256, 120
    %6881 = vbcast.lane.b32.xlu0 %v6673, %s6880
    %v6882 = vpop.permute.xlu0 %6881
    %6884 = vbcast.lane.b32.xlu0 %v6677, 256
    %v6885 = vpop.permute.xlu0 %6884
    %s6887 = sor.u32 256, 8
    %6888 = vbcast.lane.b32.xlu0 %v6677, %s6887
    %v6889 = vpop.permute.xlu0 %6888
    %s6891 = sor.u32 256, 16
    %6892 = vbcast.lane.b32.xlu0 %v6677, %s6891
    %v6893 = vpop.permute.xlu0 %6892
    %s6895 = sor.u32 256, 24
    %6896 = vbcast.lane.b32.xlu0 %v6677, %s6895
    %v6897 = vpop.permute.xlu0 %6896
    %s6899 = sor.u32 256, 32
    %6900 = vbcast.lane.b32.xlu0 %v6677, %s6899
    %v6901 = vpop.permute.xlu0 %6900
    %s6903 = sor.u32 256, 40
    %6904 = vbcast.lane.b32.xlu0 %v6677, %s6903
    %v6905 = vpop.permute.xlu0 %6904
    %s6907 = sor.u32 256, 48
    %6908 = vbcast.lane.b32.xlu0 %v6677, %s6907
    %v6909 = vpop.permute.xlu0 %6908
    %s6911 = sor.u32 256, 56
    %6912 = vbcast.lane.b32.xlu0 %v6677, %s6911
    %v6913 = vpop.permute.xlu0 %6912
    %s6915 = sor.u32 256, 64
    %6916 = vbcast.lane.b32.xlu0 %v6677, %s6915
    %v6917 = vpop.permute.xlu0 %6916
    %s6919 = sor.u32 256, 72
    %6920 = vbcast.lane.b32.xlu0 %v6677, %s6919
    %v6921 = vpop.permute.xlu0 %6920
    %s6923 = sor.u32 256, 80
    %6924 = vbcast.lane.b32.xlu0 %v6677, %s6923
    %v6925 = vpop.permute.xlu0 %6924
    %s6927 = sor.u32 256, 88
    %6928 = vbcast.lane.b32.xlu0 %v6677, %s6927
    %v6929 = vpop.permute.xlu0 %6928
    %s6931 = sor.u32 256, 96
    %6932 = vbcast.lane.b32.xlu0 %v6677, %s6931
    %v6933 = vpop.permute.xlu0 %6932
    %s6935 = sor.u32 256, 104
    %6936 = vbcast.lane.b32.xlu0 %v6677, %s6935
    %v6937 = vpop.permute.xlu0 %6936
    %s6939 = sor.u32 256, 112
    %6940 = vbcast.lane.b32.xlu0 %v6677, %s6939
    %v6941 = vpop.permute.xlu0 %6940
    %s6943 = sor.u32 256, 120
    %6944 = vbcast.lane.b32.xlu0 %v6677, %s6943
    %v6945 = vpop.permute.xlu0 %6944
    %6947 = vbcast.lane.b32.xlu0 %v6681, 256
    %v6948 = vpop.permute.xlu0 %6947
    %s6950 = sor.u32 256, 8
    %6951 = vbcast.lane.b32.xlu0 %v6681, %s6950
    %v6952 = vpop.permute.xlu0 %6951
    %s6954 = sor.u32 256, 16
    %6955 = vbcast.lane.b32.xlu0 %v6681, %s6954
    %v6956 = vpop.permute.xlu0 %6955
    %s6958 = sor.u32 256, 24
    %6959 = vbcast.lane.b32.xlu0 %v6681, %s6958
    %v6960 = vpop.permute.xlu0 %6959
    %s6962 = sor.u32 256, 32
    %6963 = vbcast.lane.b32.xlu0 %v6681, %s6962
    %v6964 = vpop.permute.xlu0 %6963
    %s6966 = sor.u32 256, 40
    %6967 = vbcast.lane.b32.xlu0 %v6681, %s6966
    %v6968 = vpop.permute.xlu0 %6967
    %s6970 = sor.u32 256, 48
    %6971 = vbcast.lane.b32.xlu0 %v6681, %s6970
    %v6972 = vpop.permute.xlu0 %6971
    %s6974 = sor.u32 256, 56
    %6975 = vbcast.lane.b32.xlu0 %v6681, %s6974
    %v6976 = vpop.permute.xlu0 %6975
    %s6978 = sor.u32 256, 64
    %6979 = vbcast.lane.b32.xlu0 %v6681, %s6978
    %v6980 = vpop.permute.xlu0 %6979
    %s6982 = sor.u32 256, 72
    %6983 = vbcast.lane.b32.xlu0 %v6681, %s6982
    %v6984 = vpop.permute.xlu0 %6983
    %s6986 = sor.u32 256, 80
    %6987 = vbcast.lane.b32.xlu0 %v6681, %s6986
    %v6988 = vpop.permute.xlu0 %6987
    %s6990 = sor.u32 256, 88
    %6991 = vbcast.lane.b32.xlu0 %v6681, %s6990
    %v6992 = vpop.permute.xlu0 %6991
    %s6994 = sor.u32 256, 96
    %6995 = vbcast.lane.b32.xlu0 %v6681, %s6994
    %v6996 = vpop.permute.xlu0 %6995
    %s6998 = sor.u32 256, 104
    %6999 = vbcast.lane.b32.xlu0 %v6681, %s6998
    %v7000 = vpop.permute.xlu0 %6999
    %s7002 = sor.u32 256, 112
    %7003 = vbcast.lane.b32.xlu0 %v6681, %s7002
    %v7004 = vpop.permute.xlu0 %7003
    %s7006 = sor.u32 256, 120
    %7007 = vbcast.lane.b32.xlu0 %v6681, %s7006
    %v7008 = vpop.permute.xlu0 %7007
    %7010 = vbcast.lane.b32.xlu0 %v6685, 256
    %v7011 = vpop.permute.xlu0 %7010
    %s7013 = sor.u32 256, 8
    %7014 = vbcast.lane.b32.xlu0 %v6685, %s7013
    %v7015 = vpop.permute.xlu0 %7014
    %s7017 = sor.u32 256, 16
    %7018 = vbcast.lane.b32.xlu0 %v6685, %s7017
    %v7019 = vpop.permute.xlu0 %7018
    %s7021 = sor.u32 256, 24
    %7022 = vbcast.lane.b32.xlu0 %v6685, %s7021
    %v7023 = vpop.permute.xlu0 %7022
    %s7025 = sor.u32 256, 32
    %7026 = vbcast.lane.b32.xlu0 %v6685, %s7025
    %v7027 = vpop.permute.xlu0 %7026
    %s7029 = sor.u32 256, 40
    %7030 = vbcast.lane.b32.xlu0 %v6685, %s7029
    %v7031 = vpop.permute.xlu0 %7030
    %s7033 = sor.u32 256, 48
    %7034 = vbcast.lane.b32.xlu0 %v6685, %s7033
    %v7035 = vpop.permute.xlu0 %7034
    %s7037 = sor.u32 256, 56
    %7038 = vbcast.lane.b32.xlu0 %v6685, %s7037
    %v7039 = vpop.permute.xlu0 %7038
    %s7041 = sor.u32 256, 64
    %7042 = vbcast.lane.b32.xlu0 %v6685, %s7041
    %v7043 = vpop.permute.xlu0 %7042
    %s7045 = sor.u32 256, 72
    %7046 = vbcast.lane.b32.xlu0 %v6685, %s7045
    %v7047 = vpop.permute.xlu0 %7046
    %s7049 = sor.u32 256, 80
    %7050 = vbcast.lane.b32.xlu0 %v6685, %s7049
    %v7051 = vpop.permute.xlu0 %7050
    %s7053 = sor.u32 256, 88
    %7054 = vbcast.lane.b32.xlu0 %v6685, %s7053
    %v7055 = vpop.permute.xlu0 %7054
    %s7057 = sor.u32 256, 96
    %7058 = vbcast.lane.b32.xlu0 %v6685, %s7057
    %v7059 = vpop.permute.xlu0 %7058
    %s7061 = sor.u32 256, 104
    %7062 = vbcast.lane.b32.xlu0 %v6685, %s7061
    %v7063 = vpop.permute.xlu0 %7062
    %s7065 = sor.u32 256, 112
    %7066 = vbcast.lane.b32.xlu0 %v6685, %s7065
    %v7067 = vpop.permute.xlu0 %7066
    %s7069 = sor.u32 256, 120
    %7070 = vbcast.lane.b32.xlu0 %v6685, %s7069
    %v7071 = vpop.permute.xlu0 %7070
    %7073 = vbcast.lane.b32.xlu0 %v6689, 256
    %v7074 = vpop.permute.xlu0 %7073
    %s7076 = sor.u32 256, 8
    %7077 = vbcast.lane.b32.xlu0 %v6689, %s7076
    %v7078 = vpop.permute.xlu0 %7077
    %s7080 = sor.u32 256, 16
    %7081 = vbcast.lane.b32.xlu0 %v6689, %s7080
    %v7082 = vpop.permute.xlu0 %7081
    %s7084 = sor.u32 256, 24
    %7085 = vbcast.lane.b32.xlu0 %v6689, %s7084
    %v7086 = vpop.permute.xlu0 %7085
    %s7088 = sor.u32 256, 32
    %7089 = vbcast.lane.b32.xlu0 %v6689, %s7088
    %v7090 = vpop.permute.xlu0 %7089
    %s7092 = sor.u32 256, 40
    %7093 = vbcast.lane.b32.xlu0 %v6689, %s7092
    %v7094 = vpop.permute.xlu0 %7093
    %s7096 = sor.u32 256, 48
    %7097 = vbcast.lane.b32.xlu0 %v6689, %s7096
    %v7098 = vpop.permute.xlu0 %7097
    %s7100 = sor.u32 256, 56
    %7101 = vbcast.lane.b32.xlu0 %v6689, %s7100
    %v7102 = vpop.permute.xlu0 %7101
    %s7104 = sor.u32 256, 64
    %7105 = vbcast.lane.b32.xlu0 %v6689, %s7104
    %v7106 = vpop.permute.xlu0 %7105
    %s7108 = sor.u32 256, 72
    %7109 = vbcast.lane.b32.xlu0 %v6689, %s7108
    %v7110 = vpop.permute.xlu0 %7109
    %s7112 = sor.u32 256, 80
    %7113 = vbcast.lane.b32.xlu0 %v6689, %s7112
    %v7114 = vpop.permute.xlu0 %7113
    %s7116 = sor.u32 256, 88
    %7117 = vbcast.lane.b32.xlu0 %v6689, %s7116
    %v7118 = vpop.permute.xlu0 %7117
    %s7120 = sor.u32 256, 96
    %7121 = vbcast.lane.b32.xlu0 %v6689, %s7120
    %v7122 = vpop.permute.xlu0 %7121
    %s7124 = sor.u32 256, 104
    %7125 = vbcast.lane.b32.xlu0 %v6689, %s7124
    %v7126 = vpop.permute.xlu0 %7125
    %s7128 = sor.u32 256, 112
    %7129 = vbcast.lane.b32.xlu0 %v6689, %s7128
    %v7130 = vpop.permute.xlu0 %7129
    %s7132 = sor.u32 256, 120
    %7133 = vbcast.lane.b32.xlu0 %v6689, %s7132
    %v7134 = vpop.permute.xlu0 %7133
    %7136 = vbcast.lane.b32.xlu0 %v6693, 256
    %v7137 = vpop.permute.xlu0 %7136
    %s7139 = sor.u32 256, 8
    %7140 = vbcast.lane.b32.xlu0 %v6693, %s7139
    %v7141 = vpop.permute.xlu0 %7140
    %s7143 = sor.u32 256, 16
    %7144 = vbcast.lane.b32.xlu0 %v6693, %s7143
    %v7145 = vpop.permute.xlu0 %7144
    %s7147 = sor.u32 256, 24
    %7148 = vbcast.lane.b32.xlu0 %v6693, %s7147
    %v7149 = vpop.permute.xlu0 %7148
    %s7151 = sor.u32 256, 32
    %7152 = vbcast.lane.b32.xlu0 %v6693, %s7151
    %v7153 = vpop.permute.xlu0 %7152
    %s7155 = sor.u32 256, 40
    %7156 = vbcast.lane.b32.xlu0 %v6693, %s7155
    %v7157 = vpop.permute.xlu0 %7156
    %s7159 = sor.u32 256, 48
    %7160 = vbcast.lane.b32.xlu0 %v6693, %s7159
    %v7161 = vpop.permute.xlu0 %7160
    %s7163 = sor.u32 256, 56
    %7164 = vbcast.lane.b32.xlu0 %v6693, %s7163
    %v7165 = vpop.permute.xlu0 %7164
    %s7167 = sor.u32 256, 64
    %7168 = vbcast.lane.b32.xlu0 %v6693, %s7167
    %v7169 = vpop.permute.xlu0 %7168
    %s7171 = sor.u32 256, 72
    %7172 = vbcast.lane.b32.xlu0 %v6693, %s7171
    %v7173 = vpop.permute.xlu0 %7172
    %s7175 = sor.u32 256, 80
    %7176 = vbcast.lane.b32.xlu0 %v6693, %s7175
    %v7177 = vpop.permute.xlu0 %7176
    %s7179 = sor.u32 256, 88
    %7180 = vbcast.lane.b32.xlu0 %v6693, %s7179
    %v7181 = vpop.permute.xlu0 %7180
    %s7183 = sor.u32 256, 96
    %7184 = vbcast.lane.b32.xlu0 %v6693, %s7183
    %v7185 = vpop.permute.xlu0 %7184
    %s7187 = sor.u32 256, 104
    %7188 = vbcast.lane.b32.xlu0 %v6693, %s7187
    %v7189 = vpop.permute.xlu0 %7188
    %s7191 = sor.u32 256, 112
    %7192 = vbcast.lane.b32.xlu0 %v6693, %s7191
    %v7193 = vpop.permute.xlu0 %7192
    %s7195 = sor.u32 256, 120
    %7196 = vbcast.lane.b32.xlu0 %v6693, %s7195
    %v7197 = vpop.permute.xlu0 %7196
    %v7326 = vmul.f32 %v6656, %v6696
    %v7327 = vmul.f32 %v6656, %v6700
    %v7328 = vmul.f32 %v6656, %v6704
    %v7329 = vmul.f32 %v6656, %v6708
    %v7330 = vmul.f32 %v6656, %v6712
    %v7331 = vmul.f32 %v6656, %v6716
    %v7332 = vmul.f32 %v6656, %v6720
    %v7333 = vmul.f32 %v6656, %v6724
    %v7334 = vmul.f32 %v6656, %v6728
    %v7335 = vmul.f32 %v6656, %v6732
    %v7336 = vmul.f32 %v6656, %v6736
    %v7337 = vmul.f32 %v6656, %v6740
    %v7338 = vmul.f32 %v6656, %v6744
    %v7339 = vmul.f32 %v6656, %v6748
    %v7340 = vmul.f32 %v6656, %v6752
    %v7341 = vmul.f32 %v6656, %v6756
    %v7342 = vmul.f32 %v6656, %v6759
    %v7343 = vmul.f32 %v6656, %v6763
    %v7344 = vmul.f32 %v6656, %v6767
    %v7345 = vmul.f32 %v6656, %v6771
    %v7346 = vmul.f32 %v6656, %v6775
    %v7347 = vmul.f32 %v6656, %v6779
    %v7348 = vmul.f32 %v6656, %v6783
    %v7349 = vmul.f32 %v6656, %v6787
    %v7350 = vmul.f32 %v6656, %v6791
    %v7351 = vmul.f32 %v6656, %v6795
    %v7352 = vmul.f32 %v6656, %v6799
    %v7353 = vmul.f32 %v6656, %v6803
    %v7354 = vmul.f32 %v6656, %v6807
    %v7355 = vmul.f32 %v6656, %v6811
    %v7356 = vmul.f32 %v6656, %v6815
    %v7357 = vmul.f32 %v6656, %v6819
    %v7358 = vmul.f32 %v6656, %v6822
    %v7359 = vmul.f32 %v6656, %v6826
    %v7360 = vmul.f32 %v6656, %v6830
    %v7361 = vmul.f32 %v6656, %v6834
    %v7362 = vmul.f32 %v6656, %v6838
    %v7363 = vmul.f32 %v6656, %v6842
    %v7364 = vmul.f32 %v6656, %v6846
    %v7365 = vmul.f32 %v6656, %v6850
    %v7366 = vmul.f32 %v6656, %v6854
    %v7367 = vmul.f32 %v6656, %v6858
    %v7368 = vmul.f32 %v6656, %v6862
    %v7369 = vmul.f32 %v6656, %v6866
    %v7370 = vmul.f32 %v6656, %v6870
    %v7371 = vmul.f32 %v6656, %v6874
    %v7372 = vmul.f32 %v6656, %v6878
    %v7373 = vmul.f32 %v6656, %v6882
    %v7374 = vmul.f32 %v6656, %v6885
    %v7375 = vmul.f32 %v6656, %v6889
    %v7376 = vmul.f32 %v6656, %v6893
    %v7377 = vmul.f32 %v6656, %v6897
    %v7378 = vmul.f32 %v6656, %v6901
    %v7379 = vmul.f32 %v6656, %v6905
    %v7380 = vmul.f32 %v6656, %v6909
    %v7381 = vmul.f32 %v6656, %v6913
    %v7382 = vmul.f32 %v6656, %v6917
    %v7383 = vmul.f32 %v6656, %v6921
    %v7384 = vmul.f32 %v6656, %v6925
    %v7385 = vmul.f32 %v6656, %v6929
    %v7386 = vmul.f32 %v6656, %v6933
    %v7387 = vmul.f32 %v6656, %v6937
    %v7388 = vmul.f32 %v6656, %v6941
    %v7389 = vmul.f32 %v6656, %v6945
    %v7390 = vmul.f32 %v6656, %v6948
    %v7391 = vmul.f32 %v6656, %v6952
    %v7392 = vmul.f32 %v6656, %v6956
    %v7393 = vmul.f32 %v6656, %v6960
    %v7394 = vmul.f32 %v6656, %v6964
    %v7395 = vmul.f32 %v6656, %v6968
    %v7396 = vmul.f32 %v6656, %v6972
    %v7397 = vmul.f32 %v6656, %v6976
    %v7398 = vmul.f32 %v6656, %v6980
    %v7399 = vmul.f32 %v6656, %v6984
    %v7400 = vmul.f32 %v6656, %v6988
    %v7401 = vmul.f32 %v6656, %v6992
    %v7402 = vmul.f32 %v6656, %v6996
    %v7403 = vmul.f32 %v6656, %v7000
    %v7404 = vmul.f32 %v6656, %v7004
    %v7405 = vmul.f32 %v6656, %v7008
    %v7406 = vmul.f32 %v6656, %v7011
    %v7407 = vmul.f32 %v6656, %v7015
    %v7408 = vmul.f32 %v6656, %v7019
    %v7409 = vmul.f32 %v6656, %v7023
    %v7410 = vmul.f32 %v6656, %v7027
    %v7411 = vmul.f32 %v6656, %v7031
    %v7412 = vmul.f32 %v6656, %v7035
    %v7413 = vmul.f32 %v6656, %v7039
    %v7414 = vmul.f32 %v6656, %v7043
    %v7415 = vmul.f32 %v6656, %v7047
    %v7416 = vmul.f32 %v6656, %v7051
    %v7417 = vmul.f32 %v6656, %v7055
    %v7418 = vmul.f32 %v6656, %v7059
    %v7419 = vmul.f32 %v6656, %v7063
    %v7420 = vmul.f32 %v6656, %v7067
    %v7421 = vmul.f32 %v6656, %v7071
    %v7422 = vmul.f32 %v6656, %v7074
    %v7423 = vmul.f32 %v6656, %v7078
    %v7424 = vmul.f32 %v6656, %v7082
    %v7425 = vmul.f32 %v6656, %v7086
    %v7426 = vmul.f32 %v6656, %v7090
    %v7427 = vmul.f32 %v6656, %v7094
    %v7428 = vmul.f32 %v6656, %v7098
    %v7429 = vmul.f32 %v6656, %v7102
    %v7430 = vmul.f32 %v6656, %v7106
    %v7431 = vmul.f32 %v6656, %v7110
    %v7432 = vmul.f32 %v6656, %v7114
    %v7433 = vmul.f32 %v6656, %v7118
    %v7434 = vmul.f32 %v6656, %v7122
    %v7435 = vmul.f32 %v6656, %v7126
    %v7436 = vmul.f32 %v6656, %v7130
    %v7437 = vmul.f32 %v6656, %v7134
    %v7438 = vmul.f32 %v6656, %v7137
    %v7439 = vmul.f32 %v6656, %v7141
    %v7440 = vmul.f32 %v6656, %v7145
    %v7441 = vmul.f32 %v6656, %v7149
    %v7442 = vmul.f32 %v6656, %v7153
    %v7443 = vmul.f32 %v6656, %v7157
    %v7444 = vmul.f32 %v6656, %v7161
    %v7445 = vmul.f32 %v6656, %v7165
    %v7446 = vmul.f32 %v6656, %v7169
    %v7447 = vmul.f32 %v6656, %v7173
    %v7448 = vmul.f32 %v6656, %v7177
    %v7449 = vmul.f32 %v6656, %v7181
    %v7450 = vmul.f32 %v6656, %v7185
    %v7451 = vmul.f32 %v6656, %v7189
    %v7452 = vmul.f32 %v6656, %v7193
    %v7453 = vmul.f32 %v6656, %v7197
    %v7454 = vmul.f32 %v6660, %v6696
    %v7455 = vmul.f32 %v6660, %v6700
    %v7456 = vmul.f32 %v6660, %v6704
    %v7457 = vmul.f32 %v6660, %v6708
    %v7458 = vmul.f32 %v6660, %v6712
    %v7459 = vmul.f32 %v6660, %v6716
    %v7460 = vmul.f32 %v6660, %v6720
    %v7461 = vmul.f32 %v6660, %v6724
    %v7462 = vmul.f32 %v6660, %v6728
    %v7463 = vmul.f32 %v6660, %v6732
    %v7464 = vmul.f32 %v6660, %v6736
    %v7465 = vmul.f32 %v6660, %v6740
    %v7466 = vmul.f32 %v6660, %v6744
    %v7467 = vmul.f32 %v6660, %v6748
    %v7468 = vmul.f32 %v6660, %v6752
    %v7469 = vmul.f32 %v6660, %v6756
    %v7470 = vmul.f32 %v6660, %v6759
    %v7471 = vmul.f32 %v6660, %v6763
    %v7472 = vmul.f32 %v6660, %v6767
    %v7473 = vmul.f32 %v6660, %v6771
    %v7474 = vmul.f32 %v6660, %v6775
    %v7475 = vmul.f32 %v6660, %v6779
    %v7476 = vmul.f32 %v6660, %v6783
    %v7477 = vmul.f32 %v6660, %v6787
    %v7478 = vmul.f32 %v6660, %v6791
    %v7479 = vmul.f32 %v6660, %v6795
    %v7480 = vmul.f32 %v6660, %v6799
    %v7481 = vmul.f32 %v6660, %v6803
    %v7482 = vmul.f32 %v6660, %v6807
    %v7483 = vmul.f32 %v6660, %v6811
    %v7484 = vmul.f32 %v6660, %v6815
    %v7485 = vmul.f32 %v6660, %v6819
    %v7486 = vmul.f32 %v6660, %v6822
    %v7487 = vmul.f32 %v6660, %v6826
    %v7488 = vmul.f32 %v6660, %v6830
    %v7489 = vmul.f32 %v6660, %v6834
    %v7490 = vmul.f32 %v6660, %v6838
    %v7491 = vmul.f32 %v6660, %v6842
    %v7492 = vmul.f32 %v6660, %v6846
    %v7493 = vmul.f32 %v6660, %v6850
    %v7494 = vmul.f32 %v6660, %v6854
    %v7495 = vmul.f32 %v6660, %v6858
    %v7496 = vmul.f32 %v6660, %v6862
    %v7497 = vmul.f32 %v6660, %v6866
    %v7498 = vmul.f32 %v6660, %v6870
    %v7499 = vmul.f32 %v6660, %v6874
    %v7500 = vmul.f32 %v6660, %v6878
    %v7501 = vmul.f32 %v6660, %v6882
    %v7502 = vmul.f32 %v6660, %v6885
    %v7503 = vmul.f32 %v6660, %v6889
    %v7504 = vmul.f32 %v6660, %v6893
    %v7505 = vmul.f32 %v6660, %v6897
    %v7506 = vmul.f32 %v6660, %v6901
    %v7507 = vmul.f32 %v6660, %v6905
    %v7508 = vmul.f32 %v6660, %v6909
    %v7509 = vmul.f32 %v6660, %v6913
    %v7510 = vmul.f32 %v6660, %v6917
    %v7511 = vmul.f32 %v6660, %v6921
    %v7512 = vmul.f32 %v6660, %v6925
    %v7513 = vmul.f32 %v6660, %v6929
    %v7514 = vmul.f32 %v6660, %v6933
    %v7515 = vmul.f32 %v6660, %v6937
    %v7516 = vmul.f32 %v6660, %v6941
    %v7517 = vmul.f32 %v6660, %v6945
    %v7518 = vmul.f32 %v6660, %v6948
    %v7519 = vmul.f32 %v6660, %v6952
    %v7520 = vmul.f32 %v6660, %v6956
    %v7521 = vmul.f32 %v6660, %v6960
    %v7522 = vmul.f32 %v6660, %v6964
    %v7523 = vmul.f32 %v6660, %v6968
    %v7524 = vmul.f32 %v6660, %v6972
    %v7525 = vmul.f32 %v6660, %v6976
    %v7526 = vmul.f32 %v6660, %v6980
    %v7527 = vmul.f32 %v6660, %v6984
    %v7528 = vmul.f32 %v6660, %v6988
    %v7529 = vmul.f32 %v6660, %v6992
    %v7530 = vmul.f32 %v6660, %v6996
    %v7531 = vmul.f32 %v6660, %v7000
    %v7532 = vmul.f32 %v6660, %v7004
    %v7533 = vmul.f32 %v6660, %v7008
    %v7534 = vmul.f32 %v6660, %v7011
    %v7535 = vmul.f32 %v6660, %v7015
    %v7536 = vmul.f32 %v6660, %v7019
    %v7537 = vmul.f32 %v6660, %v7023
    %v7538 = vmul.f32 %v6660, %v7027
    %v7539 = vmul.f32 %v6660, %v7031
    %v7540 = vmul.f32 %v6660, %v7035
    %v7541 = vmul.f32 %v6660, %v7039
    %v7542 = vmul.f32 %v6660, %v7043
    %v7543 = vmul.f32 %v6660, %v7047
    %v7544 = vmul.f32 %v6660, %v7051
    %v7545 = vmul.f32 %v6660, %v7055
    %v7546 = vmul.f32 %v6660, %v7059
    %v7547 = vmul.f32 %v6660, %v7063
    %v7548 = vmul.f32 %v6660, %v7067
    %v7549 = vmul.f32 %v6660, %v7071
    %v7550 = vmul.f32 %v6660, %v7074
    %v7551 = vmul.f32 %v6660, %v7078
    %v7552 = vmul.f32 %v6660, %v7082
    %v7553 = vmul.f32 %v6660, %v7086
    %v7554 = vmul.f32 %v6660, %v7090
    %v7555 = vmul.f32 %v6660, %v7094
    %v7556 = vmul.f32 %v6660, %v7098
    %v7557 = vmul.f32 %v6660, %v7102
    %v7558 = vmul.f32 %v6660, %v7106
    %v7559 = vmul.f32 %v6660, %v7110
    %v7560 = vmul.f32 %v6660, %v7114
    %v7561 = vmul.f32 %v6660, %v7118
    %v7562 = vmul.f32 %v6660, %v7122
    %v7563 = vmul.f32 %v6660, %v7126
    %v7564 = vmul.f32 %v6660, %v7130
    %v7565 = vmul.f32 %v6660, %v7134
    %v7566 = vmul.f32 %v6660, %v7137
    %v7567 = vmul.f32 %v6660, %v7141
    %v7568 = vmul.f32 %v6660, %v7145
    %v7569 = vmul.f32 %v6660, %v7149
    %v7570 = vmul.f32 %v6660, %v7153
    %v7571 = vmul.f32 %v6660, %v7157
    %v7572 = vmul.f32 %v6660, %v7161
    %v7573 = vmul.f32 %v6660, %v7165
    %v7574 = vmul.f32 %v6660, %v7169
    %v7575 = vmul.f32 %v6660, %v7173
    %v7576 = vmul.f32 %v6660, %v7177
    %v7577 = vmul.f32 %v6660, %v7181
    %v7578 = vmul.f32 %v6660, %v7185
    %v7579 = vmul.f32 %v6660, %v7189
    %v7580 = vmul.f32 %v6660, %v7193
    %v7581 = vmul.f32 %v6660, %v7197
    %7838 = vset.pattern.permute.xlu0 0
    %7839 = vperm.xlu0 %7838, %v7326
    %v7840 = vpop.permute.xlu0 %7839
    %7841 = vset.pattern.permute.xlu0 0
    %7842 = vperm.xlu0 %7841, %v7327
    %v7843 = vpop.permute.xlu0 %7842
    %7844 = vset.pattern.permute.xlu0 0
    %7845 = vperm.xlu0 %7844, %v7328
    %v7846 = vpop.permute.xlu0 %7845
    %7847 = vset.pattern.permute.xlu0 0
    %7848 = vperm.xlu0 %7847, %v7329
    %v7849 = vpop.permute.xlu0 %7848
    %7850 = vset.pattern.permute.xlu0 0
    %7851 = vperm.xlu0 %7850, %v7330
    %v7852 = vpop.permute.xlu0 %7851
    %7853 = vset.pattern.permute.xlu0 0
    %7854 = vperm.xlu0 %7853, %v7331
    %v7855 = vpop.permute.xlu0 %7854
    %7856 = vset.pattern.permute.xlu0 0
    %7857 = vperm.xlu0 %7856, %v7332
    %v7858 = vpop.permute.xlu0 %7857
    %7859 = vset.pattern.permute.xlu0 0
    %7860 = vperm.xlu0 %7859, %v7333
    %v7861 = vpop.permute.xlu0 %7860
    %7862 = vset.pattern.permute.xlu0 0
    %7863 = vperm.xlu0 %7862, %v7334
    %v7864 = vpop.permute.xlu0 %7863
    %7865 = vset.pattern.permute.xlu0 0
    %7866 = vperm.xlu0 %7865, %v7335
    %v7867 = vpop.permute.xlu0 %7866
    %7868 = vset.pattern.permute.xlu0 0
    %7869 = vperm.xlu0 %7868, %v7336
    %v7870 = vpop.permute.xlu0 %7869
    %7871 = vset.pattern.permute.xlu0 0
    %7872 = vperm.xlu0 %7871, %v7337
    %v7873 = vpop.permute.xlu0 %7872
    %7874 = vset.pattern.permute.xlu0 0
    %7875 = vperm.xlu0 %7874, %v7338
    %v7876 = vpop.permute.xlu0 %7875
    %7877 = vset.pattern.permute.xlu0 0
    %7878 = vperm.xlu0 %7877, %v7339
    %v7879 = vpop.permute.xlu0 %7878
    %7880 = vset.pattern.permute.xlu0 0
    %7881 = vperm.xlu0 %7880, %v7340
    %v7882 = vpop.permute.xlu0 %7881
    %7883 = vset.pattern.permute.xlu0 0
    %7884 = vperm.xlu0 %7883, %v7341
    %v7885 = vpop.permute.xlu0 %7884
    %7886 = vset.pattern.permute.xlu0 0
    %7887 = vperm.xlu0 %7886, %v7342
    %v7888 = vpop.permute.xlu0 %7887
    %7889 = vset.pattern.permute.xlu0 0
    %7890 = vperm.xlu0 %7889, %v7343
    %v7891 = vpop.permute.xlu0 %7890
    %7892 = vset.pattern.permute.xlu0 0
    %7893 = vperm.xlu0 %7892, %v7344
    %v7894 = vpop.permute.xlu0 %7893
    %7895 = vset.pattern.permute.xlu0 0
    %7896 = vperm.xlu0 %7895, %v7345
    %v7897 = vpop.permute.xlu0 %7896
    %7898 = vset.pattern.permute.xlu0 0
    %7899 = vperm.xlu0 %7898, %v7346
    %v7900 = vpop.permute.xlu0 %7899
    %7901 = vset.pattern.permute.xlu0 0
    %7902 = vperm.xlu0 %7901, %v7347
    %v7903 = vpop.permute.xlu0 %7902
    %7904 = vset.pattern.permute.xlu0 0
    %7905 = vperm.xlu0 %7904, %v7348
    %v7906 = vpop.permute.xlu0 %7905
    %7907 = vset.pattern.permute.xlu0 0
    %7908 = vperm.xlu0 %7907, %v7349
    %v7909 = vpop.permute.xlu0 %7908
    %7910 = vset.pattern.permute.xlu0 0
    %7911 = vperm.xlu0 %7910, %v7350
    %v7912 = vpop.permute.xlu0 %7911
    %7913 = vset.pattern.permute.xlu0 0
    %7914 = vperm.xlu0 %7913, %v7351
    %v7915 = vpop.permute.xlu0 %7914
    %7916 = vset.pattern.permute.xlu0 0
    %7917 = vperm.xlu0 %7916, %v7352
    %v7918 = vpop.permute.xlu0 %7917
    %7919 = vset.pattern.permute.xlu0 0
    %7920 = vperm.xlu0 %7919, %v7353
    %v7921 = vpop.permute.xlu0 %7920
    %7922 = vset.pattern.permute.xlu0 0
    %7923 = vperm.xlu0 %7922, %v7354
    %v7924 = vpop.permute.xlu0 %7923
    %7925 = vset.pattern.permute.xlu0 0
    %7926 = vperm.xlu0 %7925, %v7355
    %v7927 = vpop.permute.xlu0 %7926
    %7928 = vset.pattern.permute.xlu0 0
    %7929 = vperm.xlu0 %7928, %v7356
    %v7930 = vpop.permute.xlu0 %7929
    %7931 = vset.pattern.permute.xlu0 0
    %7932 = vperm.xlu0 %7931, %v7357
    %v7933 = vpop.permute.xlu0 %7932
    %7934 = vset.pattern.permute.xlu0 0
    %7935 = vperm.xlu0 %7934, %v7358
    %v7936 = vpop.permute.xlu0 %7935
    %7937 = vset.pattern.permute.xlu0 0
    %7938 = vperm.xlu0 %7937, %v7359
    %v7939 = vpop.permute.xlu0 %7938
    %7940 = vset.pattern.permute.xlu0 0
    %7941 = vperm.xlu0 %7940, %v7360
    %v7942 = vpop.permute.xlu0 %7941
    %7943 = vset.pattern.permute.xlu0 0
    %7944 = vperm.xlu0 %7943, %v7361
    %v7945 = vpop.permute.xlu0 %7944
    %7946 = vset.pattern.permute.xlu0 0
    %7947 = vperm.xlu0 %7946, %v7362
    %v7948 = vpop.permute.xlu0 %7947
    %7949 = vset.pattern.permute.xlu0 0
    %7950 = vperm.xlu0 %7949, %v7363
    %v7951 = vpop.permute.xlu0 %7950
    %7952 = vset.pattern.permute.xlu0 0
    %7953 = vperm.xlu0 %7952, %v7364
    %v7954 = vpop.permute.xlu0 %7953
    %7955 = vset.pattern.permute.xlu0 0
    %7956 = vperm.xlu0 %7955, %v7365
    %v7957 = vpop.permute.xlu0 %7956
    %7958 = vset.pattern.permute.xlu0 0
    %7959 = vperm.xlu0 %7958, %v7366
    %v7960 = vpop.permute.xlu0 %7959
    %7961 = vset.pattern.permute.xlu0 0
    %7962 = vperm.xlu0 %7961, %v7367
    %v7963 = vpop.permute.xlu0 %7962
    %7964 = vset.pattern.permute.xlu0 0
    %7965 = vperm.xlu0 %7964, %v7368
    %v7966 = vpop.permute.xlu0 %7965
    %7967 = vset.pattern.permute.xlu0 0
    %7968 = vperm.xlu0 %7967, %v7369
    %v7969 = vpop.permute.xlu0 %7968
    %7970 = vset.pattern.permute.xlu0 0
    %7971 = vperm.xlu0 %7970, %v7370
    %v7972 = vpop.permute.xlu0 %7971
    %7973 = vset.pattern.permute.xlu0 0
    %7974 = vperm.xlu0 %7973, %v7371
    %v7975 = vpop.permute.xlu0 %7974
    %7976 = vset.pattern.permute.xlu0 0
    %7977 = vperm.xlu0 %7976, %v7372
    %v7978 = vpop.permute.xlu0 %7977
    %7979 = vset.pattern.permute.xlu0 0
    %7980 = vperm.xlu0 %7979, %v7373
    %v7981 = vpop.permute.xlu0 %7980
    %7982 = vset.pattern.permute.xlu0 0
    %7983 = vperm.xlu0 %7982, %v7374
    %v7984 = vpop.permute.xlu0 %7983
    %7985 = vset.pattern.permute.xlu0 0
    %7986 = vperm.xlu0 %7985, %v7375
    %v7987 = vpop.permute.xlu0 %7986
    %7988 = vset.pattern.permute.xlu0 0
    %7989 = vperm.xlu0 %7988, %v7376
    %v7990 = vpop.permute.xlu0 %7989
    %7991 = vset.pattern.permute.xlu0 0
    %7992 = vperm.xlu0 %7991, %v7377
    %v7993 = vpop.permute.xlu0 %7992
    %7994 = vset.pattern.permute.xlu0 0
    %7995 = vperm.xlu0 %7994, %v7378
    %v7996 = vpop.permute.xlu0 %7995
    %7997 = vset.pattern.permute.xlu0 0
    %7998 = vperm.xlu0 %7997, %v7379
    %v7999 = vpop.permute.xlu0 %7998
    %8000 = vset.pattern.permute.xlu0 0
    %8001 = vperm.xlu0 %8000, %v7380
    %v8002 = vpop.permute.xlu0 %8001
    %8003 = vset.pattern.permute.xlu0 0
    %8004 = vperm.xlu0 %8003, %v7381
    %v8005 = vpop.permute.xlu0 %8004
    %8006 = vset.pattern.permute.xlu0 0
    %8007 = vperm.xlu0 %8006, %v7382
    %v8008 = vpop.permute.xlu0 %8007
    %8009 = vset.pattern.permute.xlu0 0
    %8010 = vperm.xlu0 %8009, %v7383
    %v8011 = vpop.permute.xlu0 %8010
    %8012 = vset.pattern.permute.xlu0 0
    %8013 = vperm.xlu0 %8012, %v7384
    %v8014 = vpop.permute.xlu0 %8013
    %8015 = vset.pattern.permute.xlu0 0
    %8016 = vperm.xlu0 %8015, %v7385
    %v8017 = vpop.permute.xlu0 %8016
    %8018 = vset.pattern.permute.xlu0 0
    %8019 = vperm.xlu0 %8018, %v7386
    %v8020 = vpop.permute.xlu0 %8019
    %8021 = vset.pattern.permute.xlu0 0
    %8022 = vperm.xlu0 %8021, %v7387
    %v8023 = vpop.permute.xlu0 %8022
    %8024 = vset.pattern.permute.xlu0 0
    %8025 = vperm.xlu0 %8024, %v7388
    %v8026 = vpop.permute.xlu0 %8025
    %8027 = vset.pattern.permute.xlu0 0
    %8028 = vperm.xlu0 %8027, %v7389
    %v8029 = vpop.permute.xlu0 %8028
    %8030 = vset.pattern.permute.xlu0 0
    %8031 = vperm.xlu0 %8030, %v7390
    %v8032 = vpop.permute.xlu0 %8031
    %8033 = vset.pattern.permute.xlu0 0
    %8034 = vperm.xlu0 %8033, %v7391
    %v8035 = vpop.permute.xlu0 %8034
    %8036 = vset.pattern.permute.xlu0 0
    %8037 = vperm.xlu0 %8036, %v7392
    %v8038 = vpop.permute.xlu0 %8037
    %8039 = vset.pattern.permute.xlu0 0
    %8040 = vperm.xlu0 %8039, %v7393
    %v8041 = vpop.permute.xlu0 %8040
    %8042 = vset.pattern.permute.xlu0 0
    %8043 = vperm.xlu0 %8042, %v7394
    %v8044 = vpop.permute.xlu0 %8043
    %8045 = vset.pattern.permute.xlu0 0
    %8046 = vperm.xlu0 %8045, %v7395
    %v8047 = vpop.permute.xlu0 %8046
    %8048 = vset.pattern.permute.xlu0 0
    %8049 = vperm.xlu0 %8048, %v7396
    %v8050 = vpop.permute.xlu0 %8049
    %8051 = vset.pattern.permute.xlu0 0
    %8052 = vperm.xlu0 %8051, %v7397
    %v8053 = vpop.permute.xlu0 %8052
    %8054 = vset.pattern.permute.xlu0 0
    %8055 = vperm.xlu0 %8054, %v7398
    %v8056 = vpop.permute.xlu0 %8055
    %8057 = vset.pattern.permute.xlu0 0
    %8058 = vperm.xlu0 %8057, %v7399
    %v8059 = vpop.permute.xlu0 %8058
    %8060 = vset.pattern.permute.xlu0 0
    %8061 = vperm.xlu0 %8060, %v7400
    %v8062 = vpop.permute.xlu0 %8061
    %8063 = vset.pattern.permute.xlu0 0
    %8064 = vperm.xlu0 %8063, %v7401
    %v8065 = vpop.permute.xlu0 %8064
    %8066 = vset.pattern.permute.xlu0 0
    %8067 = vperm.xlu0 %8066, %v7402
    %v8068 = vpop.permute.xlu0 %8067
    %8069 = vset.pattern.permute.xlu0 0
    %8070 = vperm.xlu0 %8069, %v7403
    %v8071 = vpop.permute.xlu0 %8070
    %8072 = vset.pattern.permute.xlu0 0
    %8073 = vperm.xlu0 %8072, %v7404
    %v8074 = vpop.permute.xlu0 %8073
    %8075 = vset.pattern.permute.xlu0 0
    %8076 = vperm.xlu0 %8075, %v7405
    %v8077 = vpop.permute.xlu0 %8076
    %8078 = vset.pattern.permute.xlu0 0
    %8079 = vperm.xlu0 %8078, %v7406
    %v8080 = vpop.permute.xlu0 %8079
    %8081 = vset.pattern.permute.xlu0 0
    %8082 = vperm.xlu0 %8081, %v7407
    %v8083 = vpop.permute.xlu0 %8082
    %8084 = vset.pattern.permute.xlu0 0
    %8085 = vperm.xlu0 %8084, %v7408
    %v8086 = vpop.permute.xlu0 %8085
    %8087 = vset.pattern.permute.xlu0 0
    %8088 = vperm.xlu0 %8087, %v7409
    %v8089 = vpop.permute.xlu0 %8088
    %8090 = vset.pattern.permute.xlu0 0
    %8091 = vperm.xlu0 %8090, %v7410
    %v8092 = vpop.permute.xlu0 %8091
    %8093 = vset.pattern.permute.xlu0 0
    %8094 = vperm.xlu0 %8093, %v7411
    %v8095 = vpop.permute.xlu0 %8094
    %8096 = vset.pattern.permute.xlu0 0
    %8097 = vperm.xlu0 %8096, %v7412
    %v8098 = vpop.permute.xlu0 %8097
    %8099 = vset.pattern.permute.xlu0 0
    %8100 = vperm.xlu0 %8099, %v7413
    %v8101 = vpop.permute.xlu0 %8100
    %8102 = vset.pattern.permute.xlu0 0
    %8103 = vperm.xlu0 %8102, %v7414
    %v8104 = vpop.permute.xlu0 %8103
    %8105 = vset.pattern.permute.xlu0 0
    %8106 = vperm.xlu0 %8105, %v7415
    %v8107 = vpop.permute.xlu0 %8106
    %8108 = vset.pattern.permute.xlu0 0
    %8109 = vperm.xlu0 %8108, %v7416
    %v8110 = vpop.permute.xlu0 %8109
    %8111 = vset.pattern.permute.xlu0 0
    %8112 = vperm.xlu0 %8111, %v7417
    %v8113 = vpop.permute.xlu0 %8112
    %8114 = vset.pattern.permute.xlu0 0
    %8115 = vperm.xlu0 %8114, %v7418
    %v8116 = vpop.permute.xlu0 %8115
    %8117 = vset.pattern.permute.xlu0 0
    %8118 = vperm.xlu0 %8117, %v7419
    %v8119 = vpop.permute.xlu0 %8118
    %8120 = vset.pattern.permute.xlu0 0
    %8121 = vperm.xlu0 %8120, %v7420
    %v8122 = vpop.permute.xlu0 %8121
    %8123 = vset.pattern.permute.xlu0 0
    %8124 = vperm.xlu0 %8123, %v7421
    %v8125 = vpop.permute.xlu0 %8124
    %8126 = vset.pattern.permute.xlu0 0
    %8127 = vperm.xlu0 %8126, %v7422
    %v8128 = vpop.permute.xlu0 %8127
    %8129 = vset.pattern.permute.xlu0 0
    %8130 = vperm.xlu0 %8129, %v7423
    %v8131 = vpop.permute.xlu0 %8130
    %8132 = vset.pattern.permute.xlu0 0
    %8133 = vperm.xlu0 %8132, %v7424
    %v8134 = vpop.permute.xlu0 %8133
    %8135 = vset.pattern.permute.xlu0 0
    %8136 = vperm.xlu0 %8135, %v7425
    %v8137 = vpop.permute.xlu0 %8136
    %8138 = vset.pattern.permute.xlu0 0
    %8139 = vperm.xlu0 %8138, %v7426
    %v8140 = vpop.permute.xlu0 %8139
    %8141 = vset.pattern.permute.xlu0 0
    %8142 = vperm.xlu0 %8141, %v7427
    %v8143 = vpop.permute.xlu0 %8142
    %8144 = vset.pattern.permute.xlu0 0
    %8145 = vperm.xlu0 %8144, %v7428
    %v8146 = vpop.permute.xlu0 %8145
    %8147 = vset.pattern.permute.xlu0 0
    %8148 = vperm.xlu0 %8147, %v7429
    %v8149 = vpop.permute.xlu0 %8148
    %8150 = vset.pattern.permute.xlu0 0
    %8151 = vperm.xlu0 %8150, %v7430
    %v8152 = vpop.permute.xlu0 %8151
    %8153 = vset.pattern.permute.xlu0 0
    %8154 = vperm.xlu0 %8153, %v7431
    %v8155 = vpop.permute.xlu0 %8154
    %8156 = vset.pattern.permute.xlu0 0
    %8157 = vperm.xlu0 %8156, %v7432
    %v8158 = vpop.permute.xlu0 %8157
    %8159 = vset.pattern.permute.xlu0 0
    %8160 = vperm.xlu0 %8159, %v7433
    %v8161 = vpop.permute.xlu0 %8160
    %8162 = vset.pattern.permute.xlu0 0
    %8163 = vperm.xlu0 %8162, %v7434
    %v8164 = vpop.permute.xlu0 %8163
    %8165 = vset.pattern.permute.xlu0 0
    %8166 = vperm.xlu0 %8165, %v7435
    %v8167 = vpop.permute.xlu0 %8166
    %8168 = vset.pattern.permute.xlu0 0
    %8169 = vperm.xlu0 %8168, %v7436
    %v8170 = vpop.permute.xlu0 %8169
    %8171 = vset.pattern.permute.xlu0 0
    %8172 = vperm.xlu0 %8171, %v7437
    %v8173 = vpop.permute.xlu0 %8172
    %8174 = vset.pattern.permute.xlu0 0
    %8175 = vperm.xlu0 %8174, %v7438
    %v8176 = vpop.permute.xlu0 %8175
    %8177 = vset.pattern.permute.xlu0 0
    %8178 = vperm.xlu0 %8177, %v7439
    %v8179 = vpop.permute.xlu0 %8178
    %8180 = vset.pattern.permute.xlu0 0
    %8181 = vperm.xlu0 %8180, %v7440
    %v8182 = vpop.permute.xlu0 %8181
    %8183 = vset.pattern.permute.xlu0 0
    %8184 = vperm.xlu0 %8183, %v7441
    %v8185 = vpop.permute.xlu0 %8184
    %8186 = vset.pattern.permute.xlu0 0
    %8187 = vperm.xlu0 %8186, %v7442
    %v8188 = vpop.permute.xlu0 %8187
    %8189 = vset.pattern.permute.xlu0 0
    %8190 = vperm.xlu0 %8189, %v7443
    %v8191 = vpop.permute.xlu0 %8190
    %8192 = vset.pattern.permute.xlu0 0
    %8193 = vperm.xlu0 %8192, %v7444
    %v8194 = vpop.permute.xlu0 %8193
    %8195 = vset.pattern.permute.xlu0 0
    %8196 = vperm.xlu0 %8195, %v7445
    %v8197 = vpop.permute.xlu0 %8196
    %8198 = vset.pattern.permute.xlu0 0
    %8199 = vperm.xlu0 %8198, %v7446
    %v8200 = vpop.permute.xlu0 %8199
    %8201 = vset.pattern.permute.xlu0 0
    %8202 = vperm.xlu0 %8201, %v7447
    %v8203 = vpop.permute.xlu0 %8202
    %8204 = vset.pattern.permute.xlu0 0
    %8205 = vperm.xlu0 %8204, %v7448
    %v8206 = vpop.permute.xlu0 %8205
    %8207 = vset.pattern.permute.xlu0 0
    %8208 = vperm.xlu0 %8207, %v7449
    %v8209 = vpop.permute.xlu0 %8208
    %8210 = vset.pattern.permute.xlu0 0
    %8211 = vperm.xlu0 %8210, %v7450
    %v8212 = vpop.permute.xlu0 %8211
    %8213 = vset.pattern.permute.xlu0 0
    %8214 = vperm.xlu0 %8213, %v7451
    %v8215 = vpop.permute.xlu0 %8214
    %8216 = vset.pattern.permute.xlu0 0
    %8217 = vperm.xlu0 %8216, %v7452
    %v8218 = vpop.permute.xlu0 %8217
    %8219 = vset.pattern.permute.xlu0 0
    %8220 = vperm.xlu0 %8219, %v7453
    %v8221 = vpop.permute.xlu0 %8220
    %8222 = vset.pattern.permute.xlu0 0
    %8223 = vperm.xlu0 %8222, %v7454
    %v8224 = vpop.permute.xlu0 %8223
    %8225 = vset.pattern.permute.xlu0 0
    %8226 = vperm.xlu0 %8225, %v7455
    %v8227 = vpop.permute.xlu0 %8226
    %8228 = vset.pattern.permute.xlu0 0
    %8229 = vperm.xlu0 %8228, %v7456
    %v8230 = vpop.permute.xlu0 %8229
    %8231 = vset.pattern.permute.xlu0 0
    %8232 = vperm.xlu0 %8231, %v7457
    %v8233 = vpop.permute.xlu0 %8232
    %8234 = vset.pattern.permute.xlu0 0
    %8235 = vperm.xlu0 %8234, %v7458
    %v8236 = vpop.permute.xlu0 %8235
    %8237 = vset.pattern.permute.xlu0 0
    %8238 = vperm.xlu0 %8237, %v7459
    %v8239 = vpop.permute.xlu0 %8238
    %8240 = vset.pattern.permute.xlu0 0
    %8241 = vperm.xlu0 %8240, %v7460
    %v8242 = vpop.permute.xlu0 %8241
    %8243 = vset.pattern.permute.xlu0 0
    %8244 = vperm.xlu0 %8243, %v7461
    %v8245 = vpop.permute.xlu0 %8244
    %8246 = vset.pattern.permute.xlu0 0
    %8247 = vperm.xlu0 %8246, %v7462
    %v8248 = vpop.permute.xlu0 %8247
    %8249 = vset.pattern.permute.xlu0 0
    %8250 = vperm.xlu0 %8249, %v7463
    %v8251 = vpop.permute.xlu0 %8250
    %8252 = vset.pattern.permute.xlu0 0
    %8253 = vperm.xlu0 %8252, %v7464
    %v8254 = vpop.permute.xlu0 %8253
    %8255 = vset.pattern.permute.xlu0 0
    %8256 = vperm.xlu0 %8255, %v7465
    %v8257 = vpop.permute.xlu0 %8256
    %8258 = vset.pattern.permute.xlu0 0
    %8259 = vperm.xlu0 %8258, %v7466
    %v8260 = vpop.permute.xlu0 %8259
    %8261 = vset.pattern.permute.xlu0 0
    %8262 = vperm.xlu0 %8261, %v7467
    %v8263 = vpop.permute.xlu0 %8262
    %8264 = vset.pattern.permute.xlu0 0
    %8265 = vperm.xlu0 %8264, %v7468
    %v8266 = vpop.permute.xlu0 %8265
    %8267 = vset.pattern.permute.xlu0 0
    %8268 = vperm.xlu0 %8267, %v7469
    %v8269 = vpop.permute.xlu0 %8268
    %8270 = vset.pattern.permute.xlu0 0
    %8271 = vperm.xlu0 %8270, %v7470
    %v8272 = vpop.permute.xlu0 %8271
    %8273 = vset.pattern.permute.xlu0 0
    %8274 = vperm.xlu0 %8273, %v7471
    %v8275 = vpop.permute.xlu0 %8274
    %8276 = vset.pattern.permute.xlu0 0
    %8277 = vperm.xlu0 %8276, %v7472
    %v8278 = vpop.permute.xlu0 %8277
    %8279 = vset.pattern.permute.xlu0 0
    %8280 = vperm.xlu0 %8279, %v7473
    %v8281 = vpop.permute.xlu0 %8280
    %8282 = vset.pattern.permute.xlu0 0
    %8283 = vperm.xlu0 %8282, %v7474
    %v8284 = vpop.permute.xlu0 %8283
    %8285 = vset.pattern.permute.xlu0 0
    %8286 = vperm.xlu0 %8285, %v7475
    %v8287 = vpop.permute.xlu0 %8286
    %8288 = vset.pattern.permute.xlu0 0
    %8289 = vperm.xlu0 %8288, %v7476
    %v8290 = vpop.permute.xlu0 %8289
    %8291 = vset.pattern.permute.xlu0 0
    %8292 = vperm.xlu0 %8291, %v7477
    %v8293 = vpop.permute.xlu0 %8292
    %8294 = vset.pattern.permute.xlu0 0
    %8295 = vperm.xlu0 %8294, %v7478
    %v8296 = vpop.permute.xlu0 %8295
    %8297 = vset.pattern.permute.xlu0 0
    %8298 = vperm.xlu0 %8297, %v7479
    %v8299 = vpop.permute.xlu0 %8298
    %8300 = vset.pattern.permute.xlu0 0
    %8301 = vperm.xlu0 %8300, %v7480
    %v8302 = vpop.permute.xlu0 %8301
    %8303 = vset.pattern.permute.xlu0 0
    %8304 = vperm.xlu0 %8303, %v7481
    %v8305 = vpop.permute.xlu0 %8304
    %8306 = vset.pattern.permute.xlu0 0
    %8307 = vperm.xlu0 %8306, %v7482
    %v8308 = vpop.permute.xlu0 %8307
    %8309 = vset.pattern.permute.xlu0 0
    %8310 = vperm.xlu0 %8309, %v7483
    %v8311 = vpop.permute.xlu0 %8310
    %8312 = vset.pattern.permute.xlu0 0
    %8313 = vperm.xlu0 %8312, %v7484
    %v8314 = vpop.permute.xlu0 %8313
    %8315 = vset.pattern.permute.xlu0 0
    %8316 = vperm.xlu0 %8315, %v7485
    %v8317 = vpop.permute.xlu0 %8316
    %8318 = vset.pattern.permute.xlu0 0
    %8319 = vperm.xlu0 %8318, %v7486
    %v8320 = vpop.permute.xlu0 %8319
    %8321 = vset.pattern.permute.xlu0 0
    %8322 = vperm.xlu0 %8321, %v7487
    %v8323 = vpop.permute.xlu0 %8322
    %8324 = vset.pattern.permute.xlu0 0
    %8325 = vperm.xlu0 %8324, %v7488
    %v8326 = vpop.permute.xlu0 %8325
    %8327 = vset.pattern.permute.xlu0 0
    %8328 = vperm.xlu0 %8327, %v7489
    %v8329 = vpop.permute.xlu0 %8328
    %8330 = vset.pattern.permute.xlu0 0
    %8331 = vperm.xlu0 %8330, %v7490
    %v8332 = vpop.permute.xlu0 %8331
    %8333 = vset.pattern.permute.xlu0 0
    %8334 = vperm.xlu0 %8333, %v7491
    %v8335 = vpop.permute.xlu0 %8334
    %8336 = vset.pattern.permute.xlu0 0
    %8337 = vperm.xlu0 %8336, %v7492
    %v8338 = vpop.permute.xlu0 %8337
    %8339 = vset.pattern.permute.xlu0 0
    %8340 = vperm.xlu0 %8339, %v7493
    %v8341 = vpop.permute.xlu0 %8340
    %8342 = vset.pattern.permute.xlu0 0
    %8343 = vperm.xlu0 %8342, %v7494
    %v8344 = vpop.permute.xlu0 %8343
    %8345 = vset.pattern.permute.xlu0 0
    %8346 = vperm.xlu0 %8345, %v7495
    %v8347 = vpop.permute.xlu0 %8346
    %8348 = vset.pattern.permute.xlu0 0
    %8349 = vperm.xlu0 %8348, %v7496
    %v8350 = vpop.permute.xlu0 %8349
    %8351 = vset.pattern.permute.xlu0 0
    %8352 = vperm.xlu0 %8351, %v7497
    %v8353 = vpop.permute.xlu0 %8352
    %8354 = vset.pattern.permute.xlu0 0
    %8355 = vperm.xlu0 %8354, %v7498
    %v8356 = vpop.permute.xlu0 %8355
    %8357 = vset.pattern.permute.xlu0 0
    %8358 = vperm.xlu0 %8357, %v7499
    %v8359 = vpop.permute.xlu0 %8358
    %8360 = vset.pattern.permute.xlu0 0
    %8361 = vperm.xlu0 %8360, %v7500
    %v8362 = vpop.permute.xlu0 %8361
    %8363 = vset.pattern.permute.xlu0 0
    %8364 = vperm.xlu0 %8363, %v7501
    %v8365 = vpop.permute.xlu0 %8364
    %8366 = vset.pattern.permute.xlu0 0
    %8367 = vperm.xlu0 %8366, %v7502
    %v8368 = vpop.permute.xlu0 %8367
    %8369 = vset.pattern.permute.xlu0 0
    %8370 = vperm.xlu0 %8369, %v7503
    %v8371 = vpop.permute.xlu0 %8370
    %8372 = vset.pattern.permute.xlu0 0
    %8373 = vperm.xlu0 %8372, %v7504
    %v8374 = vpop.permute.xlu0 %8373
    %8375 = vset.pattern.permute.xlu0 0
    %8376 = vperm.xlu0 %8375, %v7505
    %v8377 = vpop.permute.xlu0 %8376
    %8378 = vset.pattern.permute.xlu0 0
    %8379 = vperm.xlu0 %8378, %v7506
    %v8380 = vpop.permute.xlu0 %8379
    %8381 = vset.pattern.permute.xlu0 0
    %8382 = vperm.xlu0 %8381, %v7507
    %v8383 = vpop.permute.xlu0 %8382
    %8384 = vset.pattern.permute.xlu0 0
    %8385 = vperm.xlu0 %8384, %v7508
    %v8386 = vpop.permute.xlu0 %8385
    %8387 = vset.pattern.permute.xlu0 0
    %8388 = vperm.xlu0 %8387, %v7509
    %v8389 = vpop.permute.xlu0 %8388
    %8390 = vset.pattern.permute.xlu0 0
    %8391 = vperm.xlu0 %8390, %v7510
    %v8392 = vpop.permute.xlu0 %8391
    %8393 = vset.pattern.permute.xlu0 0
    %8394 = vperm.xlu0 %8393, %v7511
    %v8395 = vpop.permute.xlu0 %8394
    %8396 = vset.pattern.permute.xlu0 0
    %8397 = vperm.xlu0 %8396, %v7512
    %v8398 = vpop.permute.xlu0 %8397
    %8399 = vset.pattern.permute.xlu0 0
    %8400 = vperm.xlu0 %8399, %v7513
    %v8401 = vpop.permute.xlu0 %8400
    %8402 = vset.pattern.permute.xlu0 0
    %8403 = vperm.xlu0 %8402, %v7514
    %v8404 = vpop.permute.xlu0 %8403
    %8405 = vset.pattern.permute.xlu0 0
    %8406 = vperm.xlu0 %8405, %v7515
    %v8407 = vpop.permute.xlu0 %8406
    %8408 = vset.pattern.permute.xlu0 0
    %8409 = vperm.xlu0 %8408, %v7516
    %v8410 = vpop.permute.xlu0 %8409
    %8411 = vset.pattern.permute.xlu0 0
    %8412 = vperm.xlu0 %8411, %v7517
    %v8413 = vpop.permute.xlu0 %8412
    %8414 = vset.pattern.permute.xlu0 0
    %8415 = vperm.xlu0 %8414, %v7518
    %v8416 = vpop.permute.xlu0 %8415
    %8417 = vset.pattern.permute.xlu0 0
    %8418 = vperm.xlu0 %8417, %v7519
    %v8419 = vpop.permute.xlu0 %8418
    %8420 = vset.pattern.permute.xlu0 0
    %8421 = vperm.xlu0 %8420, %v7520
    %v8422 = vpop.permute.xlu0 %8421
    %8423 = vset.pattern.permute.xlu0 0
    %8424 = vperm.xlu0 %8423, %v7521
    %v8425 = vpop.permute.xlu0 %8424
    %8426 = vset.pattern.permute.xlu0 0
    %8427 = vperm.xlu0 %8426, %v7522
    %v8428 = vpop.permute.xlu0 %8427
    %8429 = vset.pattern.permute.xlu0 0
    %8430 = vperm.xlu0 %8429, %v7523
    %v8431 = vpop.permute.xlu0 %8430
    %8432 = vset.pattern.permute.xlu0 0
    %8433 = vperm.xlu0 %8432, %v7524
    %v8434 = vpop.permute.xlu0 %8433
    %8435 = vset.pattern.permute.xlu0 0
    %8436 = vperm.xlu0 %8435, %v7525
    %v8437 = vpop.permute.xlu0 %8436
    %8438 = vset.pattern.permute.xlu0 0
    %8439 = vperm.xlu0 %8438, %v7526
    %v8440 = vpop.permute.xlu0 %8439
    %8441 = vset.pattern.permute.xlu0 0
    %8442 = vperm.xlu0 %8441, %v7527
    %v8443 = vpop.permute.xlu0 %8442
    %8444 = vset.pattern.permute.xlu0 0
    %8445 = vperm.xlu0 %8444, %v7528
    %v8446 = vpop.permute.xlu0 %8445
    %8447 = vset.pattern.permute.xlu0 0
    %8448 = vperm.xlu0 %8447, %v7529
    %v8449 = vpop.permute.xlu0 %8448
    %8450 = vset.pattern.permute.xlu0 0
    %8451 = vperm.xlu0 %8450, %v7530
    %v8452 = vpop.permute.xlu0 %8451
    %8453 = vset.pattern.permute.xlu0 0
    %8454 = vperm.xlu0 %8453, %v7531
    %v8455 = vpop.permute.xlu0 %8454
    %8456 = vset.pattern.permute.xlu0 0
    %8457 = vperm.xlu0 %8456, %v7532
    %v8458 = vpop.permute.xlu0 %8457
    %8459 = vset.pattern.permute.xlu0 0
    %8460 = vperm.xlu0 %8459, %v7533
    %v8461 = vpop.permute.xlu0 %8460
    %8462 = vset.pattern.permute.xlu0 0
    %8463 = vperm.xlu0 %8462, %v7534
    %v8464 = vpop.permute.xlu0 %8463
    %8465 = vset.pattern.permute.xlu0 0
    %8466 = vperm.xlu0 %8465, %v7535
    %v8467 = vpop.permute.xlu0 %8466
    %8468 = vset.pattern.permute.xlu0 0
    %8469 = vperm.xlu0 %8468, %v7536
    %v8470 = vpop.permute.xlu0 %8469
    %8471 = vset.pattern.permute.xlu0 0
    %8472 = vperm.xlu0 %8471, %v7537
    %v8473 = vpop.permute.xlu0 %8472
    %8474 = vset.pattern.permute.xlu0 0
    %8475 = vperm.xlu0 %8474, %v7538
    %v8476 = vpop.permute.xlu0 %8475
    %8477 = vset.pattern.permute.xlu0 0
    %8478 = vperm.xlu0 %8477, %v7539
    %v8479 = vpop.permute.xlu0 %8478
    %8480 = vset.pattern.permute.xlu0 0
    %8481 = vperm.xlu0 %8480, %v7540
    %v8482 = vpop.permute.xlu0 %8481
    %8483 = vset.pattern.permute.xlu0 0
    %8484 = vperm.xlu0 %8483, %v7541
    %v8485 = vpop.permute.xlu0 %8484
    %8486 = vset.pattern.permute.xlu0 0
    %8487 = vperm.xlu0 %8486, %v7542
    %v8488 = vpop.permute.xlu0 %8487
    %8489 = vset.pattern.permute.xlu0 0
    %8490 = vperm.xlu0 %8489, %v7543
    %v8491 = vpop.permute.xlu0 %8490
    %8492 = vset.pattern.permute.xlu0 0
    %8493 = vperm.xlu0 %8492, %v7544
    %v8494 = vpop.permute.xlu0 %8493
    %8495 = vset.pattern.permute.xlu0 0
    %8496 = vperm.xlu0 %8495, %v7545
    %v8497 = vpop.permute.xlu0 %8496
    %8498 = vset.pattern.permute.xlu0 0
    %8499 = vperm.xlu0 %8498, %v7546
    %v8500 = vpop.permute.xlu0 %8499
    %8501 = vset.pattern.permute.xlu0 0
    %8502 = vperm.xlu0 %8501, %v7547
    %v8503 = vpop.permute.xlu0 %8502
    %8504 = vset.pattern.permute.xlu0 0
    %8505 = vperm.xlu0 %8504, %v7548
    %v8506 = vpop.permute.xlu0 %8505
    %8507 = vset.pattern.permute.xlu0 0
    %8508 = vperm.xlu0 %8507, %v7549
    %v8509 = vpop.permute.xlu0 %8508
    %8510 = vset.pattern.permute.xlu0 0
    %8511 = vperm.xlu0 %8510, %v7550
    %v8512 = vpop.permute.xlu0 %8511
    %8513 = vset.pattern.permute.xlu0 0
    %8514 = vperm.xlu0 %8513, %v7551
    %v8515 = vpop.permute.xlu0 %8514
    %8516 = vset.pattern.permute.xlu0 0
    %8517 = vperm.xlu0 %8516, %v7552
    %v8518 = vpop.permute.xlu0 %8517
    %8519 = vset.pattern.permute.xlu0 0
    %8520 = vperm.xlu0 %8519, %v7553
    %v8521 = vpop.permute.xlu0 %8520
    %8522 = vset.pattern.permute.xlu0 0
    %8523 = vperm.xlu0 %8522, %v7554
    %v8524 = vpop.permute.xlu0 %8523
    %8525 = vset.pattern.permute.xlu0 0
    %8526 = vperm.xlu0 %8525, %v7555
    %v8527 = vpop.permute.xlu0 %8526
    %8528 = vset.pattern.permute.xlu0 0
    %8529 = vperm.xlu0 %8528, %v7556
    %v8530 = vpop.permute.xlu0 %8529
    %8531 = vset.pattern.permute.xlu0 0
    %8532 = vperm.xlu0 %8531, %v7557
    %v8533 = vpop.permute.xlu0 %8532
    %8534 = vset.pattern.permute.xlu0 0
    %8535 = vperm.xlu0 %8534, %v7558
    %v8536 = vpop.permute.xlu0 %8535
    %8537 = vset.pattern.permute.xlu0 0
    %8538 = vperm.xlu0 %8537, %v7559
    %v8539 = vpop.permute.xlu0 %8538
    %8540 = vset.pattern.permute.xlu0 0
    %8541 = vperm.xlu0 %8540, %v7560
    %v8542 = vpop.permute.xlu0 %8541
    %8543 = vset.pattern.permute.xlu0 0
    %8544 = vperm.xlu0 %8543, %v7561
    %v8545 = vpop.permute.xlu0 %8544
    %8546 = vset.pattern.permute.xlu0 0
    %8547 = vperm.xlu0 %8546, %v7562
    %v8548 = vpop.permute.xlu0 %8547
    %8549 = vset.pattern.permute.xlu0 0
    %8550 = vperm.xlu0 %8549, %v7563
    %v8551 = vpop.permute.xlu0 %8550
    %8552 = vset.pattern.permute.xlu0 0
    %8553 = vperm.xlu0 %8552, %v7564
    %v8554 = vpop.permute.xlu0 %8553
    %8555 = vset.pattern.permute.xlu0 0
    %8556 = vperm.xlu0 %8555, %v7565
    %v8557 = vpop.permute.xlu0 %8556
    %8558 = vset.pattern.permute.xlu0 0
    %8559 = vperm.xlu0 %8558, %v7566
    %v8560 = vpop.permute.xlu0 %8559
    %8561 = vset.pattern.permute.xlu0 0
    %8562 = vperm.xlu0 %8561, %v7567
    %v8563 = vpop.permute.xlu0 %8562
    %8564 = vset.pattern.permute.xlu0 0
    %8565 = vperm.xlu0 %8564, %v7568
    %v8566 = vpop.permute.xlu0 %8565
    %8567 = vset.pattern.permute.xlu0 0
    %8568 = vperm.xlu0 %8567, %v7569
    %v8569 = vpop.permute.xlu0 %8568
    %8570 = vset.pattern.permute.xlu0 0
    %8571 = vperm.xlu0 %8570, %v7570
    %v8572 = vpop.permute.xlu0 %8571
    %8573 = vset.pattern.permute.xlu0 0
    %8574 = vperm.xlu0 %8573, %v7571
    %v8575 = vpop.permute.xlu0 %8574
    %8576 = vset.pattern.permute.xlu0 0
    %8577 = vperm.xlu0 %8576, %v7572
    %v8578 = vpop.permute.xlu0 %8577
    %8579 = vset.pattern.permute.xlu0 0
    %8580 = vperm.xlu0 %8579, %v7573
    %v8581 = vpop.permute.xlu0 %8580
    %8582 = vset.pattern.permute.xlu0 0
    %8583 = vperm.xlu0 %8582, %v7574
    %v8584 = vpop.permute.xlu0 %8583
    %8585 = vset.pattern.permute.xlu0 0
    %8586 = vperm.xlu0 %8585, %v7575
    %v8587 = vpop.permute.xlu0 %8586
    %8588 = vset.pattern.permute.xlu0 0
    %8589 = vperm.xlu0 %8588, %v7576
    %v8590 = vpop.permute.xlu0 %8589
    %8591 = vset.pattern.permute.xlu0 0
    %8592 = vperm.xlu0 %8591, %v7577
    %v8593 = vpop.permute.xlu0 %8592
    %8594 = vset.pattern.permute.xlu0 0
    %8595 = vperm.xlu0 %8594, %v7578
    %v8596 = vpop.permute.xlu0 %8595
    %8597 = vset.pattern.permute.xlu0 0
    %8598 = vperm.xlu0 %8597, %v7579
    %v8599 = vpop.permute.xlu0 %8598
    %8600 = vset.pattern.permute.xlu0 0
    %8601 = vperm.xlu0 %8600, %v7580
    %v8602 = vpop.permute.xlu0 %8601
    %8603 = vset.pattern.permute.xlu0 0
    %8604 = vperm.xlu0 %8603, %v7581
    %v8605 = vpop.permute.xlu0 %8604
    %v8606 = vlaneseq
    %v8607 = vshrl.u32 %v8606, 7
    %v8608 = vsub.s32 %v2088, %v8607
    %v8609 = vrot.slane %v7840, %v8608
    %v8610 = vlaneseq
    %v8611 = vshrl.u32 %v8610, 7
    %v8612 = vsub.s32 %v2093, %v8611
    %v8613 = vrot.slane %v7843, %v8612
    %v8614 = vsel %vm2098, %v8613, %v8609
    %v8615 = vlaneseq
    %v8616 = vshrl.u32 %v8615, 7
    %v8617 = vsub.s32 %v2100, %v8616
    %v8618 = vrot.slane %v7846, %v8617
    %v8619 = vsel %vm2105, %v8618, %v8614
    %v8620 = vlaneseq
    %v8621 = vshrl.u32 %v8620, 7
    %v8622 = vsub.s32 %v2107, %v8621
    %v8623 = vrot.slane %v7849, %v8622
    %v8624 = vsel %vm2112, %v8623, %v8619
    %v8625 = vlaneseq
    %v8626 = vshrl.u32 %v8625, 7
    %v8627 = vsub.s32 %v2114, %v8626
    %v8628 = vrot.slane %v7852, %v8627
    %v8629 = vsel %vm2119, %v8628, %v8624
    %v8630 = vlaneseq
    %v8631 = vshrl.u32 %v8630, 7
    %v8632 = vsub.s32 %v2121, %v8631
    %v8633 = vrot.slane %v7855, %v8632
    %v8634 = vsel %vm2126, %v8633, %v8629
    %v8635 = vlaneseq
    %v8636 = vshrl.u32 %v8635, 7
    %v8637 = vsub.s32 %v2128, %v8636
    %v8638 = vrot.slane %v7858, %v8637
    %v8639 = vsel %vm2133, %v8638, %v8634
    %v8640 = vlaneseq
    %v8641 = vshrl.u32 %v8640, 7
    %v8642 = vsub.s32 %v2135, %v8641
    %v8643 = vrot.slane %v7861, %v8642
    %v8644 = vsel %vm2140, %v8643, %v8639
    %v8645 = vlaneseq
    %v8646 = vshrl.u32 %v8645, 7
    %v8647 = vsub.s32 %v2142, %v8646
    %v8648 = vrot.slane %v7864, %v8647
    %v8649 = vsel %vm2147, %v8648, %v8644
    %v8650 = vlaneseq
    %v8651 = vshrl.u32 %v8650, 7
    %v8652 = vsub.s32 %v2149, %v8651
    %v8653 = vrot.slane %v7867, %v8652
    %v8654 = vsel %vm2154, %v8653, %v8649
    %v8655 = vlaneseq
    %v8656 = vshrl.u32 %v8655, 7
    %v8657 = vsub.s32 %v2156, %v8656
    %v8658 = vrot.slane %v7870, %v8657
    %v8659 = vsel %vm2161, %v8658, %v8654
    %v8660 = vlaneseq
    %v8661 = vshrl.u32 %v8660, 7
    %v8662 = vsub.s32 %v2163, %v8661
    %v8663 = vrot.slane %v7873, %v8662
    %v8664 = vsel %vm2168, %v8663, %v8659
    %v8665 = vlaneseq
    %v8666 = vshrl.u32 %v8665, 7
    %v8667 = vsub.s32 %v2170, %v8666
    %v8668 = vrot.slane %v7876, %v8667
    %v8669 = vsel %vm2175, %v8668, %v8664
    %v8670 = vlaneseq
    %v8671 = vshrl.u32 %v8670, 7
    %v8672 = vsub.s32 %v2177, %v8671
    %v8673 = vrot.slane %v7879, %v8672
    %v8674 = vsel %vm2182, %v8673, %v8669
    %v8675 = vlaneseq
    %v8676 = vshrl.u32 %v8675, 7
    %v8677 = vsub.s32 %v2184, %v8676
    %v8678 = vrot.slane %v7882, %v8677
    %v8679 = vsel %vm2189, %v8678, %v8674
    %v8680 = vlaneseq
    %v8681 = vshrl.u32 %v8680, 7
    %v8682 = vsub.s32 %v2191, %v8681
    %v8683 = vrot.slane %v7885, %v8682
    %v8684 = vsel %vm2196, %v8683, %v8679
    %v8685 = vlaneseq
    %v8686 = vshrl.u32 %v8685, 7
    %v8687 = vsub.s32 %v2088, %v8686
    %v8688 = vrot.slane %v7888, %v8687
    %v8689 = vlaneseq
    %v8690 = vshrl.u32 %v8689, 7
    %v8691 = vsub.s32 %v2093, %v8690
    %v8692 = vrot.slane %v7891, %v8691
    %v8693 = vsel %vm2098, %v8692, %v8688
    %v8694 = vlaneseq
    %v8695 = vshrl.u32 %v8694, 7
    %v8696 = vsub.s32 %v2100, %v8695
    %v8697 = vrot.slane %v7894, %v8696
    %v8698 = vsel %vm2105, %v8697, %v8693
    %v8699 = vlaneseq
    %v8700 = vshrl.u32 %v8699, 7
    %v8701 = vsub.s32 %v2107, %v8700
    %v8702 = vrot.slane %v7897, %v8701
    %v8703 = vsel %vm2112, %v8702, %v8698
    %v8704 = vlaneseq
    %v8705 = vshrl.u32 %v8704, 7
    %v8706 = vsub.s32 %v2114, %v8705
    %v8707 = vrot.slane %v7900, %v8706
    %v8708 = vsel %vm2119, %v8707, %v8703
    %v8709 = vlaneseq
    %v8710 = vshrl.u32 %v8709, 7
    %v8711 = vsub.s32 %v2121, %v8710
    %v8712 = vrot.slane %v7903, %v8711
    %v8713 = vsel %vm2126, %v8712, %v8708
    %v8714 = vlaneseq
    %v8715 = vshrl.u32 %v8714, 7
    %v8716 = vsub.s32 %v2128, %v8715
    %v8717 = vrot.slane %v7906, %v8716
    %v8718 = vsel %vm2133, %v8717, %v8713
    %v8719 = vlaneseq
    %v8720 = vshrl.u32 %v8719, 7
    %v8721 = vsub.s32 %v2135, %v8720
    %v8722 = vrot.slane %v7909, %v8721
    %v8723 = vsel %vm2140, %v8722, %v8718
    %v8724 = vlaneseq
    %v8725 = vshrl.u32 %v8724, 7
    %v8726 = vsub.s32 %v2142, %v8725
    %v8727 = vrot.slane %v7912, %v8726
    %v8728 = vsel %vm2147, %v8727, %v8723
    %v8729 = vlaneseq
    %v8730 = vshrl.u32 %v8729, 7
    %v8731 = vsub.s32 %v2149, %v8730
    %v8732 = vrot.slane %v7915, %v8731
    %v8733 = vsel %vm2154, %v8732, %v8728
    %v8734 = vlaneseq
    %v8735 = vshrl.u32 %v8734, 7
    %v8736 = vsub.s32 %v2156, %v8735
    %v8737 = vrot.slane %v7918, %v8736
    %v8738 = vsel %vm2161, %v8737, %v8733
    %v8739 = vlaneseq
    %v8740 = vshrl.u32 %v8739, 7
    %v8741 = vsub.s32 %v2163, %v8740
    %v8742 = vrot.slane %v7921, %v8741
    %v8743 = vsel %vm2168, %v8742, %v8738
    %v8744 = vlaneseq
    %v8745 = vshrl.u32 %v8744, 7
    %v8746 = vsub.s32 %v2170, %v8745
    %v8747 = vrot.slane %v7924, %v8746
    %v8748 = vsel %vm2175, %v8747, %v8743
    %v8749 = vlaneseq
    %v8750 = vshrl.u32 %v8749, 7
    %v8751 = vsub.s32 %v2177, %v8750
    %v8752 = vrot.slane %v7927, %v8751
    %v8753 = vsel %vm2182, %v8752, %v8748
    %v8754 = vlaneseq
    %v8755 = vshrl.u32 %v8754, 7
    %v8756 = vsub.s32 %v2184, %v8755
    %v8757 = vrot.slane %v7930, %v8756
    %v8758 = vsel %vm2189, %v8757, %v8753
    %v8759 = vlaneseq
    %v8760 = vshrl.u32 %v8759, 7
    %v8761 = vsub.s32 %v2191, %v8760
    %v8762 = vrot.slane %v7933, %v8761
    %v8763 = vsel %vm2196, %v8762, %v8758
    %v8764 = vlaneseq
    %v8765 = vshrl.u32 %v8764, 7
    %v8766 = vsub.s32 %v2088, %v8765
    %v8767 = vrot.slane %v7936, %v8766
    %v8768 = vlaneseq
    %v8769 = vshrl.u32 %v8768, 7
    %v8770 = vsub.s32 %v2093, %v8769
    %v8771 = vrot.slane %v7939, %v8770
    %v8772 = vsel %vm2098, %v8771, %v8767
    %v8773 = vlaneseq
    %v8774 = vshrl.u32 %v8773, 7
    %v8775 = vsub.s32 %v2100, %v8774
    %v8776 = vrot.slane %v7942, %v8775
    %v8777 = vsel %vm2105, %v8776, %v8772
    %v8778 = vlaneseq
    %v8779 = vshrl.u32 %v8778, 7
    %v8780 = vsub.s32 %v2107, %v8779
    %v8781 = vrot.slane %v7945, %v8780
    %v8782 = vsel %vm2112, %v8781, %v8777
    %v8783 = vlaneseq
    %v8784 = vshrl.u32 %v8783, 7
    %v8785 = vsub.s32 %v2114, %v8784
    %v8786 = vrot.slane %v7948, %v8785
    %v8787 = vsel %vm2119, %v8786, %v8782
    %v8788 = vlaneseq
    %v8789 = vshrl.u32 %v8788, 7
    %v8790 = vsub.s32 %v2121, %v8789
    %v8791 = vrot.slane %v7951, %v8790
    %v8792 = vsel %vm2126, %v8791, %v8787
    %v8793 = vlaneseq
    %v8794 = vshrl.u32 %v8793, 7
    %v8795 = vsub.s32 %v2128, %v8794
    %v8796 = vrot.slane %v7954, %v8795
    %v8797 = vsel %vm2133, %v8796, %v8792
    %v8798 = vlaneseq
    %v8799 = vshrl.u32 %v8798, 7
    %v8800 = vsub.s32 %v2135, %v8799
    %v8801 = vrot.slane %v7957, %v8800
    %v8802 = vsel %vm2140, %v8801, %v8797
    %v8803 = vlaneseq
    %v8804 = vshrl.u32 %v8803, 7
    %v8805 = vsub.s32 %v2142, %v8804
    %v8806 = vrot.slane %v7960, %v8805
    %v8807 = vsel %vm2147, %v8806, %v8802
    %v8808 = vlaneseq
    %v8809 = vshrl.u32 %v8808, 7
    %v8810 = vsub.s32 %v2149, %v8809
    %v8811 = vrot.slane %v7963, %v8810
    %v8812 = vsel %vm2154, %v8811, %v8807
    %v8813 = vlaneseq
    %v8814 = vshrl.u32 %v8813, 7
    %v8815 = vsub.s32 %v2156, %v8814
    %v8816 = vrot.slane %v7966, %v8815
    %v8817 = vsel %vm2161, %v8816, %v8812
    %v8818 = vlaneseq
    %v8819 = vshrl.u32 %v8818, 7
    %v8820 = vsub.s32 %v2163, %v8819
    %v8821 = vrot.slane %v7969, %v8820
    %v8822 = vsel %vm2168, %v8821, %v8817
    %v8823 = vlaneseq
    %v8824 = vshrl.u32 %v8823, 7
    %v8825 = vsub.s32 %v2170, %v8824
    %v8826 = vrot.slane %v7972, %v8825
    %v8827 = vsel %vm2175, %v8826, %v8822
    %v8828 = vlaneseq
    %v8829 = vshrl.u32 %v8828, 7
    %v8830 = vsub.s32 %v2177, %v8829
    %v8831 = vrot.slane %v7975, %v8830
    %v8832 = vsel %vm2182, %v8831, %v8827
    %v8833 = vlaneseq
    %v8834 = vshrl.u32 %v8833, 7
    %v8835 = vsub.s32 %v2184, %v8834
    %v8836 = vrot.slane %v7978, %v8835
    %v8837 = vsel %vm2189, %v8836, %v8832
    %v8838 = vlaneseq
    %v8839 = vshrl.u32 %v8838, 7
    %v8840 = vsub.s32 %v2191, %v8839
    %v8841 = vrot.slane %v7981, %v8840
    %v8842 = vsel %vm2196, %v8841, %v8837
    %v8843 = vlaneseq
    %v8844 = vshrl.u32 %v8843, 7
    %v8845 = vsub.s32 %v2088, %v8844
    %v8846 = vrot.slane %v7984, %v8845
    %v8847 = vlaneseq
    %v8848 = vshrl.u32 %v8847, 7
    %v8849 = vsub.s32 %v2093, %v8848
    %v8850 = vrot.slane %v7987, %v8849
    %v8851 = vsel %vm2098, %v8850, %v8846
    %v8852 = vlaneseq
    %v8853 = vshrl.u32 %v8852, 7
    %v8854 = vsub.s32 %v2100, %v8853
    %v8855 = vrot.slane %v7990, %v8854
    %v8856 = vsel %vm2105, %v8855, %v8851
    %v8857 = vlaneseq
    %v8858 = vshrl.u32 %v8857, 7
    %v8859 = vsub.s32 %v2107, %v8858
    %v8860 = vrot.slane %v7993, %v8859
    %v8861 = vsel %vm2112, %v8860, %v8856
    %v8862 = vlaneseq
    %v8863 = vshrl.u32 %v8862, 7
    %v8864 = vsub.s32 %v2114, %v8863
    %v8865 = vrot.slane %v7996, %v8864
    %v8866 = vsel %vm2119, %v8865, %v8861
    %v8867 = vlaneseq
    %v8868 = vshrl.u32 %v8867, 7
    %v8869 = vsub.s32 %v2121, %v8868
    %v8870 = vrot.slane %v7999, %v8869
    %v8871 = vsel %vm2126, %v8870, %v8866
    %v8872 = vlaneseq
    %v8873 = vshrl.u32 %v8872, 7
    %v8874 = vsub.s32 %v2128, %v8873
    %v8875 = vrot.slane %v8002, %v8874
    %v8876 = vsel %vm2133, %v8875, %v8871
    %v8877 = vlaneseq
    %v8878 = vshrl.u32 %v8877, 7
    %v8879 = vsub.s32 %v2135, %v8878
    %v8880 = vrot.slane %v8005, %v8879
    %v8881 = vsel %vm2140, %v8880, %v8876
    %v8882 = vlaneseq
    %v8883 = vshrl.u32 %v8882, 7
    %v8884 = vsub.s32 %v2142, %v8883
    %v8885 = vrot.slane %v8008, %v8884
    %v8886 = vsel %vm2147, %v8885, %v8881
    %v8887 = vlaneseq
    %v8888 = vshrl.u32 %v8887, 7
    %v8889 = vsub.s32 %v2149, %v8888
    %v8890 = vrot.slane %v8011, %v8889
    %v8891 = vsel %vm2154, %v8890, %v8886
    %v8892 = vlaneseq
    %v8893 = vshrl.u32 %v8892, 7
    %v8894 = vsub.s32 %v2156, %v8893
    %v8895 = vrot.slane %v8014, %v8894
    %v8896 = vsel %vm2161, %v8895, %v8891
    %v8897 = vlaneseq
    %v8898 = vshrl.u32 %v8897, 7
    %v8899 = vsub.s32 %v2163, %v8898
    %v8900 = vrot.slane %v8017, %v8899
    %v8901 = vsel %vm2168, %v8900, %v8896
    %v8902 = vlaneseq
    %v8903 = vshrl.u32 %v8902, 7
    %v8904 = vsub.s32 %v2170, %v8903
    %v8905 = vrot.slane %v8020, %v8904
    %v8906 = vsel %vm2175, %v8905, %v8901
    %v8907 = vlaneseq
    %v8908 = vshrl.u32 %v8907, 7
    %v8909 = vsub.s32 %v2177, %v8908
    %v8910 = vrot.slane %v8023, %v8909
    %v8911 = vsel %vm2182, %v8910, %v8906
    %v8912 = vlaneseq
    %v8913 = vshrl.u32 %v8912, 7
    %v8914 = vsub.s32 %v2184, %v8913
    %v8915 = vrot.slane %v8026, %v8914
    %v8916 = vsel %vm2189, %v8915, %v8911
    %v8917 = vlaneseq
    %v8918 = vshrl.u32 %v8917, 7
    %v8919 = vsub.s32 %v2191, %v8918
    %v8920 = vrot.slane %v8029, %v8919
    %v8921 = vsel %vm2196, %v8920, %v8916
    %v8922 = vlaneseq
    %v8923 = vshrl.u32 %v8922, 7
    %v8924 = vsub.s32 %v2088, %v8923
    %v8925 = vrot.slane %v8032, %v8924
    %v8926 = vlaneseq
    %v8927 = vshrl.u32 %v8926, 7
    %v8928 = vsub.s32 %v2093, %v8927
    %v8929 = vrot.slane %v8035, %v8928
    %v8930 = vsel %vm2098, %v8929, %v8925
    %v8931 = vlaneseq
    %v8932 = vshrl.u32 %v8931, 7
    %v8933 = vsub.s32 %v2100, %v8932
    %v8934 = vrot.slane %v8038, %v8933
    %v8935 = vsel %vm2105, %v8934, %v8930
    %v8936 = vlaneseq
    %v8937 = vshrl.u32 %v8936, 7
    %v8938 = vsub.s32 %v2107, %v8937
    %v8939 = vrot.slane %v8041, %v8938
    %v8940 = vsel %vm2112, %v8939, %v8935
    %v8941 = vlaneseq
    %v8942 = vshrl.u32 %v8941, 7
    %v8943 = vsub.s32 %v2114, %v8942
    %v8944 = vrot.slane %v8044, %v8943
    %v8945 = vsel %vm2119, %v8944, %v8940
    %v8946 = vlaneseq
    %v8947 = vshrl.u32 %v8946, 7
    %v8948 = vsub.s32 %v2121, %v8947
    %v8949 = vrot.slane %v8047, %v8948
    %v8950 = vsel %vm2126, %v8949, %v8945
    %v8951 = vlaneseq
    %v8952 = vshrl.u32 %v8951, 7
    %v8953 = vsub.s32 %v2128, %v8952
    %v8954 = vrot.slane %v8050, %v8953
    %v8955 = vsel %vm2133, %v8954, %v8950
    %v8956 = vlaneseq
    %v8957 = vshrl.u32 %v8956, 7
    %v8958 = vsub.s32 %v2135, %v8957
    %v8959 = vrot.slane %v8053, %v8958
    %v8960 = vsel %vm2140, %v8959, %v8955
    %v8961 = vlaneseq
    %v8962 = vshrl.u32 %v8961, 7
    %v8963 = vsub.s32 %v2142, %v8962
    %v8964 = vrot.slane %v8056, %v8963
    %v8965 = vsel %vm2147, %v8964, %v8960
    %v8966 = vlaneseq
    %v8967 = vshrl.u32 %v8966, 7
    %v8968 = vsub.s32 %v2149, %v8967
    %v8969 = vrot.slane %v8059, %v8968
    %v8970 = vsel %vm2154, %v8969, %v8965
    %v8971 = vlaneseq
    %v8972 = vshrl.u32 %v8971, 7
    %v8973 = vsub.s32 %v2156, %v8972
    %v8974 = vrot.slane %v8062, %v8973
    %v8975 = vsel %vm2161, %v8974, %v8970
    %v8976 = vlaneseq
    %v8977 = vshrl.u32 %v8976, 7
    %v8978 = vsub.s32 %v2163, %v8977
    %v8979 = vrot.slane %v8065, %v8978
    %v8980 = vsel %vm2168, %v8979, %v8975
    %v8981 = vlaneseq
    %v8982 = vshrl.u32 %v8981, 7
    %v8983 = vsub.s32 %v2170, %v8982
    %v8984 = vrot.slane %v8068, %v8983
    %v8985 = vsel %vm2175, %v8984, %v8980
    %v8986 = vlaneseq
    %v8987 = vshrl.u32 %v8986, 7
    %v8988 = vsub.s32 %v2177, %v8987
    %v8989 = vrot.slane %v8071, %v8988
    %v8990 = vsel %vm2182, %v8989, %v8985
    %v8991 = vlaneseq
    %v8992 = vshrl.u32 %v8991, 7
    %v8993 = vsub.s32 %v2184, %v8992
    %v8994 = vrot.slane %v8074, %v8993
    %v8995 = vsel %vm2189, %v8994, %v8990
    %v8996 = vlaneseq
    %v8997 = vshrl.u32 %v8996, 7
    %v8998 = vsub.s32 %v2191, %v8997
    %v8999 = vrot.slane %v8077, %v8998
    %v9000 = vsel %vm2196, %v8999, %v8995
    %v9001 = vlaneseq
    %v9002 = vshrl.u32 %v9001, 7
    %v9003 = vsub.s32 %v2088, %v9002
    %v9004 = vrot.slane %v8080, %v9003
    %v9005 = vlaneseq
    %v9006 = vshrl.u32 %v9005, 7
    %v9007 = vsub.s32 %v2093, %v9006
    %v9008 = vrot.slane %v8083, %v9007
    %v9009 = vsel %vm2098, %v9008, %v9004
    %v9010 = vlaneseq
    %v9011 = vshrl.u32 %v9010, 7
    %v9012 = vsub.s32 %v2100, %v9011
    %v9013 = vrot.slane %v8086, %v9012
    %v9014 = vsel %vm2105, %v9013, %v9009
    %v9015 = vlaneseq
    %v9016 = vshrl.u32 %v9015, 7
    %v9017 = vsub.s32 %v2107, %v9016
    %v9018 = vrot.slane %v8089, %v9017
    %v9019 = vsel %vm2112, %v9018, %v9014
    %v9020 = vlaneseq
    %v9021 = vshrl.u32 %v9020, 7
    %v9022 = vsub.s32 %v2114, %v9021
    %v9023 = vrot.slane %v8092, %v9022
    %v9024 = vsel %vm2119, %v9023, %v9019
    %v9025 = vlaneseq
    %v9026 = vshrl.u32 %v9025, 7
    %v9027 = vsub.s32 %v2121, %v9026
    %v9028 = vrot.slane %v8095, %v9027
    %v9029 = vsel %vm2126, %v9028, %v9024
    %v9030 = vlaneseq
    %v9031 = vshrl.u32 %v9030, 7
    %v9032 = vsub.s32 %v2128, %v9031
    %v9033 = vrot.slane %v8098, %v9032
    %v9034 = vsel %vm2133, %v9033, %v9029
    %v9035 = vlaneseq
    %v9036 = vshrl.u32 %v9035, 7
    %v9037 = vsub.s32 %v2135, %v9036
    %v9038 = vrot.slane %v8101, %v9037
    %v9039 = vsel %vm2140, %v9038, %v9034
    %v9040 = vlaneseq
    %v9041 = vshrl.u32 %v9040, 7
    %v9042 = vsub.s32 %v2142, %v9041
    %v9043 = vrot.slane %v8104, %v9042
    %v9044 = vsel %vm2147, %v9043, %v9039
    %v9045 = vlaneseq
    %v9046 = vshrl.u32 %v9045, 7
    %v9047 = vsub.s32 %v2149, %v9046
    %v9048 = vrot.slane %v8107, %v9047
    %v9049 = vsel %vm2154, %v9048, %v9044
    %v9050 = vlaneseq
    %v9051 = vshrl.u32 %v9050, 7
    %v9052 = vsub.s32 %v2156, %v9051
    %v9053 = vrot.slane %v8110, %v9052
    %v9054 = vsel %vm2161, %v9053, %v9049
    %v9055 = vlaneseq
    %v9056 = vshrl.u32 %v9055, 7
    %v9057 = vsub.s32 %v2163, %v9056
    %v9058 = vrot.slane %v8113, %v9057
    %v9059 = vsel %vm2168, %v9058, %v9054
    %v9060 = vlaneseq
    %v9061 = vshrl.u32 %v9060, 7
    %v9062 = vsub.s32 %v2170, %v9061
    %v9063 = vrot.slane %v8116, %v9062
    %v9064 = vsel %vm2175, %v9063, %v9059
    %v9065 = vlaneseq
    %v9066 = vshrl.u32 %v9065, 7
    %v9067 = vsub.s32 %v2177, %v9066
    %v9068 = vrot.slane %v8119, %v9067
    %v9069 = vsel %vm2182, %v9068, %v9064
    %v9070 = vlaneseq
    %v9071 = vshrl.u32 %v9070, 7
    %v9072 = vsub.s32 %v2184, %v9071
    %v9073 = vrot.slane %v8122, %v9072
    %v9074 = vsel %vm2189, %v9073, %v9069
    %v9075 = vlaneseq
    %v9076 = vshrl.u32 %v9075, 7
    %v9077 = vsub.s32 %v2191, %v9076
    %v9078 = vrot.slane %v8125, %v9077
    %v9079 = vsel %vm2196, %v9078, %v9074
    %v9080 = vlaneseq
    %v9081 = vshrl.u32 %v9080, 7
    %v9082 = vsub.s32 %v2088, %v9081
    %v9083 = vrot.slane %v8128, %v9082
    %v9084 = vlaneseq
    %v9085 = vshrl.u32 %v9084, 7
    %v9086 = vsub.s32 %v2093, %v9085
    %v9087 = vrot.slane %v8131, %v9086
    %v9088 = vsel %vm2098, %v9087, %v9083
    %v9089 = vlaneseq
    %v9090 = vshrl.u32 %v9089, 7
    %v9091 = vsub.s32 %v2100, %v9090
    %v9092 = vrot.slane %v8134, %v9091
    %v9093 = vsel %vm2105, %v9092, %v9088
    %v9094 = vlaneseq
    %v9095 = vshrl.u32 %v9094, 7
    %v9096 = vsub.s32 %v2107, %v9095
    %v9097 = vrot.slane %v8137, %v9096
    %v9098 = vsel %vm2112, %v9097, %v9093
    %v9099 = vlaneseq
    %v9100 = vshrl.u32 %v9099, 7
    %v9101 = vsub.s32 %v2114, %v9100
    %v9102 = vrot.slane %v8140, %v9101
    %v9103 = vsel %vm2119, %v9102, %v9098
    %v9104 = vlaneseq
    %v9105 = vshrl.u32 %v9104, 7
    %v9106 = vsub.s32 %v2121, %v9105
    %v9107 = vrot.slane %v8143, %v9106
    %v9108 = vsel %vm2126, %v9107, %v9103
    %v9109 = vlaneseq
    %v9110 = vshrl.u32 %v9109, 7
    %v9111 = vsub.s32 %v2128, %v9110
    %v9112 = vrot.slane %v8146, %v9111
    %v9113 = vsel %vm2133, %v9112, %v9108
    %v9114 = vlaneseq
    %v9115 = vshrl.u32 %v9114, 7
    %v9116 = vsub.s32 %v2135, %v9115
    %v9117 = vrot.slane %v8149, %v9116
    %v9118 = vsel %vm2140, %v9117, %v9113
    %v9119 = vlaneseq
    %v9120 = vshrl.u32 %v9119, 7
    %v9121 = vsub.s32 %v2142, %v9120
    %v9122 = vrot.slane %v8152, %v9121
    %v9123 = vsel %vm2147, %v9122, %v9118
    %v9124 = vlaneseq
    %v9125 = vshrl.u32 %v9124, 7
    %v9126 = vsub.s32 %v2149, %v9125
    %v9127 = vrot.slane %v8155, %v9126
    %v9128 = vsel %vm2154, %v9127, %v9123
    %v9129 = vlaneseq
    %v9130 = vshrl.u32 %v9129, 7
    %v9131 = vsub.s32 %v2156, %v9130
    %v9132 = vrot.slane %v8158, %v9131
    %v9133 = vsel %vm2161, %v9132, %v9128
    %v9134 = vlaneseq
    %v9135 = vshrl.u32 %v9134, 7
    %v9136 = vsub.s32 %v2163, %v9135
    %v9137 = vrot.slane %v8161, %v9136
    %v9138 = vsel %vm2168, %v9137, %v9133
    %v9139 = vlaneseq
    %v9140 = vshrl.u32 %v9139, 7
    %v9141 = vsub.s32 %v2170, %v9140
    %v9142 = vrot.slane %v8164, %v9141
    %v9143 = vsel %vm2175, %v9142, %v9138
    %v9144 = vlaneseq
    %v9145 = vshrl.u32 %v9144, 7
    %v9146 = vsub.s32 %v2177, %v9145
    %v9147 = vrot.slane %v8167, %v9146
    %v9148 = vsel %vm2182, %v9147, %v9143
    %v9149 = vlaneseq
    %v9150 = vshrl.u32 %v9149, 7
    %v9151 = vsub.s32 %v2184, %v9150
    %v9152 = vrot.slane %v8170, %v9151
    %v9153 = vsel %vm2189, %v9152, %v9148
    %v9154 = vlaneseq
    %v9155 = vshrl.u32 %v9154, 7
    %v9156 = vsub.s32 %v2191, %v9155
    %v9157 = vrot.slane %v8173, %v9156
    %v9158 = vsel %vm2196, %v9157, %v9153
    %v9159 = vlaneseq
    %v9160 = vshrl.u32 %v9159, 7
    %v9161 = vsub.s32 %v2088, %v9160
    %v9162 = vrot.slane %v8176, %v9161
    %v9163 = vlaneseq
    %v9164 = vshrl.u32 %v9163, 7
    %v9165 = vsub.s32 %v2093, %v9164
    %v9166 = vrot.slane %v8179, %v9165
    %v9167 = vsel %vm2098, %v9166, %v9162
    %v9168 = vlaneseq
    %v9169 = vshrl.u32 %v9168, 7
    %v9170 = vsub.s32 %v2100, %v9169
    %v9171 = vrot.slane %v8182, %v9170
    %v9172 = vsel %vm2105, %v9171, %v9167
    %v9173 = vlaneseq
    %v9174 = vshrl.u32 %v9173, 7
    %v9175 = vsub.s32 %v2107, %v9174
    %v9176 = vrot.slane %v8185, %v9175
    %v9177 = vsel %vm2112, %v9176, %v9172
    %v9178 = vlaneseq
    %v9179 = vshrl.u32 %v9178, 7
    %v9180 = vsub.s32 %v2114, %v9179
    %v9181 = vrot.slane %v8188, %v9180
    %v9182 = vsel %vm2119, %v9181, %v9177
    %v9183 = vlaneseq
    %v9184 = vshrl.u32 %v9183, 7
    %v9185 = vsub.s32 %v2121, %v9184
    %v9186 = vrot.slane %v8191, %v9185
    %v9187 = vsel %vm2126, %v9186, %v9182
    %v9188 = vlaneseq
    %v9189 = vshrl.u32 %v9188, 7
    %v9190 = vsub.s32 %v2128, %v9189
    %v9191 = vrot.slane %v8194, %v9190
    %v9192 = vsel %vm2133, %v9191, %v9187
    %v9193 = vlaneseq
    %v9194 = vshrl.u32 %v9193, 7
    %v9195 = vsub.s32 %v2135, %v9194
    %v9196 = vrot.slane %v8197, %v9195
    %v9197 = vsel %vm2140, %v9196, %v9192
    %v9198 = vlaneseq
    %v9199 = vshrl.u32 %v9198, 7
    %v9200 = vsub.s32 %v2142, %v9199
    %v9201 = vrot.slane %v8200, %v9200
    %v9202 = vsel %vm2147, %v9201, %v9197
    %v9203 = vlaneseq
    %v9204 = vshrl.u32 %v9203, 7
    %v9205 = vsub.s32 %v2149, %v9204
    %v9206 = vrot.slane %v8203, %v9205
    %v9207 = vsel %vm2154, %v9206, %v9202
    %v9208 = vlaneseq
    %v9209 = vshrl.u32 %v9208, 7
    %v9210 = vsub.s32 %v2156, %v9209
    %v9211 = vrot.slane %v8206, %v9210
    %v9212 = vsel %vm2161, %v9211, %v9207
    %v9213 = vlaneseq
    %v9214 = vshrl.u32 %v9213, 7
    %v9215 = vsub.s32 %v2163, %v9214
    %v9216 = vrot.slane %v8209, %v9215
    %v9217 = vsel %vm2168, %v9216, %v9212
    %v9218 = vlaneseq
    %v9219 = vshrl.u32 %v9218, 7
    %v9220 = vsub.s32 %v2170, %v9219
    %v9221 = vrot.slane %v8212, %v9220
    %v9222 = vsel %vm2175, %v9221, %v9217
    %v9223 = vlaneseq
    %v9224 = vshrl.u32 %v9223, 7
    %v9225 = vsub.s32 %v2177, %v9224
    %v9226 = vrot.slane %v8215, %v9225
    %v9227 = vsel %vm2182, %v9226, %v9222
    %v9228 = vlaneseq
    %v9229 = vshrl.u32 %v9228, 7
    %v9230 = vsub.s32 %v2184, %v9229
    %v9231 = vrot.slane %v8218, %v9230
    %v9232 = vsel %vm2189, %v9231, %v9227
    %v9233 = vlaneseq
    %v9234 = vshrl.u32 %v9233, 7
    %v9235 = vsub.s32 %v2191, %v9234
    %v9236 = vrot.slane %v8221, %v9235
    %v9237 = vsel %vm2196, %v9236, %v9232
    %v9238 = vlaneseq
    %v9239 = vshrl.u32 %v9238, 7
    %v9240 = vsub.s32 %v2088, %v9239
    %v9241 = vrot.slane %v8224, %v9240
    %v9242 = vlaneseq
    %v9243 = vshrl.u32 %v9242, 7
    %v9244 = vsub.s32 %v2093, %v9243
    %v9245 = vrot.slane %v8227, %v9244
    %v9246 = vsel %vm2098, %v9245, %v9241
    %v9247 = vlaneseq
    %v9248 = vshrl.u32 %v9247, 7
    %v9249 = vsub.s32 %v2100, %v9248
    %v9250 = vrot.slane %v8230, %v9249
    %v9251 = vsel %vm2105, %v9250, %v9246
    %v9252 = vlaneseq
    %v9253 = vshrl.u32 %v9252, 7
    %v9254 = vsub.s32 %v2107, %v9253
    %v9255 = vrot.slane %v8233, %v9254
    %v9256 = vsel %vm2112, %v9255, %v9251
    %v9257 = vlaneseq
    %v9258 = vshrl.u32 %v9257, 7
    %v9259 = vsub.s32 %v2114, %v9258
    %v9260 = vrot.slane %v8236, %v9259
    %v9261 = vsel %vm2119, %v9260, %v9256
    %v9262 = vlaneseq
    %v9263 = vshrl.u32 %v9262, 7
    %v9264 = vsub.s32 %v2121, %v9263
    %v9265 = vrot.slane %v8239, %v9264
    %v9266 = vsel %vm2126, %v9265, %v9261
    %v9267 = vlaneseq
    %v9268 = vshrl.u32 %v9267, 7
    %v9269 = vsub.s32 %v2128, %v9268
    %v9270 = vrot.slane %v8242, %v9269
    %v9271 = vsel %vm2133, %v9270, %v9266
    %v9272 = vlaneseq
    %v9273 = vshrl.u32 %v9272, 7
    %v9274 = vsub.s32 %v2135, %v9273
    %v9275 = vrot.slane %v8245, %v9274
    %v9276 = vsel %vm2140, %v9275, %v9271
    %v9277 = vlaneseq
    %v9278 = vshrl.u32 %v9277, 7
    %v9279 = vsub.s32 %v2142, %v9278
    %v9280 = vrot.slane %v8248, %v9279
    %v9281 = vsel %vm2147, %v9280, %v9276
    %v9282 = vlaneseq
    %v9283 = vshrl.u32 %v9282, 7
    %v9284 = vsub.s32 %v2149, %v9283
    %v9285 = vrot.slane %v8251, %v9284
    %v9286 = vsel %vm2154, %v9285, %v9281
    %v9287 = vlaneseq
    %v9288 = vshrl.u32 %v9287, 7
    %v9289 = vsub.s32 %v2156, %v9288
    %v9290 = vrot.slane %v8254, %v9289
    %v9291 = vsel %vm2161, %v9290, %v9286
    %v9292 = vlaneseq
    %v9293 = vshrl.u32 %v9292, 7
    %v9294 = vsub.s32 %v2163, %v9293
    %v9295 = vrot.slane %v8257, %v9294
    %v9296 = vsel %vm2168, %v9295, %v9291
    %v9297 = vlaneseq
    %v9298 = vshrl.u32 %v9297, 7
    %v9299 = vsub.s32 %v2170, %v9298
    %v9300 = vrot.slane %v8260, %v9299
    %v9301 = vsel %vm2175, %v9300, %v9296
    %v9302 = vlaneseq
    %v9303 = vshrl.u32 %v9302, 7
    %v9304 = vsub.s32 %v2177, %v9303
    %v9305 = vrot.slane %v8263, %v9304
    %v9306 = vsel %vm2182, %v9305, %v9301
    %v9307 = vlaneseq
    %v9308 = vshrl.u32 %v9307, 7
    %v9309 = vsub.s32 %v2184, %v9308
    %v9310 = vrot.slane %v8266, %v9309
    %v9311 = vsel %vm2189, %v9310, %v9306
    %v9312 = vlaneseq
    %v9313 = vshrl.u32 %v9312, 7
    %v9314 = vsub.s32 %v2191, %v9313
    %v9315 = vrot.slane %v8269, %v9314
    %v9316 = vsel %vm2196, %v9315, %v9311
    %v9317 = vlaneseq
    %v9318 = vshrl.u32 %v9317, 7
    %v9319 = vsub.s32 %v2088, %v9318
    %v9320 = vrot.slane %v8272, %v9319
    %v9321 = vlaneseq
    %v9322 = vshrl.u32 %v9321, 7
    %v9323 = vsub.s32 %v2093, %v9322
    %v9324 = vrot.slane %v8275, %v9323
    %v9325 = vsel %vm2098, %v9324, %v9320
    %v9326 = vlaneseq
    %v9327 = vshrl.u32 %v9326, 7
    %v9328 = vsub.s32 %v2100, %v9327
    %v9329 = vrot.slane %v8278, %v9328
    %v9330 = vsel %vm2105, %v9329, %v9325
    %v9331 = vlaneseq
    %v9332 = vshrl.u32 %v9331, 7
    %v9333 = vsub.s32 %v2107, %v9332
    %v9334 = vrot.slane %v8281, %v9333
    %v9335 = vsel %vm2112, %v9334, %v9330
    %v9336 = vlaneseq
    %v9337 = vshrl.u32 %v9336, 7
    %v9338 = vsub.s32 %v2114, %v9337
    %v9339 = vrot.slane %v8284, %v9338
    %v9340 = vsel %vm2119, %v9339, %v9335
    %v9341 = vlaneseq
    %v9342 = vshrl.u32 %v9341, 7
    %v9343 = vsub.s32 %v2121, %v9342
    %v9344 = vrot.slane %v8287, %v9343
    %v9345 = vsel %vm2126, %v9344, %v9340
    %v9346 = vlaneseq
    %v9347 = vshrl.u32 %v9346, 7
    %v9348 = vsub.s32 %v2128, %v9347
    %v9349 = vrot.slane %v8290, %v9348
    %v9350 = vsel %vm2133, %v9349, %v9345
    %v9351 = vlaneseq
    %v9352 = vshrl.u32 %v9351, 7
    %v9353 = vsub.s32 %v2135, %v9352
    %v9354 = vrot.slane %v8293, %v9353
    %v9355 = vsel %vm2140, %v9354, %v9350
    %v9356 = vlaneseq
    %v9357 = vshrl.u32 %v9356, 7
    %v9358 = vsub.s32 %v2142, %v9357
    %v9359 = vrot.slane %v8296, %v9358
    %v9360 = vsel %vm2147, %v9359, %v9355
    %v9361 = vlaneseq
    %v9362 = vshrl.u32 %v9361, 7
    %v9363 = vsub.s32 %v2149, %v9362
    %v9364 = vrot.slane %v8299, %v9363
    %v9365 = vsel %vm2154, %v9364, %v9360
    %v9366 = vlaneseq
    %v9367 = vshrl.u32 %v9366, 7
    %v9368 = vsub.s32 %v2156, %v9367
    %v9369 = vrot.slane %v8302, %v9368
    %v9370 = vsel %vm2161, %v9369, %v9365
    %v9371 = vlaneseq
    %v9372 = vshrl.u32 %v9371, 7
    %v9373 = vsub.s32 %v2163, %v9372
    %v9374 = vrot.slane %v8305, %v9373
    %v9375 = vsel %vm2168, %v9374, %v9370
    %v9376 = vlaneseq
    %v9377 = vshrl.u32 %v9376, 7
    %v9378 = vsub.s32 %v2170, %v9377
    %v9379 = vrot.slane %v8308, %v9378
    %v9380 = vsel %vm2175, %v9379, %v9375
    %v9381 = vlaneseq
    %v9382 = vshrl.u32 %v9381, 7
    %v9383 = vsub.s32 %v2177, %v9382
    %v9384 = vrot.slane %v8311, %v9383
    %v9385 = vsel %vm2182, %v9384, %v9380
    %v9386 = vlaneseq
    %v9387 = vshrl.u32 %v9386, 7
    %v9388 = vsub.s32 %v2184, %v9387
    %v9389 = vrot.slane %v8314, %v9388
    %v9390 = vsel %vm2189, %v9389, %v9385
    %v9391 = vlaneseq
    %v9392 = vshrl.u32 %v9391, 7
    %v9393 = vsub.s32 %v2191, %v9392
    %v9394 = vrot.slane %v8317, %v9393
    %v9395 = vsel %vm2196, %v9394, %v9390
    %v9396 = vlaneseq
    %v9397 = vshrl.u32 %v9396, 7
    %v9398 = vsub.s32 %v2088, %v9397
    %v9399 = vrot.slane %v8320, %v9398
    %v9400 = vlaneseq
    %v9401 = vshrl.u32 %v9400, 7
    %v9402 = vsub.s32 %v2093, %v9401
    %v9403 = vrot.slane %v8323, %v9402
    %v9404 = vsel %vm2098, %v9403, %v9399
    %v9405 = vlaneseq
    %v9406 = vshrl.u32 %v9405, 7
    %v9407 = vsub.s32 %v2100, %v9406
    %v9408 = vrot.slane %v8326, %v9407
    %v9409 = vsel %vm2105, %v9408, %v9404
    %v9410 = vlaneseq
    %v9411 = vshrl.u32 %v9410, 7
    %v9412 = vsub.s32 %v2107, %v9411
    %v9413 = vrot.slane %v8329, %v9412
    %v9414 = vsel %vm2112, %v9413, %v9409
    %v9415 = vlaneseq
    %v9416 = vshrl.u32 %v9415, 7
    %v9417 = vsub.s32 %v2114, %v9416
    %v9418 = vrot.slane %v8332, %v9417
    %v9419 = vsel %vm2119, %v9418, %v9414
    %v9420 = vlaneseq
    %v9421 = vshrl.u32 %v9420, 7
    %v9422 = vsub.s32 %v2121, %v9421
    %v9423 = vrot.slane %v8335, %v9422
    %v9424 = vsel %vm2126, %v9423, %v9419
    %v9425 = vlaneseq
    %v9426 = vshrl.u32 %v9425, 7
    %v9427 = vsub.s32 %v2128, %v9426
    %v9428 = vrot.slane %v8338, %v9427
    %v9429 = vsel %vm2133, %v9428, %v9424
    %v9430 = vlaneseq
    %v9431 = vshrl.u32 %v9430, 7
    %v9432 = vsub.s32 %v2135, %v9431
    %v9433 = vrot.slane %v8341, %v9432
    %v9434 = vsel %vm2140, %v9433, %v9429
    %v9435 = vlaneseq
    %v9436 = vshrl.u32 %v9435, 7
    %v9437 = vsub.s32 %v2142, %v9436
    %v9438 = vrot.slane %v8344, %v9437
    %v9439 = vsel %vm2147, %v9438, %v9434
    %v9440 = vlaneseq
    %v9441 = vshrl.u32 %v9440, 7
    %v9442 = vsub.s32 %v2149, %v9441
    %v9443 = vrot.slane %v8347, %v9442
    %v9444 = vsel %vm2154, %v9443, %v9439
    %v9445 = vlaneseq
    %v9446 = vshrl.u32 %v9445, 7
    %v9447 = vsub.s32 %v2156, %v9446
    %v9448 = vrot.slane %v8350, %v9447
    %v9449 = vsel %vm2161, %v9448, %v9444
    %v9450 = vlaneseq
    %v9451 = vshrl.u32 %v9450, 7
    %v9452 = vsub.s32 %v2163, %v9451
    %v9453 = vrot.slane %v8353, %v9452
    %v9454 = vsel %vm2168, %v9453, %v9449
    %v9455 = vlaneseq
    %v9456 = vshrl.u32 %v9455, 7
    %v9457 = vsub.s32 %v2170, %v9456
    %v9458 = vrot.slane %v8356, %v9457
    %v9459 = vsel %vm2175, %v9458, %v9454
    %v9460 = vlaneseq
    %v9461 = vshrl.u32 %v9460, 7
    %v9462 = vsub.s32 %v2177, %v9461
    %v9463 = vrot.slane %v8359, %v9462
    %v9464 = vsel %vm2182, %v9463, %v9459
    %v9465 = vlaneseq
    %v9466 = vshrl.u32 %v9465, 7
    %v9467 = vsub.s32 %v2184, %v9466
    %v9468 = vrot.slane %v8362, %v9467
    %v9469 = vsel %vm2189, %v9468, %v9464
    %v9470 = vlaneseq
    %v9471 = vshrl.u32 %v9470, 7
    %v9472 = vsub.s32 %v2191, %v9471
    %v9473 = vrot.slane %v8365, %v9472
    %v9474 = vsel %vm2196, %v9473, %v9469
    %v9475 = vlaneseq
    %v9476 = vshrl.u32 %v9475, 7
    %v9477 = vsub.s32 %v2088, %v9476
    %v9478 = vrot.slane %v8368, %v9477
    %v9479 = vlaneseq
    %v9480 = vshrl.u32 %v9479, 7
    %v9481 = vsub.s32 %v2093, %v9480
    %v9482 = vrot.slane %v8371, %v9481
    %v9483 = vsel %vm2098, %v9482, %v9478
    %v9484 = vlaneseq
    %v9485 = vshrl.u32 %v9484, 7
    %v9486 = vsub.s32 %v2100, %v9485
    %v9487 = vrot.slane %v8374, %v9486
    %v9488 = vsel %vm2105, %v9487, %v9483
    %v9489 = vlaneseq
    %v9490 = vshrl.u32 %v9489, 7
    %v9491 = vsub.s32 %v2107, %v9490
    %v9492 = vrot.slane %v8377, %v9491
    %v9493 = vsel %vm2112, %v9492, %v9488
    %v9494 = vlaneseq
    %v9495 = vshrl.u32 %v9494, 7
    %v9496 = vsub.s32 %v2114, %v9495
    %v9497 = vrot.slane %v8380, %v9496
    %v9498 = vsel %vm2119, %v9497, %v9493
    %v9499 = vlaneseq
    %v9500 = vshrl.u32 %v9499, 7
    %v9501 = vsub.s32 %v2121, %v9500
    %v9502 = vrot.slane %v8383, %v9501
    %v9503 = vsel %vm2126, %v9502, %v9498
    %v9504 = vlaneseq
    %v9505 = vshrl.u32 %v9504, 7
    %v9506 = vsub.s32 %v2128, %v9505
    %v9507 = vrot.slane %v8386, %v9506
    %v9508 = vsel %vm2133, %v9507, %v9503
    %v9509 = vlaneseq
    %v9510 = vshrl.u32 %v9509, 7
    %v9511 = vsub.s32 %v2135, %v9510
    %v9512 = vrot.slane %v8389, %v9511
    %v9513 = vsel %vm2140, %v9512, %v9508
    %v9514 = vlaneseq
    %v9515 = vshrl.u32 %v9514, 7
    %v9516 = vsub.s32 %v2142, %v9515
    %v9517 = vrot.slane %v8392, %v9516
    %v9518 = vsel %vm2147, %v9517, %v9513
    %v9519 = vlaneseq
    %v9520 = vshrl.u32 %v9519, 7
    %v9521 = vsub.s32 %v2149, %v9520
    %v9522 = vrot.slane %v8395, %v9521
    %v9523 = vsel %vm2154, %v9522, %v9518
    %v9524 = vlaneseq
    %v9525 = vshrl.u32 %v9524, 7
    %v9526 = vsub.s32 %v2156, %v9525
    %v9527 = vrot.slane %v8398, %v9526
    %v9528 = vsel %vm2161, %v9527, %v9523
    %v9529 = vlaneseq
    %v9530 = vshrl.u32 %v9529, 7
    %v9531 = vsub.s32 %v2163, %v9530
    %v9532 = vrot.slane %v8401, %v9531
    %v9533 = vsel %vm2168, %v9532, %v9528
    %v9534 = vlaneseq
    %v9535 = vshrl.u32 %v9534, 7
    %v9536 = vsub.s32 %v2170, %v9535
    %v9537 = vrot.slane %v8404, %v9536
    %v9538 = vsel %vm2175, %v9537, %v9533
    %v9539 = vlaneseq
    %v9540 = vshrl.u32 %v9539, 7
    %v9541 = vsub.s32 %v2177, %v9540
    %v9542 = vrot.slane %v8407, %v9541
    %v9543 = vsel %vm2182, %v9542, %v9538
    %v9544 = vlaneseq
    %v9545 = vshrl.u32 %v9544, 7
    %v9546 = vsub.s32 %v2184, %v9545
    %v9547 = vrot.slane %v8410, %v9546
    %v9548 = vsel %vm2189, %v9547, %v9543
    %v9549 = vlaneseq
    %v9550 = vshrl.u32 %v9549, 7
    %v9551 = vsub.s32 %v2191, %v9550
    %v9552 = vrot.slane %v8413, %v9551
    %v9553 = vsel %vm2196, %v9552, %v9548
    %v9554 = vlaneseq
    %v9555 = vshrl.u32 %v9554, 7
    %v9556 = vsub.s32 %v2088, %v9555
    %v9557 = vrot.slane %v8416, %v9556
    %v9558 = vlaneseq
    %v9559 = vshrl.u32 %v9558, 7
    %v9560 = vsub.s32 %v2093, %v9559
    %v9561 = vrot.slane %v8419, %v9560
    %v9562 = vsel %vm2098, %v9561, %v9557
    %v9563 = vlaneseq
    %v9564 = vshrl.u32 %v9563, 7
    %v9565 = vsub.s32 %v2100, %v9564
    %v9566 = vrot.slane %v8422, %v9565
    %v9567 = vsel %vm2105, %v9566, %v9562
    %v9568 = vlaneseq
    %v9569 = vshrl.u32 %v9568, 7
    %v9570 = vsub.s32 %v2107, %v9569
    %v9571 = vrot.slane %v8425, %v9570
    %v9572 = vsel %vm2112, %v9571, %v9567
    %v9573 = vlaneseq
    %v9574 = vshrl.u32 %v9573, 7
    %v9575 = vsub.s32 %v2114, %v9574
    %v9576 = vrot.slane %v8428, %v9575
    %v9577 = vsel %vm2119, %v9576, %v9572
    %v9578 = vlaneseq
    %v9579 = vshrl.u32 %v9578, 7
    %v9580 = vsub.s32 %v2121, %v9579
    %v9581 = vrot.slane %v8431, %v9580
    %v9582 = vsel %vm2126, %v9581, %v9577
    %v9583 = vlaneseq
    %v9584 = vshrl.u32 %v9583, 7
    %v9585 = vsub.s32 %v2128, %v9584
    %v9586 = vrot.slane %v8434, %v9585
    %v9587 = vsel %vm2133, %v9586, %v9582
    %v9588 = vlaneseq
    %v9589 = vshrl.u32 %v9588, 7
    %v9590 = vsub.s32 %v2135, %v9589
    %v9591 = vrot.slane %v8437, %v9590
    %v9592 = vsel %vm2140, %v9591, %v9587
    %v9593 = vlaneseq
    %v9594 = vshrl.u32 %v9593, 7
    %v9595 = vsub.s32 %v2142, %v9594
    %v9596 = vrot.slane %v8440, %v9595
    %v9597 = vsel %vm2147, %v9596, %v9592
    %v9598 = vlaneseq
    %v9599 = vshrl.u32 %v9598, 7
    %v9600 = vsub.s32 %v2149, %v9599
    %v9601 = vrot.slane %v8443, %v9600
    %v9602 = vsel %vm2154, %v9601, %v9597
    %v9603 = vlaneseq
    %v9604 = vshrl.u32 %v9603, 7
    %v9605 = vsub.s32 %v2156, %v9604
    %v9606 = vrot.slane %v8446, %v9605
    %v9607 = vsel %vm2161, %v9606, %v9602
    %v9608 = vlaneseq
    %v9609 = vshrl.u32 %v9608, 7
    %v9610 = vsub.s32 %v2163, %v9609
    %v9611 = vrot.slane %v8449, %v9610
    %v9612 = vsel %vm2168, %v9611, %v9607
    %v9613 = vlaneseq
    %v9614 = vshrl.u32 %v9613, 7
    %v9615 = vsub.s32 %v2170, %v9614
    %v9616 = vrot.slane %v8452, %v9615
    %v9617 = vsel %vm2175, %v9616, %v9612
    %v9618 = vlaneseq
    %v9619 = vshrl.u32 %v9618, 7
    %v9620 = vsub.s32 %v2177, %v9619
    %v9621 = vrot.slane %v8455, %v9620
    %v9622 = vsel %vm2182, %v9621, %v9617
    %v9623 = vlaneseq
    %v9624 = vshrl.u32 %v9623, 7
    %v9625 = vsub.s32 %v2184, %v9624
    %v9626 = vrot.slane %v8458, %v9625
    %v9627 = vsel %vm2189, %v9626, %v9622
    %v9628 = vlaneseq
    %v9629 = vshrl.u32 %v9628, 7
    %v9630 = vsub.s32 %v2191, %v9629
    %v9631 = vrot.slane %v8461, %v9630
    %v9632 = vsel %vm2196, %v9631, %v9627
    %v9633 = vlaneseq
    %v9634 = vshrl.u32 %v9633, 7
    %v9635 = vsub.s32 %v2088, %v9634
    %v9636 = vrot.slane %v8464, %v9635
    %v9637 = vlaneseq
    %v9638 = vshrl.u32 %v9637, 7
    %v9639 = vsub.s32 %v2093, %v9638
    %v9640 = vrot.slane %v8467, %v9639
    %v9641 = vsel %vm2098, %v9640, %v9636
    %v9642 = vlaneseq
    %v9643 = vshrl.u32 %v9642, 7
    %v9644 = vsub.s32 %v2100, %v9643
    %v9645 = vrot.slane %v8470, %v9644
    %v9646 = vsel %vm2105, %v9645, %v9641
    %v9647 = vlaneseq
    %v9648 = vshrl.u32 %v9647, 7
    %v9649 = vsub.s32 %v2107, %v9648
    %v9650 = vrot.slane %v8473, %v9649
    %v9651 = vsel %vm2112, %v9650, %v9646
    %v9652 = vlaneseq
    %v9653 = vshrl.u32 %v9652, 7
    %v9654 = vsub.s32 %v2114, %v9653
    %v9655 = vrot.slane %v8476, %v9654
    %v9656 = vsel %vm2119, %v9655, %v9651
    %v9657 = vlaneseq
    %v9658 = vshrl.u32 %v9657, 7
    %v9659 = vsub.s32 %v2121, %v9658
    %v9660 = vrot.slane %v8479, %v9659
    %v9661 = vsel %vm2126, %v9660, %v9656
    %v9662 = vlaneseq
    %v9663 = vshrl.u32 %v9662, 7
    %v9664 = vsub.s32 %v2128, %v9663
    %v9665 = vrot.slane %v8482, %v9664
    %v9666 = vsel %vm2133, %v9665, %v9661
    %v9667 = vlaneseq
    %v9668 = vshrl.u32 %v9667, 7
    %v9669 = vsub.s32 %v2135, %v9668
    %v9670 = vrot.slane %v8485, %v9669
    %v9671 = vsel %vm2140, %v9670, %v9666
    %v9672 = vlaneseq
    %v9673 = vshrl.u32 %v9672, 7
    %v9674 = vsub.s32 %v2142, %v9673
    %v9675 = vrot.slane %v8488, %v9674
    %v9676 = vsel %vm2147, %v9675, %v9671
    %v9677 = vlaneseq
    %v9678 = vshrl.u32 %v9677, 7
    %v9679 = vsub.s32 %v2149, %v9678
    %v9680 = vrot.slane %v8491, %v9679
    %v9681 = vsel %vm2154, %v9680, %v9676
    %v9682 = vlaneseq
    %v9683 = vshrl.u32 %v9682, 7
    %v9684 = vsub.s32 %v2156, %v9683
    %v9685 = vrot.slane %v8494, %v9684
    %v9686 = vsel %vm2161, %v9685, %v9681
    %v9687 = vlaneseq
    %v9688 = vshrl.u32 %v9687, 7
    %v9689 = vsub.s32 %v2163, %v9688
    %v9690 = vrot.slane %v8497, %v9689
    %v9691 = vsel %vm2168, %v9690, %v9686
    %v9692 = vlaneseq
    %v9693 = vshrl.u32 %v9692, 7
    %v9694 = vsub.s32 %v2170, %v9693
    %v9695 = vrot.slane %v8500, %v9694
    %v9696 = vsel %vm2175, %v9695, %v9691
    %v9697 = vlaneseq
    %v9698 = vshrl.u32 %v9697, 7
    %v9699 = vsub.s32 %v2177, %v9698
    %v9700 = vrot.slane %v8503, %v9699
    %v9701 = vsel %vm2182, %v9700, %v9696
    %v9702 = vlaneseq
    %v9703 = vshrl.u32 %v9702, 7
    %v9704 = vsub.s32 %v2184, %v9703
    %v9705 = vrot.slane %v8506, %v9704
    %v9706 = vsel %vm2189, %v9705, %v9701
    %v9707 = vlaneseq
    %v9708 = vshrl.u32 %v9707, 7
    %v9709 = vsub.s32 %v2191, %v9708
    %v9710 = vrot.slane %v8509, %v9709
    %v9711 = vsel %vm2196, %v9710, %v9706
    %v9712 = vlaneseq
    %v9713 = vshrl.u32 %v9712, 7
    %v9714 = vsub.s32 %v2088, %v9713
    %v9715 = vrot.slane %v8512, %v9714
    %v9716 = vlaneseq
    %v9717 = vshrl.u32 %v9716, 7
    %v9718 = vsub.s32 %v2093, %v9717
    %v9719 = vrot.slane %v8515, %v9718
    %v9720 = vsel %vm2098, %v9719, %v9715
    %v9721 = vlaneseq
    %v9722 = vshrl.u32 %v9721, 7
    %v9723 = vsub.s32 %v2100, %v9722
    %v9724 = vrot.slane %v8518, %v9723
    %v9725 = vsel %vm2105, %v9724, %v9720
    %v9726 = vlaneseq
    %v9727 = vshrl.u32 %v9726, 7
    %v9728 = vsub.s32 %v2107, %v9727
    %v9729 = vrot.slane %v8521, %v9728
    %v9730 = vsel %vm2112, %v9729, %v9725
    %v9731 = vlaneseq
    %v9732 = vshrl.u32 %v9731, 7
    %v9733 = vsub.s32 %v2114, %v9732
    %v9734 = vrot.slane %v8524, %v9733
    %v9735 = vsel %vm2119, %v9734, %v9730
    %v9736 = vlaneseq
    %v9737 = vshrl.u32 %v9736, 7
    %v9738 = vsub.s32 %v2121, %v9737
    %v9739 = vrot.slane %v8527, %v9738
    %v9740 = vsel %vm2126, %v9739, %v9735
    %v9741 = vlaneseq
    %v9742 = vshrl.u32 %v9741, 7
    %v9743 = vsub.s32 %v2128, %v9742
    %v9744 = vrot.slane %v8530, %v9743
    %v9745 = vsel %vm2133, %v9744, %v9740
    %v9746 = vlaneseq
    %v9747 = vshrl.u32 %v9746, 7
    %v9748 = vsub.s32 %v2135, %v9747
    %v9749 = vrot.slane %v8533, %v9748
    %v9750 = vsel %vm2140, %v9749, %v9745
    %v9751 = vlaneseq
    %v9752 = vshrl.u32 %v9751, 7
    %v9753 = vsub.s32 %v2142, %v9752
    %v9754 = vrot.slane %v8536, %v9753
    %v9755 = vsel %vm2147, %v9754, %v9750
    %v9756 = vlaneseq
    %v9757 = vshrl.u32 %v9756, 7
    %v9758 = vsub.s32 %v2149, %v9757
    %v9759 = vrot.slane %v8539, %v9758
    %v9760 = vsel %vm2154, %v9759, %v9755
    %v9761 = vlaneseq
    %v9762 = vshrl.u32 %v9761, 7
    %v9763 = vsub.s32 %v2156, %v9762
    %v9764 = vrot.slane %v8542, %v9763
    %v9765 = vsel %vm2161, %v9764, %v9760
    %v9766 = vlaneseq
    %v9767 = vshrl.u32 %v9766, 7
    %v9768 = vsub.s32 %v2163, %v9767
    %v9769 = vrot.slane %v8545, %v9768
    %v9770 = vsel %vm2168, %v9769, %v9765
    %v9771 = vlaneseq
    %v9772 = vshrl.u32 %v9771, 7
    %v9773 = vsub.s32 %v2170, %v9772
    %v9774 = vrot.slane %v8548, %v9773
    %v9775 = vsel %vm2175, %v9774, %v9770
    %v9776 = vlaneseq
    %v9777 = vshrl.u32 %v9776, 7
    %v9778 = vsub.s32 %v2177, %v9777
    %v9779 = vrot.slane %v8551, %v9778
    %v9780 = vsel %vm2182, %v9779, %v9775
    %v9781 = vlaneseq
    %v9782 = vshrl.u32 %v9781, 7
    %v9783 = vsub.s32 %v2184, %v9782
    %v9784 = vrot.slane %v8554, %v9783
    %v9785 = vsel %vm2189, %v9784, %v9780
    %v9786 = vlaneseq
    %v9787 = vshrl.u32 %v9786, 7
    %v9788 = vsub.s32 %v2191, %v9787
    %v9789 = vrot.slane %v8557, %v9788
    %v9790 = vsel %vm2196, %v9789, %v9785
    %v9791 = vlaneseq
    %v9792 = vshrl.u32 %v9791, 7
    %v9793 = vsub.s32 %v2088, %v9792
    %v9794 = vrot.slane %v8560, %v9793
    %v9795 = vlaneseq
    %v9796 = vshrl.u32 %v9795, 7
    %v9797 = vsub.s32 %v2093, %v9796
    %v9798 = vrot.slane %v8563, %v9797
    %v9799 = vsel %vm2098, %v9798, %v9794
    %v9800 = vlaneseq
    %v9801 = vshrl.u32 %v9800, 7
    %v9802 = vsub.s32 %v2100, %v9801
    %v9803 = vrot.slane %v8566, %v9802
    %v9804 = vsel %vm2105, %v9803, %v9799
    %v9805 = vlaneseq
    %v9806 = vshrl.u32 %v9805, 7
    %v9807 = vsub.s32 %v2107, %v9806
    %v9808 = vrot.slane %v8569, %v9807
    %v9809 = vsel %vm2112, %v9808, %v9804
    %v9810 = vlaneseq
    %v9811 = vshrl.u32 %v9810, 7
    %v9812 = vsub.s32 %v2114, %v9811
    %v9813 = vrot.slane %v8572, %v9812
    %v9814 = vsel %vm2119, %v9813, %v9809
    %v9815 = vlaneseq
    %v9816 = vshrl.u32 %v9815, 7
    %v9817 = vsub.s32 %v2121, %v9816
    %v9818 = vrot.slane %v8575, %v9817
    %v9819 = vsel %vm2126, %v9818, %v9814
    %v9820 = vlaneseq
    %v9821 = vshrl.u32 %v9820, 7
    %v9822 = vsub.s32 %v2128, %v9821
    %v9823 = vrot.slane %v8578, %v9822
    %v9824 = vsel %vm2133, %v9823, %v9819
    %v9825 = vlaneseq
    %v9826 = vshrl.u32 %v9825, 7
    %v9827 = vsub.s32 %v2135, %v9826
    %v9828 = vrot.slane %v8581, %v9827
    %v9829 = vsel %vm2140, %v9828, %v9824
    %v9830 = vlaneseq
    %v9831 = vshrl.u32 %v9830, 7
    %v9832 = vsub.s32 %v2142, %v9831
    %v9833 = vrot.slane %v8584, %v9832
    %v9834 = vsel %vm2147, %v9833, %v9829
    %v9835 = vlaneseq
    %v9836 = vshrl.u32 %v9835, 7
    %v9837 = vsub.s32 %v2149, %v9836
    %v9838 = vrot.slane %v8587, %v9837
    %v9839 = vsel %vm2154, %v9838, %v9834
    %v9840 = vlaneseq
    %v9841 = vshrl.u32 %v9840, 7
    %v9842 = vsub.s32 %v2156, %v9841
    %v9843 = vrot.slane %v8590, %v9842
    %v9844 = vsel %vm2161, %v9843, %v9839
    %v9845 = vlaneseq
    %v9846 = vshrl.u32 %v9845, 7
    %v9847 = vsub.s32 %v2163, %v9846
    %v9848 = vrot.slane %v8593, %v9847
    %v9849 = vsel %vm2168, %v9848, %v9844
    %v9850 = vlaneseq
    %v9851 = vshrl.u32 %v9850, 7
    %v9852 = vsub.s32 %v2170, %v9851
    %v9853 = vrot.slane %v8596, %v9852
    %v9854 = vsel %vm2175, %v9853, %v9849
    %v9855 = vlaneseq
    %v9856 = vshrl.u32 %v9855, 7
    %v9857 = vsub.s32 %v2177, %v9856
    %v9858 = vrot.slane %v8599, %v9857
    %v9859 = vsel %vm2182, %v9858, %v9854
    %v9860 = vlaneseq
    %v9861 = vshrl.u32 %v9860, 7
    %v9862 = vsub.s32 %v2184, %v9861
    %v9863 = vrot.slane %v8602, %v9862
    %v9864 = vsel %vm2189, %v9863, %v9859
    %v9865 = vlaneseq
    %v9866 = vshrl.u32 %v9865, 7
    %v9867 = vsub.s32 %v2191, %v9866
    %v9868 = vrot.slane %v8605, %v9867
    %v9869 = vsel %vm2196, %v9868, %v9864
    %v9870 = vsel %vm3383, %v9316, %v8684
    %v9871 = vsel %vm3383, %v9395, %v8763
    %v9872 = vsel %vm3383, %v9474, %v8842
    %v9873 = vsel %vm3383, %v9553, %v8921
    %v9874 = vsel %vm3383, %v9632, %v9000
    %v9875 = vsel %vm3383, %v9711, %v9079
    %v9876 = vsel %vm3383, %v9790, %v9158
    %v9877 = vsel %vm3383, %v9869, %v9237
    %v9886 = vadd.f32 %v6643, %v9870
    %v9887 = vadd.f32 %v6644, %v9871
    %v9888 = vadd.f32 %v6645, %v9872
    %v9889 = vadd.f32 %v6646, %v9873
    %v9890 = vadd.f32 %v6647, %v9874
    %v9891 = vadd.f32 %v6648, %v9875
    %v9892 = vadd.f32 %v6649, %v9876
    %v9893 = vadd.f32 %v6650, %v9877
    %s9894 = scalar_lea.vmem [#allocation6], 3
    %v9895 = vld [vmem:[%s9894] ss:$4 sm:$0xff]
    %v9896 = vlaneseq
    %v9897 = vshrl.u32 %v9896, 7
    %v9898 = vsub.s32 3, %v9897
    %v9899 = vrot.slane %v85, %v9898
    %v9900 = vlaneseq
    %v9901 = vshrl.u32 %v9900, 7
    %v9902 = vsub.s32 3, %v9901
    %v9903 = vrot.slane %v90, %v9902
    %v9905 = vlaneseq
    %v9906 = vshrl.u32 %v9905, 7
    %v9907 = vsub.s32 0, %v9906
    %v9908 = vrot.slane %v9895, %v9907
    %v9909 = vlaneseq
    %v9910 = vshrl.u32 %v9909, 7
    %v9911 = vsub.s32 1, %v9910
    %v9912 = vrot.slane %v9895, %v9911
    %v9913 = vlaneseq
    %v9914 = vshrl.u32 %v9913, 7
    %v9915 = vsub.s32 2, %v9914
    %v9916 = vrot.slane %v9895, %v9915
    %v9917 = vlaneseq
    %v9918 = vshrl.u32 %v9917, 7
    %v9919 = vsub.s32 3, %v9918
    %v9920 = vrot.slane %v9895, %v9919
    %v9921 = vlaneseq
    %v9922 = vshrl.u32 %v9921, 7
    %v9923 = vsub.s32 4, %v9922
    %v9924 = vrot.slane %v9895, %v9923
    %v9925 = vlaneseq
    %v9926 = vshrl.u32 %v9925, 7
    %v9927 = vsub.s32 5, %v9926
    %v9928 = vrot.slane %v9895, %v9927
    %v9929 = vlaneseq
    %v9930 = vshrl.u32 %v9929, 7
    %v9931 = vsub.s32 6, %v9930
    %v9932 = vrot.slane %v9895, %v9931
    %v9933 = vlaneseq
    %v9934 = vshrl.u32 %v9933, 7
    %v9935 = vsub.s32 7, %v9934
    %v9936 = vrot.slane %v9895, %v9935
    %9938 = vbcast.lane.b32.xlu0 %v9908, 256
    %v9939 = vpop.permute.xlu0 %9938
    %s9941 = sor.u32 256, 8
    %9942 = vbcast.lane.b32.xlu0 %v9908, %s9941
    %v9943 = vpop.permute.xlu0 %9942
    %s9945 = sor.u32 256, 16
    %9946 = vbcast.lane.b32.xlu0 %v9908, %s9945
    %v9947 = vpop.permute.xlu0 %9946
    %s9949 = sor.u32 256, 24
    %9950 = vbcast.lane.b32.xlu0 %v9908, %s9949
    %v9951 = vpop.permute.xlu0 %9950
    %s9953 = sor.u32 256, 32
    %9954 = vbcast.lane.b32.xlu0 %v9908, %s9953
    %v9955 = vpop.permute.xlu0 %9954
    %s9957 = sor.u32 256, 40
    %9958 = vbcast.lane.b32.xlu0 %v9908, %s9957
    %v9959 = vpop.permute.xlu0 %9958
    %s9961 = sor.u32 256, 48
    %9962 = vbcast.lane.b32.xlu0 %v9908, %s9961
    %v9963 = vpop.permute.xlu0 %9962
    %s9965 = sor.u32 256, 56
    %9966 = vbcast.lane.b32.xlu0 %v9908, %s9965
    %v9967 = vpop.permute.xlu0 %9966
    %s9969 = sor.u32 256, 64
    %9970 = vbcast.lane.b32.xlu0 %v9908, %s9969
    %v9971 = vpop.permute.xlu0 %9970
    %s9973 = sor.u32 256, 72
    %9974 = vbcast.lane.b32.xlu0 %v9908, %s9973
    %v9975 = vpop.permute.xlu0 %9974
    %s9977 = sor.u32 256, 80
    %9978 = vbcast.lane.b32.xlu0 %v9908, %s9977
    %v9979 = vpop.permute.xlu0 %9978
    %s9981 = sor.u32 256, 88
    %9982 = vbcast.lane.b32.xlu0 %v9908, %s9981
    %v9983 = vpop.permute.xlu0 %9982
    %s9985 = sor.u32 256, 96
    %9986 = vbcast.lane.b32.xlu0 %v9908, %s9985
    %v9987 = vpop.permute.xlu0 %9986
    %s9989 = sor.u32 256, 104
    %9990 = vbcast.lane.b32.xlu0 %v9908, %s9989
    %v9991 = vpop.permute.xlu0 %9990
    %s9993 = sor.u32 256, 112
    %9994 = vbcast.lane.b32.xlu0 %v9908, %s9993
    %v9995 = vpop.permute.xlu0 %9994
    %s9997 = sor.u32 256, 120
    %9998 = vbcast.lane.b32.xlu0 %v9908, %s9997
    %v9999 = vpop.permute.xlu0 %9998
    %10001 = vbcast.lane.b32.xlu0 %v9912, 256
    %v10002 = vpop.permute.xlu0 %10001
    %s10004 = sor.u32 256, 8
    %10005 = vbcast.lane.b32.xlu0 %v9912, %s10004
    %v10006 = vpop.permute.xlu0 %10005
    %s10008 = sor.u32 256, 16
    %10009 = vbcast.lane.b32.xlu0 %v9912, %s10008
    %v10010 = vpop.permute.xlu0 %10009
    %s10012 = sor.u32 256, 24
    %10013 = vbcast.lane.b32.xlu0 %v9912, %s10012
    %v10014 = vpop.permute.xlu0 %10013
    %s10016 = sor.u32 256, 32
    %10017 = vbcast.lane.b32.xlu0 %v9912, %s10016
    %v10018 = vpop.permute.xlu0 %10017
    %s10020 = sor.u32 256, 40
    %10021 = vbcast.lane.b32.xlu0 %v9912, %s10020
    %v10022 = vpop.permute.xlu0 %10021
    %s10024 = sor.u32 256, 48
    %10025 = vbcast.lane.b32.xlu0 %v9912, %s10024
    %v10026 = vpop.permute.xlu0 %10025
    %s10028 = sor.u32 256, 56
    %10029 = vbcast.lane.b32.xlu0 %v9912, %s10028
    %v10030 = vpop.permute.xlu0 %10029
    %s10032 = sor.u32 256, 64
    %10033 = vbcast.lane.b32.xlu0 %v9912, %s10032
    %v10034 = vpop.permute.xlu0 %10033
    %s10036 = sor.u32 256, 72
    %10037 = vbcast.lane.b32.xlu0 %v9912, %s10036
    %v10038 = vpop.permute.xlu0 %10037
    %s10040 = sor.u32 256, 80
    %10041 = vbcast.lane.b32.xlu0 %v9912, %s10040
    %v10042 = vpop.permute.xlu0 %10041
    %s10044 = sor.u32 256, 88
    %10045 = vbcast.lane.b32.xlu0 %v9912, %s10044
    %v10046 = vpop.permute.xlu0 %10045
    %s10048 = sor.u32 256, 96
    %10049 = vbcast.lane.b32.xlu0 %v9912, %s10048
    %v10050 = vpop.permute.xlu0 %10049
    %s10052 = sor.u32 256, 104
    %10053 = vbcast.lane.b32.xlu0 %v9912, %s10052
    %v10054 = vpop.permute.xlu0 %10053
    %s10056 = sor.u32 256, 112
    %10057 = vbcast.lane.b32.xlu0 %v9912, %s10056
    %v10058 = vpop.permute.xlu0 %10057
    %s10060 = sor.u32 256, 120
    %10061 = vbcast.lane.b32.xlu0 %v9912, %s10060
    %v10062 = vpop.permute.xlu0 %10061
    %10064 = vbcast.lane.b32.xlu0 %v9916, 256
    %v10065 = vpop.permute.xlu0 %10064
    %s10067 = sor.u32 256, 8
    %10068 = vbcast.lane.b32.xlu0 %v9916, %s10067
    %v10069 = vpop.permute.xlu0 %10068
    %s10071 = sor.u32 256, 16
    %10072 = vbcast.lane.b32.xlu0 %v9916, %s10071
    %v10073 = vpop.permute.xlu0 %10072
    %s10075 = sor.u32 256, 24
    %10076 = vbcast.lane.b32.xlu0 %v9916, %s10075
    %v10077 = vpop.permute.xlu0 %10076
    %s10079 = sor.u32 256, 32
    %10080 = vbcast.lane.b32.xlu0 %v9916, %s10079
    %v10081 = vpop.permute.xlu0 %10080
    %s10083 = sor.u32 256, 40
    %10084 = vbcast.lane.b32.xlu0 %v9916, %s10083
    %v10085 = vpop.permute.xlu0 %10084
    %s10087 = sor.u32 256, 48
    %10088 = vbcast.lane.b32.xlu0 %v9916, %s10087
    %v10089 = vpop.permute.xlu0 %10088
    %s10091 = sor.u32 256, 56
    %10092 = vbcast.lane.b32.xlu0 %v9916, %s10091
    %v10093 = vpop.permute.xlu0 %10092
    %s10095 = sor.u32 256, 64
    %10096 = vbcast.lane.b32.xlu0 %v9916, %s10095
    %v10097 = vpop.permute.xlu0 %10096
    %s10099 = sor.u32 256, 72
    %10100 = vbcast.lane.b32.xlu0 %v9916, %s10099
    %v10101 = vpop.permute.xlu0 %10100
    %s10103 = sor.u32 256, 80
    %10104 = vbcast.lane.b32.xlu0 %v9916, %s10103
    %v10105 = vpop.permute.xlu0 %10104
    %s10107 = sor.u32 256, 88
    %10108 = vbcast.lane.b32.xlu0 %v9916, %s10107
    %v10109 = vpop.permute.xlu0 %10108
    %s10111 = sor.u32 256, 96
    %10112 = vbcast.lane.b32.xlu0 %v9916, %s10111
    %v10113 = vpop.permute.xlu0 %10112
    %s10115 = sor.u32 256, 104
    %10116 = vbcast.lane.b32.xlu0 %v9916, %s10115
    %v10117 = vpop.permute.xlu0 %10116
    %s10119 = sor.u32 256, 112
    %10120 = vbcast.lane.b32.xlu0 %v9916, %s10119
    %v10121 = vpop.permute.xlu0 %10120
    %s10123 = sor.u32 256, 120
    %10124 = vbcast.lane.b32.xlu0 %v9916, %s10123
    %v10125 = vpop.permute.xlu0 %10124
    %10127 = vbcast.lane.b32.xlu0 %v9920, 256
    %v10128 = vpop.permute.xlu0 %10127
    %s10130 = sor.u32 256, 8
    %10131 = vbcast.lane.b32.xlu0 %v9920, %s10130
    %v10132 = vpop.permute.xlu0 %10131
    %s10134 = sor.u32 256, 16
    %10135 = vbcast.lane.b32.xlu0 %v9920, %s10134
    %v10136 = vpop.permute.xlu0 %10135
    %s10138 = sor.u32 256, 24
    %10139 = vbcast.lane.b32.xlu0 %v9920, %s10138
    %v10140 = vpop.permute.xlu0 %10139
    %s10142 = sor.u32 256, 32
    %10143 = vbcast.lane.b32.xlu0 %v9920, %s10142
    %v10144 = vpop.permute.xlu0 %10143
    %s10146 = sor.u32 256, 40
    %10147 = vbcast.lane.b32.xlu0 %v9920, %s10146
    %v10148 = vpop.permute.xlu0 %10147
    %s10150 = sor.u32 256, 48
    %10151 = vbcast.lane.b32.xlu0 %v9920, %s10150
    %v10152 = vpop.permute.xlu0 %10151
    %s10154 = sor.u32 256, 56
    %10155 = vbcast.lane.b32.xlu0 %v9920, %s10154
    %v10156 = vpop.permute.xlu0 %10155
    %s10158 = sor.u32 256, 64
    %10159 = vbcast.lane.b32.xlu0 %v9920, %s10158
    %v10160 = vpop.permute.xlu0 %10159
    %s10162 = sor.u32 256, 72
    %10163 = vbcast.lane.b32.xlu0 %v9920, %s10162
    %v10164 = vpop.permute.xlu0 %10163
    %s10166 = sor.u32 256, 80
    %10167 = vbcast.lane.b32.xlu0 %v9920, %s10166
    %v10168 = vpop.permute.xlu0 %10167
    %s10170 = sor.u32 256, 88
    %10171 = vbcast.lane.b32.xlu0 %v9920, %s10170
    %v10172 = vpop.permute.xlu0 %10171
    %s10174 = sor.u32 256, 96
    %10175 = vbcast.lane.b32.xlu0 %v9920, %s10174
    %v10176 = vpop.permute.xlu0 %10175
    %s10178 = sor.u32 256, 104
    %10179 = vbcast.lane.b32.xlu0 %v9920, %s10178
    %v10180 = vpop.permute.xlu0 %10179
    %s10182 = sor.u32 256, 112
    %10183 = vbcast.lane.b32.xlu0 %v9920, %s10182
    %v10184 = vpop.permute.xlu0 %10183
    %s10186 = sor.u32 256, 120
    %10187 = vbcast.lane.b32.xlu0 %v9920, %s10186
    %v10188 = vpop.permute.xlu0 %10187
    %10190 = vbcast.lane.b32.xlu0 %v9924, 256
    %v10191 = vpop.permute.xlu0 %10190
    %s10193 = sor.u32 256, 8
    %10194 = vbcast.lane.b32.xlu0 %v9924, %s10193
    %v10195 = vpop.permute.xlu0 %10194
    %s10197 = sor.u32 256, 16
    %10198 = vbcast.lane.b32.xlu0 %v9924, %s10197
    %v10199 = vpop.permute.xlu0 %10198
    %s10201 = sor.u32 256, 24
    %10202 = vbcast.lane.b32.xlu0 %v9924, %s10201
    %v10203 = vpop.permute.xlu0 %10202
    %s10205 = sor.u32 256, 32
    %10206 = vbcast.lane.b32.xlu0 %v9924, %s10205
    %v10207 = vpop.permute.xlu0 %10206
    %s10209 = sor.u32 256, 40
    %10210 = vbcast.lane.b32.xlu0 %v9924, %s10209
    %v10211 = vpop.permute.xlu0 %10210
    %s10213 = sor.u32 256, 48
    %10214 = vbcast.lane.b32.xlu0 %v9924, %s10213
    %v10215 = vpop.permute.xlu0 %10214
    %s10217 = sor.u32 256, 56
    %10218 = vbcast.lane.b32.xlu0 %v9924, %s10217
    %v10219 = vpop.permute.xlu0 %10218
    %s10221 = sor.u32 256, 64
    %10222 = vbcast.lane.b32.xlu0 %v9924, %s10221
    %v10223 = vpop.permute.xlu0 %10222
    %s10225 = sor.u32 256, 72
    %10226 = vbcast.lane.b32.xlu0 %v9924, %s10225
    %v10227 = vpop.permute.xlu0 %10226
    %s10229 = sor.u32 256, 80
    %10230 = vbcast.lane.b32.xlu0 %v9924, %s10229
    %v10231 = vpop.permute.xlu0 %10230
    %s10233 = sor.u32 256, 88
    %10234 = vbcast.lane.b32.xlu0 %v9924, %s10233
    %v10235 = vpop.permute.xlu0 %10234
    %s10237 = sor.u32 256, 96
    %10238 = vbcast.lane.b32.xlu0 %v9924, %s10237
    %v10239 = vpop.permute.xlu0 %10238
    %s10241 = sor.u32 256, 104
    %10242 = vbcast.lane.b32.xlu0 %v9924, %s10241
    %v10243 = vpop.permute.xlu0 %10242
    %s10245 = sor.u32 256, 112
    %10246 = vbcast.lane.b32.xlu0 %v9924, %s10245
    %v10247 = vpop.permute.xlu0 %10246
    %s10249 = sor.u32 256, 120
    %10250 = vbcast.lane.b32.xlu0 %v9924, %s10249
    %v10251 = vpop.permute.xlu0 %10250
    %10253 = vbcast.lane.b32.xlu0 %v9928, 256
    %v10254 = vpop.permute.xlu0 %10253
    %s10256 = sor.u32 256, 8
    %10257 = vbcast.lane.b32.xlu0 %v9928, %s10256
    %v10258 = vpop.permute.xlu0 %10257
    %s10260 = sor.u32 256, 16
    %10261 = vbcast.lane.b32.xlu0 %v9928, %s10260
    %v10262 = vpop.permute.xlu0 %10261
    %s10264 = sor.u32 256, 24
    %10265 = vbcast.lane.b32.xlu0 %v9928, %s10264
    %v10266 = vpop.permute.xlu0 %10265
    %s10268 = sor.u32 256, 32
    %10269 = vbcast.lane.b32.xlu0 %v9928, %s10268
    %v10270 = vpop.permute.xlu0 %10269
    %s10272 = sor.u32 256, 40
    %10273 = vbcast.lane.b32.xlu0 %v9928, %s10272
    %v10274 = vpop.permute.xlu0 %10273
    %s10276 = sor.u32 256, 48
    %10277 = vbcast.lane.b32.xlu0 %v9928, %s10276
    %v10278 = vpop.permute.xlu0 %10277
    %s10280 = sor.u32 256, 56
    %10281 = vbcast.lane.b32.xlu0 %v9928, %s10280
    %v10282 = vpop.permute.xlu0 %10281
    %s10284 = sor.u32 256, 64
    %10285 = vbcast.lane.b32.xlu0 %v9928, %s10284
    %v10286 = vpop.permute.xlu0 %10285
    %s10288 = sor.u32 256, 72
    %10289 = vbcast.lane.b32.xlu0 %v9928, %s10288
    %v10290 = vpop.permute.xlu0 %10289
    %s10292 = sor.u32 256, 80
    %10293 = vbcast.lane.b32.xlu0 %v9928, %s10292
    %v10294 = vpop.permute.xlu0 %10293
    %s10296 = sor.u32 256, 88
    %10297 = vbcast.lane.b32.xlu0 %v9928, %s10296
    %v10298 = vpop.permute.xlu0 %10297
    %s10300 = sor.u32 256, 96
    %10301 = vbcast.lane.b32.xlu0 %v9928, %s10300
    %v10302 = vpop.permute.xlu0 %10301
    %s10304 = sor.u32 256, 104
    %10305 = vbcast.lane.b32.xlu0 %v9928, %s10304
    %v10306 = vpop.permute.xlu0 %10305
    %s10308 = sor.u32 256, 112
    %10309 = vbcast.lane.b32.xlu0 %v9928, %s10308
    %v10310 = vpop.permute.xlu0 %10309
    %s10312 = sor.u32 256, 120
    %10313 = vbcast.lane.b32.xlu0 %v9928, %s10312
    %v10314 = vpop.permute.xlu0 %10313
    %10316 = vbcast.lane.b32.xlu0 %v9932, 256
    %v10317 = vpop.permute.xlu0 %10316
    %s10319 = sor.u32 256, 8
    %10320 = vbcast.lane.b32.xlu0 %v9932, %s10319
    %v10321 = vpop.permute.xlu0 %10320
    %s10323 = sor.u32 256, 16
    %10324 = vbcast.lane.b32.xlu0 %v9932, %s10323
    %v10325 = vpop.permute.xlu0 %10324
    %s10327 = sor.u32 256, 24
    %10328 = vbcast.lane.b32.xlu0 %v9932, %s10327
    %v10329 = vpop.permute.xlu0 %10328
    %s10331 = sor.u32 256, 32
    %10332 = vbcast.lane.b32.xlu0 %v9932, %s10331
    %v10333 = vpop.permute.xlu0 %10332
    %s10335 = sor.u32 256, 40
    %10336 = vbcast.lane.b32.xlu0 %v9932, %s10335
    %v10337 = vpop.permute.xlu0 %10336
    %s10339 = sor.u32 256, 48
    %10340 = vbcast.lane.b32.xlu0 %v9932, %s10339
    %v10341 = vpop.permute.xlu0 %10340
    %s10343 = sor.u32 256, 56
    %10344 = vbcast.lane.b32.xlu0 %v9932, %s10343
    %v10345 = vpop.permute.xlu0 %10344
    %s10347 = sor.u32 256, 64
    %10348 = vbcast.lane.b32.xlu0 %v9932, %s10347
    %v10349 = vpop.permute.xlu0 %10348
    %s10351 = sor.u32 256, 72
    %10352 = vbcast.lane.b32.xlu0 %v9932, %s10351
    %v10353 = vpop.permute.xlu0 %10352
    %s10355 = sor.u32 256, 80
    %10356 = vbcast.lane.b32.xlu0 %v9932, %s10355
    %v10357 = vpop.permute.xlu0 %10356
    %s10359 = sor.u32 256, 88
    %10360 = vbcast.lane.b32.xlu0 %v9932, %s10359
    %v10361 = vpop.permute.xlu0 %10360
    %s10363 = sor.u32 256, 96
    %10364 = vbcast.lane.b32.xlu0 %v9932, %s10363
    %v10365 = vpop.permute.xlu0 %10364
    %s10367 = sor.u32 256, 104
    %10368 = vbcast.lane.b32.xlu0 %v9932, %s10367
    %v10369 = vpop.permute.xlu0 %10368
    %s10371 = sor.u32 256, 112
    %10372 = vbcast.lane.b32.xlu0 %v9932, %s10371
    %v10373 = vpop.permute.xlu0 %10372
    %s10375 = sor.u32 256, 120
    %10376 = vbcast.lane.b32.xlu0 %v9932, %s10375
    %v10377 = vpop.permute.xlu0 %10376
    %10379 = vbcast.lane.b32.xlu0 %v9936, 256
    %v10380 = vpop.permute.xlu0 %10379
    %s10382 = sor.u32 256, 8
    %10383 = vbcast.lane.b32.xlu0 %v9936, %s10382
    %v10384 = vpop.permute.xlu0 %10383
    %s10386 = sor.u32 256, 16
    %10387 = vbcast.lane.b32.xlu0 %v9936, %s10386
    %v10388 = vpop.permute.xlu0 %10387
    %s10390 = sor.u32 256, 24
    %10391 = vbcast.lane.b32.xlu0 %v9936, %s10390
    %v10392 = vpop.permute.xlu0 %10391
    %s10394 = sor.u32 256, 32
    %10395 = vbcast.lane.b32.xlu0 %v9936, %s10394
    %v10396 = vpop.permute.xlu0 %10395
    %s10398 = sor.u32 256, 40
    %10399 = vbcast.lane.b32.xlu0 %v9936, %s10398
    %v10400 = vpop.permute.xlu0 %10399
    %s10402 = sor.u32 256, 48
    %10403 = vbcast.lane.b32.xlu0 %v9936, %s10402
    %v10404 = vpop.permute.xlu0 %10403
    %s10406 = sor.u32 256, 56
    %10407 = vbcast.lane.b32.xlu0 %v9936, %s10406
    %v10408 = vpop.permute.xlu0 %10407
    %s10410 = sor.u32 256, 64
    %10411 = vbcast.lane.b32.xlu0 %v9936, %s10410
    %v10412 = vpop.permute.xlu0 %10411
    %s10414 = sor.u32 256, 72
    %10415 = vbcast.lane.b32.xlu0 %v9936, %s10414
    %v10416 = vpop.permute.xlu0 %10415
    %s10418 = sor.u32 256, 80
    %10419 = vbcast.lane.b32.xlu0 %v9936, %s10418
    %v10420 = vpop.permute.xlu0 %10419
    %s10422 = sor.u32 256, 88
    %10423 = vbcast.lane.b32.xlu0 %v9936, %s10422
    %v10424 = vpop.permute.xlu0 %10423
    %s10426 = sor.u32 256, 96
    %10427 = vbcast.lane.b32.xlu0 %v9936, %s10426
    %v10428 = vpop.permute.xlu0 %10427
    %s10430 = sor.u32 256, 104
    %10431 = vbcast.lane.b32.xlu0 %v9936, %s10430
    %v10432 = vpop.permute.xlu0 %10431
    %s10434 = sor.u32 256, 112
    %10435 = vbcast.lane.b32.xlu0 %v9936, %s10434
    %v10436 = vpop.permute.xlu0 %10435
    %s10438 = sor.u32 256, 120
    %10439 = vbcast.lane.b32.xlu0 %v9936, %s10438
    %v10440 = vpop.permute.xlu0 %10439
    %v10569 = vmul.f32 %v9899, %v9939
    %v10570 = vmul.f32 %v9899, %v9943
    %v10571 = vmul.f32 %v9899, %v9947
    %v10572 = vmul.f32 %v9899, %v9951
    %v10573 = vmul.f32 %v9899, %v9955
    %v10574 = vmul.f32 %v9899, %v9959
    %v10575 = vmul.f32 %v9899, %v9963
    %v10576 = vmul.f32 %v9899, %v9967
    %v10577 = vmul.f32 %v9899, %v9971
    %v10578 = vmul.f32 %v9899, %v9975
    %v10579 = vmul.f32 %v9899, %v9979
    %v10580 = vmul.f32 %v9899, %v9983
    %v10581 = vmul.f32 %v9899, %v9987
    %v10582 = vmul.f32 %v9899, %v9991
    %v10583 = vmul.f32 %v9899, %v9995
    %v10584 = vmul.f32 %v9899, %v9999
    %v10585 = vmul.f32 %v9899, %v10002
    %v10586 = vmul.f32 %v9899, %v10006
    %v10587 = vmul.f32 %v9899, %v10010
    %v10588 = vmul.f32 %v9899, %v10014
    %v10589 = vmul.f32 %v9899, %v10018
    %v10590 = vmul.f32 %v9899, %v10022
    %v10591 = vmul.f32 %v9899, %v10026
    %v10592 = vmul.f32 %v9899, %v10030
    %v10593 = vmul.f32 %v9899, %v10034
    %v10594 = vmul.f32 %v9899, %v10038
    %v10595 = vmul.f32 %v9899, %v10042
    %v10596 = vmul.f32 %v9899, %v10046
    %v10597 = vmul.f32 %v9899, %v10050
    %v10598 = vmul.f32 %v9899, %v10054
    %v10599 = vmul.f32 %v9899, %v10058
    %v10600 = vmul.f32 %v9899, %v10062
    %v10601 = vmul.f32 %v9899, %v10065
    %v10602 = vmul.f32 %v9899, %v10069
    %v10603 = vmul.f32 %v9899, %v10073
    %v10604 = vmul.f32 %v9899, %v10077
    %v10605 = vmul.f32 %v9899, %v10081
    %v10606 = vmul.f32 %v9899, %v10085
    %v10607 = vmul.f32 %v9899, %v10089
    %v10608 = vmul.f32 %v9899, %v10093
    %v10609 = vmul.f32 %v9899, %v10097
    %v10610 = vmul.f32 %v9899, %v10101
    %v10611 = vmul.f32 %v9899, %v10105
    %v10612 = vmul.f32 %v9899, %v10109
    %v10613 = vmul.f32 %v9899, %v10113
    %v10614 = vmul.f32 %v9899, %v10117
    %v10615 = vmul.f32 %v9899, %v10121
    %v10616 = vmul.f32 %v9899, %v10125
    %v10617 = vmul.f32 %v9899, %v10128
    %v10618 = vmul.f32 %v9899, %v10132
    %v10619 = vmul.f32 %v9899, %v10136
    %v10620 = vmul.f32 %v9899, %v10140
    %v10621 = vmul.f32 %v9899, %v10144
    %v10622 = vmul.f32 %v9899, %v10148
    %v10623 = vmul.f32 %v9899, %v10152
    %v10624 = vmul.f32 %v9899, %v10156
    %v10625 = vmul.f32 %v9899, %v10160
    %v10626 = vmul.f32 %v9899, %v10164
    %v10627 = vmul.f32 %v9899, %v10168
    %v10628 = vmul.f32 %v9899, %v10172
    %v10629 = vmul.f32 %v9899, %v10176
    %v10630 = vmul.f32 %v9899, %v10180
    %v10631 = vmul.f32 %v9899, %v10184
    %v10632 = vmul.f32 %v9899, %v10188
    %v10633 = vmul.f32 %v9899, %v10191
    %v10634 = vmul.f32 %v9899, %v10195
    %v10635 = vmul.f32 %v9899, %v10199
    %v10636 = vmul.f32 %v9899, %v10203
    %v10637 = vmul.f32 %v9899, %v10207
    %v10638 = vmul.f32 %v9899, %v10211
    %v10639 = vmul.f32 %v9899, %v10215
    %v10640 = vmul.f32 %v9899, %v10219
    %v10641 = vmul.f32 %v9899, %v10223
    %v10642 = vmul.f32 %v9899, %v10227
    %v10643 = vmul.f32 %v9899, %v10231
    %v10644 = vmul.f32 %v9899, %v10235
    %v10645 = vmul.f32 %v9899, %v10239
    %v10646 = vmul.f32 %v9899, %v10243
    %v10647 = vmul.f32 %v9899, %v10247
    %v10648 = vmul.f32 %v9899, %v10251
    %v10649 = vmul.f32 %v9899, %v10254
    %v10650 = vmul.f32 %v9899, %v10258
    %v10651 = vmul.f32 %v9899, %v10262
    %v10652 = vmul.f32 %v9899, %v10266
    %v10653 = vmul.f32 %v9899, %v10270
    %v10654 = vmul.f32 %v9899, %v10274
    %v10655 = vmul.f32 %v9899, %v10278
    %v10656 = vmul.f32 %v9899, %v10282
    %v10657 = vmul.f32 %v9899, %v10286
    %v10658 = vmul.f32 %v9899, %v10290
    %v10659 = vmul.f32 %v9899, %v10294
    %v10660 = vmul.f32 %v9899, %v10298
    %v10661 = vmul.f32 %v9899, %v10302
    %v10662 = vmul.f32 %v9899, %v10306
    %v10663 = vmul.f32 %v9899, %v10310
    %v10664 = vmul.f32 %v9899, %v10314
    %v10665 = vmul.f32 %v9899, %v10317
    %v10666 = vmul.f32 %v9899, %v10321
    %v10667 = vmul.f32 %v9899, %v10325
    %v10668 = vmul.f32 %v9899, %v10329
    %v10669 = vmul.f32 %v9899, %v10333
    %v10670 = vmul.f32 %v9899, %v10337
    %v10671 = vmul.f32 %v9899, %v10341
    %v10672 = vmul.f32 %v9899, %v10345
    %v10673 = vmul.f32 %v9899, %v10349
    %v10674 = vmul.f32 %v9899, %v10353
    %v10675 = vmul.f32 %v9899, %v10357
    %v10676 = vmul.f32 %v9899, %v10361
    %v10677 = vmul.f32 %v9899, %v10365
    %v10678 = vmul.f32 %v9899, %v10369
    %v10679 = vmul.f32 %v9899, %v10373
    %v10680 = vmul.f32 %v9899, %v10377
    %v10681 = vmul.f32 %v9899, %v10380
    %v10682 = vmul.f32 %v9899, %v10384
    %v10683 = vmul.f32 %v9899, %v10388
    %v10684 = vmul.f32 %v9899, %v10392
    %v10685 = vmul.f32 %v9899, %v10396
    %v10686 = vmul.f32 %v9899, %v10400
    %v10687 = vmul.f32 %v9899, %v10404
    %v10688 = vmul.f32 %v9899, %v10408
    %v10689 = vmul.f32 %v9899, %v10412
    %v10690 = vmul.f32 %v9899, %v10416
    %v10691 = vmul.f32 %v9899, %v10420
    %v10692 = vmul.f32 %v9899, %v10424
    %v10693 = vmul.f32 %v9899, %v10428
    %v10694 = vmul.f32 %v9899, %v10432
    %v10695 = vmul.f32 %v9899, %v10436
    %v10696 = vmul.f32 %v9899, %v10440
    %v10697 = vmul.f32 %v9903, %v9939
    %v10698 = vmul.f32 %v9903, %v9943
    %v10699 = vmul.f32 %v9903, %v9947
    %v10700 = vmul.f32 %v9903, %v9951
    %v10701 = vmul.f32 %v9903, %v9955
    %v10702 = vmul.f32 %v9903, %v9959
    %v10703 = vmul.f32 %v9903, %v9963
    %v10704 = vmul.f32 %v9903, %v9967
    %v10705 = vmul.f32 %v9903, %v9971
    %v10706 = vmul.f32 %v9903, %v9975
    %v10707 = vmul.f32 %v9903, %v9979
    %v10708 = vmul.f32 %v9903, %v9983
    %v10709 = vmul.f32 %v9903, %v9987
    %v10710 = vmul.f32 %v9903, %v9991
    %v10711 = vmul.f32 %v9903, %v9995
    %v10712 = vmul.f32 %v9903, %v9999
    %v10713 = vmul.f32 %v9903, %v10002
    %v10714 = vmul.f32 %v9903, %v10006
    %v10715 = vmul.f32 %v9903, %v10010
    %v10716 = vmul.f32 %v9903, %v10014
    %v10717 = vmul.f32 %v9903, %v10018
    %v10718 = vmul.f32 %v9903, %v10022
    %v10719 = vmul.f32 %v9903, %v10026
    %v10720 = vmul.f32 %v9903, %v10030
    %v10721 = vmul.f32 %v9903, %v10034
    %v10722 = vmul.f32 %v9903, %v10038
    %v10723 = vmul.f32 %v9903, %v10042
    %v10724 = vmul.f32 %v9903, %v10046
    %v10725 = vmul.f32 %v9903, %v10050
    %v10726 = vmul.f32 %v9903, %v10054
    %v10727 = vmul.f32 %v9903, %v10058
    %v10728 = vmul.f32 %v9903, %v10062
    %v10729 = vmul.f32 %v9903, %v10065
    %v10730 = vmul.f32 %v9903, %v10069
    %v10731 = vmul.f32 %v9903, %v10073
    %v10732 = vmul.f32 %v9903, %v10077
    %v10733 = vmul.f32 %v9903, %v10081
    %v10734 = vmul.f32 %v9903, %v10085
    %v10735 = vmul.f32 %v9903, %v10089
    %v10736 = vmul.f32 %v9903, %v10093
    %v10737 = vmul.f32 %v9903, %v10097
    %v10738 = vmul.f32 %v9903, %v10101
    %v10739 = vmul.f32 %v9903, %v10105
    %v10740 = vmul.f32 %v9903, %v10109
    %v10741 = vmul.f32 %v9903, %v10113
    %v10742 = vmul.f32 %v9903, %v10117
    %v10743 = vmul.f32 %v9903, %v10121
    %v10744 = vmul.f32 %v9903, %v10125
    %v10745 = vmul.f32 %v9903, %v10128
    %v10746 = vmul.f32 %v9903, %v10132
    %v10747 = vmul.f32 %v9903, %v10136
    %v10748 = vmul.f32 %v9903, %v10140
    %v10749 = vmul.f32 %v9903, %v10144
    %v10750 = vmul.f32 %v9903, %v10148
    %v10751 = vmul.f32 %v9903, %v10152
    %v10752 = vmul.f32 %v9903, %v10156
    %v10753 = vmul.f32 %v9903, %v10160
    %v10754 = vmul.f32 %v9903, %v10164
    %v10755 = vmul.f32 %v9903, %v10168
    %v10756 = vmul.f32 %v9903, %v10172
    %v10757 = vmul.f32 %v9903, %v10176
    %v10758 = vmul.f32 %v9903, %v10180
    %v10759 = vmul.f32 %v9903, %v10184
    %v10760 = vmul.f32 %v9903, %v10188
    %v10761 = vmul.f32 %v9903, %v10191
    %v10762 = vmul.f32 %v9903, %v10195
    %v10763 = vmul.f32 %v9903, %v10199
    %v10764 = vmul.f32 %v9903, %v10203
    %v10765 = vmul.f32 %v9903, %v10207
    %v10766 = vmul.f32 %v9903, %v10211
    %v10767 = vmul.f32 %v9903, %v10215
    %v10768 = vmul.f32 %v9903, %v10219
    %v10769 = vmul.f32 %v9903, %v10223
    %v10770 = vmul.f32 %v9903, %v10227
    %v10771 = vmul.f32 %v9903, %v10231
    %v10772 = vmul.f32 %v9903, %v10235
    %v10773 = vmul.f32 %v9903, %v10239
    %v10774 = vmul.f32 %v9903, %v10243
    %v10775 = vmul.f32 %v9903, %v10247
    %v10776 = vmul.f32 %v9903, %v10251
    %v10777 = vmul.f32 %v9903, %v10254
    %v10778 = vmul.f32 %v9903, %v10258
    %v10779 = vmul.f32 %v9903, %v10262
    %v10780 = vmul.f32 %v9903, %v10266
    %v10781 = vmul.f32 %v9903, %v10270
    %v10782 = vmul.f32 %v9903, %v10274
    %v10783 = vmul.f32 %v9903, %v10278
    %v10784 = vmul.f32 %v9903, %v10282
    %v10785 = vmul.f32 %v9903, %v10286
    %v10786 = vmul.f32 %v9903, %v10290
    %v10787 = vmul.f32 %v9903, %v10294
    %v10788 = vmul.f32 %v9903, %v10298
    %v10789 = vmul.f32 %v9903, %v10302
    %v10790 = vmul.f32 %v9903, %v10306
    %v10791 = vmul.f32 %v9903, %v10310
    %v10792 = vmul.f32 %v9903, %v10314
    %v10793 = vmul.f32 %v9903, %v10317
    %v10794 = vmul.f32 %v9903, %v10321
    %v10795 = vmul.f32 %v9903, %v10325
    %v10796 = vmul.f32 %v9903, %v10329
    %v10797 = vmul.f32 %v9903, %v10333
    %v10798 = vmul.f32 %v9903, %v10337
    %v10799 = vmul.f32 %v9903, %v10341
    %v10800 = vmul.f32 %v9903, %v10345
    %v10801 = vmul.f32 %v9903, %v10349
    %v10802 = vmul.f32 %v9903, %v10353
    %v10803 = vmul.f32 %v9903, %v10357
    %v10804 = vmul.f32 %v9903, %v10361
    %v10805 = vmul.f32 %v9903, %v10365
    %v10806 = vmul.f32 %v9903, %v10369
    %v10807 = vmul.f32 %v9903, %v10373
    %v10808 = vmul.f32 %v9903, %v10377
    %v10809 = vmul.f32 %v9903, %v10380
    %v10810 = vmul.f32 %v9903, %v10384
    %v10811 = vmul.f32 %v9903, %v10388
    %v10812 = vmul.f32 %v9903, %v10392
    %v10813 = vmul.f32 %v9903, %v10396
    %v10814 = vmul.f32 %v9903, %v10400
    %v10815 = vmul.f32 %v9903, %v10404
    %v10816 = vmul.f32 %v9903, %v10408
    %v10817 = vmul.f32 %v9903, %v10412
    %v10818 = vmul.f32 %v9903, %v10416
    %v10819 = vmul.f32 %v9903, %v10420
    %v10820 = vmul.f32 %v9903, %v10424
    %v10821 = vmul.f32 %v9903, %v10428
    %v10822 = vmul.f32 %v9903, %v10432
    %v10823 = vmul.f32 %v9903, %v10436
    %v10824 = vmul.f32 %v9903, %v10440
    %11081 = vset.pattern.permute.xlu0 0
    %11082 = vperm.xlu0 %11081, %v10569
    %v11083 = vpop.permute.xlu0 %11082
    %11084 = vset.pattern.permute.xlu0 0
    %11085 = vperm.xlu0 %11084, %v10570
    %v11086 = vpop.permute.xlu0 %11085
    %11087 = vset.pattern.permute.xlu0 0
    %11088 = vperm.xlu0 %11087, %v10571
    %v11089 = vpop.permute.xlu0 %11088
    %11090 = vset.pattern.permute.xlu0 0
    %11091 = vperm.xlu0 %11090, %v10572
    %v11092 = vpop.permute.xlu0 %11091
    %11093 = vset.pattern.permute.xlu0 0
    %11094 = vperm.xlu0 %11093, %v10573
    %v11095 = vpop.permute.xlu0 %11094
    %11096 = vset.pattern.permute.xlu0 0
    %11097 = vperm.xlu0 %11096, %v10574
    %v11098 = vpop.permute.xlu0 %11097
    %11099 = vset.pattern.permute.xlu0 0
    %11100 = vperm.xlu0 %11099, %v10575
    %v11101 = vpop.permute.xlu0 %11100
    %11102 = vset.pattern.permute.xlu0 0
    %11103 = vperm.xlu0 %11102, %v10576
    %v11104 = vpop.permute.xlu0 %11103
    %11105 = vset.pattern.permute.xlu0 0
    %11106 = vperm.xlu0 %11105, %v10577
    %v11107 = vpop.permute.xlu0 %11106
    %11108 = vset.pattern.permute.xlu0 0
    %11109 = vperm.xlu0 %11108, %v10578
    %v11110 = vpop.permute.xlu0 %11109
    %11111 = vset.pattern.permute.xlu0 0
    %11112 = vperm.xlu0 %11111, %v10579
    %v11113 = vpop.permute.xlu0 %11112
    %11114 = vset.pattern.permute.xlu0 0
    %11115 = vperm.xlu0 %11114, %v10580
    %v11116 = vpop.permute.xlu0 %11115
    %11117 = vset.pattern.permute.xlu0 0
    %11118 = vperm.xlu0 %11117, %v10581
    %v11119 = vpop.permute.xlu0 %11118
    %11120 = vset.pattern.permute.xlu0 0
    %11121 = vperm.xlu0 %11120, %v10582
    %v11122 = vpop.permute.xlu0 %11121
    %11123 = vset.pattern.permute.xlu0 0
    %11124 = vperm.xlu0 %11123, %v10583
    %v11125 = vpop.permute.xlu0 %11124
    %11126 = vset.pattern.permute.xlu0 0
    %11127 = vperm.xlu0 %11126, %v10584
    %v11128 = vpop.permute.xlu0 %11127
    %11129 = vset.pattern.permute.xlu0 0
    %11130 = vperm.xlu0 %11129, %v10585
    %v11131 = vpop.permute.xlu0 %11130
    %11132 = vset.pattern.permute.xlu0 0
    %11133 = vperm.xlu0 %11132, %v10586
    %v11134 = vpop.permute.xlu0 %11133
    %11135 = vset.pattern.permute.xlu0 0
    %11136 = vperm.xlu0 %11135, %v10587
    %v11137 = vpop.permute.xlu0 %11136
    %11138 = vset.pattern.permute.xlu0 0
    %11139 = vperm.xlu0 %11138, %v10588
    %v11140 = vpop.permute.xlu0 %11139
    %11141 = vset.pattern.permute.xlu0 0
    %11142 = vperm.xlu0 %11141, %v10589
    %v11143 = vpop.permute.xlu0 %11142
    %11144 = vset.pattern.permute.xlu0 0
    %11145 = vperm.xlu0 %11144, %v10590
    %v11146 = vpop.permute.xlu0 %11145
    %11147 = vset.pattern.permute.xlu0 0
    %11148 = vperm.xlu0 %11147, %v10591
    %v11149 = vpop.permute.xlu0 %11148
    %11150 = vset.pattern.permute.xlu0 0
    %11151 = vperm.xlu0 %11150, %v10592
    %v11152 = vpop.permute.xlu0 %11151
    %11153 = vset.pattern.permute.xlu0 0
    %11154 = vperm.xlu0 %11153, %v10593
    %v11155 = vpop.permute.xlu0 %11154
    %11156 = vset.pattern.permute.xlu0 0
    %11157 = vperm.xlu0 %11156, %v10594
    %v11158 = vpop.permute.xlu0 %11157
    %11159 = vset.pattern.permute.xlu0 0
    %11160 = vperm.xlu0 %11159, %v10595
    %v11161 = vpop.permute.xlu0 %11160
    %11162 = vset.pattern.permute.xlu0 0
    %11163 = vperm.xlu0 %11162, %v10596
    %v11164 = vpop.permute.xlu0 %11163
    %11165 = vset.pattern.permute.xlu0 0
    %11166 = vperm.xlu0 %11165, %v10597
    %v11167 = vpop.permute.xlu0 %11166
    %11168 = vset.pattern.permute.xlu0 0
    %11169 = vperm.xlu0 %11168, %v10598
    %v11170 = vpop.permute.xlu0 %11169
    %11171 = vset.pattern.permute.xlu0 0
    %11172 = vperm.xlu0 %11171, %v10599
    %v11173 = vpop.permute.xlu0 %11172
    %11174 = vset.pattern.permute.xlu0 0
    %11175 = vperm.xlu0 %11174, %v10600
    %v11176 = vpop.permute.xlu0 %11175
    %11177 = vset.pattern.permute.xlu0 0
    %11178 = vperm.xlu0 %11177, %v10601
    %v11179 = vpop.permute.xlu0 %11178
    %11180 = vset.pattern.permute.xlu0 0
    %11181 = vperm.xlu0 %11180, %v10602
    %v11182 = vpop.permute.xlu0 %11181
    %11183 = vset.pattern.permute.xlu0 0
    %11184 = vperm.xlu0 %11183, %v10603
    %v11185 = vpop.permute.xlu0 %11184
    %11186 = vset.pattern.permute.xlu0 0
    %11187 = vperm.xlu0 %11186, %v10604
    %v11188 = vpop.permute.xlu0 %11187
    %11189 = vset.pattern.permute.xlu0 0
    %11190 = vperm.xlu0 %11189, %v10605
    %v11191 = vpop.permute.xlu0 %11190
    %11192 = vset.pattern.permute.xlu0 0
    %11193 = vperm.xlu0 %11192, %v10606
    %v11194 = vpop.permute.xlu0 %11193
    %11195 = vset.pattern.permute.xlu0 0
    %11196 = vperm.xlu0 %11195, %v10607
    %v11197 = vpop.permute.xlu0 %11196
    %11198 = vset.pattern.permute.xlu0 0
    %11199 = vperm.xlu0 %11198, %v10608
    %v11200 = vpop.permute.xlu0 %11199
    %11201 = vset.pattern.permute.xlu0 0
    %11202 = vperm.xlu0 %11201, %v10609
    %v11203 = vpop.permute.xlu0 %11202
    %11204 = vset.pattern.permute.xlu0 0
    %11205 = vperm.xlu0 %11204, %v10610
    %v11206 = vpop.permute.xlu0 %11205
    %11207 = vset.pattern.permute.xlu0 0
    %11208 = vperm.xlu0 %11207, %v10611
    %v11209 = vpop.permute.xlu0 %11208
    %11210 = vset.pattern.permute.xlu0 0
    %11211 = vperm.xlu0 %11210, %v10612
    %v11212 = vpop.permute.xlu0 %11211
    %11213 = vset.pattern.permute.xlu0 0
    %11214 = vperm.xlu0 %11213, %v10613
    %v11215 = vpop.permute.xlu0 %11214
    %11216 = vset.pattern.permute.xlu0 0
    %11217 = vperm.xlu0 %11216, %v10614
    %v11218 = vpop.permute.xlu0 %11217
    %11219 = vset.pattern.permute.xlu0 0
    %11220 = vperm.xlu0 %11219, %v10615
    %v11221 = vpop.permute.xlu0 %11220
    %11222 = vset.pattern.permute.xlu0 0
    %11223 = vperm.xlu0 %11222, %v10616
    %v11224 = vpop.permute.xlu0 %11223
    %11225 = vset.pattern.permute.xlu0 0
    %11226 = vperm.xlu0 %11225, %v10617
    %v11227 = vpop.permute.xlu0 %11226
    %11228 = vset.pattern.permute.xlu0 0
    %11229 = vperm.xlu0 %11228, %v10618
    %v11230 = vpop.permute.xlu0 %11229
    %11231 = vset.pattern.permute.xlu0 0
    %11232 = vperm.xlu0 %11231, %v10619
    %v11233 = vpop.permute.xlu0 %11232
    %11234 = vset.pattern.permute.xlu0 0
    %11235 = vperm.xlu0 %11234, %v10620
    %v11236 = vpop.permute.xlu0 %11235
    %11237 = vset.pattern.permute.xlu0 0
    %11238 = vperm.xlu0 %11237, %v10621
    %v11239 = vpop.permute.xlu0 %11238
    %11240 = vset.pattern.permute.xlu0 0
    %11241 = vperm.xlu0 %11240, %v10622
    %v11242 = vpop.permute.xlu0 %11241
    %11243 = vset.pattern.permute.xlu0 0
    %11244 = vperm.xlu0 %11243, %v10623
    %v11245 = vpop.permute.xlu0 %11244
    %11246 = vset.pattern.permute.xlu0 0
    %11247 = vperm.xlu0 %11246, %v10624
    %v11248 = vpop.permute.xlu0 %11247
    %11249 = vset.pattern.permute.xlu0 0
    %11250 = vperm.xlu0 %11249, %v10625
    %v11251 = vpop.permute.xlu0 %11250
    %11252 = vset.pattern.permute.xlu0 0
    %11253 = vperm.xlu0 %11252, %v10626
    %v11254 = vpop.permute.xlu0 %11253
    %11255 = vset.pattern.permute.xlu0 0
    %11256 = vperm.xlu0 %11255, %v10627
    %v11257 = vpop.permute.xlu0 %11256
    %11258 = vset.pattern.permute.xlu0 0
    %11259 = vperm.xlu0 %11258, %v10628
    %v11260 = vpop.permute.xlu0 %11259
    %11261 = vset.pattern.permute.xlu0 0
    %11262 = vperm.xlu0 %11261, %v10629
    %v11263 = vpop.permute.xlu0 %11262
    %11264 = vset.pattern.permute.xlu0 0
    %11265 = vperm.xlu0 %11264, %v10630
    %v11266 = vpop.permute.xlu0 %11265
    %11267 = vset.pattern.permute.xlu0 0
    %11268 = vperm.xlu0 %11267, %v10631
    %v11269 = vpop.permute.xlu0 %11268
    %11270 = vset.pattern.permute.xlu0 0
    %11271 = vperm.xlu0 %11270, %v10632
    %v11272 = vpop.permute.xlu0 %11271
    %11273 = vset.pattern.permute.xlu0 0
    %11274 = vperm.xlu0 %11273, %v10633
    %v11275 = vpop.permute.xlu0 %11274
    %11276 = vset.pattern.permute.xlu0 0
    %11277 = vperm.xlu0 %11276, %v10634
    %v11278 = vpop.permute.xlu0 %11277
    %11279 = vset.pattern.permute.xlu0 0
    %11280 = vperm.xlu0 %11279, %v10635
    %v11281 = vpop.permute.xlu0 %11280
    %11282 = vset.pattern.permute.xlu0 0
    %11283 = vperm.xlu0 %11282, %v10636
    %v11284 = vpop.permute.xlu0 %11283
    %11285 = vset.pattern.permute.xlu0 0
    %11286 = vperm.xlu0 %11285, %v10637
    %v11287 = vpop.permute.xlu0 %11286
    %11288 = vset.pattern.permute.xlu0 0
    %11289 = vperm.xlu0 %11288, %v10638
    %v11290 = vpop.permute.xlu0 %11289
    %11291 = vset.pattern.permute.xlu0 0
    %11292 = vperm.xlu0 %11291, %v10639
    %v11293 = vpop.permute.xlu0 %11292
    %11294 = vset.pattern.permute.xlu0 0
    %11295 = vperm.xlu0 %11294, %v10640
    %v11296 = vpop.permute.xlu0 %11295
    %11297 = vset.pattern.permute.xlu0 0
    %11298 = vperm.xlu0 %11297, %v10641
    %v11299 = vpop.permute.xlu0 %11298
    %11300 = vset.pattern.permute.xlu0 0
    %11301 = vperm.xlu0 %11300, %v10642
    %v11302 = vpop.permute.xlu0 %11301
    %11303 = vset.pattern.permute.xlu0 0
    %11304 = vperm.xlu0 %11303, %v10643
    %v11305 = vpop.permute.xlu0 %11304
    %11306 = vset.pattern.permute.xlu0 0
    %11307 = vperm.xlu0 %11306, %v10644
    %v11308 = vpop.permute.xlu0 %11307
    %11309 = vset.pattern.permute.xlu0 0
    %11310 = vperm.xlu0 %11309, %v10645
    %v11311 = vpop.permute.xlu0 %11310
    %11312 = vset.pattern.permute.xlu0 0
    %11313 = vperm.xlu0 %11312, %v10646
    %v11314 = vpop.permute.xlu0 %11313
    %11315 = vset.pattern.permute.xlu0 0
    %11316 = vperm.xlu0 %11315, %v10647
    %v11317 = vpop.permute.xlu0 %11316
    %11318 = vset.pattern.permute.xlu0 0
    %11319 = vperm.xlu0 %11318, %v10648
    %v11320 = vpop.permute.xlu0 %11319
    %11321 = vset.pattern.permute.xlu0 0
    %11322 = vperm.xlu0 %11321, %v10649
    %v11323 = vpop.permute.xlu0 %11322
    %11324 = vset.pattern.permute.xlu0 0
    %11325 = vperm.xlu0 %11324, %v10650
    %v11326 = vpop.permute.xlu0 %11325
    %11327 = vset.pattern.permute.xlu0 0
    %11328 = vperm.xlu0 %11327, %v10651
    %v11329 = vpop.permute.xlu0 %11328
    %11330 = vset.pattern.permute.xlu0 0
    %11331 = vperm.xlu0 %11330, %v10652
    %v11332 = vpop.permute.xlu0 %11331
    %11333 = vset.pattern.permute.xlu0 0
    %11334 = vperm.xlu0 %11333, %v10653
    %v11335 = vpop.permute.xlu0 %11334
    %11336 = vset.pattern.permute.xlu0 0
    %11337 = vperm.xlu0 %11336, %v10654
    %v11338 = vpop.permute.xlu0 %11337
    %11339 = vset.pattern.permute.xlu0 0
    %11340 = vperm.xlu0 %11339, %v10655
    %v11341 = vpop.permute.xlu0 %11340
    %11342 = vset.pattern.permute.xlu0 0
    %11343 = vperm.xlu0 %11342, %v10656
    %v11344 = vpop.permute.xlu0 %11343
    %11345 = vset.pattern.permute.xlu0 0
    %11346 = vperm.xlu0 %11345, %v10657
    %v11347 = vpop.permute.xlu0 %11346
    %11348 = vset.pattern.permute.xlu0 0
    %11349 = vperm.xlu0 %11348, %v10658
    %v11350 = vpop.permute.xlu0 %11349
    %11351 = vset.pattern.permute.xlu0 0
    %11352 = vperm.xlu0 %11351, %v10659
    %v11353 = vpop.permute.xlu0 %11352
    %11354 = vset.pattern.permute.xlu0 0
    %11355 = vperm.xlu0 %11354, %v10660
    %v11356 = vpop.permute.xlu0 %11355
    %11357 = vset.pattern.permute.xlu0 0
    %11358 = vperm.xlu0 %11357, %v10661
    %v11359 = vpop.permute.xlu0 %11358
    %11360 = vset.pattern.permute.xlu0 0
    %11361 = vperm.xlu0 %11360, %v10662
    %v11362 = vpop.permute.xlu0 %11361
    %11363 = vset.pattern.permute.xlu0 0
    %11364 = vperm.xlu0 %11363, %v10663
    %v11365 = vpop.permute.xlu0 %11364
    %11366 = vset.pattern.permute.xlu0 0
    %11367 = vperm.xlu0 %11366, %v10664
    %v11368 = vpop.permute.xlu0 %11367
    %11369 = vset.pattern.permute.xlu0 0
    %11370 = vperm.xlu0 %11369, %v10665
    %v11371 = vpop.permute.xlu0 %11370
    %11372 = vset.pattern.permute.xlu0 0
    %11373 = vperm.xlu0 %11372, %v10666
    %v11374 = vpop.permute.xlu0 %11373
    %11375 = vset.pattern.permute.xlu0 0
    %11376 = vperm.xlu0 %11375, %v10667
    %v11377 = vpop.permute.xlu0 %11376
    %11378 = vset.pattern.permute.xlu0 0
    %11379 = vperm.xlu0 %11378, %v10668
    %v11380 = vpop.permute.xlu0 %11379
    %11381 = vset.pattern.permute.xlu0 0
    %11382 = vperm.xlu0 %11381, %v10669
    %v11383 = vpop.permute.xlu0 %11382
    %11384 = vset.pattern.permute.xlu0 0
    %11385 = vperm.xlu0 %11384, %v10670
    %v11386 = vpop.permute.xlu0 %11385
    %11387 = vset.pattern.permute.xlu0 0
    %11388 = vperm.xlu0 %11387, %v10671
    %v11389 = vpop.permute.xlu0 %11388
    %11390 = vset.pattern.permute.xlu0 0
    %11391 = vperm.xlu0 %11390, %v10672
    %v11392 = vpop.permute.xlu0 %11391
    %11393 = vset.pattern.permute.xlu0 0
    %11394 = vperm.xlu0 %11393, %v10673
    %v11395 = vpop.permute.xlu0 %11394
    %11396 = vset.pattern.permute.xlu0 0
    %11397 = vperm.xlu0 %11396, %v10674
    %v11398 = vpop.permute.xlu0 %11397
    %11399 = vset.pattern.permute.xlu0 0
    %11400 = vperm.xlu0 %11399, %v10675
    %v11401 = vpop.permute.xlu0 %11400
    %11402 = vset.pattern.permute.xlu0 0
    %11403 = vperm.xlu0 %11402, %v10676
    %v11404 = vpop.permute.xlu0 %11403
    %11405 = vset.pattern.permute.xlu0 0
    %11406 = vperm.xlu0 %11405, %v10677
    %v11407 = vpop.permute.xlu0 %11406
    %11408 = vset.pattern.permute.xlu0 0
    %11409 = vperm.xlu0 %11408, %v10678
    %v11410 = vpop.permute.xlu0 %11409
    %11411 = vset.pattern.permute.xlu0 0
    %11412 = vperm.xlu0 %11411, %v10679
    %v11413 = vpop.permute.xlu0 %11412
    %11414 = vset.pattern.permute.xlu0 0
    %11415 = vperm.xlu0 %11414, %v10680
    %v11416 = vpop.permute.xlu0 %11415
    %11417 = vset.pattern.permute.xlu0 0
    %11418 = vperm.xlu0 %11417, %v10681
    %v11419 = vpop.permute.xlu0 %11418
    %11420 = vset.pattern.permute.xlu0 0
    %11421 = vperm.xlu0 %11420, %v10682
    %v11422 = vpop.permute.xlu0 %11421
    %11423 = vset.pattern.permute.xlu0 0
    %11424 = vperm.xlu0 %11423, %v10683
    %v11425 = vpop.permute.xlu0 %11424
    %11426 = vset.pattern.permute.xlu0 0
    %11427 = vperm.xlu0 %11426, %v10684
    %v11428 = vpop.permute.xlu0 %11427
    %11429 = vset.pattern.permute.xlu0 0
    %11430 = vperm.xlu0 %11429, %v10685
    %v11431 = vpop.permute.xlu0 %11430
    %11432 = vset.pattern.permute.xlu0 0
    %11433 = vperm.xlu0 %11432, %v10686
    %v11434 = vpop.permute.xlu0 %11433
    %11435 = vset.pattern.permute.xlu0 0
    %11436 = vperm.xlu0 %11435, %v10687
    %v11437 = vpop.permute.xlu0 %11436
    %11438 = vset.pattern.permute.xlu0 0
    %11439 = vperm.xlu0 %11438, %v10688
    %v11440 = vpop.permute.xlu0 %11439
    %11441 = vset.pattern.permute.xlu0 0
    %11442 = vperm.xlu0 %11441, %v10689
    %v11443 = vpop.permute.xlu0 %11442
    %11444 = vset.pattern.permute.xlu0 0
    %11445 = vperm.xlu0 %11444, %v10690
    %v11446 = vpop.permute.xlu0 %11445
    %11447 = vset.pattern.permute.xlu0 0
    %11448 = vperm.xlu0 %11447, %v10691
    %v11449 = vpop.permute.xlu0 %11448
    %11450 = vset.pattern.permute.xlu0 0
    %11451 = vperm.xlu0 %11450, %v10692
    %v11452 = vpop.permute.xlu0 %11451
    %11453 = vset.pattern.permute.xlu0 0
    %11454 = vperm.xlu0 %11453, %v10693
    %v11455 = vpop.permute.xlu0 %11454
    %11456 = vset.pattern.permute.xlu0 0
    %11457 = vperm.xlu0 %11456, %v10694
    %v11458 = vpop.permute.xlu0 %11457
    %11459 = vset.pattern.permute.xlu0 0
    %11460 = vperm.xlu0 %11459, %v10695
    %v11461 = vpop.permute.xlu0 %11460
    %11462 = vset.pattern.permute.xlu0 0
    %11463 = vperm.xlu0 %11462, %v10696
    %v11464 = vpop.permute.xlu0 %11463
    %11465 = vset.pattern.permute.xlu0 0
    %11466 = vperm.xlu0 %11465, %v10697
    %v11467 = vpop.permute.xlu0 %11466
    %11468 = vset.pattern.permute.xlu0 0
    %11469 = vperm.xlu0 %11468, %v10698
    %v11470 = vpop.permute.xlu0 %11469
    %11471 = vset.pattern.permute.xlu0 0
    %11472 = vperm.xlu0 %11471, %v10699
    %v11473 = vpop.permute.xlu0 %11472
    %11474 = vset.pattern.permute.xlu0 0
    %11475 = vperm.xlu0 %11474, %v10700
    %v11476 = vpop.permute.xlu0 %11475
    %11477 = vset.pattern.permute.xlu0 0
    %11478 = vperm.xlu0 %11477, %v10701
    %v11479 = vpop.permute.xlu0 %11478
    %11480 = vset.pattern.permute.xlu0 0
    %11481 = vperm.xlu0 %11480, %v10702
    %v11482 = vpop.permute.xlu0 %11481
    %11483 = vset.pattern.permute.xlu0 0
    %11484 = vperm.xlu0 %11483, %v10703
    %v11485 = vpop.permute.xlu0 %11484
    %11486 = vset.pattern.permute.xlu0 0
    %11487 = vperm.xlu0 %11486, %v10704
    %v11488 = vpop.permute.xlu0 %11487
    %11489 = vset.pattern.permute.xlu0 0
    %11490 = vperm.xlu0 %11489, %v10705
    %v11491 = vpop.permute.xlu0 %11490
    %11492 = vset.pattern.permute.xlu0 0
    %11493 = vperm.xlu0 %11492, %v10706
    %v11494 = vpop.permute.xlu0 %11493
    %11495 = vset.pattern.permute.xlu0 0
    %11496 = vperm.xlu0 %11495, %v10707
    %v11497 = vpop.permute.xlu0 %11496
    %11498 = vset.pattern.permute.xlu0 0
    %11499 = vperm.xlu0 %11498, %v10708
    %v11500 = vpop.permute.xlu0 %11499
    %11501 = vset.pattern.permute.xlu0 0
    %11502 = vperm.xlu0 %11501, %v10709
    %v11503 = vpop.permute.xlu0 %11502
    %11504 = vset.pattern.permute.xlu0 0
    %11505 = vperm.xlu0 %11504, %v10710
    %v11506 = vpop.permute.xlu0 %11505
    %11507 = vset.pattern.permute.xlu0 0
    %11508 = vperm.xlu0 %11507, %v10711
    %v11509 = vpop.permute.xlu0 %11508
    %11510 = vset.pattern.permute.xlu0 0
    %11511 = vperm.xlu0 %11510, %v10712
    %v11512 = vpop.permute.xlu0 %11511
    %11513 = vset.pattern.permute.xlu0 0
    %11514 = vperm.xlu0 %11513, %v10713
    %v11515 = vpop.permute.xlu0 %11514
    %11516 = vset.pattern.permute.xlu0 0
    %11517 = vperm.xlu0 %11516, %v10714
    %v11518 = vpop.permute.xlu0 %11517
    %11519 = vset.pattern.permute.xlu0 0
    %11520 = vperm.xlu0 %11519, %v10715
    %v11521 = vpop.permute.xlu0 %11520
    %11522 = vset.pattern.permute.xlu0 0
    %11523 = vperm.xlu0 %11522, %v10716
    %v11524 = vpop.permute.xlu0 %11523
    %11525 = vset.pattern.permute.xlu0 0
    %11526 = vperm.xlu0 %11525, %v10717
    %v11527 = vpop.permute.xlu0 %11526
    %11528 = vset.pattern.permute.xlu0 0
    %11529 = vperm.xlu0 %11528, %v10718
    %v11530 = vpop.permute.xlu0 %11529
    %11531 = vset.pattern.permute.xlu0 0
    %11532 = vperm.xlu0 %11531, %v10719
    %v11533 = vpop.permute.xlu0 %11532
    %11534 = vset.pattern.permute.xlu0 0
    %11535 = vperm.xlu0 %11534, %v10720
    %v11536 = vpop.permute.xlu0 %11535
    %11537 = vset.pattern.permute.xlu0 0
    %11538 = vperm.xlu0 %11537, %v10721
    %v11539 = vpop.permute.xlu0 %11538
    %11540 = vset.pattern.permute.xlu0 0
    %11541 = vperm.xlu0 %11540, %v10722
    %v11542 = vpop.permute.xlu0 %11541
    %11543 = vset.pattern.permute.xlu0 0
    %11544 = vperm.xlu0 %11543, %v10723
    %v11545 = vpop.permute.xlu0 %11544
    %11546 = vset.pattern.permute.xlu0 0
    %11547 = vperm.xlu0 %11546, %v10724
    %v11548 = vpop.permute.xlu0 %11547
    %11549 = vset.pattern.permute.xlu0 0
    %11550 = vperm.xlu0 %11549, %v10725
    %v11551 = vpop.permute.xlu0 %11550
    %11552 = vset.pattern.permute.xlu0 0
    %11553 = vperm.xlu0 %11552, %v10726
    %v11554 = vpop.permute.xlu0 %11553
    %11555 = vset.pattern.permute.xlu0 0
    %11556 = vperm.xlu0 %11555, %v10727
    %v11557 = vpop.permute.xlu0 %11556
    %11558 = vset.pattern.permute.xlu0 0
    %11559 = vperm.xlu0 %11558, %v10728
    %v11560 = vpop.permute.xlu0 %11559
    %11561 = vset.pattern.permute.xlu0 0
    %11562 = vperm.xlu0 %11561, %v10729
    %v11563 = vpop.permute.xlu0 %11562
    %11564 = vset.pattern.permute.xlu0 0
    %11565 = vperm.xlu0 %11564, %v10730
    %v11566 = vpop.permute.xlu0 %11565
    %11567 = vset.pattern.permute.xlu0 0
    %11568 = vperm.xlu0 %11567, %v10731
    %v11569 = vpop.permute.xlu0 %11568
    %11570 = vset.pattern.permute.xlu0 0
    %11571 = vperm.xlu0 %11570, %v10732
    %v11572 = vpop.permute.xlu0 %11571
    %11573 = vset.pattern.permute.xlu0 0
    %11574 = vperm.xlu0 %11573, %v10733
    %v11575 = vpop.permute.xlu0 %11574
    %11576 = vset.pattern.permute.xlu0 0
    %11577 = vperm.xlu0 %11576, %v10734
    %v11578 = vpop.permute.xlu0 %11577
    %11579 = vset.pattern.permute.xlu0 0
    %11580 = vperm.xlu0 %11579, %v10735
    %v11581 = vpop.permute.xlu0 %11580
    %11582 = vset.pattern.permute.xlu0 0
    %11583 = vperm.xlu0 %11582, %v10736
    %v11584 = vpop.permute.xlu0 %11583
    %11585 = vset.pattern.permute.xlu0 0
    %11586 = vperm.xlu0 %11585, %v10737
    %v11587 = vpop.permute.xlu0 %11586
    %11588 = vset.pattern.permute.xlu0 0
    %11589 = vperm.xlu0 %11588, %v10738
    %v11590 = vpop.permute.xlu0 %11589
    %11591 = vset.pattern.permute.xlu0 0
    %11592 = vperm.xlu0 %11591, %v10739
    %v11593 = vpop.permute.xlu0 %11592
    %11594 = vset.pattern.permute.xlu0 0
    %11595 = vperm.xlu0 %11594, %v10740
    %v11596 = vpop.permute.xlu0 %11595
    %11597 = vset.pattern.permute.xlu0 0
    %11598 = vperm.xlu0 %11597, %v10741
    %v11599 = vpop.permute.xlu0 %11598
    %11600 = vset.pattern.permute.xlu0 0
    %11601 = vperm.xlu0 %11600, %v10742
    %v11602 = vpop.permute.xlu0 %11601
    %11603 = vset.pattern.permute.xlu0 0
    %11604 = vperm.xlu0 %11603, %v10743
    %v11605 = vpop.permute.xlu0 %11604
    %11606 = vset.pattern.permute.xlu0 0
    %11607 = vperm.xlu0 %11606, %v10744
    %v11608 = vpop.permute.xlu0 %11607
    %11609 = vset.pattern.permute.xlu0 0
    %11610 = vperm.xlu0 %11609, %v10745
    %v11611 = vpop.permute.xlu0 %11610
    %11612 = vset.pattern.permute.xlu0 0
    %11613 = vperm.xlu0 %11612, %v10746
    %v11614 = vpop.permute.xlu0 %11613
    %11615 = vset.pattern.permute.xlu0 0
    %11616 = vperm.xlu0 %11615, %v10747
    %v11617 = vpop.permute.xlu0 %11616
    %11618 = vset.pattern.permute.xlu0 0
    %11619 = vperm.xlu0 %11618, %v10748
    %v11620 = vpop.permute.xlu0 %11619
    %11621 = vset.pattern.permute.xlu0 0
    %11622 = vperm.xlu0 %11621, %v10749
    %v11623 = vpop.permute.xlu0 %11622
    %11624 = vset.pattern.permute.xlu0 0
    %11625 = vperm.xlu0 %11624, %v10750
    %v11626 = vpop.permute.xlu0 %11625
    %11627 = vset.pattern.permute.xlu0 0
    %11628 = vperm.xlu0 %11627, %v10751
    %v11629 = vpop.permute.xlu0 %11628
    %11630 = vset.pattern.permute.xlu0 0
    %11631 = vperm.xlu0 %11630, %v10752
    %v11632 = vpop.permute.xlu0 %11631
    %11633 = vset.pattern.permute.xlu0 0
    %11634 = vperm.xlu0 %11633, %v10753
    %v11635 = vpop.permute.xlu0 %11634
    %11636 = vset.pattern.permute.xlu0 0
    %11637 = vperm.xlu0 %11636, %v10754
    %v11638 = vpop.permute.xlu0 %11637
    %11639 = vset.pattern.permute.xlu0 0
    %11640 = vperm.xlu0 %11639, %v10755
    %v11641 = vpop.permute.xlu0 %11640
    %11642 = vset.pattern.permute.xlu0 0
    %11643 = vperm.xlu0 %11642, %v10756
    %v11644 = vpop.permute.xlu0 %11643
    %11645 = vset.pattern.permute.xlu0 0
    %11646 = vperm.xlu0 %11645, %v10757
    %v11647 = vpop.permute.xlu0 %11646
    %11648 = vset.pattern.permute.xlu0 0
    %11649 = vperm.xlu0 %11648, %v10758
    %v11650 = vpop.permute.xlu0 %11649
    %11651 = vset.pattern.permute.xlu0 0
    %11652 = vperm.xlu0 %11651, %v10759
    %v11653 = vpop.permute.xlu0 %11652
    %11654 = vset.pattern.permute.xlu0 0
    %11655 = vperm.xlu0 %11654, %v10760
    %v11656 = vpop.permute.xlu0 %11655
    %11657 = vset.pattern.permute.xlu0 0
    %11658 = vperm.xlu0 %11657, %v10761
    %v11659 = vpop.permute.xlu0 %11658
    %11660 = vset.pattern.permute.xlu0 0
    %11661 = vperm.xlu0 %11660, %v10762
    %v11662 = vpop.permute.xlu0 %11661
    %11663 = vset.pattern.permute.xlu0 0
    %11664 = vperm.xlu0 %11663, %v10763
    %v11665 = vpop.permute.xlu0 %11664
    %11666 = vset.pattern.permute.xlu0 0
    %11667 = vperm.xlu0 %11666, %v10764
    %v11668 = vpop.permute.xlu0 %11667
    %11669 = vset.pattern.permute.xlu0 0
    %11670 = vperm.xlu0 %11669, %v10765
    %v11671 = vpop.permute.xlu0 %11670
    %11672 = vset.pattern.permute.xlu0 0
    %11673 = vperm.xlu0 %11672, %v10766
    %v11674 = vpop.permute.xlu0 %11673
    %11675 = vset.pattern.permute.xlu0 0
    %11676 = vperm.xlu0 %11675, %v10767
    %v11677 = vpop.permute.xlu0 %11676
    %11678 = vset.pattern.permute.xlu0 0
    %11679 = vperm.xlu0 %11678, %v10768
    %v11680 = vpop.permute.xlu0 %11679
    %11681 = vset.pattern.permute.xlu0 0
    %11682 = vperm.xlu0 %11681, %v10769
    %v11683 = vpop.permute.xlu0 %11682
    %11684 = vset.pattern.permute.xlu0 0
    %11685 = vperm.xlu0 %11684, %v10770
    %v11686 = vpop.permute.xlu0 %11685
    %11687 = vset.pattern.permute.xlu0 0
    %11688 = vperm.xlu0 %11687, %v10771
    %v11689 = vpop.permute.xlu0 %11688
    %11690 = vset.pattern.permute.xlu0 0
    %11691 = vperm.xlu0 %11690, %v10772
    %v11692 = vpop.permute.xlu0 %11691
    %11693 = vset.pattern.permute.xlu0 0
    %11694 = vperm.xlu0 %11693, %v10773
    %v11695 = vpop.permute.xlu0 %11694
    %11696 = vset.pattern.permute.xlu0 0
    %11697 = vperm.xlu0 %11696, %v10774
    %v11698 = vpop.permute.xlu0 %11697
    %11699 = vset.pattern.permute.xlu0 0
    %11700 = vperm.xlu0 %11699, %v10775
    %v11701 = vpop.permute.xlu0 %11700
    %11702 = vset.pattern.permute.xlu0 0
    %11703 = vperm.xlu0 %11702, %v10776
    %v11704 = vpop.permute.xlu0 %11703
    %11705 = vset.pattern.permute.xlu0 0
    %11706 = vperm.xlu0 %11705, %v10777
    %v11707 = vpop.permute.xlu0 %11706
    %11708 = vset.pattern.permute.xlu0 0
    %11709 = vperm.xlu0 %11708, %v10778
    %v11710 = vpop.permute.xlu0 %11709
    %11711 = vset.pattern.permute.xlu0 0
    %11712 = vperm.xlu0 %11711, %v10779
    %v11713 = vpop.permute.xlu0 %11712
    %11714 = vset.pattern.permute.xlu0 0
    %11715 = vperm.xlu0 %11714, %v10780
    %v11716 = vpop.permute.xlu0 %11715
    %11717 = vset.pattern.permute.xlu0 0
    %11718 = vperm.xlu0 %11717, %v10781
    %v11719 = vpop.permute.xlu0 %11718
    %11720 = vset.pattern.permute.xlu0 0
    %11721 = vperm.xlu0 %11720, %v10782
    %v11722 = vpop.permute.xlu0 %11721
    %11723 = vset.pattern.permute.xlu0 0
    %11724 = vperm.xlu0 %11723, %v10783
    %v11725 = vpop.permute.xlu0 %11724
    %11726 = vset.pattern.permute.xlu0 0
    %11727 = vperm.xlu0 %11726, %v10784
    %v11728 = vpop.permute.xlu0 %11727
    %11729 = vset.pattern.permute.xlu0 0
    %11730 = vperm.xlu0 %11729, %v10785
    %v11731 = vpop.permute.xlu0 %11730
    %11732 = vset.pattern.permute.xlu0 0
    %11733 = vperm.xlu0 %11732, %v10786
    %v11734 = vpop.permute.xlu0 %11733
    %11735 = vset.pattern.permute.xlu0 0
    %11736 = vperm.xlu0 %11735, %v10787
    %v11737 = vpop.permute.xlu0 %11736
    %11738 = vset.pattern.permute.xlu0 0
    %11739 = vperm.xlu0 %11738, %v10788
    %v11740 = vpop.permute.xlu0 %11739
    %11741 = vset.pattern.permute.xlu0 0
    %11742 = vperm.xlu0 %11741, %v10789
    %v11743 = vpop.permute.xlu0 %11742
    %11744 = vset.pattern.permute.xlu0 0
    %11745 = vperm.xlu0 %11744, %v10790
    %v11746 = vpop.permute.xlu0 %11745
    %11747 = vset.pattern.permute.xlu0 0
    %11748 = vperm.xlu0 %11747, %v10791
    %v11749 = vpop.permute.xlu0 %11748
    %11750 = vset.pattern.permute.xlu0 0
    %11751 = vperm.xlu0 %11750, %v10792
    %v11752 = vpop.permute.xlu0 %11751
    %11753 = vset.pattern.permute.xlu0 0
    %11754 = vperm.xlu0 %11753, %v10793
    %v11755 = vpop.permute.xlu0 %11754
    %11756 = vset.pattern.permute.xlu0 0
    %11757 = vperm.xlu0 %11756, %v10794
    %v11758 = vpop.permute.xlu0 %11757
    %11759 = vset.pattern.permute.xlu0 0
    %11760 = vperm.xlu0 %11759, %v10795
    %v11761 = vpop.permute.xlu0 %11760
    %11762 = vset.pattern.permute.xlu0 0
    %11763 = vperm.xlu0 %11762, %v10796
    %v11764 = vpop.permute.xlu0 %11763
    %11765 = vset.pattern.permute.xlu0 0
    %11766 = vperm.xlu0 %11765, %v10797
    %v11767 = vpop.permute.xlu0 %11766
    %11768 = vset.pattern.permute.xlu0 0
    %11769 = vperm.xlu0 %11768, %v10798
    %v11770 = vpop.permute.xlu0 %11769
    %11771 = vset.pattern.permute.xlu0 0
    %11772 = vperm.xlu0 %11771, %v10799
    %v11773 = vpop.permute.xlu0 %11772
    %11774 = vset.pattern.permute.xlu0 0
    %11775 = vperm.xlu0 %11774, %v10800
    %v11776 = vpop.permute.xlu0 %11775
    %11777 = vset.pattern.permute.xlu0 0
    %11778 = vperm.xlu0 %11777, %v10801
    %v11779 = vpop.permute.xlu0 %11778
    %11780 = vset.pattern.permute.xlu0 0
    %11781 = vperm.xlu0 %11780, %v10802
    %v11782 = vpop.permute.xlu0 %11781
    %11783 = vset.pattern.permute.xlu0 0
    %11784 = vperm.xlu0 %11783, %v10803
    %v11785 = vpop.permute.xlu0 %11784
    %11786 = vset.pattern.permute.xlu0 0
    %11787 = vperm.xlu0 %11786, %v10804
    %v11788 = vpop.permute.xlu0 %11787
    %11789 = vset.pattern.permute.xlu0 0
    %11790 = vperm.xlu0 %11789, %v10805
    %v11791 = vpop.permute.xlu0 %11790
    %11792 = vset.pattern.permute.xlu0 0
    %11793 = vperm.xlu0 %11792, %v10806
    %v11794 = vpop.permute.xlu0 %11793
    %11795 = vset.pattern.permute.xlu0 0
    %11796 = vperm.xlu0 %11795, %v10807
    %v11797 = vpop.permute.xlu0 %11796
    %11798 = vset.pattern.permute.xlu0 0
    %11799 = vperm.xlu0 %11798, %v10808
    %v11800 = vpop.permute.xlu0 %11799
    %11801 = vset.pattern.permute.xlu0 0
    %11802 = vperm.xlu0 %11801, %v10809
    %v11803 = vpop.permute.xlu0 %11802
    %11804 = vset.pattern.permute.xlu0 0
    %11805 = vperm.xlu0 %11804, %v10810
    %v11806 = vpop.permute.xlu0 %11805
    %11807 = vset.pattern.permute.xlu0 0
    %11808 = vperm.xlu0 %11807, %v10811
    %v11809 = vpop.permute.xlu0 %11808
    %11810 = vset.pattern.permute.xlu0 0
    %11811 = vperm.xlu0 %11810, %v10812
    %v11812 = vpop.permute.xlu0 %11811
    %11813 = vset.pattern.permute.xlu0 0
    %11814 = vperm.xlu0 %11813, %v10813
    %v11815 = vpop.permute.xlu0 %11814
    %11816 = vset.pattern.permute.xlu0 0
    %11817 = vperm.xlu0 %11816, %v10814
    %v11818 = vpop.permute.xlu0 %11817
    %11819 = vset.pattern.permute.xlu0 0
    %11820 = vperm.xlu0 %11819, %v10815
    %v11821 = vpop.permute.xlu0 %11820
    %11822 = vset.pattern.permute.xlu0 0
    %11823 = vperm.xlu0 %11822, %v10816
    %v11824 = vpop.permute.xlu0 %11823
    %11825 = vset.pattern.permute.xlu0 0
    %11826 = vperm.xlu0 %11825, %v10817
    %v11827 = vpop.permute.xlu0 %11826
    %11828 = vset.pattern.permute.xlu0 0
    %11829 = vperm.xlu0 %11828, %v10818
    %v11830 = vpop.permute.xlu0 %11829
    %11831 = vset.pattern.permute.xlu0 0
    %11832 = vperm.xlu0 %11831, %v10819
    %v11833 = vpop.permute.xlu0 %11832
    %11834 = vset.pattern.permute.xlu0 0
    %11835 = vperm.xlu0 %11834, %v10820
    %v11836 = vpop.permute.xlu0 %11835
    %11837 = vset.pattern.permute.xlu0 0
    %11838 = vperm.xlu0 %11837, %v10821
    %v11839 = vpop.permute.xlu0 %11838
    %11840 = vset.pattern.permute.xlu0 0
    %11841 = vperm.xlu0 %11840, %v10822
    %v11842 = vpop.permute.xlu0 %11841
    %11843 = vset.pattern.permute.xlu0 0
    %11844 = vperm.xlu0 %11843, %v10823
    %v11845 = vpop.permute.xlu0 %11844
    %11846 = vset.pattern.permute.xlu0 0
    %11847 = vperm.xlu0 %11846, %v10824
    %v11848 = vpop.permute.xlu0 %11847
    %v11849 = vlaneseq
    %v11850 = vshrl.u32 %v11849, 7
    %v11851 = vsub.s32 %v2088, %v11850
    %v11852 = vrot.slane %v11083, %v11851
    %v11853 = vlaneseq
    %v11854 = vshrl.u32 %v11853, 7
    %v11855 = vsub.s32 %v2093, %v11854
    %v11856 = vrot.slane %v11086, %v11855
    %v11857 = vsel %vm2098, %v11856, %v11852
    %v11858 = vlaneseq
    %v11859 = vshrl.u32 %v11858, 7
    %v11860 = vsub.s32 %v2100, %v11859
    %v11861 = vrot.slane %v11089, %v11860
    %v11862 = vsel %vm2105, %v11861, %v11857
    %v11863 = vlaneseq
    %v11864 = vshrl.u32 %v11863, 7
    %v11865 = vsub.s32 %v2107, %v11864
    %v11866 = vrot.slane %v11092, %v11865
    %v11867 = vsel %vm2112, %v11866, %v11862
    %v11868 = vlaneseq
    %v11869 = vshrl.u32 %v11868, 7
    %v11870 = vsub.s32 %v2114, %v11869
    %v11871 = vrot.slane %v11095, %v11870
    %v11872 = vsel %vm2119, %v11871, %v11867
    %v11873 = vlaneseq
    %v11874 = vshrl.u32 %v11873, 7
    %v11875 = vsub.s32 %v2121, %v11874
    %v11876 = vrot.slane %v11098, %v11875
    %v11877 = vsel %vm2126, %v11876, %v11872
    %v11878 = vlaneseq
    %v11879 = vshrl.u32 %v11878, 7
    %v11880 = vsub.s32 %v2128, %v11879
    %v11881 = vrot.slane %v11101, %v11880
    %v11882 = vsel %vm2133, %v11881, %v11877
    %v11883 = vlaneseq
    %v11884 = vshrl.u32 %v11883, 7
    %v11885 = vsub.s32 %v2135, %v11884
    %v11886 = vrot.slane %v11104, %v11885
    %v11887 = vsel %vm2140, %v11886, %v11882
    %v11888 = vlaneseq
    %v11889 = vshrl.u32 %v11888, 7
    %v11890 = vsub.s32 %v2142, %v11889
    %v11891 = vrot.slane %v11107, %v11890
    %v11892 = vsel %vm2147, %v11891, %v11887
    %v11893 = vlaneseq
    %v11894 = vshrl.u32 %v11893, 7
    %v11895 = vsub.s32 %v2149, %v11894
    %v11896 = vrot.slane %v11110, %v11895
    %v11897 = vsel %vm2154, %v11896, %v11892
    %v11898 = vlaneseq
    %v11899 = vshrl.u32 %v11898, 7
    %v11900 = vsub.s32 %v2156, %v11899
    %v11901 = vrot.slane %v11113, %v11900
    %v11902 = vsel %vm2161, %v11901, %v11897
    %v11903 = vlaneseq
    %v11904 = vshrl.u32 %v11903, 7
    %v11905 = vsub.s32 %v2163, %v11904
    %v11906 = vrot.slane %v11116, %v11905
    %v11907 = vsel %vm2168, %v11906, %v11902
    %v11908 = vlaneseq
    %v11909 = vshrl.u32 %v11908, 7
    %v11910 = vsub.s32 %v2170, %v11909
    %v11911 = vrot.slane %v11119, %v11910
    %v11912 = vsel %vm2175, %v11911, %v11907
    %v11913 = vlaneseq
    %v11914 = vshrl.u32 %v11913, 7
    %v11915 = vsub.s32 %v2177, %v11914
    %v11916 = vrot.slane %v11122, %v11915
    %v11917 = vsel %vm2182, %v11916, %v11912
    %v11918 = vlaneseq
    %v11919 = vshrl.u32 %v11918, 7
    %v11920 = vsub.s32 %v2184, %v11919
    %v11921 = vrot.slane %v11125, %v11920
    %v11922 = vsel %vm2189, %v11921, %v11917
    %v11923 = vlaneseq
    %v11924 = vshrl.u32 %v11923, 7
    %v11925 = vsub.s32 %v2191, %v11924
    %v11926 = vrot.slane %v11128, %v11925
    %v11927 = vsel %vm2196, %v11926, %v11922
    %v11928 = vlaneseq
    %v11929 = vshrl.u32 %v11928, 7
    %v11930 = vsub.s32 %v2088, %v11929
    %v11931 = vrot.slane %v11131, %v11930
    %v11932 = vlaneseq
    %v11933 = vshrl.u32 %v11932, 7
    %v11934 = vsub.s32 %v2093, %v11933
    %v11935 = vrot.slane %v11134, %v11934
    %v11936 = vsel %vm2098, %v11935, %v11931
    %v11937 = vlaneseq
    %v11938 = vshrl.u32 %v11937, 7
    %v11939 = vsub.s32 %v2100, %v11938
    %v11940 = vrot.slane %v11137, %v11939
    %v11941 = vsel %vm2105, %v11940, %v11936
    %v11942 = vlaneseq
    %v11943 = vshrl.u32 %v11942, 7
    %v11944 = vsub.s32 %v2107, %v11943
    %v11945 = vrot.slane %v11140, %v11944
    %v11946 = vsel %vm2112, %v11945, %v11941
    %v11947 = vlaneseq
    %v11948 = vshrl.u32 %v11947, 7
    %v11949 = vsub.s32 %v2114, %v11948
    %v11950 = vrot.slane %v11143, %v11949
    %v11951 = vsel %vm2119, %v11950, %v11946
    %v11952 = vlaneseq
    %v11953 = vshrl.u32 %v11952, 7
    %v11954 = vsub.s32 %v2121, %v11953
    %v11955 = vrot.slane %v11146, %v11954
    %v11956 = vsel %vm2126, %v11955, %v11951
    %v11957 = vlaneseq
    %v11958 = vshrl.u32 %v11957, 7
    %v11959 = vsub.s32 %v2128, %v11958
    %v11960 = vrot.slane %v11149, %v11959
    %v11961 = vsel %vm2133, %v11960, %v11956
    %v11962 = vlaneseq
    %v11963 = vshrl.u32 %v11962, 7
    %v11964 = vsub.s32 %v2135, %v11963
    %v11965 = vrot.slane %v11152, %v11964
    %v11966 = vsel %vm2140, %v11965, %v11961
    %v11967 = vlaneseq
    %v11968 = vshrl.u32 %v11967, 7
    %v11969 = vsub.s32 %v2142, %v11968
    %v11970 = vrot.slane %v11155, %v11969
    %v11971 = vsel %vm2147, %v11970, %v11966
    %v11972 = vlaneseq
    %v11973 = vshrl.u32 %v11972, 7
    %v11974 = vsub.s32 %v2149, %v11973
    %v11975 = vrot.slane %v11158, %v11974
    %v11976 = vsel %vm2154, %v11975, %v11971
    %v11977 = vlaneseq
    %v11978 = vshrl.u32 %v11977, 7
    %v11979 = vsub.s32 %v2156, %v11978
    %v11980 = vrot.slane %v11161, %v11979
    %v11981 = vsel %vm2161, %v11980, %v11976
    %v11982 = vlaneseq
    %v11983 = vshrl.u32 %v11982, 7
    %v11984 = vsub.s32 %v2163, %v11983
    %v11985 = vrot.slane %v11164, %v11984
    %v11986 = vsel %vm2168, %v11985, %v11981
    %v11987 = vlaneseq
    %v11988 = vshrl.u32 %v11987, 7
    %v11989 = vsub.s32 %v2170, %v11988
    %v11990 = vrot.slane %v11167, %v11989
    %v11991 = vsel %vm2175, %v11990, %v11986
    %v11992 = vlaneseq
    %v11993 = vshrl.u32 %v11992, 7
    %v11994 = vsub.s32 %v2177, %v11993
    %v11995 = vrot.slane %v11170, %v11994
    %v11996 = vsel %vm2182, %v11995, %v11991
    %v11997 = vlaneseq
    %v11998 = vshrl.u32 %v11997, 7
    %v11999 = vsub.s32 %v2184, %v11998
    %v12000 = vrot.slane %v11173, %v11999
    %v12001 = vsel %vm2189, %v12000, %v11996
    %v12002 = vlaneseq
    %v12003 = vshrl.u32 %v12002, 7
    %v12004 = vsub.s32 %v2191, %v12003
    %v12005 = vrot.slane %v11176, %v12004
    %v12006 = vsel %vm2196, %v12005, %v12001
    %v12007 = vlaneseq
    %v12008 = vshrl.u32 %v12007, 7
    %v12009 = vsub.s32 %v2088, %v12008
    %v12010 = vrot.slane %v11179, %v12009
    %v12011 = vlaneseq
    %v12012 = vshrl.u32 %v12011, 7
    %v12013 = vsub.s32 %v2093, %v12012
    %v12014 = vrot.slane %v11182, %v12013
    %v12015 = vsel %vm2098, %v12014, %v12010
    %v12016 = vlaneseq
    %v12017 = vshrl.u32 %v12016, 7
    %v12018 = vsub.s32 %v2100, %v12017
    %v12019 = vrot.slane %v11185, %v12018
    %v12020 = vsel %vm2105, %v12019, %v12015
    %v12021 = vlaneseq
    %v12022 = vshrl.u32 %v12021, 7
    %v12023 = vsub.s32 %v2107, %v12022
    %v12024 = vrot.slane %v11188, %v12023
    %v12025 = vsel %vm2112, %v12024, %v12020
    %v12026 = vlaneseq
    %v12027 = vshrl.u32 %v12026, 7
    %v12028 = vsub.s32 %v2114, %v12027
    %v12029 = vrot.slane %v11191, %v12028
    %v12030 = vsel %vm2119, %v12029, %v12025
    %v12031 = vlaneseq
    %v12032 = vshrl.u32 %v12031, 7
    %v12033 = vsub.s32 %v2121, %v12032
    %v12034 = vrot.slane %v11194, %v12033
    %v12035 = vsel %vm2126, %v12034, %v12030
    %v12036 = vlaneseq
    %v12037 = vshrl.u32 %v12036, 7
    %v12038 = vsub.s32 %v2128, %v12037
    %v12039 = vrot.slane %v11197, %v12038
    %v12040 = vsel %vm2133, %v12039, %v12035
    %v12041 = vlaneseq
    %v12042 = vshrl.u32 %v12041, 7
    %v12043 = vsub.s32 %v2135, %v12042
    %v12044 = vrot.slane %v11200, %v12043
    %v12045 = vsel %vm2140, %v12044, %v12040
    %v12046 = vlaneseq
    %v12047 = vshrl.u32 %v12046, 7
    %v12048 = vsub.s32 %v2142, %v12047
    %v12049 = vrot.slane %v11203, %v12048
    %v12050 = vsel %vm2147, %v12049, %v12045
    %v12051 = vlaneseq
    %v12052 = vshrl.u32 %v12051, 7
    %v12053 = vsub.s32 %v2149, %v12052
    %v12054 = vrot.slane %v11206, %v12053
    %v12055 = vsel %vm2154, %v12054, %v12050
    %v12056 = vlaneseq
    %v12057 = vshrl.u32 %v12056, 7
    %v12058 = vsub.s32 %v2156, %v12057
    %v12059 = vrot.slane %v11209, %v12058
    %v12060 = vsel %vm2161, %v12059, %v12055
    %v12061 = vlaneseq
    %v12062 = vshrl.u32 %v12061, 7
    %v12063 = vsub.s32 %v2163, %v12062
    %v12064 = vrot.slane %v11212, %v12063
    %v12065 = vsel %vm2168, %v12064, %v12060
    %v12066 = vlaneseq
    %v12067 = vshrl.u32 %v12066, 7
    %v12068 = vsub.s32 %v2170, %v12067
    %v12069 = vrot.slane %v11215, %v12068
    %v12070 = vsel %vm2175, %v12069, %v12065
    %v12071 = vlaneseq
    %v12072 = vshrl.u32 %v12071, 7
    %v12073 = vsub.s32 %v2177, %v12072
    %v12074 = vrot.slane %v11218, %v12073
    %v12075 = vsel %vm2182, %v12074, %v12070
    %v12076 = vlaneseq
    %v12077 = vshrl.u32 %v12076, 7
    %v12078 = vsub.s32 %v2184, %v12077
    %v12079 = vrot.slane %v11221, %v12078
    %v12080 = vsel %vm2189, %v12079, %v12075
    %v12081 = vlaneseq
    %v12082 = vshrl.u32 %v12081, 7
    %v12083 = vsub.s32 %v2191, %v12082
    %v12084 = vrot.slane %v11224, %v12083
    %v12085 = vsel %vm2196, %v12084, %v12080
    %v12086 = vlaneseq
    %v12087 = vshrl.u32 %v12086, 7
    %v12088 = vsub.s32 %v2088, %v12087
    %v12089 = vrot.slane %v11227, %v12088
    %v12090 = vlaneseq
    %v12091 = vshrl.u32 %v12090, 7
    %v12092 = vsub.s32 %v2093, %v12091
    %v12093 = vrot.slane %v11230, %v12092
    %v12094 = vsel %vm2098, %v12093, %v12089
    %v12095 = vlaneseq
    %v12096 = vshrl.u32 %v12095, 7
    %v12097 = vsub.s32 %v2100, %v12096
    %v12098 = vrot.slane %v11233, %v12097
    %v12099 = vsel %vm2105, %v12098, %v12094
    %v12100 = vlaneseq
    %v12101 = vshrl.u32 %v12100, 7
    %v12102 = vsub.s32 %v2107, %v12101
    %v12103 = vrot.slane %v11236, %v12102
    %v12104 = vsel %vm2112, %v12103, %v12099
    %v12105 = vlaneseq
    %v12106 = vshrl.u32 %v12105, 7
    %v12107 = vsub.s32 %v2114, %v12106
    %v12108 = vrot.slane %v11239, %v12107
    %v12109 = vsel %vm2119, %v12108, %v12104
    %v12110 = vlaneseq
    %v12111 = vshrl.u32 %v12110, 7
    %v12112 = vsub.s32 %v2121, %v12111
    %v12113 = vrot.slane %v11242, %v12112
    %v12114 = vsel %vm2126, %v12113, %v12109
    %v12115 = vlaneseq
    %v12116 = vshrl.u32 %v12115, 7
    %v12117 = vsub.s32 %v2128, %v12116
    %v12118 = vrot.slane %v11245, %v12117
    %v12119 = vsel %vm2133, %v12118, %v12114
    %v12120 = vlaneseq
    %v12121 = vshrl.u32 %v12120, 7
    %v12122 = vsub.s32 %v2135, %v12121
    %v12123 = vrot.slane %v11248, %v12122
    %v12124 = vsel %vm2140, %v12123, %v12119
    %v12125 = vlaneseq
    %v12126 = vshrl.u32 %v12125, 7
    %v12127 = vsub.s32 %v2142, %v12126
    %v12128 = vrot.slane %v11251, %v12127
    %v12129 = vsel %vm2147, %v12128, %v12124
    %v12130 = vlaneseq
    %v12131 = vshrl.u32 %v12130, 7
    %v12132 = vsub.s32 %v2149, %v12131
    %v12133 = vrot.slane %v11254, %v12132
    %v12134 = vsel %vm2154, %v12133, %v12129
    %v12135 = vlaneseq
    %v12136 = vshrl.u32 %v12135, 7
    %v12137 = vsub.s32 %v2156, %v12136
    %v12138 = vrot.slane %v11257, %v12137
    %v12139 = vsel %vm2161, %v12138, %v12134
    %v12140 = vlaneseq
    %v12141 = vshrl.u32 %v12140, 7
    %v12142 = vsub.s32 %v2163, %v12141
    %v12143 = vrot.slane %v11260, %v12142
    %v12144 = vsel %vm2168, %v12143, %v12139
    %v12145 = vlaneseq
    %v12146 = vshrl.u32 %v12145, 7
    %v12147 = vsub.s32 %v2170, %v12146
    %v12148 = vrot.slane %v11263, %v12147
    %v12149 = vsel %vm2175, %v12148, %v12144
    %v12150 = vlaneseq
    %v12151 = vshrl.u32 %v12150, 7
    %v12152 = vsub.s32 %v2177, %v12151
    %v12153 = vrot.slane %v11266, %v12152
    %v12154 = vsel %vm2182, %v12153, %v12149
    %v12155 = vlaneseq
    %v12156 = vshrl.u32 %v12155, 7
    %v12157 = vsub.s32 %v2184, %v12156
    %v12158 = vrot.slane %v11269, %v12157
    %v12159 = vsel %vm2189, %v12158, %v12154
    %v12160 = vlaneseq
    %v12161 = vshrl.u32 %v12160, 7
    %v12162 = vsub.s32 %v2191, %v12161
    %v12163 = vrot.slane %v11272, %v12162
    %v12164 = vsel %vm2196, %v12163, %v12159
    %v12165 = vlaneseq
    %v12166 = vshrl.u32 %v12165, 7
    %v12167 = vsub.s32 %v2088, %v12166
    %v12168 = vrot.slane %v11275, %v12167
    %v12169 = vlaneseq
    %v12170 = vshrl.u32 %v12169, 7
    %v12171 = vsub.s32 %v2093, %v12170
    %v12172 = vrot.slane %v11278, %v12171
    %v12173 = vsel %vm2098, %v12172, %v12168
    %v12174 = vlaneseq
    %v12175 = vshrl.u32 %v12174, 7
    %v12176 = vsub.s32 %v2100, %v12175
    %v12177 = vrot.slane %v11281, %v12176
    %v12178 = vsel %vm2105, %v12177, %v12173
    %v12179 = vlaneseq
    %v12180 = vshrl.u32 %v12179, 7
    %v12181 = vsub.s32 %v2107, %v12180
    %v12182 = vrot.slane %v11284, %v12181
    %v12183 = vsel %vm2112, %v12182, %v12178
    %v12184 = vlaneseq
    %v12185 = vshrl.u32 %v12184, 7
    %v12186 = vsub.s32 %v2114, %v12185
    %v12187 = vrot.slane %v11287, %v12186
    %v12188 = vsel %vm2119, %v12187, %v12183
    %v12189 = vlaneseq
    %v12190 = vshrl.u32 %v12189, 7
    %v12191 = vsub.s32 %v2121, %v12190
    %v12192 = vrot.slane %v11290, %v12191
    %v12193 = vsel %vm2126, %v12192, %v12188
    %v12194 = vlaneseq
    %v12195 = vshrl.u32 %v12194, 7
    %v12196 = vsub.s32 %v2128, %v12195
    %v12197 = vrot.slane %v11293, %v12196
    %v12198 = vsel %vm2133, %v12197, %v12193
    %v12199 = vlaneseq
    %v12200 = vshrl.u32 %v12199, 7
    %v12201 = vsub.s32 %v2135, %v12200
    %v12202 = vrot.slane %v11296, %v12201
    %v12203 = vsel %vm2140, %v12202, %v12198
    %v12204 = vlaneseq
    %v12205 = vshrl.u32 %v12204, 7
    %v12206 = vsub.s32 %v2142, %v12205
    %v12207 = vrot.slane %v11299, %v12206
    %v12208 = vsel %vm2147, %v12207, %v12203
    %v12209 = vlaneseq
    %v12210 = vshrl.u32 %v12209, 7
    %v12211 = vsub.s32 %v2149, %v12210
    %v12212 = vrot.slane %v11302, %v12211
    %v12213 = vsel %vm2154, %v12212, %v12208
    %v12214 = vlaneseq
    %v12215 = vshrl.u32 %v12214, 7
    %v12216 = vsub.s32 %v2156, %v12215
    %v12217 = vrot.slane %v11305, %v12216
    %v12218 = vsel %vm2161, %v12217, %v12213
    %v12219 = vlaneseq
    %v12220 = vshrl.u32 %v12219, 7
    %v12221 = vsub.s32 %v2163, %v12220
    %v12222 = vrot.slane %v11308, %v12221
    %v12223 = vsel %vm2168, %v12222, %v12218
    %v12224 = vlaneseq
    %v12225 = vshrl.u32 %v12224, 7
    %v12226 = vsub.s32 %v2170, %v12225
    %v12227 = vrot.slane %v11311, %v12226
    %v12228 = vsel %vm2175, %v12227, %v12223
    %v12229 = vlaneseq
    %v12230 = vshrl.u32 %v12229, 7
    %v12231 = vsub.s32 %v2177, %v12230
    %v12232 = vrot.slane %v11314, %v12231
    %v12233 = vsel %vm2182, %v12232, %v12228
    %v12234 = vlaneseq
    %v12235 = vshrl.u32 %v12234, 7
    %v12236 = vsub.s32 %v2184, %v12235
    %v12237 = vrot.slane %v11317, %v12236
    %v12238 = vsel %vm2189, %v12237, %v12233
    %v12239 = vlaneseq
    %v12240 = vshrl.u32 %v12239, 7
    %v12241 = vsub.s32 %v2191, %v12240
    %v12242 = vrot.slane %v11320, %v12241
    %v12243 = vsel %vm2196, %v12242, %v12238
    %v12244 = vlaneseq
    %v12245 = vshrl.u32 %v12244, 7
    %v12246 = vsub.s32 %v2088, %v12245
    %v12247 = vrot.slane %v11323, %v12246
    %v12248 = vlaneseq
    %v12249 = vshrl.u32 %v12248, 7
    %v12250 = vsub.s32 %v2093, %v12249
    %v12251 = vrot.slane %v11326, %v12250
    %v12252 = vsel %vm2098, %v12251, %v12247
    %v12253 = vlaneseq
    %v12254 = vshrl.u32 %v12253, 7
    %v12255 = vsub.s32 %v2100, %v12254
    %v12256 = vrot.slane %v11329, %v12255
    %v12257 = vsel %vm2105, %v12256, %v12252
    %v12258 = vlaneseq
    %v12259 = vshrl.u32 %v12258, 7
    %v12260 = vsub.s32 %v2107, %v12259
    %v12261 = vrot.slane %v11332, %v12260
    %v12262 = vsel %vm2112, %v12261, %v12257
    %v12263 = vlaneseq
    %v12264 = vshrl.u32 %v12263, 7
    %v12265 = vsub.s32 %v2114, %v12264
    %v12266 = vrot.slane %v11335, %v12265
    %v12267 = vsel %vm2119, %v12266, %v12262
    %v12268 = vlaneseq
    %v12269 = vshrl.u32 %v12268, 7
    %v12270 = vsub.s32 %v2121, %v12269
    %v12271 = vrot.slane %v11338, %v12270
    %v12272 = vsel %vm2126, %v12271, %v12267
    %v12273 = vlaneseq
    %v12274 = vshrl.u32 %v12273, 7
    %v12275 = vsub.s32 %v2128, %v12274
    %v12276 = vrot.slane %v11341, %v12275
    %v12277 = vsel %vm2133, %v12276, %v12272
    %v12278 = vlaneseq
    %v12279 = vshrl.u32 %v12278, 7
    %v12280 = vsub.s32 %v2135, %v12279
    %v12281 = vrot.slane %v11344, %v12280
    %v12282 = vsel %vm2140, %v12281, %v12277
    %v12283 = vlaneseq
    %v12284 = vshrl.u32 %v12283, 7
    %v12285 = vsub.s32 %v2142, %v12284
    %v12286 = vrot.slane %v11347, %v12285
    %v12287 = vsel %vm2147, %v12286, %v12282
    %v12288 = vlaneseq
    %v12289 = vshrl.u32 %v12288, 7
    %v12290 = vsub.s32 %v2149, %v12289
    %v12291 = vrot.slane %v11350, %v12290
    %v12292 = vsel %vm2154, %v12291, %v12287
    %v12293 = vlaneseq
    %v12294 = vshrl.u32 %v12293, 7
    %v12295 = vsub.s32 %v2156, %v12294
    %v12296 = vrot.slane %v11353, %v12295
    %v12297 = vsel %vm2161, %v12296, %v12292
    %v12298 = vlaneseq
    %v12299 = vshrl.u32 %v12298, 7
    %v12300 = vsub.s32 %v2163, %v12299
    %v12301 = vrot.slane %v11356, %v12300
    %v12302 = vsel %vm2168, %v12301, %v12297
    %v12303 = vlaneseq
    %v12304 = vshrl.u32 %v12303, 7
    %v12305 = vsub.s32 %v2170, %v12304
    %v12306 = vrot.slane %v11359, %v12305
    %v12307 = vsel %vm2175, %v12306, %v12302
    %v12308 = vlaneseq
    %v12309 = vshrl.u32 %v12308, 7
    %v12310 = vsub.s32 %v2177, %v12309
    %v12311 = vrot.slane %v11362, %v12310
    %v12312 = vsel %vm2182, %v12311, %v12307
    %v12313 = vlaneseq
    %v12314 = vshrl.u32 %v12313, 7
    %v12315 = vsub.s32 %v2184, %v12314
    %v12316 = vrot.slane %v11365, %v12315
    %v12317 = vsel %vm2189, %v12316, %v12312
    %v12318 = vlaneseq
    %v12319 = vshrl.u32 %v12318, 7
    %v12320 = vsub.s32 %v2191, %v12319
    %v12321 = vrot.slane %v11368, %v12320
    %v12322 = vsel %vm2196, %v12321, %v12317
    %v12323 = vlaneseq
    %v12324 = vshrl.u32 %v12323, 7
    %v12325 = vsub.s32 %v2088, %v12324
    %v12326 = vrot.slane %v11371, %v12325
    %v12327 = vlaneseq
    %v12328 = vshrl.u32 %v12327, 7
    %v12329 = vsub.s32 %v2093, %v12328
    %v12330 = vrot.slane %v11374, %v12329
    %v12331 = vsel %vm2098, %v12330, %v12326
    %v12332 = vlaneseq
    %v12333 = vshrl.u32 %v12332, 7
    %v12334 = vsub.s32 %v2100, %v12333
    %v12335 = vrot.slane %v11377, %v12334
    %v12336 = vsel %vm2105, %v12335, %v12331
    %v12337 = vlaneseq
    %v12338 = vshrl.u32 %v12337, 7
    %v12339 = vsub.s32 %v2107, %v12338
    %v12340 = vrot.slane %v11380, %v12339
    %v12341 = vsel %vm2112, %v12340, %v12336
    %v12342 = vlaneseq
    %v12343 = vshrl.u32 %v12342, 7
    %v12344 = vsub.s32 %v2114, %v12343
    %v12345 = vrot.slane %v11383, %v12344
    %v12346 = vsel %vm2119, %v12345, %v12341
    %v12347 = vlaneseq
    %v12348 = vshrl.u32 %v12347, 7
    %v12349 = vsub.s32 %v2121, %v12348
    %v12350 = vrot.slane %v11386, %v12349
    %v12351 = vsel %vm2126, %v12350, %v12346
    %v12352 = vlaneseq
    %v12353 = vshrl.u32 %v12352, 7
    %v12354 = vsub.s32 %v2128, %v12353
    %v12355 = vrot.slane %v11389, %v12354
    %v12356 = vsel %vm2133, %v12355, %v12351
    %v12357 = vlaneseq
    %v12358 = vshrl.u32 %v12357, 7
    %v12359 = vsub.s32 %v2135, %v12358
    %v12360 = vrot.slane %v11392, %v12359
    %v12361 = vsel %vm2140, %v12360, %v12356
    %v12362 = vlaneseq
    %v12363 = vshrl.u32 %v12362, 7
    %v12364 = vsub.s32 %v2142, %v12363
    %v12365 = vrot.slane %v11395, %v12364
    %v12366 = vsel %vm2147, %v12365, %v12361
    %v12367 = vlaneseq
    %v12368 = vshrl.u32 %v12367, 7
    %v12369 = vsub.s32 %v2149, %v12368
    %v12370 = vrot.slane %v11398, %v12369
    %v12371 = vsel %vm2154, %v12370, %v12366
    %v12372 = vlaneseq
    %v12373 = vshrl.u32 %v12372, 7
    %v12374 = vsub.s32 %v2156, %v12373
    %v12375 = vrot.slane %v11401, %v12374
    %v12376 = vsel %vm2161, %v12375, %v12371
    %v12377 = vlaneseq
    %v12378 = vshrl.u32 %v12377, 7
    %v12379 = vsub.s32 %v2163, %v12378
    %v12380 = vrot.slane %v11404, %v12379
    %v12381 = vsel %vm2168, %v12380, %v12376
    %v12382 = vlaneseq
    %v12383 = vshrl.u32 %v12382, 7
    %v12384 = vsub.s32 %v2170, %v12383
    %v12385 = vrot.slane %v11407, %v12384
    %v12386 = vsel %vm2175, %v12385, %v12381
    %v12387 = vlaneseq
    %v12388 = vshrl.u32 %v12387, 7
    %v12389 = vsub.s32 %v2177, %v12388
    %v12390 = vrot.slane %v11410, %v12389
    %v12391 = vsel %vm2182, %v12390, %v12386
    %v12392 = vlaneseq
    %v12393 = vshrl.u32 %v12392, 7
    %v12394 = vsub.s32 %v2184, %v12393
    %v12395 = vrot.slane %v11413, %v12394
    %v12396 = vsel %vm2189, %v12395, %v12391
    %v12397 = vlaneseq
    %v12398 = vshrl.u32 %v12397, 7
    %v12399 = vsub.s32 %v2191, %v12398
    %v12400 = vrot.slane %v11416, %v12399
    %v12401 = vsel %vm2196, %v12400, %v12396
    %v12402 = vlaneseq
    %v12403 = vshrl.u32 %v12402, 7
    %v12404 = vsub.s32 %v2088, %v12403
    %v12405 = vrot.slane %v11419, %v12404
    %v12406 = vlaneseq
    %v12407 = vshrl.u32 %v12406, 7
    %v12408 = vsub.s32 %v2093, %v12407
    %v12409 = vrot.slane %v11422, %v12408
    %v12410 = vsel %vm2098, %v12409, %v12405
    %v12411 = vlaneseq
    %v12412 = vshrl.u32 %v12411, 7
    %v12413 = vsub.s32 %v2100, %v12412
    %v12414 = vrot.slane %v11425, %v12413
    %v12415 = vsel %vm2105, %v12414, %v12410
    %v12416 = vlaneseq
    %v12417 = vshrl.u32 %v12416, 7
    %v12418 = vsub.s32 %v2107, %v12417
    %v12419 = vrot.slane %v11428, %v12418
    %v12420 = vsel %vm2112, %v12419, %v12415
    %v12421 = vlaneseq
    %v12422 = vshrl.u32 %v12421, 7
    %v12423 = vsub.s32 %v2114, %v12422
    %v12424 = vrot.slane %v11431, %v12423
    %v12425 = vsel %vm2119, %v12424, %v12420
    %v12426 = vlaneseq
    %v12427 = vshrl.u32 %v12426, 7
    %v12428 = vsub.s32 %v2121, %v12427
    %v12429 = vrot.slane %v11434, %v12428
    %v12430 = vsel %vm2126, %v12429, %v12425
    %v12431 = vlaneseq
    %v12432 = vshrl.u32 %v12431, 7
    %v12433 = vsub.s32 %v2128, %v12432
    %v12434 = vrot.slane %v11437, %v12433
    %v12435 = vsel %vm2133, %v12434, %v12430
    %v12436 = vlaneseq
    %v12437 = vshrl.u32 %v12436, 7
    %v12438 = vsub.s32 %v2135, %v12437
    %v12439 = vrot.slane %v11440, %v12438
    %v12440 = vsel %vm2140, %v12439, %v12435
    %v12441 = vlaneseq
    %v12442 = vshrl.u32 %v12441, 7
    %v12443 = vsub.s32 %v2142, %v12442
    %v12444 = vrot.slane %v11443, %v12443
    %v12445 = vsel %vm2147, %v12444, %v12440
    %v12446 = vlaneseq
    %v12447 = vshrl.u32 %v12446, 7
    %v12448 = vsub.s32 %v2149, %v12447
    %v12449 = vrot.slane %v11446, %v12448
    %v12450 = vsel %vm2154, %v12449, %v12445
    %v12451 = vlaneseq
    %v12452 = vshrl.u32 %v12451, 7
    %v12453 = vsub.s32 %v2156, %v12452
    %v12454 = vrot.slane %v11449, %v12453
    %v12455 = vsel %vm2161, %v12454, %v12450
    %v12456 = vlaneseq
    %v12457 = vshrl.u32 %v12456, 7
    %v12458 = vsub.s32 %v2163, %v12457
    %v12459 = vrot.slane %v11452, %v12458
    %v12460 = vsel %vm2168, %v12459, %v12455
    %v12461 = vlaneseq
    %v12462 = vshrl.u32 %v12461, 7
    %v12463 = vsub.s32 %v2170, %v12462
    %v12464 = vrot.slane %v11455, %v12463
    %v12465 = vsel %vm2175, %v12464, %v12460
    %v12466 = vlaneseq
    %v12467 = vshrl.u32 %v12466, 7
    %v12468 = vsub.s32 %v2177, %v12467
    %v12469 = vrot.slane %v11458, %v12468
    %v12470 = vsel %vm2182, %v12469, %v12465
    %v12471 = vlaneseq
    %v12472 = vshrl.u32 %v12471, 7
    %v12473 = vsub.s32 %v2184, %v12472
    %v12474 = vrot.slane %v11461, %v12473
    %v12475 = vsel %vm2189, %v12474, %v12470
    %v12476 = vlaneseq
    %v12477 = vshrl.u32 %v12476, 7
    %v12478 = vsub.s32 %v2191, %v12477
    %v12479 = vrot.slane %v11464, %v12478
    %v12480 = vsel %vm2196, %v12479, %v12475
    %v12481 = vlaneseq
    %v12482 = vshrl.u32 %v12481, 7
    %v12483 = vsub.s32 %v2088, %v12482
    %v12484 = vrot.slane %v11467, %v12483
    %v12485 = vlaneseq
    %v12486 = vshrl.u32 %v12485, 7
    %v12487 = vsub.s32 %v2093, %v12486
    %v12488 = vrot.slane %v11470, %v12487
    %v12489 = vsel %vm2098, %v12488, %v12484
    %v12490 = vlaneseq
    %v12491 = vshrl.u32 %v12490, 7
    %v12492 = vsub.s32 %v2100, %v12491
    %v12493 = vrot.slane %v11473, %v12492
    %v12494 = vsel %vm2105, %v12493, %v12489
    %v12495 = vlaneseq
    %v12496 = vshrl.u32 %v12495, 7
    %v12497 = vsub.s32 %v2107, %v12496
    %v12498 = vrot.slane %v11476, %v12497
    %v12499 = vsel %vm2112, %v12498, %v12494
    %v12500 = vlaneseq
    %v12501 = vshrl.u32 %v12500, 7
    %v12502 = vsub.s32 %v2114, %v12501
    %v12503 = vrot.slane %v11479, %v12502
    %v12504 = vsel %vm2119, %v12503, %v12499
    %v12505 = vlaneseq
    %v12506 = vshrl.u32 %v12505, 7
    %v12507 = vsub.s32 %v2121, %v12506
    %v12508 = vrot.slane %v11482, %v12507
    %v12509 = vsel %vm2126, %v12508, %v12504
    %v12510 = vlaneseq
    %v12511 = vshrl.u32 %v12510, 7
    %v12512 = vsub.s32 %v2128, %v12511
    %v12513 = vrot.slane %v11485, %v12512
    %v12514 = vsel %vm2133, %v12513, %v12509
    %v12515 = vlaneseq
    %v12516 = vshrl.u32 %v12515, 7
    %v12517 = vsub.s32 %v2135, %v12516
    %v12518 = vrot.slane %v11488, %v12517
    %v12519 = vsel %vm2140, %v12518, %v12514
    %v12520 = vlaneseq
    %v12521 = vshrl.u32 %v12520, 7
    %v12522 = vsub.s32 %v2142, %v12521
    %v12523 = vrot.slane %v11491, %v12522
    %v12524 = vsel %vm2147, %v12523, %v12519
    %v12525 = vlaneseq
    %v12526 = vshrl.u32 %v12525, 7
    %v12527 = vsub.s32 %v2149, %v12526
    %v12528 = vrot.slane %v11494, %v12527
    %v12529 = vsel %vm2154, %v12528, %v12524
    %v12530 = vlaneseq
    %v12531 = vshrl.u32 %v12530, 7
    %v12532 = vsub.s32 %v2156, %v12531
    %v12533 = vrot.slane %v11497, %v12532
    %v12534 = vsel %vm2161, %v12533, %v12529
    %v12535 = vlaneseq
    %v12536 = vshrl.u32 %v12535, 7
    %v12537 = vsub.s32 %v2163, %v12536
    %v12538 = vrot.slane %v11500, %v12537
    %v12539 = vsel %vm2168, %v12538, %v12534
    %v12540 = vlaneseq
    %v12541 = vshrl.u32 %v12540, 7
    %v12542 = vsub.s32 %v2170, %v12541
    %v12543 = vrot.slane %v11503, %v12542
    %v12544 = vsel %vm2175, %v12543, %v12539
    %v12545 = vlaneseq
    %v12546 = vshrl.u32 %v12545, 7
    %v12547 = vsub.s32 %v2177, %v12546
    %v12548 = vrot.slane %v11506, %v12547
    %v12549 = vsel %vm2182, %v12548, %v12544
    %v12550 = vlaneseq
    %v12551 = vshrl.u32 %v12550, 7
    %v12552 = vsub.s32 %v2184, %v12551
    %v12553 = vrot.slane %v11509, %v12552
    %v12554 = vsel %vm2189, %v12553, %v12549
    %v12555 = vlaneseq
    %v12556 = vshrl.u32 %v12555, 7
    %v12557 = vsub.s32 %v2191, %v12556
    %v12558 = vrot.slane %v11512, %v12557
    %v12559 = vsel %vm2196, %v12558, %v12554
    %v12560 = vlaneseq
    %v12561 = vshrl.u32 %v12560, 7
    %v12562 = vsub.s32 %v2088, %v12561
    %v12563 = vrot.slane %v11515, %v12562
    %v12564 = vlaneseq
    %v12565 = vshrl.u32 %v12564, 7
    %v12566 = vsub.s32 %v2093, %v12565
    %v12567 = vrot.slane %v11518, %v12566
    %v12568 = vsel %vm2098, %v12567, %v12563
    %v12569 = vlaneseq
    %v12570 = vshrl.u32 %v12569, 7
    %v12571 = vsub.s32 %v2100, %v12570
    %v12572 = vrot.slane %v11521, %v12571
    %v12573 = vsel %vm2105, %v12572, %v12568
    %v12574 = vlaneseq
    %v12575 = vshrl.u32 %v12574, 7
    %v12576 = vsub.s32 %v2107, %v12575
    %v12577 = vrot.slane %v11524, %v12576
    %v12578 = vsel %vm2112, %v12577, %v12573
    %v12579 = vlaneseq
    %v12580 = vshrl.u32 %v12579, 7
    %v12581 = vsub.s32 %v2114, %v12580
    %v12582 = vrot.slane %v11527, %v12581
    %v12583 = vsel %vm2119, %v12582, %v12578
    %v12584 = vlaneseq
    %v12585 = vshrl.u32 %v12584, 7
    %v12586 = vsub.s32 %v2121, %v12585
    %v12587 = vrot.slane %v11530, %v12586
    %v12588 = vsel %vm2126, %v12587, %v12583
    %v12589 = vlaneseq
    %v12590 = vshrl.u32 %v12589, 7
    %v12591 = vsub.s32 %v2128, %v12590
    %v12592 = vrot.slane %v11533, %v12591
    %v12593 = vsel %vm2133, %v12592, %v12588
    %v12594 = vlaneseq
    %v12595 = vshrl.u32 %v12594, 7
    %v12596 = vsub.s32 %v2135, %v12595
    %v12597 = vrot.slane %v11536, %v12596
    %v12598 = vsel %vm2140, %v12597, %v12593
    %v12599 = vlaneseq
    %v12600 = vshrl.u32 %v12599, 7
    %v12601 = vsub.s32 %v2142, %v12600
    %v12602 = vrot.slane %v11539, %v12601
    %v12603 = vsel %vm2147, %v12602, %v12598
    %v12604 = vlaneseq
    %v12605 = vshrl.u32 %v12604, 7
    %v12606 = vsub.s32 %v2149, %v12605
    %v12607 = vrot.slane %v11542, %v12606
    %v12608 = vsel %vm2154, %v12607, %v12603
    %v12609 = vlaneseq
    %v12610 = vshrl.u32 %v12609, 7
    %v12611 = vsub.s32 %v2156, %v12610
    %v12612 = vrot.slane %v11545, %v12611
    %v12613 = vsel %vm2161, %v12612, %v12608
    %v12614 = vlaneseq
    %v12615 = vshrl.u32 %v12614, 7
    %v12616 = vsub.s32 %v2163, %v12615
    %v12617 = vrot.slane %v11548, %v12616
    %v12618 = vsel %vm2168, %v12617, %v12613
    %v12619 = vlaneseq
    %v12620 = vshrl.u32 %v12619, 7
    %v12621 = vsub.s32 %v2170, %v12620
    %v12622 = vrot.slane %v11551, %v12621
    %v12623 = vsel %vm2175, %v12622, %v12618
    %v12624 = vlaneseq
    %v12625 = vshrl.u32 %v12624, 7
    %v12626 = vsub.s32 %v2177, %v12625
    %v12627 = vrot.slane %v11554, %v12626
    %v12628 = vsel %vm2182, %v12627, %v12623
    %v12629 = vlaneseq
    %v12630 = vshrl.u32 %v12629, 7
    %v12631 = vsub.s32 %v2184, %v12630
    %v12632 = vrot.slane %v11557, %v12631
    %v12633 = vsel %vm2189, %v12632, %v12628
    %v12634 = vlaneseq
    %v12635 = vshrl.u32 %v12634, 7
    %v12636 = vsub.s32 %v2191, %v12635
    %v12637 = vrot.slane %v11560, %v12636
    %v12638 = vsel %vm2196, %v12637, %v12633
    %v12639 = vlaneseq
    %v12640 = vshrl.u32 %v12639, 7
    %v12641 = vsub.s32 %v2088, %v12640
    %v12642 = vrot.slane %v11563, %v12641
    %v12643 = vlaneseq
    %v12644 = vshrl.u32 %v12643, 7
    %v12645 = vsub.s32 %v2093, %v12644
    %v12646 = vrot.slane %v11566, %v12645
    %v12647 = vsel %vm2098, %v12646, %v12642
    %v12648 = vlaneseq
    %v12649 = vshrl.u32 %v12648, 7
    %v12650 = vsub.s32 %v2100, %v12649
    %v12651 = vrot.slane %v11569, %v12650
    %v12652 = vsel %vm2105, %v12651, %v12647
    %v12653 = vlaneseq
    %v12654 = vshrl.u32 %v12653, 7
    %v12655 = vsub.s32 %v2107, %v12654
    %v12656 = vrot.slane %v11572, %v12655
    %v12657 = vsel %vm2112, %v12656, %v12652
    %v12658 = vlaneseq
    %v12659 = vshrl.u32 %v12658, 7
    %v12660 = vsub.s32 %v2114, %v12659
    %v12661 = vrot.slane %v11575, %v12660
    %v12662 = vsel %vm2119, %v12661, %v12657
    %v12663 = vlaneseq
    %v12664 = vshrl.u32 %v12663, 7
    %v12665 = vsub.s32 %v2121, %v12664
    %v12666 = vrot.slane %v11578, %v12665
    %v12667 = vsel %vm2126, %v12666, %v12662
    %v12668 = vlaneseq
    %v12669 = vshrl.u32 %v12668, 7
    %v12670 = vsub.s32 %v2128, %v12669
    %v12671 = vrot.slane %v11581, %v12670
    %v12672 = vsel %vm2133, %v12671, %v12667
    %v12673 = vlaneseq
    %v12674 = vshrl.u32 %v12673, 7
    %v12675 = vsub.s32 %v2135, %v12674
    %v12676 = vrot.slane %v11584, %v12675
    %v12677 = vsel %vm2140, %v12676, %v12672
    %v12678 = vlaneseq
    %v12679 = vshrl.u32 %v12678, 7
    %v12680 = vsub.s32 %v2142, %v12679
    %v12681 = vrot.slane %v11587, %v12680
    %v12682 = vsel %vm2147, %v12681, %v12677
    %v12683 = vlaneseq
    %v12684 = vshrl.u32 %v12683, 7
    %v12685 = vsub.s32 %v2149, %v12684
    %v12686 = vrot.slane %v11590, %v12685
    %v12687 = vsel %vm2154, %v12686, %v12682
    %v12688 = vlaneseq
    %v12689 = vshrl.u32 %v12688, 7
    %v12690 = vsub.s32 %v2156, %v12689
    %v12691 = vrot.slane %v11593, %v12690
    %v12692 = vsel %vm2161, %v12691, %v12687
    %v12693 = vlaneseq
    %v12694 = vshrl.u32 %v12693, 7
    %v12695 = vsub.s32 %v2163, %v12694
    %v12696 = vrot.slane %v11596, %v12695
    %v12697 = vsel %vm2168, %v12696, %v12692
    %v12698 = vlaneseq
    %v12699 = vshrl.u32 %v12698, 7
    %v12700 = vsub.s32 %v2170, %v12699
    %v12701 = vrot.slane %v11599, %v12700
    %v12702 = vsel %vm2175, %v12701, %v12697
    %v12703 = vlaneseq
    %v12704 = vshrl.u32 %v12703, 7
    %v12705 = vsub.s32 %v2177, %v12704
    %v12706 = vrot.slane %v11602, %v12705
    %v12707 = vsel %vm2182, %v12706, %v12702
    %v12708 = vlaneseq
    %v12709 = vshrl.u32 %v12708, 7
    %v12710 = vsub.s32 %v2184, %v12709
    %v12711 = vrot.slane %v11605, %v12710
    %v12712 = vsel %vm2189, %v12711, %v12707
    %v12713 = vlaneseq
    %v12714 = vshrl.u32 %v12713, 7
    %v12715 = vsub.s32 %v2191, %v12714
    %v12716 = vrot.slane %v11608, %v12715
    %v12717 = vsel %vm2196, %v12716, %v12712
    %v12718 = vlaneseq
    %v12719 = vshrl.u32 %v12718, 7
    %v12720 = vsub.s32 %v2088, %v12719
    %v12721 = vrot.slane %v11611, %v12720
    %v12722 = vlaneseq
    %v12723 = vshrl.u32 %v12722, 7
    %v12724 = vsub.s32 %v2093, %v12723
    %v12725 = vrot.slane %v11614, %v12724
    %v12726 = vsel %vm2098, %v12725, %v12721
    %v12727 = vlaneseq
    %v12728 = vshrl.u32 %v12727, 7
    %v12729 = vsub.s32 %v2100, %v12728
    %v12730 = vrot.slane %v11617, %v12729
    %v12731 = vsel %vm2105, %v12730, %v12726
    %v12732 = vlaneseq
    %v12733 = vshrl.u32 %v12732, 7
    %v12734 = vsub.s32 %v2107, %v12733
    %v12735 = vrot.slane %v11620, %v12734
    %v12736 = vsel %vm2112, %v12735, %v12731
    %v12737 = vlaneseq
    %v12738 = vshrl.u32 %v12737, 7
    %v12739 = vsub.s32 %v2114, %v12738
    %v12740 = vrot.slane %v11623, %v12739
    %v12741 = vsel %vm2119, %v12740, %v12736
    %v12742 = vlaneseq
    %v12743 = vshrl.u32 %v12742, 7
    %v12744 = vsub.s32 %v2121, %v12743
    %v12745 = vrot.slane %v11626, %v12744
    %v12746 = vsel %vm2126, %v12745, %v12741
    %v12747 = vlaneseq
    %v12748 = vshrl.u32 %v12747, 7
    %v12749 = vsub.s32 %v2128, %v12748
    %v12750 = vrot.slane %v11629, %v12749
    %v12751 = vsel %vm2133, %v12750, %v12746
    %v12752 = vlaneseq
    %v12753 = vshrl.u32 %v12752, 7
    %v12754 = vsub.s32 %v2135, %v12753
    %v12755 = vrot.slane %v11632, %v12754
    %v12756 = vsel %vm2140, %v12755, %v12751
    %v12757 = vlaneseq
    %v12758 = vshrl.u32 %v12757, 7
    %v12759 = vsub.s32 %v2142, %v12758
    %v12760 = vrot.slane %v11635, %v12759
    %v12761 = vsel %vm2147, %v12760, %v12756
    %v12762 = vlaneseq
    %v12763 = vshrl.u32 %v12762, 7
    %v12764 = vsub.s32 %v2149, %v12763
    %v12765 = vrot.slane %v11638, %v12764
    %v12766 = vsel %vm2154, %v12765, %v12761
    %v12767 = vlaneseq
    %v12768 = vshrl.u32 %v12767, 7
    %v12769 = vsub.s32 %v2156, %v12768
    %v12770 = vrot.slane %v11641, %v12769
    %v12771 = vsel %vm2161, %v12770, %v12766
    %v12772 = vlaneseq
    %v12773 = vshrl.u32 %v12772, 7
    %v12774 = vsub.s32 %v2163, %v12773
    %v12775 = vrot.slane %v11644, %v12774
    %v12776 = vsel %vm2168, %v12775, %v12771
    %v12777 = vlaneseq
    %v12778 = vshrl.u32 %v12777, 7
    %v12779 = vsub.s32 %v2170, %v12778
    %v12780 = vrot.slane %v11647, %v12779
    %v12781 = vsel %vm2175, %v12780, %v12776
    %v12782 = vlaneseq
    %v12783 = vshrl.u32 %v12782, 7
    %v12784 = vsub.s32 %v2177, %v12783
    %v12785 = vrot.slane %v11650, %v12784
    %v12786 = vsel %vm2182, %v12785, %v12781
    %v12787 = vlaneseq
    %v12788 = vshrl.u32 %v12787, 7
    %v12789 = vsub.s32 %v2184, %v12788
    %v12790 = vrot.slane %v11653, %v12789
    %v12791 = vsel %vm2189, %v12790, %v12786
    %v12792 = vlaneseq
    %v12793 = vshrl.u32 %v12792, 7
    %v12794 = vsub.s32 %v2191, %v12793
    %v12795 = vrot.slane %v11656, %v12794
    %v12796 = vsel %vm2196, %v12795, %v12791
    %v12797 = vlaneseq
    %v12798 = vshrl.u32 %v12797, 7
    %v12799 = vsub.s32 %v2088, %v12798
    %v12800 = vrot.slane %v11659, %v12799
    %v12801 = vlaneseq
    %v12802 = vshrl.u32 %v12801, 7
    %v12803 = vsub.s32 %v2093, %v12802
    %v12804 = vrot.slane %v11662, %v12803
    %v12805 = vsel %vm2098, %v12804, %v12800
    %v12806 = vlaneseq
    %v12807 = vshrl.u32 %v12806, 7
    %v12808 = vsub.s32 %v2100, %v12807
    %v12809 = vrot.slane %v11665, %v12808
    %v12810 = vsel %vm2105, %v12809, %v12805
    %v12811 = vlaneseq
    %v12812 = vshrl.u32 %v12811, 7
    %v12813 = vsub.s32 %v2107, %v12812
    %v12814 = vrot.slane %v11668, %v12813
    %v12815 = vsel %vm2112, %v12814, %v12810
    %v12816 = vlaneseq
    %v12817 = vshrl.u32 %v12816, 7
    %v12818 = vsub.s32 %v2114, %v12817
    %v12819 = vrot.slane %v11671, %v12818
    %v12820 = vsel %vm2119, %v12819, %v12815
    %v12821 = vlaneseq
    %v12822 = vshrl.u32 %v12821, 7
    %v12823 = vsub.s32 %v2121, %v12822
    %v12824 = vrot.slane %v11674, %v12823
    %v12825 = vsel %vm2126, %v12824, %v12820
    %v12826 = vlaneseq
    %v12827 = vshrl.u32 %v12826, 7
    %v12828 = vsub.s32 %v2128, %v12827
    %v12829 = vrot.slane %v11677, %v12828
    %v12830 = vsel %vm2133, %v12829, %v12825
    %v12831 = vlaneseq
    %v12832 = vshrl.u32 %v12831, 7
    %v12833 = vsub.s32 %v2135, %v12832
    %v12834 = vrot.slane %v11680, %v12833
    %v12835 = vsel %vm2140, %v12834, %v12830
    %v12836 = vlaneseq
    %v12837 = vshrl.u32 %v12836, 7
    %v12838 = vsub.s32 %v2142, %v12837
    %v12839 = vrot.slane %v11683, %v12838
    %v12840 = vsel %vm2147, %v12839, %v12835
    %v12841 = vlaneseq
    %v12842 = vshrl.u32 %v12841, 7
    %v12843 = vsub.s32 %v2149, %v12842
    %v12844 = vrot.slane %v11686, %v12843
    %v12845 = vsel %vm2154, %v12844, %v12840
    %v12846 = vlaneseq
    %v12847 = vshrl.u32 %v12846, 7
    %v12848 = vsub.s32 %v2156, %v12847
    %v12849 = vrot.slane %v11689, %v12848
    %v12850 = vsel %vm2161, %v12849, %v12845
    %v12851 = vlaneseq
    %v12852 = vshrl.u32 %v12851, 7
    %v12853 = vsub.s32 %v2163, %v12852
    %v12854 = vrot.slane %v11692, %v12853
    %v12855 = vsel %vm2168, %v12854, %v12850
    %v12856 = vlaneseq
    %v12857 = vshrl.u32 %v12856, 7
    %v12858 = vsub.s32 %v2170, %v12857
    %v12859 = vrot.slane %v11695, %v12858
    %v12860 = vsel %vm2175, %v12859, %v12855
    %v12861 = vlaneseq
    %v12862 = vshrl.u32 %v12861, 7
    %v12863 = vsub.s32 %v2177, %v12862
    %v12864 = vrot.slane %v11698, %v12863
    %v12865 = vsel %vm2182, %v12864, %v12860
    %v12866 = vlaneseq
    %v12867 = vshrl.u32 %v12866, 7
    %v12868 = vsub.s32 %v2184, %v12867
    %v12869 = vrot.slane %v11701, %v12868
    %v12870 = vsel %vm2189, %v12869, %v12865
    %v12871 = vlaneseq
    %v12872 = vshrl.u32 %v12871, 7
    %v12873 = vsub.s32 %v2191, %v12872
    %v12874 = vrot.slane %v11704, %v12873
    %v12875 = vsel %vm2196, %v12874, %v12870
    %v12876 = vlaneseq
    %v12877 = vshrl.u32 %v12876, 7
    %v12878 = vsub.s32 %v2088, %v12877
    %v12879 = vrot.slane %v11707, %v12878
    %v12880 = vlaneseq
    %v12881 = vshrl.u32 %v12880, 7
    %v12882 = vsub.s32 %v2093, %v12881
    %v12883 = vrot.slane %v11710, %v12882
    %v12884 = vsel %vm2098, %v12883, %v12879
    %v12885 = vlaneseq
    %v12886 = vshrl.u32 %v12885, 7
    %v12887 = vsub.s32 %v2100, %v12886
    %v12888 = vrot.slane %v11713, %v12887
    %v12889 = vsel %vm2105, %v12888, %v12884
    %v12890 = vlaneseq
    %v12891 = vshrl.u32 %v12890, 7
    %v12892 = vsub.s32 %v2107, %v12891
    %v12893 = vrot.slane %v11716, %v12892
    %v12894 = vsel %vm2112, %v12893, %v12889
    %v12895 = vlaneseq
    %v12896 = vshrl.u32 %v12895, 7
    %v12897 = vsub.s32 %v2114, %v12896
    %v12898 = vrot.slane %v11719, %v12897
    %v12899 = vsel %vm2119, %v12898, %v12894
    %v12900 = vlaneseq
    %v12901 = vshrl.u32 %v12900, 7
    %v12902 = vsub.s32 %v2121, %v12901
    %v12903 = vrot.slane %v11722, %v12902
    %v12904 = vsel %vm2126, %v12903, %v12899
    %v12905 = vlaneseq
    %v12906 = vshrl.u32 %v12905, 7
    %v12907 = vsub.s32 %v2128, %v12906
    %v12908 = vrot.slane %v11725, %v12907
    %v12909 = vsel %vm2133, %v12908, %v12904
    %v12910 = vlaneseq
    %v12911 = vshrl.u32 %v12910, 7
    %v12912 = vsub.s32 %v2135, %v12911
    %v12913 = vrot.slane %v11728, %v12912
    %v12914 = vsel %vm2140, %v12913, %v12909
    %v12915 = vlaneseq
    %v12916 = vshrl.u32 %v12915, 7
    %v12917 = vsub.s32 %v2142, %v12916
    %v12918 = vrot.slane %v11731, %v12917
    %v12919 = vsel %vm2147, %v12918, %v12914
    %v12920 = vlaneseq
    %v12921 = vshrl.u32 %v12920, 7
    %v12922 = vsub.s32 %v2149, %v12921
    %v12923 = vrot.slane %v11734, %v12922
    %v12924 = vsel %vm2154, %v12923, %v12919
    %v12925 = vlaneseq
    %v12926 = vshrl.u32 %v12925, 7
    %v12927 = vsub.s32 %v2156, %v12926
    %v12928 = vrot.slane %v11737, %v12927
    %v12929 = vsel %vm2161, %v12928, %v12924
    %v12930 = vlaneseq
    %v12931 = vshrl.u32 %v12930, 7
    %v12932 = vsub.s32 %v2163, %v12931
    %v12933 = vrot.slane %v11740, %v12932
    %v12934 = vsel %vm2168, %v12933, %v12929
    %v12935 = vlaneseq
    %v12936 = vshrl.u32 %v12935, 7
    %v12937 = vsub.s32 %v2170, %v12936
    %v12938 = vrot.slane %v11743, %v12937
    %v12939 = vsel %vm2175, %v12938, %v12934
    %v12940 = vlaneseq
    %v12941 = vshrl.u32 %v12940, 7
    %v12942 = vsub.s32 %v2177, %v12941
    %v12943 = vrot.slane %v11746, %v12942
    %v12944 = vsel %vm2182, %v12943, %v12939
    %v12945 = vlaneseq
    %v12946 = vshrl.u32 %v12945, 7
    %v12947 = vsub.s32 %v2184, %v12946
    %v12948 = vrot.slane %v11749, %v12947
    %v12949 = vsel %vm2189, %v12948, %v12944
    %v12950 = vlaneseq
    %v12951 = vshrl.u32 %v12950, 7
    %v12952 = vsub.s32 %v2191, %v12951
    %v12953 = vrot.slane %v11752, %v12952
    %v12954 = vsel %vm2196, %v12953, %v12949
    %v12955 = vlaneseq
    %v12956 = vshrl.u32 %v12955, 7
    %v12957 = vsub.s32 %v2088, %v12956
    %v12958 = vrot.slane %v11755, %v12957
    %v12959 = vlaneseq
    %v12960 = vshrl.u32 %v12959, 7
    %v12961 = vsub.s32 %v2093, %v12960
    %v12962 = vrot.slane %v11758, %v12961
    %v12963 = vsel %vm2098, %v12962, %v12958
    %v12964 = vlaneseq
    %v12965 = vshrl.u32 %v12964, 7
    %v12966 = vsub.s32 %v2100, %v12965
    %v12967 = vrot.slane %v11761, %v12966
    %v12968 = vsel %vm2105, %v12967, %v12963
    %v12969 = vlaneseq
    %v12970 = vshrl.u32 %v12969, 7
    %v12971 = vsub.s32 %v2107, %v12970
    %v12972 = vrot.slane %v11764, %v12971
    %v12973 = vsel %vm2112, %v12972, %v12968
    %v12974 = vlaneseq
    %v12975 = vshrl.u32 %v12974, 7
    %v12976 = vsub.s32 %v2114, %v12975
    %v12977 = vrot.slane %v11767, %v12976
    %v12978 = vsel %vm2119, %v12977, %v12973
    %v12979 = vlaneseq
    %v12980 = vshrl.u32 %v12979, 7
    %v12981 = vsub.s32 %v2121, %v12980
    %v12982 = vrot.slane %v11770, %v12981
    %v12983 = vsel %vm2126, %v12982, %v12978
    %v12984 = vlaneseq
    %v12985 = vshrl.u32 %v12984, 7
    %v12986 = vsub.s32 %v2128, %v12985
    %v12987 = vrot.slane %v11773, %v12986
    %v12988 = vsel %vm2133, %v12987, %v12983
    %v12989 = vlaneseq
    %v12990 = vshrl.u32 %v12989, 7
    %v12991 = vsub.s32 %v2135, %v12990
    %v12992 = vrot.slane %v11776, %v12991
    %v12993 = vsel %vm2140, %v12992, %v12988
    %v12994 = vlaneseq
    %v12995 = vshrl.u32 %v12994, 7
    %v12996 = vsub.s32 %v2142, %v12995
    %v12997 = vrot.slane %v11779, %v12996
    %v12998 = vsel %vm2147, %v12997, %v12993
    %v12999 = vlaneseq
    %v13000 = vshrl.u32 %v12999, 7
    %v13001 = vsub.s32 %v2149, %v13000
    %v13002 = vrot.slane %v11782, %v13001
    %v13003 = vsel %vm2154, %v13002, %v12998
    %v13004 = vlaneseq
    %v13005 = vshrl.u32 %v13004, 7
    %v13006 = vsub.s32 %v2156, %v13005
    %v13007 = vrot.slane %v11785, %v13006
    %v13008 = vsel %vm2161, %v13007, %v13003
    %v13009 = vlaneseq
    %v13010 = vshrl.u32 %v13009, 7
    %v13011 = vsub.s32 %v2163, %v13010
    %v13012 = vrot.slane %v11788, %v13011
    %v13013 = vsel %vm2168, %v13012, %v13008
    %v13014 = vlaneseq
    %v13015 = vshrl.u32 %v13014, 7
    %v13016 = vsub.s32 %v2170, %v13015
    %v13017 = vrot.slane %v11791, %v13016
    %v13018 = vsel %vm2175, %v13017, %v13013
    %v13019 = vlaneseq
    %v13020 = vshrl.u32 %v13019, 7
    %v13021 = vsub.s32 %v2177, %v13020
    %v13022 = vrot.slane %v11794, %v13021
    %v13023 = vsel %vm2182, %v13022, %v13018
    %v13024 = vlaneseq
    %v13025 = vshrl.u32 %v13024, 7
    %v13026 = vsub.s32 %v2184, %v13025
    %v13027 = vrot.slane %v11797, %v13026
    %v13028 = vsel %vm2189, %v13027, %v13023
    %v13029 = vlaneseq
    %v13030 = vshrl.u32 %v13029, 7
    %v13031 = vsub.s32 %v2191, %v13030
    %v13032 = vrot.slane %v11800, %v13031
    %v13033 = vsel %vm2196, %v13032, %v13028
    %v13034 = vlaneseq
    %v13035 = vshrl.u32 %v13034, 7
    %v13036 = vsub.s32 %v2088, %v13035
    %v13037 = vrot.slane %v11803, %v13036
    %v13038 = vlaneseq
    %v13039 = vshrl.u32 %v13038, 7
    %v13040 = vsub.s32 %v2093, %v13039
    %v13041 = vrot.slane %v11806, %v13040
    %v13042 = vsel %vm2098, %v13041, %v13037
    %v13043 = vlaneseq
    %v13044 = vshrl.u32 %v13043, 7
    %v13045 = vsub.s32 %v2100, %v13044
    %v13046 = vrot.slane %v11809, %v13045
    %v13047 = vsel %vm2105, %v13046, %v13042
    %v13048 = vlaneseq
    %v13049 = vshrl.u32 %v13048, 7
    %v13050 = vsub.s32 %v2107, %v13049
    %v13051 = vrot.slane %v11812, %v13050
    %v13052 = vsel %vm2112, %v13051, %v13047
    %v13053 = vlaneseq
    %v13054 = vshrl.u32 %v13053, 7
    %v13055 = vsub.s32 %v2114, %v13054
    %v13056 = vrot.slane %v11815, %v13055
    %v13057 = vsel %vm2119, %v13056, %v13052
    %v13058 = vlaneseq
    %v13059 = vshrl.u32 %v13058, 7
    %v13060 = vsub.s32 %v2121, %v13059
    %v13061 = vrot.slane %v11818, %v13060
    %v13062 = vsel %vm2126, %v13061, %v13057
    %v13063 = vlaneseq
    %v13064 = vshrl.u32 %v13063, 7
    %v13065 = vsub.s32 %v2128, %v13064
    %v13066 = vrot.slane %v11821, %v13065
    %v13067 = vsel %vm2133, %v13066, %v13062
    %v13068 = vlaneseq
    %v13069 = vshrl.u32 %v13068, 7
    %v13070 = vsub.s32 %v2135, %v13069
    %v13071 = vrot.slane %v11824, %v13070
    %v13072 = vsel %vm2140, %v13071, %v13067
    %v13073 = vlaneseq
    %v13074 = vshrl.u32 %v13073, 7
    %v13075 = vsub.s32 %v2142, %v13074
    %v13076 = vrot.slane %v11827, %v13075
    %v13077 = vsel %vm2147, %v13076, %v13072
    %v13078 = vlaneseq
    %v13079 = vshrl.u32 %v13078, 7
    %v13080 = vsub.s32 %v2149, %v13079
    %v13081 = vrot.slane %v11830, %v13080
    %v13082 = vsel %vm2154, %v13081, %v13077
    %v13083 = vlaneseq
    %v13084 = vshrl.u32 %v13083, 7
    %v13085 = vsub.s32 %v2156, %v13084
    %v13086 = vrot.slane %v11833, %v13085
    %v13087 = vsel %vm2161, %v13086, %v13082
    %v13088 = vlaneseq
    %v13089 = vshrl.u32 %v13088, 7
    %v13090 = vsub.s32 %v2163, %v13089
    %v13091 = vrot.slane %v11836, %v13090
    %v13092 = vsel %vm2168, %v13091, %v13087
    %v13093 = vlaneseq
    %v13094 = vshrl.u32 %v13093, 7
    %v13095 = vsub.s32 %v2170, %v13094
    %v13096 = vrot.slane %v11839, %v13095
    %v13097 = vsel %vm2175, %v13096, %v13092
    %v13098 = vlaneseq
    %v13099 = vshrl.u32 %v13098, 7
    %v13100 = vsub.s32 %v2177, %v13099
    %v13101 = vrot.slane %v11842, %v13100
    %v13102 = vsel %vm2182, %v13101, %v13097
    %v13103 = vlaneseq
    %v13104 = vshrl.u32 %v13103, 7
    %v13105 = vsub.s32 %v2184, %v13104
    %v13106 = vrot.slane %v11845, %v13105
    %v13107 = vsel %vm2189, %v13106, %v13102
    %v13108 = vlaneseq
    %v13109 = vshrl.u32 %v13108, 7
    %v13110 = vsub.s32 %v2191, %v13109
    %v13111 = vrot.slane %v11848, %v13110
    %v13112 = vsel %vm2196, %v13111, %v13107
    %v13113 = vsel %vm3383, %v12559, %v11927
    %v13114 = vsel %vm3383, %v12638, %v12006
    %v13115 = vsel %vm3383, %v12717, %v12085
    %v13116 = vsel %vm3383, %v12796, %v12164
    %v13117 = vsel %vm3383, %v12875, %v12243
    %v13118 = vsel %vm3383, %v12954, %v12322
    %v13119 = vsel %vm3383, %v13033, %v12401
    %v13120 = vsel %vm3383, %v13112, %v12480
    %v13129 = vadd.f32 %v9886, %v13113
    %v13130 = vadd.f32 %v9887, %v13114
    %v13131 = vadd.f32 %v9888, %v13115
    %v13132 = vadd.f32 %v9889, %v13116
    %v13133 = vadd.f32 %v9890, %v13117
    %v13134 = vadd.f32 %v9891, %v13118
    %v13135 = vadd.f32 %v9892, %v13119
    %v13136 = vadd.f32 %v9893, %v13120
    %v13137 = vmax.f32 %v13129, 0.0
    %v13138 = vmax.f32 %v13130, 0.0
    %v13139 = vmax.f32 %v13131, 0.0
    %v13140 = vmax.f32 %v13132, 0.0
    %v13141 = vmax.f32 %v13133, 0.0
    %v13142 = vmax.f32 %v13134, 0.0
    %v13143 = vmax.f32 %v13135, 0.0
    %v13144 = vmax.f32 %v13136, 0.0
    %v13145 = vld [vmem:[#allocation9] sm:$0xff]
    %v13147 = vlaneseq
    %v13148 = vshrl.u32 %v13147, 7
    %v13149 = vsub.s32 0, %v13148
    %v13150 = vrot.slane %v13145, %v13149
    %v13151 = vlaneseq
    %v13152 = vshrl.u32 %v13151, 7
    %v13153 = vsub.s32 1, %v13152
    %v13154 = vrot.slane %v13145, %v13153
    %v13155 = vlaneseq
    %v13156 = vshrl.u32 %v13155, 7
    %v13157 = vsub.s32 2, %v13156
    %v13158 = vrot.slane %v13145, %v13157
    %v13159 = vlaneseq
    %v13160 = vshrl.u32 %v13159, 7
    %v13161 = vsub.s32 3, %v13160
    %v13162 = vrot.slane %v13145, %v13161
    %v13163 = vlaneseq
    %v13164 = vshrl.u32 %v13163, 7
    %v13165 = vsub.s32 4, %v13164
    %v13166 = vrot.slane %v13145, %v13165
    %v13167 = vlaneseq
    %v13168 = vshrl.u32 %v13167, 7
    %v13169 = vsub.s32 5, %v13168
    %v13170 = vrot.slane %v13145, %v13169
    %v13171 = vlaneseq
    %v13172 = vshrl.u32 %v13171, 7
    %v13173 = vsub.s32 6, %v13172
    %v13174 = vrot.slane %v13145, %v13173
    %v13175 = vlaneseq
    %v13176 = vshrl.u32 %v13175, 7
    %v13177 = vsub.s32 7, %v13176
    %v13178 = vrot.slane %v13145, %v13177
    %v13187 = vmul.f32 %v13137, %v13150
    %v13188 = vmul.f32 %v13138, %v13154
    %v13189 = vmul.f32 %v13139, %v13158
    %v13190 = vmul.f32 %v13140, %v13162
    %v13191 = vmul.f32 %v13141, %v13166
    %v13192 = vmul.f32 %v13142, %v13170
    %v13193 = vmul.f32 %v13143, %v13174
    %v13194 = vmul.f32 %v13144, %v13178
    %vm13195 = vcmask 1041408
    %v13196 = vsel %vm13195, %v13187, 0.0
    %v13197 = vsel %vm13195, %v13188, 0.0
    %v13198 = vadd.f32 %v13196, %v13197
    %v13199 = vsel %vm13195, %v13189, 0.0
    %v13200 = vadd.f32 %v13198, %v13199
    %v13201 = vsel %vm13195, %v13190, 0.0
    %v13202 = vadd.f32 %v13200, %v13201
    %v13203 = vsel %vm13195, %v13191, 0.0
    %v13204 = vadd.f32 %v13202, %v13203
    %v13205 = vsel %vm13195, %v13192, 0.0
    %v13206 = vadd.f32 %v13204, %v13205
    %v13207 = vsel %vm13195, %v13193, 0.0
    %v13208 = vadd.f32 %v13206, %v13207
    %v13209 = vsel %vm13195, %v13194, 0.0
    %v13210 = vadd.f32 %v13208, %v13209
    %13211 = vadd.xlane.f32.xlu0 %v13210
    %v13212 = vpop.xlane.xlu0 %13211
    %v13213 = vld [vmem:[#allocation2] sm:$0x1]
    %v13215 = vlaneseq
    %v13216 = vshrl.u32 %v13215, 7
    %v13217 = vsub.s32 0, %v13216
    %v13218 = vrot.slane %v13213, %v13217
    %v13220 = vadd.f32 %v13212, %v13218
    %v13221 = vxor.u32 %v13220, 2147483648
    %v13222 = vmul.f32 %v13221, 1.442695
    %v13223 = vpow.pop %v13222
    %v13224 = vadd.f32 %v13223, 1.0
    %v13225 = vrcp.pop %v13224
    %v13226 = vmul.f32 1.0, %v13225
    %13228 = vset.pattern.permute.xlu0 0
    %13229 = vperm.xlu0 %13228, %v13226
    %v13230 = vpop.permute.xlu0 %13229
    %13232 = vst [vmem:[#allocation11] sm:$0x3] %v13230
    // Predicated region
    $region38: #{tpu_custom_call.1} parent=1 // pred_check
      _
    $region39: #{tpu_custom_call.1} parent=1 // pred_check_branch
      %13234 = sbr.rel (0) target = $region41
    $region40: #{tpu_custom_call.1} parent=1 // pred_region
      %s13236 = ssub.s32 32, 32
      %13237 = vsyncadd [#allocation5], %s13236
      %s13239 = sshll.u32 [#allocation11], 4
      %s13240 = int_to_ptr.vmem [resolvable:$true] %s13239
      %13242 = dma.vmem_to_hbm [thread:$0]  %s13240, 32, %s5, [#allocation5]
    $region41: #{tpu_custom_call.1} parent=1 // pred_fallthru
      _
    // Predicated region
    $region42: #{tpu_custom_call.1} parent=1 // pred_check
      _
    $region43: #{tpu_custom_call.1} parent=1 // pred_check_branch
      %13244 = sbr.rel (0) target = $region45
    $region44: #{tpu_custom_call.1} parent=1 // pred_region
      %13245 = dma.done [#allocation5], 32
    $region45: #{tpu_custom_call.1} parent=1 // pred_fallthru
      _
    %13246 = vsyncpa [#allocation4], 1
    %13247 = vsyncpa [#allocation7], 1
    %13248 = vsyncpa [#allocation10], 1
    %13249 = vsyncpa [#allocation5], 1

</llo_original>
